<compile_context>
chip_gen: v6e
topology: v6e:2x2x1
jax: 0.10.0
libtpu: 0.0.40
codegen_flags: <defaults>
</compile_context>

<pallas_src>
import functools

import jax
import jax.numpy as jnp
from jax.experimental import pallas as pl
from jax.experimental.pallas import tpu as pltpu

# ---------------- architecture constants (fixed by the PyTorch module) -------------
K_E, K_P = 5, 3                 # conv kernel sizes (ECG / PPG)
C1, C2 = 32, 64                 # conv channel widths
ECG_OUT, PPG_OUT, MOT_OUT = 128, 64, 64
H = 32                          # LSTM hidden
F_IN, F_PAD = 6, 8              # motion features (padded to 8 lanes-of-contraction)
D_CAT = ECG_OUT + PPG_OUT + MOT_OUT   # 256
ATT_HID = 64
OUT_PACK = 128                  # packed head output width [arr(2)|stress(3)|act(4)|0...]

# ---------------- packed parameter slab layouts (static) ---------------------------
# row-vector slab: one row per bias / BN scale-shift vector, padded to 256 lanes
VROWS = dict(ecg_b1=0, ecg_s1=1, ecg_t1=2, ecg_b2=3, ecg_bl=4,
             ppg_b1=5, ppg_s1=6, ppg_t1=7, ppg_b2=8, ppg_bl=9,
             lstm_b=10, mot_bfc=11, ba1=12, ba2=13, bh1=14, bh2=15)
VEC_ROWS, VEC_W = 16, 256
# small-weight slab (88 x 128): w1e rows 0:5, w1g rows 8:11, wfc rows 16:48,
#                               wih rows 48:56, whh rows 56:88  (8-row aligned)
WS_ROWS, WS_W = 88, 128
# conv-2 weight slab (256 x 64): ecg rows 0:160, ppg rows 160:256
# encoder-linear slab (128 x 128): ecg rows 0:64 cols 0:128, ppg rows 64:128 cols 0:64
# fusion slab (512 x 256), prefetched from HBM:
#   wh1 rows 0:256 cols 0:256 ; wh2 rows 256:512 cols 0:128 ;
#   wa1 rows 256:512 cols 128:192 ; wa2 rows 256:320 cols 192:195
FUS_ROWS, FUS_W = 512, 256


# ----------------------------------------------------------------------------------
# Fused forward kernel
# ----------------------------------------------------------------------------------
def _fused_kernel(xe_ref, xg_ref, xm_ref, vec_ref, ws_ref, w2_ref, wl_ref, fus_hbm,
                  out_ref,
                  fus_vmem, ime_scr, img_scr, fus_sem,
                  *, B, T, L_e, L_p):
    f32 = jnp.float32

    # Prefetch the large fusion/head weights from HBM; they are only needed after
    # both conv encoders and the LSTM, so the DMA is hidden behind that compute.
    fus_cp = pltpu.make_async_copy(fus_hbm, fus_vmem, fus_sem.at[0])
    fus_cp.start()

    def row(name, width):
        r = VROWS[name]
        return vec_ref[r:r + 1, 0:width]          # (1, width) row vector

    # ---------------- conv encoder (shared by ECG / PPG branches) ------------------
    def conv_encoder(x_ref, K, L1, w1, b1, s1, t1, w2, b2, wl, bl, im_scr):
        P = (K - 1) // 2
        M = L1                    # dense (stride-1) conv-2 positions; real outputs = even m
        L2 = M // 2               # stride-2 outputs averaged by AdaptiveAvgPool1d(1)

        # Conv1d(1->C1, K, stride 1, 'same') as K shifted broadcast-FMAs (VPU);
        # k=0 term initializes the accumulator. Then ReLU -> eval BatchNorm1d.
        h1 = x_ref[:, 0:L1, :] * w1[0:1, :]
        for k in range(1, K):
            h1 = h1 + x_ref[:, k:k + L1, :] * w1[k:k + 1, :]
        a1 = jnp.maximum(h1 + b1, 0.0) * s1 + t1                    # (B, L1, C1)

        # Build the conv-2 im2col slab (B, M, K*C1) in VMEM: one shifted store per
        # tap; boundary rows get explicit zero stores (every element written, so no
        # stale-scratch hazard and no full zero-fill).
        for k in range(K):
            s = k - P
            lo, hi = k * C1, (k + 1) * C1
            if s == 0:
                im_scr[:, :, lo:hi] = a1
            elif s > 0:
                im_scr[:, 0:L1 - s, lo:hi] = a1[:, s:L1, :]
                im_scr[:, L1 - s:L1, lo:hi] = jnp.zeros((B, s, C1), f32)
            else:
                im_scr[:, -s:L1, lo:hi] = a1[:, 0:L1 + s, :]
                im_scr[:, 0:-s, lo:hi] = jnp.zeros((B, -s, C1), f32)

        # Conv1d(C1->C2, K, stride 2, 'same') evaluated densely at stride 1 as ONE
        # K*C1-deep MXU matmul (160 for ECG / 96 for PPG).
        lhs = im_scr[...].reshape(B * M, K * C1)
        a2 = jnp.maximum(jnp.dot(lhs, w2, preferred_element_type=f32) + b2, 0.0)

        # stride-2 + AdaptiveAvgPool1d(1): mean over the even dense positions only
        # (row parity == position parity since M is even).  BatchNorm-2 scale/shift
        # are folded into wl/bl at pack time.
        r = jax.lax.broadcasted_iota(jnp.int32, (B * M, 1), 0)
        even = (r & 1) == 0
        pooled = jnp.where(even, a2, 0.0).reshape(B, M, C2).sum(axis=1) * (1.0 / L2)

        # Flatten + Linear (BN-2 folded)
        return jnp.dot(pooled, wl, preferred_element_type=f32) + bl

    ecg_f = conv_encoder(
        xe_ref, K_E, L_e,
        ws_ref[0:K_E, 0:C1], row("ecg_b1", C1), row("ecg_s1", C1), row("ecg_t1", C1),
        w2_ref[0:K_E * C1, :], row("ecg_b2", C2),
        wl_ref[0:C2, 0:ECG_OUT], row("ecg_bl", ECG_OUT), ime_scr)       # (B, 128)
    ppg_f = conv_encoder(
        xg_ref, K_P, L_p,
        ws_ref[8:8 + K_P, 0:C1], row("ppg_b1", C1), row("ppg_s1", C1), row("ppg_t1", C1),
        w2_ref[K_E * C1:K_E * C1 + K_P * C1, :], row("ppg_b2", C2),
        wl_ref[C2:2 * C2, 0:PPG_OUT], row("ppg_bl", PPG_OUT), img_scr)  # (B, 64)

    # ---------------- motion branch: LSTM (hoisted input proj) + motion_fc ---------
    wih = ws_ref[48:56, 0:4 * H]
    whh = ws_ref[56:88, 0:4 * H]
    xproj = jnp.dot(xm_ref[...], wih, preferred_element_type=f32) + row("lstm_b", 4 * H)
    h = jnp.zeros((B, H), f32)
    c = jnp.zeros((B, H), f32)
    for t in range(T):                                        # fully unrolled (T static)
        g = xproj[t * B:(t + 1) * B, :] + jnp.dot(h, whh, preferred_element_type=f32)
        i_g = jax.nn.sigmoid(g[:, 0 * H:1 * H])               # PyTorch gate order i,f,g,o
        f_g = jax.nn.sigmoid(g[:, 1 * H:2 * H])
        g_g = jnp.tanh(g[:, 2 * H:3 * H])
        o_g = jax.nn.sigmoid(g[:, 3 * H:4 * H])
        c = f_g * c + i_g * g_g
        h = o_g * jnp.tanh(c)
    mot_f = (jnp.dot(h, ws_ref[16:48, 0:MOT_OUT], preferred_element_type=f32)
             + row("mot_bfc", MOT_OUT))                                 # (B, 64)

    # ---------------- attention + fused heads (prefetched weights arrive here) -----
    fus_cp.wait()
    wh1 = fus_vmem[0:D_CAT, 0:D_CAT]
    wh2 = fus_vmem[D_CAT:2 * D_CAT, 0:OUT_PACK]
    wa1 = fus_vmem[D_CAT:2 * D_CAT, 128:128 + ATT_HID]
    wa2 = fus_vmem[D_CAT:D_CAT + ATT_HID, 128 + ATT_HID:128 + ATT_HID + 3]

    def split_matmul(xs, w):
        # torch.cat(ecg, ppg, motion, dim=1) @ W realized as a split matmul (same
        # concat order); avoids lane concat, maps to 128/64-deep MXU passes.
        return (jnp.dot(xs[0], w[0:ECG_OUT, :], preferred_element_type=f32)
                + jnp.dot(xs[1], w[ECG_OUT:ECG_OUT + PPG_OUT, :],
                          preferred_element_type=f32)
                + jnp.dot(xs[2], w[ECG_OUT + PPG_OUT:D_CAT, :],
                          preferred_element_type=f32))

    # attention: Linear(256,64) -> ReLU -> Linear(64,3) -> Softmax(dim=1)
    a = jnp.maximum(split_matmul((ecg_f, ppg_f, mot_f), wa1) + row("ba1", ATT_HID), 0.0)
    logits = jnp.dot(a, wa2, preferred_element_type=f32) + row("ba2", 3)
    logits = logits - jnp.max(logits, axis=1, keepdims=True)
    ex = jnp.exp(logits)
    att = ex / jnp.sum(ex, axis=1, keepdims=True)             # (B, 3)

    w_ecg = ecg_f * att[:, 0:1]
    w_ppg = ppg_f * att[:, 1:2]
    w_mot = mot_f * att[:, 2:3]

    # three heads fused: layer-1 = one 256-deep/256-wide matmul; layer-2 = one
    # block-diagonal (256,128) matmul -> lane-dense packed (B,128) output
    # [arrhythmia(2) | stress(3) | activity(4) | 0...].  Dropout = identity (eval).
    hid = jnp.maximum(split_matmul((w_ecg, w_ppg, w_mot), wh1) + row("bh1", D_CAT), 0.0)
    out_ref[...] = jnp.dot(hid, wh2, preferred_element_type=f32) + row("bh2", OUT_PACK)


# ----------------------------------------------------------------------------------
# Parameters: raw PyTorch-layout params (for the reference) + packed kernel slabs
# ----------------------------------------------------------------------------------
def init_params(key):
    keys = iter(jax.random.split(key, 64))
    nk = lambda: next(keys)
    dense = lambda shape, s=0.1: s * jax.random.normal(nk(), shape, jnp.float32)

    def bn(c):
        return dict(gamma=1.0 + 0.1 * jax.random.normal(nk(), (c,), jnp.float32),
                    beta=0.1 * jax.random.normal(nk(), (c,), jnp.float32),
                    mean=0.05 * jax.random.normal(nk(), (c,), jnp.float32),
                    var=1.0 + jnp.abs(0.1 * jax.random.normal(nk(), (c,), jnp.float32)))

    def enc(k, out_dim):
        return dict(w1=dense((C1, 1, k)), b1=dense((C1,)), bn1=bn(C1),
                    w2=dense((C2, C1, k)), b2=dense((C2,)), bn2=bn(C2),
                    wl=dense((out_dim, C2)), bl=dense((out_dim,)))

    p = dict(ecg=enc(K_E, ECG_OUT), ppg=enc(K_P, PPG_OUT))
    p["motion"] = dict(w_ih=dense((4 * H, F_IN)), w_hh=dense((4 * H, H)),
                       b_ih=dense((4 * H,)), b_hh=dense((4 * H,)),
                       w_fc=dense((MOT_OUT, H)), b_fc=dense((MOT_OUT,)))
    p["att"] = dict(w1=dense((ATT_HID, D_CAT)), b1=dense((ATT_HID,)),
                    w2=dense((3, ATT_HID)), b2=dense((3,)))
    p["arr"] = dict(w1=dense((128, D_CAT)), b1=dense((128,)), w2=dense((2, 128)), b2=dense((2,)))
    p["stress"] = dict(w1=dense((64, D_CAT)), b1=dense((64,)), w2=dense((3, 64)), b2=dense((3,)))
    p["act"] = dict(w1=dense((64, D_CAT)), b1=dense((64,)), w2=dense((4, 64)), b2=dense((4,)))
    return p


def pack_params(p):
    """Fold eval-BN, transpose to kernel layouts and pack everything into 5 slabs."""
    eps = 1e-5

    def bn_fold(bn):
        scale = bn["gamma"] / jnp.sqrt(bn["var"] + eps)
        return scale, bn["beta"] - bn["mean"] * scale

    def enc_pack(e, K):
        s1, t1 = bn_fold(e["bn1"])
        s2, t2 = bn_fold(e["bn2"])
        w1 = jnp.transpose(e["w1"], (2, 1, 0)).reshape(K, C1)        # (K, C1)
        w2 = jnp.transpose(e["w2"], (2, 1, 0)).reshape(K * C1, C2)   # (K*C1, C2)
        wl = s2[:, None] * e["wl"].T                                 # fold BN-2 scale
        bl = t2 @ e["wl"].T + e["bl"]                                # fold BN-2 shift
        return dict(w1=w1, b1=e["b1"], s1=s1, t1=t1, w2=w2, b2=e["b2"], wl=wl, bl=bl)

    ecg = enc_pack(p["ecg"], K_E)
    ppg = enc_pack(p["ppg"], K_P)

    m = p["motion"]
    wih = jnp.pad(m["w_ih"].T, ((0, F_PAD - F_IN), (0, 0)))          # (8, 4H)
    whh = m["w_hh"].T                                                 # (H, 4H)
    lstm_b = m["b_ih"] + m["b_hh"]
    wfc = m["w_fc"].T                                                 # (H, 64)

    # fused heads: layer-1 concat, layer-2 block-diagonal -> packed 9 output lanes
    wh1 = jnp.concatenate([p["arr"]["w1"].T, p["stress"]["w1"].T, p["act"]["w1"].T], axis=1)
    bh1 = jnp.concatenate([p["arr"]["b1"], p["stress"]["b1"], p["act"]["b1"]])
    wh2 = jnp.zeros((D_CAT, OUT_PACK), jnp.float32)
    wh2 = wh2.at[0:128, 0:2].set(p["arr"]["w2"].T)
    wh2 = wh2.at[128:192, 2:5].set(p["stress"]["w2"].T)
    wh2 = wh2.at[192:256, 5:9].set(p["act"]["w2"].T)
    bh2 = jnp.zeros((OUT_PACK,), jnp.float32)
    bh2 = bh2.at[0:2].set(p["arr"]["b2"]).at[2:5].set(p["stress"]["b2"]).at[5:9].set(p["act"]["b2"])

    # row-vector slab
    def rowvec(v):
        v = jnp.asarray(v, jnp.float32).reshape(-1)
        return jnp.pad(v, (0, VEC_W - v.shape[0]))

    vec_entries = {"ecg_b1": ecg["b1"], "ecg_s1": ecg["s1"], "ecg_t1": ecg["t1"],
                   "ecg_b2": ecg["b2"], "ecg_bl": ecg["bl"],
                   "ppg_b1": ppg["b1"], "ppg_s1": ppg["s1"], "ppg_t1": ppg["t1"],
                   "ppg_b2": ppg["b2"], "ppg_bl": ppg["bl"],
                   "lstm_b": lstm_b, "mot_bfc": m["b_fc"],
                   "ba1": p["att"]["b1"], "ba2": p["att"]["b2"],
                   "bh1": bh1, "bh2": bh2}
    vecs = jnp.zeros((VEC_ROWS, VEC_W), jnp.float32)
    for name, v in vec_entries.items():
        vecs = vecs.at[VROWS[name], :].set(rowvec(v))

    # small-weight slab (8-row aligned regions)
    ws = jnp.zeros((WS_ROWS, WS_W), jnp.float32)
    ws = ws.at[0:K_E, 0:C1].set(ecg["w1"])
    ws = ws.at[8:8 + K_P, 0:C1].set(ppg["w1"])
    ws = ws.at[16:16 + H, 0:MOT_OUT].set(wfc)
    ws = ws.at[48:48 + F_PAD, 0:4 * H].set(wih)
    ws = ws.at[56:56 + H, 0:4 * H].set(whh)

    # conv-2 weight slab
    w2s = jnp.zeros((K_E * C1 + K_P * C1, C2), jnp.float32)
    w2s = w2s.at[0:K_E * C1, :].set(ecg["w2"])
    w2s = w2s.at[K_E * C1:, :].set(ppg["w2"])

    # encoder linear slab (BN-2 folded)
    wls = jnp.zeros((2 * C2, 128), jnp.float32)
    wls = wls.at[0:C2, 0:ECG_OUT].set(ecg["wl"])
    wls = wls.at[C2:2 * C2, 0:PPG_OUT].set(ppg["wl"])

    # large fusion-weight slab (stays in HBM, prefetched inside the kernel)
    fus = jnp.zeros((FUS_ROWS, FUS_W), jnp.float32)
    fus = fus.at[0:D_CAT, 0:D_CAT].set(wh1)
    fus = fus.at[D_CAT:2 * D_CAT, 0:OUT_PACK].set(wh2)
    fus = fus.at[D_CAT:2 * D_CAT, 128:128 + ATT_HID].set(p["att"]["w1"].T)
    fus = fus.at[D_CAT:D_CAT + ATT_HID, 128 + ATT_HID:128 + ATT_HID + 3].set(p["att"]["w2"].T)

    return dict(vecs=vecs, wsmall=ws, w2=w2s, wl=wls, fus=fus)


# ----------------------------------------------------------------------------------
# Forward wrapper: one pallas_call for the whole model
# ----------------------------------------------------------------------------------
def multimodal_forward(packed, ecg, ppg, motion):
    """ecg: (B,1,L_e), ppg: (B,1,L_p), motion: (B,T,6) — PyTorch layouts."""
    B, _, L_e = ecg.shape
    _, _, L_p = ppg.shape
    _, T, F = motion.shape
    assert L_e % 2 == 0 and L_p % 2 == 0, "signal lengths must be even"

    P_e, P_p = (K_E - 1) // 2, (K_P - 1) // 2
    xe = jnp.pad(ecg[:, 0, :].astype(jnp.float32), ((0, 0), (P_e, P_e)))[..., None]
    xg = jnp.pad(ppg[:, 0, :].astype(jnp.float32), ((0, 0), (P_p, P_p)))[..., None]
    xm = jnp.transpose(motion.astype(jnp.float32), (1, 0, 2))        # (T, B, 6)
    xm = jnp.pad(xm, ((0, 0), (0, 0), (0, F_PAD - F))).reshape(T * B, F_PAD)

    kernel = functools.partial(_fused_kernel, B=B, T=T, L_e=L_e, L_p=L_p)
    vmem = lambda: pl.BlockSpec(memory_space=pltpu.MemorySpace.VMEM)

    out = pl.pallas_call(
        kernel,
        out_shape=jax.ShapeDtypeStruct((B, OUT_PACK), jnp.float32),
        in_specs=[vmem(), vmem(), vmem(),                 # xe, xg, xm
                  vmem(), vmem(), vmem(), vmem(),         # vecs, wsmall, w2, wl
                  pl.BlockSpec(memory_space=pl.ANY)],     # fusion slab stays in HBM
        out_specs=vmem(),
        scratch_shapes=[
            pltpu.VMEM((FUS_ROWS, FUS_W), jnp.float32),       # prefetched fusion weights
            pltpu.VMEM((B, L_e, K_E * C1), jnp.float32),      # ECG conv-2 im2col slab
            pltpu.VMEM((B, L_p, K_P * C1), jnp.float32),      # PPG conv-2 im2col slab
            pltpu.SemaphoreType.DMA((1,)),                    # fusion-prefetch semaphore
        ],
    )(xe, xg, xm, packed["vecs"], packed["wsmall"], packed["w2"], packed["wl"],
      packed["fus"])

    return {"arrhythmia": out[:, 0:2], "stress": out[:, 2:5], "activity": out[:, 5:9]}


# ----------------------------------------------------------------------------------
# Pure-JAX reference (PyTorch eval-mode semantics, UNFOLDED params) for a self-check
# ----------------------------------------------------------------------------------
def _reference_forward(p, ecg, ppg, motion):
    eps = 1e-5

    def bn_eval(x_bcl, bn):
        s = bn["gamma"] / jnp.sqrt(bn["var"] + eps)
        t = bn["beta"] - bn["mean"] * s
        return x_bcl * s[None, :, None] + t[None, :, None]

    def conv1d(x_bcl, w_oik, b, stride, pad):
        y = jax.lax.conv_general_dilated(x_bcl, w_oik, window_strides=(stride,),
                                         padding=[(pad, pad)],
                                         dimension_numbers=("NCH", "OIH", "NCH"))
        return y + b[None, :, None]

    def encoder(x_bcl, e, K):
        pad = (K - 1) // 2
        y = bn_eval(jnp.maximum(conv1d(x_bcl, e["w1"], e["b1"], 1, pad), 0.0), e["bn1"])
        y = bn_eval(jnp.maximum(conv1d(y, e["w2"], e["b2"], 2, pad), 0.0), e["bn2"])
        pooled = jnp.mean(y, axis=2)                     # AdaptiveAvgPool1d(1) + Flatten
        return pooled @ e["wl"].T + e["bl"]

    ecg_f = encoder(ecg.astype(jnp.float32), p["ecg"], K_E)
    ppg_f = encoder(ppg.astype(jnp.float32), p["ppg"], K_P)

    m = p["motion"]
    x = motion.astype(jnp.float32)
    B, T, _ = x.shape
    h = jnp.zeros((B, H), jnp.float32)
    c = jnp.zeros((B, H), jnp.float32)
    for t in range(T):
        g = x[:, t, :] @ m["w_ih"].T + h @ m["w_hh"].T + m["b_ih"] + m["b_hh"]
        i_g = jax.nn.sigmoid(g[:, 0:H]); f_g = jax.nn.sigmoid(g[:, H:2 * H])
        g_g = jnp.tanh(g[:, 2 * H:3 * H]); o_g = jax.nn.sigmoid(g[:, 3 * H:4 * H])
        c = f_g * c + i_g * g_g
        h = o_g * jnp.tanh(c)
    mot_f = h @ m["w_fc"].T + m["b_fc"]

    cat = jnp.concatenate([ecg_f, ppg_f, mot_f], axis=1)
    a = jnp.maximum(cat @ p["att"]["w1"].T + p["att"]["b1"], 0.0)
    att = jax.nn.softmax(a @ p["att"]["w2"].T + p["att"]["b2"], axis=1)
    wcat = jnp.concatenate([ecg_f * att[:, 0:1], ppg_f * att[:, 1:2],
                            mot_f * att[:, 2:3]], axis=1)

    def head(hp):
        hh = jnp.maximum(wcat @ hp["w1"].T + hp["b1"], 0.0)
        return hh @ hp["w2"].T + hp["b2"]

    return {"arrhythmia": head(p["arr"]), "stress": head(p["stress"]),
            "activity": head(p["act"])}


# ----------------------------------------------------------------------------------
if __name__ == "__main__":
    key = jax.random.PRNGKey(0)
    pkey, dkey = jax.random.split(key)
    raw_params = init_params(pkey)
    packed_params = pack_params(raw_params)

    B, L_ECG, L_PPG, T = 2, 128, 64, 8
    k1, k2, k3 = jax.random.split(dkey, 3)
    ecg = jax.random.normal(k1, (B, 1, L_ECG), jnp.float32)
    ppg = jax.random.normal(k2, (B, 1, L_PPG), jnp.float32)
    motion = jax.random.normal(k3, (B, T, 6), jnp.float32)

    fwd = jax.jit(multimodal_forward)
    out = jax.block_until_ready(fwd(packed_params, ecg, ppg, motion))

    assert out["arrhythmia"].shape == (B, 2)
    assert out["stress"].shape == (B, 3)
    assert out["activity"].shape == (B, 4)
    assert all(bool(jnp.all(jnp.isfinite(v))) for v in out.values())

    # numerical check against a pure-JAX reference of the same (eval-mode) module,
    # using the UNFOLDED PyTorch-layout parameters (also validates the BN-2 folding).
    ref = _reference_forward(raw_params, ecg, ppg, motion)
    for name in out:
        err = float(jnp.max(jnp.abs(out[name] - ref[name])))
        assert err < 2e-3, f"{name} mismatch vs reference: max|diff|={err}"

    print("KERNEL_OK")
</pallas_src>

<mosaic_0001>
module attributes {stable_mosaic.version = 11 : i64} {
  func.func @_fused_kernel(%arg0: memref<2x132x1xf32, #tpu.memory_space<vmem>>, %arg1: memref<2x66x1xf32, #tpu.memory_space<vmem>>, %arg2: memref<16x8xf32, #tpu.memory_space<vmem>>, %arg3: memref<16x256xf32, #tpu.memory_space<vmem>>, %arg4: memref<88x128xf32, #tpu.memory_space<vmem>>, %arg5: memref<256x64xf32, #tpu.memory_space<vmem>>, %arg6: memref<128x128xf32, #tpu.memory_space<vmem>>, %arg7: memref<512x256xf32, #tpu.memory_space<any>>, %arg8: memref<2x128xf32, #tpu.memory_space<vmem>>, %arg9: memref<512x256xf32, #tpu.memory_space<vmem>>, %arg10: memref<2x128x160xf32, #tpu.memory_space<vmem>>, %arg11: memref<2x64x96xf32, #tpu.memory_space<vmem>>, %arg12: memref<1x!tpu.dma_semaphore, #tpu.memory_space<semaphore_mem>>) attributes {dimension_semantics = [], scalar_prefetch = 0 : i64, scratch_operands = 4 : i64, tpu.core_type = #tpu.core_type<tc>} {
    %c0_i32 = arith.constant 0 : i32
    %0 = tpu.memref_slice %arg12[%c0_i32] : memref<1x!tpu.dma_semaphore, #tpu.memory_space<semaphore_mem>> -> memref<1x!tpu.dma_semaphore, #tpu.memory_space<semaphore_mem>>
    %1 = tpu.memref_squeeze %0 : memref<1x!tpu.dma_semaphore, #tpu.memory_space<semaphore_mem>> -> memref<!tpu.dma_semaphore, #tpu.memory_space<semaphore_mem>>
    tpu.enqueue_dma source(%arg7 : memref<512x256xf32, #tpu.memory_space<any>>) target(%arg9 : memref<512x256xf32, #tpu.memory_space<vmem>>) target_semaphore(%1 : memref<!tpu.dma_semaphore, #tpu.memory_space<semaphore_mem>>)
    %c0 = arith.constant 0 : index
    %c0_0 = arith.constant 0 : index
    %2 = vector.load %arg4[%c0, %c0_0] : memref<88x128xf32, #tpu.memory_space<vmem>>, vector<5x32xf32>
    %c0_1 = arith.constant 0 : index
    %c0_2 = arith.constant 0 : index
    %3 = vector.load %arg3[%c0_1, %c0_2] : memref<16x256xf32, #tpu.memory_space<vmem>>, vector<1x32xf32>
    %c1 = arith.constant 1 : index
    %c0_3 = arith.constant 0 : index
    %4 = vector.load %arg3[%c1, %c0_3] : memref<16x256xf32, #tpu.memory_space<vmem>>, vector<1x32xf32>
    %c2 = arith.constant 2 : index
    %c0_4 = arith.constant 0 : index
    %5 = vector.load %arg3[%c2, %c0_4] : memref<16x256xf32, #tpu.memory_space<vmem>>, vector<1x32xf32>
    %c0_5 = arith.constant 0 : index
    %c0_6 = arith.constant 0 : index
    %6 = vector.load %arg5[%c0_5, %c0_6] : memref<256x64xf32, #tpu.memory_space<vmem>>, vector<160x64xf32>
    %c3 = arith.constant 3 : index
    %c0_7 = arith.constant 0 : index
    %7 = vector.load %arg3[%c3, %c0_7] : memref<16x256xf32, #tpu.memory_space<vmem>>, vector<1x64xf32>
    %c0_8 = arith.constant 0 : index
    %c0_9 = arith.constant 0 : index
    %8 = vector.load %arg6[%c0_8, %c0_9] : memref<128x128xf32, #tpu.memory_space<vmem>>, vector<64x128xf32>
    %c4 = arith.constant 4 : index
    %c0_10 = arith.constant 0 : index
    %9 = vector.load %arg3[%c4, %c0_10] : memref<16x256xf32, #tpu.memory_space<vmem>>, vector<1x128xf32>
    %c0_11 = arith.constant 0 : index
    %c0_12 = arith.constant 0 : index
    %c0_13 = arith.constant 0 : index
    %10 = vector.load %arg0[%c0_11, %c0_12, %c0_13] : memref<2x132x1xf32, #tpu.memory_space<vmem>>, vector<2x128x1xf32>
    %11 = vector.extract_strided_slice %2 {offsets = [0, 0], sizes = [1, 32], strides = [1, 1]} : vector<5x32xf32> to vector<1x32xf32>
    %12 = vector.shape_cast %11 : vector<1x32xf32> to vector<1x1x32xf32>
    %13 = vector.broadcast %10 : vector<2x128x1xf32> to vector<2x128x32xf32>
    %14 = vector.broadcast %12 : vector<1x1x32xf32> to vector<2x128x32xf32>
    %15 = arith.mulf %13, %14 : vector<2x128x32xf32>
    %c0_14 = arith.constant 0 : index
    %c1_15 = arith.constant 1 : index
    %c0_16 = arith.constant 0 : index
    %16 = vector.load %arg0[%c0_14, %c1_15, %c0_16] : memref<2x132x1xf32, #tpu.memory_space<vmem>>, vector<2x128x1xf32>
    %17 = vector.extract_strided_slice %2 {offsets = [1, 0], sizes = [1, 32], strides = [1, 1]} : vector<5x32xf32> to vector<1x32xf32>
    %18 = vector.shape_cast %17 : vector<1x32xf32> to vector<1x1x32xf32>
    %19 = vector.broadcast %16 : vector<2x128x1xf32> to vector<2x128x32xf32>
    %20 = vector.broadcast %18 : vector<1x1x32xf32> to vector<2x128x32xf32>
    %21 = arith.mulf %19, %20 : vector<2x128x32xf32>
    %22 = arith.addf %15, %21 : vector<2x128x32xf32>
    %c0_17 = arith.constant 0 : index
    %c2_18 = arith.constant 2 : index
    %c0_19 = arith.constant 0 : index
    %23 = vector.load %arg0[%c0_17, %c2_18, %c0_19] : memref<2x132x1xf32, #tpu.memory_space<vmem>>, vector<2x128x1xf32>
    %24 = vector.extract_strided_slice %2 {offsets = [2, 0], sizes = [1, 32], strides = [1, 1]} : vector<5x32xf32> to vector<1x32xf32>
    %25 = vector.shape_cast %24 : vector<1x32xf32> to vector<1x1x32xf32>
    %26 = vector.broadcast %23 : vector<2x128x1xf32> to vector<2x128x32xf32>
    %27 = vector.broadcast %25 : vector<1x1x32xf32> to vector<2x128x32xf32>
    %28 = arith.mulf %26, %27 : vector<2x128x32xf32>
    %29 = arith.addf %22, %28 : vector<2x128x32xf32>
    %c0_20 = arith.constant 0 : index
    %c3_21 = arith.constant 3 : index
    %c0_22 = arith.constant 0 : index
    %30 = vector.load %arg0[%c0_20, %c3_21, %c0_22] : memref<2x132x1xf32, #tpu.memory_space<vmem>>, vector<2x128x1xf32>
    %31 = vector.extract_strided_slice %2 {offsets = [3, 0], sizes = [1, 32], strides = [1, 1]} : vector<5x32xf32> to vector<1x32xf32>
    %32 = vector.shape_cast %31 : vector<1x32xf32> to vector<1x1x32xf32>
    %33 = vector.broadcast %30 : vector<2x128x1xf32> to vector<2x128x32xf32>
    %34 = vector.broadcast %32 : vector<1x1x32xf32> to vector<2x128x32xf32>
    %35 = arith.mulf %33, %34 : vector<2x128x32xf32>
    %36 = arith.addf %29, %35 : vector<2x128x32xf32>
    %c0_23 = arith.constant 0 : index
    %c4_24 = arith.constant 4 : index
    %c0_25 = arith.constant 0 : index
    %37 = vector.load %arg0[%c0_23, %c4_24, %c0_25] : memref<2x132x1xf32, #tpu.memory_space<vmem>>, vector<2x128x1xf32>
    %38 = vector.extract_strided_slice %2 {offsets = [4, 0], sizes = [1, 32], strides = [1, 1]} : vector<5x32xf32> to vector<1x32xf32>
    %39 = vector.shape_cast %38 : vector<1x32xf32> to vector<1x1x32xf32>
    %40 = vector.broadcast %37 : vector<2x128x1xf32> to vector<2x128x32xf32>
    %41 = vector.broadcast %39 : vector<1x1x32xf32> to vector<2x128x32xf32>
    %42 = arith.mulf %40, %41 : vector<2x128x32xf32>
    %43 = arith.addf %36, %42 : vector<2x128x32xf32>
    %44 = vector.shape_cast %3 : vector<1x32xf32> to vector<1x1x32xf32>
    %45 = vector.broadcast %44 : vector<1x1x32xf32> to vector<2x128x32xf32>
    %46 = arith.addf %43, %45 : vector<2x128x32xf32>
    %cst = arith.constant 0.000000e+00 : f32
    %47 = vector.broadcast %cst : f32 to vector<2x128x32xf32>
    %48 = arith.maximumf %46, %47 : vector<2x128x32xf32>
    %49 = vector.shape_cast %4 : vector<1x32xf32> to vector<1x1x32xf32>
    %50 = vector.broadcast %49 : vector<1x1x32xf32> to vector<2x128x32xf32>
    %51 = arith.mulf %48, %50 : vector<2x128x32xf32>
    %52 = vector.shape_cast %5 : vector<1x32xf32> to vector<1x1x32xf32>
    %53 = vector.broadcast %52 : vector<1x1x32xf32> to vector<2x128x32xf32>
    %54 = arith.addf %51, %53 : vector<2x128x32xf32>
    %55 = vector.extract_strided_slice %54 {offsets = [0, 0, 0], sizes = [2, 126, 32], strides = [1, 1, 1]} : vector<2x128x32xf32> to vector<2x126x32xf32>
    %c0_26 = arith.constant 0 : index
    %c2_27 = arith.constant 2 : index
    %c0_28 = arith.constant 0 : index
    %56 = vector.load %arg10[%c0_26, %c2_27, %c0_28] : memref<2x128x160xf32, #tpu.memory_space<vmem>>, vector<2x126x32xf32>
    tpu.vector_store %arg10[%c0_26, %c2_27, %c0_28], %55 {strides = array<i32>} : memref<2x128x160xf32, #tpu.memory_space<vmem>>, vector<2x126x32xf32>,
    %cst_29 = arith.constant 0.000000e+00 : f32
    %57 = vector.broadcast %cst_29 : f32 to vector<2x2x32xf32>
    %c0_30 = arith.constant 0 : index
    %c0_31 = arith.constant 0 : index
    %c0_32 = arith.constant 0 : index
    %58 = vector.load %arg10[%c0_30, %c0_31, %c0_32] : memref<2x128x160xf32, #tpu.memory_space<vmem>>, vector<2x2x32xf32>
    tpu.vector_store %arg10[%c0_30, %c0_31, %c0_32], %57 {strides = array<i32>} : memref<2x128x160xf32, #tpu.memory_space<vmem>>, vector<2x2x32xf32>,
    %59 = vector.extract_strided_slice %54 {offsets = [0, 0, 0], sizes = [2, 127, 32], strides = [1, 1, 1]} : vector<2x128x32xf32> to vector<2x127x32xf32>
    %c0_33 = arith.constant 0 : index
    %c1_34 = arith.constant 1 : index
    %c32 = arith.constant 32 : index
    %60 = vector.load %arg10[%c0_33, %c1_34, %c32] : memref<2x128x160xf32, #tpu.memory_space<vmem>>, vector<2x127x32xf32>
    tpu.vector_store %arg10[%c0_33, %c1_34, %c32], %59 {strides = array<i32>} : memref<2x128x160xf32, #tpu.memory_space<vmem>>, vector<2x127x32xf32>,
    %cst_35 = arith.constant 0.000000e+00 : f32
    %61 = vector.broadcast %cst_35 : f32 to vector<2x1x32xf32>
    %c0_36 = arith.constant 0 : index
    %c0_37 = arith.constant 0 : index
    %c32_38 = arith.constant 32 : index
    %62 = vector.load %arg10[%c0_36, %c0_37, %c32_38] : memref<2x128x160xf32, #tpu.memory_space<vmem>>, vector<2x1x32xf32>
    tpu.vector_store %arg10[%c0_36, %c0_37, %c32_38], %61 {strides = array<i32>} : memref<2x128x160xf32, #tpu.memory_space<vmem>>, vector<2x1x32xf32>,
    %c0_39 = arith.constant 0 : index
    %c0_40 = arith.constant 0 : index
    %c64 = arith.constant 64 : index
    %63 = vector.load %arg10[%c0_39, %c0_40, %c64] : memref<2x128x160xf32, #tpu.memory_space<vmem>>, vector<2x128x32xf32>
    tpu.vector_store %arg10[%c0_39, %c0_40, %c64], %54 {strides = array<i32>} : memref<2x128x160xf32, #tpu.memory_space<vmem>>, vector<2x128x32xf32>,
    %64 = vector.extract_strided_slice %54 {offsets = [0, 1, 0], sizes = [2, 127, 32], strides = [1, 1, 1]} : vector<2x128x32xf32> to vector<2x127x32xf32>
    %c0_41 = arith.constant 0 : index
    %c0_42 = arith.constant 0 : index
    %c96 = arith.constant 96 : index
    %65 = vector.load %arg10[%c0_41, %c0_42, %c96] : memref<2x128x160xf32, #tpu.memory_space<vmem>>, vector<2x127x32xf32>
    tpu.vector_store %arg10[%c0_41, %c0_42, %c96], %64 {strides = array<i32>} : memref<2x128x160xf32, #tpu.memory_space<vmem>>, vector<2x127x32xf32>,
    %cst_43 = arith.constant 0.000000e+00 : f32
    %66 = vector.broadcast %cst_43 : f32 to vector<2x1x32xf32>
    %c0_44 = arith.constant 0 : index
    %c127 = arith.constant 127 : index
    %c96_45 = arith.constant 96 : index
    %67 = vector.load %arg10[%c0_44, %c127, %c96_45] : memref<2x128x160xf32, #tpu.memory_space<vmem>>, vector<2x1x32xf32>
    tpu.vector_store %arg10[%c0_44, %c127, %c96_45], %66 {strides = array<i32>} : memref<2x128x160xf32, #tpu.memory_space<vmem>>, vector<2x1x32xf32>,
    %68 = vector.extract_strided_slice %54 {offsets = [0, 2, 0], sizes = [2, 126, 32], strides = [1, 1, 1]} : vector<2x128x32xf32> to vector<2x126x32xf32>
    %c0_46 = arith.constant 0 : index
    %c0_47 = arith.constant 0 : index
    %c128 = arith.constant 128 : index
    %69 = vector.load %arg10[%c0_46, %c0_47, %c128] : memref<2x128x160xf32, #tpu.memory_space<vmem>>, vector<2x126x32xf32>
    tpu.vector_store %arg10[%c0_46, %c0_47, %c128], %68 {strides = array<i32>} : memref<2x128x160xf32, #tpu.memory_space<vmem>>, vector<2x126x32xf32>,
    %cst_48 = arith.constant 0.000000e+00 : f32
    %70 = vector.broadcast %cst_48 : f32 to vector<2x2x32xf32>
    %c0_49 = arith.constant 0 : index
    %c126 = arith.constant 126 : index
    %c128_50 = arith.constant 128 : index
    %71 = vector.load %arg10[%c0_49, %c126, %c128_50] : memref<2x128x160xf32, #tpu.memory_space<vmem>>, vector<2x2x32xf32>
    tpu.vector_store %arg10[%c0_49, %c126, %c128_50], %70 {strides = array<i32>} : memref<2x128x160xf32, #tpu.memory_space<vmem>>, vector<2x2x32xf32>,
    %c0_51 = arith.constant 0 : index
    %c0_52 = arith.constant 0 : index
    %c0_53 = arith.constant 0 : index
    %72 = vector.load %arg10[%c0_51, %c0_52, %c0_53] : memref<2x128x160xf32, #tpu.memory_space<vmem>>, vector<2x128x160xf32>
    %73 = vector.shape_cast %72 : vector<2x128x160xf32> to vector<256x160xf32>
    %cst_54 = arith.constant dense<0.000000e+00> : vector<256x64xf32>
    %74 = tpu.matmul %73, %6, %cst_54 {dimension_numbers = #tpu.dot_dimension_numbers<[1], [0], [0], [1], [0, 0, 1, 1], [], []>} : vector<256x160xf32>, vector<160x64xf32>, vector<256x64xf32> -> vector<256x64xf32>
    %75 = vector.broadcast %7 : vector<1x64xf32> to vector<256x64xf32>
    %76 = arith.addf %74, %75 : vector<256x64xf32>
    %cst_55 = arith.constant 0.000000e+00 : f32
    %77 = vector.broadcast %cst_55 : f32 to vector<256x64xf32>
    %78 = arith.maximumf %76, %77 : vector<256x64xf32>
    %79 = tpu.iota {dimensions = array<i32: 0>} : vector<256x1xi32>
    %c1_i32 = arith.constant 1 : i32
    %80 = vector.broadcast %c1_i32 : i32 to vector<256x1xi32>
    %81 = arith.andi %79, %80 : vector<256x1xi32>
    %c0_i32_56 = arith.constant 0 : i32
    %82 = vector.broadcast %c0_i32_56 : i32 to vector<256x1xi32>
    %83 = arith.cmpi eq, %81, %82 : vector<256x1xi32>
    %cst_57 = arith.constant 0.000000e+00 : f32
    %84 = vector.shape_cast %83 : vector<256x1xi1> to vector<256x1xi1>
    %85 = vector.broadcast %84 : vector<256x1xi1> to vector<256x64xi1>
    %86 = vector.broadcast %cst_57 : f32 to vector<256x64xf32>
    %87 = arith.select %85, %78, %86 : vector<256x64xi1>, vector<256x64xf32>
    %88 = vector.shape_cast %87 : vector<256x64xf32> to vector<2x128x64xf32>
    %cst_58 = arith.constant dense<0.000000e+00> : vector<2x64xf32>
    %89 = vector.multi_reduction <add>, %88, %cst_58 [1] : vector<2x128x64xf32> to vector<2x64xf32>
    %cst_59 = arith.constant 1.562500e-02 : f32
    %90 = vector.broadcast %cst_59 : f32 to vector<2x64xf32>
    %91 = arith.mulf %89, %90 : vector<2x64xf32>
    %cst_60 = arith.constant dense<0.000000e+00> : vector<2x128xf32>
    %92 = tpu.matmul %91, %8, %cst_60 {dimension_numbers = #tpu.dot_dimension_numbers<[1], [0], [0], [1], [0, 0, 1, 1], [], []>} : vector<2x64xf32>, vector<64x128xf32>, vector<2x128xf32> -> vector<2x128xf32>
    %93 = vector.broadcast %9 : vector<1x128xf32> to vector<2x128xf32>
    %94 = arith.addf %92, %93 : vector<2x128xf32>
    %c8 = arith.constant 8 : index
    %c0_61 = arith.constant 0 : index
    %95 = vector.load %arg4[%c8, %c0_61] : memref<88x128xf32, #tpu.memory_space<vmem>>, vector<3x32xf32>
    %c5 = arith.constant 5 : index
    %c0_62 = arith.constant 0 : index
    %96 = vector.load %arg3[%c5, %c0_62] : memref<16x256xf32, #tpu.memory_space<vmem>>, vector<1x32xf32>
    %c6 = arith.constant 6 : index
    %c0_63 = arith.constant 0 : index
    %97 = vector.load %arg3[%c6, %c0_63] : memref<16x256xf32, #tpu.memory_space<vmem>>, vector<1x32xf32>
    %c7 = arith.constant 7 : index
    %c0_64 = arith.constant 0 : index
    %98 = vector.load %arg3[%c7, %c0_64] : memref<16x256xf32, #tpu.memory_space<vmem>>, vector<1x32xf32>
    %c160 = arith.constant 160 : index
    %c0_65 = arith.constant 0 : index
    %99 = vector.load %arg5[%c160, %c0_65] : memref<256x64xf32, #tpu.memory_space<vmem>>, vector<96x64xf32>
    %c8_66 = arith.constant 8 : index
    %c0_67 = arith.constant 0 : index
    %100 = vector.load %arg3[%c8_66, %c0_67] : memref<16x256xf32, #tpu.memory_space<vmem>>, vector<1x64xf32>
    %c64_68 = arith.constant 64 : index
    %c0_69 = arith.constant 0 : index
    %101 = vector.load %arg6[%c64_68, %c0_69] : memref<128x128xf32, #tpu.memory_space<vmem>>, vector<64x64xf32>
    %c9 = arith.constant 9 : index
    %c0_70 = arith.constant 0 : index
    %102 = vector.load %arg3[%c9, %c0_70] : memref<16x256xf32, #tpu.memory_space<vmem>>, vector<1x64xf32>
    %c0_71 = arith.constant 0 : index
    %c0_72 = arith.constant 0 : index
    %c0_73 = arith.constant 0 : index
    %103 = vector.load %arg1[%c0_71, %c0_72, %c0_73] : memref<2x66x1xf32, #tpu.memory_space<vmem>>, vector<2x64x1xf32>
    %104 = vector.extract_strided_slice %95 {offsets = [0, 0], sizes = [1, 32], strides = [1, 1]} : vector<3x32xf32> to vector<1x32xf32>
    %105 = vector.shape_cast %104 : vector<1x32xf32> to vector<1x1x32xf32>
    %106 = vector.broadcast %103 : vector<2x64x1xf32> to vector<2x64x32xf32>
    %107 = vector.broadcast %105 : vector<1x1x32xf32> to vector<2x64x32xf32>
    %108 = arith.mulf %106, %107 : vector<2x64x32xf32>
    %c0_74 = arith.constant 0 : index
    %c1_75 = arith.constant 1 : index
    %c0_76 = arith.constant 0 : index
    %109 = vector.load %arg1[%c0_74, %c1_75, %c0_76] : memref<2x66x1xf32, #tpu.memory_space<vmem>>, vector<2x64x1xf32>
    %110 = vector.extract_strided_slice %95 {offsets = [1, 0], sizes = [1, 32], strides = [1, 1]} : vector<3x32xf32> to vector<1x32xf32>
    %111 = vector.shape_cast %110 : vector<1x32xf32> to vector<1x1x32xf32>
    %112 = vector.broadcast %109 : vector<2x64x1xf32> to vector<2x64x32xf32>
    %113 = vector.broadcast %111 : vector<1x1x32xf32> to vector<2x64x32xf32>
    %114 = arith.mulf %112, %113 : vector<2x64x32xf32>
    %115 = arith.addf %108, %114 : vector<2x64x32xf32>
    %c0_77 = arith.constant 0 : index
    %c2_78 = arith.constant 2 : index
    %c0_79 = arith.constant 0 : index
    %116 = vector.load %arg1[%c0_77, %c2_78, %c0_79] : memref<2x66x1xf32, #tpu.memory_space<vmem>>, vector<2x64x1xf32>
    %117 = vector.extract_strided_slice %95 {offsets = [2, 0], sizes = [1, 32], strides = [1, 1]} : vector<3x32xf32> to vector<1x32xf32>
    %118 = vector.shape_cast %117 : vector<1x32xf32> to vector<1x1x32xf32>
    %119 = vector.broadcast %116 : vector<2x64x1xf32> to vector<2x64x32xf32>
    %120 = vector.broadcast %118 : vector<1x1x32xf32> to vector<2x64x32xf32>
    %121 = arith.mulf %119, %120 : vector<2x64x32xf32>
    %122 = arith.addf %115, %121 : vector<2x64x32xf32>
    %123 = vector.shape_cast %96 : vector<1x32xf32> to vector<1x1x32xf32>
    %124 = vector.broadcast %123 : vector<1x1x32xf32> to vector<2x64x32xf32>
    %125 = arith.addf %122, %124 : vector<2x64x32xf32>
    %cst_80 = arith.constant 0.000000e+00 : f32
    %126 = vector.broadcast %cst_80 : f32 to vector<2x64x32xf32>
    %127 = arith.maximumf %125, %126 : vector<2x64x32xf32>
    %128 = vector.shape_cast %97 : vector<1x32xf32> to vector<1x1x32xf32>
    %129 = vector.broadcast %128 : vector<1x1x32xf32> to vector<2x64x32xf32>
    %130 = arith.mulf %127, %129 : vector<2x64x32xf32>
    %131 = vector.shape_cast %98 : vector<1x32xf32> to vector<1x1x32xf32>
    %132 = vector.broadcast %131 : vector<1x1x32xf32> to vector<2x64x32xf32>
    %133 = arith.addf %130, %132 : vector<2x64x32xf32>
    %134 = vector.extract_strided_slice %133 {offsets = [0, 0, 0], sizes = [2, 63, 32], strides = [1, 1, 1]} : vector<2x64x32xf32> to vector<2x63x32xf32>
    %c0_81 = arith.constant 0 : index
    %c1_82 = arith.constant 1 : index
    %c0_83 = arith.constant 0 : index
    %135 = vector.load %arg11[%c0_81, %c1_82, %c0_83] : memref<2x64x96xf32, #tpu.memory_space<vmem>>, vector<2x63x32xf32>
    tpu.vector_store %arg11[%c0_81, %c1_82, %c0_83], %134 {strides = array<i32>} : memref<2x64x96xf32, #tpu.memory_space<vmem>>, vector<2x63x32xf32>,
    %cst_84 = arith.constant 0.000000e+00 : f32
    %136 = vector.broadcast %cst_84 : f32 to vector<2x1x32xf32>
    %c0_85 = arith.constant 0 : index
    %c0_86 = arith.constant 0 : index
    %c0_87 = arith.constant 0 : index
    %137 = vector.load %arg11[%c0_85, %c0_86, %c0_87] : memref<2x64x96xf32, #tpu.memory_space<vmem>>, vector<2x1x32xf32>
    tpu.vector_store %arg11[%c0_85, %c0_86, %c0_87], %136 {strides = array<i32>} : memref<2x64x96xf32, #tpu.memory_space<vmem>>, vector<2x1x32xf32>,
    %c0_88 = arith.constant 0 : index
    %c0_89 = arith.constant 0 : index
    %c32_90 = arith.constant 32 : index
    %138 = vector.load %arg11[%c0_88, %c0_89, %c32_90] : memref<2x64x96xf32, #tpu.memory_space<vmem>>, vector<2x64x32xf32>
    tpu.vector_store %arg11[%c0_88, %c0_89, %c32_90], %133 {strides = array<i32>} : memref<2x64x96xf32, #tpu.memory_space<vmem>>, vector<2x64x32xf32>,
    %139 = vector.extract_strided_slice %133 {offsets = [0, 1, 0], sizes = [2, 63, 32], strides = [1, 1, 1]} : vector<2x64x32xf32> to vector<2x63x32xf32>
    %c0_91 = arith.constant 0 : index
    %c0_92 = arith.constant 0 : index
    %c64_93 = arith.constant 64 : index
    %140 = vector.load %arg11[%c0_91, %c0_92, %c64_93] : memref<2x64x96xf32, #tpu.memory_space<vmem>>, vector<2x63x32xf32>
    tpu.vector_store %arg11[%c0_91, %c0_92, %c64_93], %139 {strides = array<i32>} : memref<2x64x96xf32, #tpu.memory_space<vmem>>, vector<2x63x32xf32>,
    %cst_94 = arith.constant 0.000000e+00 : f32
    %141 = vector.broadcast %cst_94 : f32 to vector<2x1x32xf32>
    %c0_95 = arith.constant 0 : index
    %c63 = arith.constant 63 : index
    %c64_96 = arith.constant 64 : index
    %142 = vector.load %arg11[%c0_95, %c63, %c64_96] : memref<2x64x96xf32, #tpu.memory_space<vmem>>, vector<2x1x32xf32>
    tpu.vector_store %arg11[%c0_95, %c63, %c64_96], %141 {strides = array<i32>} : memref<2x64x96xf32, #tpu.memory_space<vmem>>, vector<2x1x32xf32>,
    %c0_97 = arith.constant 0 : index
    %c0_98 = arith.constant 0 : index
    %c0_99 = arith.constant 0 : index
    %143 = vector.load %arg11[%c0_97, %c0_98, %c0_99] : memref<2x64x96xf32, #tpu.memory_space<vmem>>, vector<2x64x96xf32>
    %144 = vector.shape_cast %143 : vector<2x64x96xf32> to vector<128x96xf32>
    %cst_100 = arith.constant dense<0.000000e+00> : vector<128x64xf32>
    %145 = tpu.matmul %144, %99, %cst_100 {dimension_numbers = #tpu.dot_dimension_numbers<[1], [0], [0], [1], [0, 0, 1, 1], [], []>} : vector<128x96xf32>, vector<96x64xf32>, vector<128x64xf32> -> vector<128x64xf32>
    %146 = vector.broadcast %100 : vector<1x64xf32> to vector<128x64xf32>
    %147 = arith.addf %145, %146 : vector<128x64xf32>
    %cst_101 = arith.constant 0.000000e+00 : f32
    %148 = vector.broadcast %cst_101 : f32 to vector<128x64xf32>
    %149 = arith.maximumf %147, %148 : vector<128x64xf32>
    %150 = tpu.iota {dimensions = array<i32: 0>} : vector<128x1xi32>
    %c1_i32_102 = arith.constant 1 : i32
    %151 = vector.broadcast %c1_i32_102 : i32 to vector<128x1xi32>
    %152 = arith.andi %150, %151 : vector<128x1xi32>
    %c0_i32_103 = arith.constant 0 : i32
    %153 = vector.broadcast %c0_i32_103 : i32 to vector<128x1xi32>
    %154 = arith.cmpi eq, %152, %153 : vector<128x1xi32>
    %cst_104 = arith.constant 0.000000e+00 : f32
    %155 = vector.shape_cast %154 : vector<128x1xi1> to vector<128x1xi1>
    %156 = vector.broadcast %155 : vector<128x1xi1> to vector<128x64xi1>
    %157 = vector.broadcast %cst_104 : f32 to vector<128x64xf32>
    %158 = arith.select %156, %149, %157 : vector<128x64xi1>, vector<128x64xf32>
    %159 = vector.shape_cast %158 : vector<128x64xf32> to vector<2x64x64xf32>
    %cst_105 = arith.constant dense<0.000000e+00> : vector<2x64xf32>
    %160 = vector.multi_reduction <add>, %159, %cst_105 [1] : vector<2x64x64xf32> to vector<2x64xf32>
    %cst_106 = arith.constant 3.125000e-02 : f32
    %161 = vector.broadcast %cst_106 : f32 to vector<2x64xf32>
    %162 = arith.mulf %160, %161 : vector<2x64xf32>
    %cst_107 = arith.constant dense<0.000000e+00> : vector<2x64xf32>
    %163 = tpu.matmul %162, %101, %cst_107 {dimension_numbers = #tpu.dot_dimension_numbers<[1], [0], [0], [1], [0, 0, 1, 1], [], []>} : vector<2x64xf32>, vector<64x64xf32>, vector<2x64xf32> -> vector<2x64xf32>
    %164 = vector.broadcast %102 : vector<1x64xf32> to vector<2x64xf32>
    %165 = arith.addf %163, %164 : vector<2x64xf32>
    %c48 = arith.constant 48 : index
    %c0_108 = arith.constant 0 : index
    %166 = vector.load %arg4[%c48, %c0_108] : memref<88x128xf32, #tpu.memory_space<vmem>>, vector<8x128xf32>
    %c56 = arith.constant 56 : index
    %c0_109 = arith.constant 0 : index
    %167 = vector.load %arg4[%c56, %c0_109] : memref<88x128xf32, #tpu.memory_space<vmem>>, vector<32x128xf32>
    %c0_110 = arith.constant 0 : index
    %c0_111 = arith.constant 0 : index
    %168 = vector.load %arg2[%c0_110, %c0_111] : memref<16x8xf32, #tpu.memory_space<vmem>>, vector<16x8xf32>
    %cst_112 = arith.constant dense<0.000000e+00> : vector<16x128xf32>
    %169 = tpu.matmul %168, %166, %cst_112 {dimension_numbers = #tpu.dot_dimension_numbers<[1], [0], [0], [1], [0, 0, 1, 1], [], []>} : vector<16x8xf32>, vector<8x128xf32>, vector<16x128xf32> -> vector<16x128xf32>
    %c10 = arith.constant 10 : index
    %c0_113 = arith.constant 0 : index
    %170 = vector.load %arg3[%c10, %c0_113] : memref<16x256xf32, #tpu.memory_space<vmem>>, vector<1x128xf32>
    %171 = vector.broadcast %170 : vector<1x128xf32> to vector<16x128xf32>
    %172 = arith.addf %169, %171 : vector<16x128xf32>
    %cst_114 = arith.constant 0.000000e+00 : f32
    %173 = vector.broadcast %cst_114 : f32 to vector<2x32xf32>
    %cst_115 = arith.constant 0.000000e+00 : f32
    %174 = vector.broadcast %cst_115 : f32 to vector<2x32xf32>
    %175 = vector.extract_strided_slice %172 {offsets = [0, 0], sizes = [2, 128], strides = [1, 1]} : vector<16x128xf32> to vector<2x128xf32>
    %cst_116 = arith.constant dense<0.000000e+00> : vector<2x128xf32>
    %176 = tpu.matmul %173, %167, %cst_116 {dimension_numbers = #tpu.dot_dimension_numbers<[1], [0], [0], [1], [0, 0, 1, 1], [], []>} : vector<2x32xf32>, vector<32x128xf32>, vector<2x128xf32> -> vector<2x128xf32>
    %177 = arith.addf %175, %176 : vector<2x128xf32>
    %178 = vector.extract_strided_slice %177 {offsets = [0, 0], sizes = [2, 32], strides = [1, 1]} : vector<2x128xf32> to vector<2x32xf32>
    %179 = arith.negf %178 : vector<2x32xf32>
    %180 = math.exp %179 : vector<2x32xf32>
    %cst_117 = arith.constant 1.000000e+00 : f32
    %181 = vector.broadcast %cst_117 : f32 to vector<2x32xf32>
    %182 = arith.addf %181, %180 : vector<2x32xf32>
    %183 = arith.divf %181, %182 : vector<2x32xf32>
    %184 = vector.extract_strided_slice %177 {offsets = [0, 32], sizes = [2, 32], strides = [1, 1]} : vector<2x128xf32> to vector<2x32xf32>
    %185 = arith.negf %184 : vector<2x32xf32>
    %186 = math.exp %185 : vector<2x32xf32>
    %cst_118 = arith.constant 1.000000e+00 : f32
    %187 = vector.broadcast %cst_118 : f32 to vector<2x32xf32>
    %188 = arith.addf %187, %186 : vector<2x32xf32>
    %189 = arith.divf %187, %188 : vector<2x32xf32>
    %190 = vector.extract_strided_slice %177 {offsets = [0, 64], sizes = [2, 32], strides = [1, 1]} : vector<2x128xf32> to vector<2x32xf32>
    %191 = math.tanh %190 : vector<2x32xf32>
    %192 = vector.extract_strided_slice %177 {offsets = [0, 96], sizes = [2, 32], strides = [1, 1]} : vector<2x128xf32> to vector<2x32xf32>
    %193 = arith.negf %192 : vector<2x32xf32>
    %194 = math.exp %193 : vector<2x32xf32>
    %cst_119 = arith.constant 1.000000e+00 : f32
    %195 = vector.broadcast %cst_119 : f32 to vector<2x32xf32>
    %196 = arith.addf %195, %194 : vector<2x32xf32>
    %197 = arith.divf %195, %196 : vector<2x32xf32>
    %198 = arith.mulf %189, %174 : vector<2x32xf32>
    %199 = arith.mulf %183, %191 : vector<2x32xf32>
    %200 = arith.addf %198, %199 : vector<2x32xf32>
    %201 = math.tanh %200 : vector<2x32xf32>
    %202 = arith.mulf %197, %201 : vector<2x32xf32>
    %203 = vector.extract_strided_slice %172 {offsets = [2, 0], sizes = [2, 128], strides = [1, 1]} : vector<16x128xf32> to vector<2x128xf32>
    %cst_120 = arith.constant dense<0.000000e+00> : vector<2x128xf32>
    %204 = tpu.matmul %202, %167, %cst_120 {dimension_numbers = #tpu.dot_dimension_numbers<[1], [0], [0], [1], [0, 0, 1, 1], [], []>} : vector<2x32xf32>, vector<32x128xf32>, vector<2x128xf32> -> vector<2x128xf32>
    %205 = arith.addf %203, %204 : vector<2x128xf32>
    %206 = vector.extract_strided_slice %205 {offsets = [0, 0], sizes = [2, 32], strides = [1, 1]} : vector<2x128xf32> to vector<2x32xf32>
    %207 = arith.negf %206 : vector<2x32xf32>
    %208 = math.exp %207 : vector<2x32xf32>
    %cst_121 = arith.constant 1.000000e+00 : f32
    %209 = vector.broadcast %cst_121 : f32 to vector<2x32xf32>
    %210 = arith.addf %209, %208 : vector<2x32xf32>
    %211 = arith.divf %209, %210 : vector<2x32xf32>
    %212 = vector.extract_strided_slice %205 {offsets = [0, 32], sizes = [2, 32], strides = [1, 1]} : vector<2x128xf32> to vector<2x32xf32>
    %213 = arith.negf %212 : vector<2x32xf32>
    %214 = math.exp %213 : vector<2x32xf32>
    %cst_122 = arith.constant 1.000000e+00 : f32
    %215 = vector.broadcast %cst_122 : f32 to vector<2x32xf32>
    %216 = arith.addf %215, %214 : vector<2x32xf32>
    %217 = arith.divf %215, %216 : vector<2x32xf32>
    %218 = vector.extract_strided_slice %205 {offsets = [0, 64], sizes = [2, 32], strides = [1, 1]} : vector<2x128xf32> to vector<2x32xf32>
    %219 = math.tanh %218 : vector<2x32xf32>
    %220 = vector.extract_strided_slice %205 {offsets = [0, 96], sizes = [2, 32], strides = [1, 1]} : vector<2x128xf32> to vector<2x32xf32>
    %221 = arith.negf %220 : vector<2x32xf32>
    %222 = math.exp %221 : vector<2x32xf32>
    %cst_123 = arith.constant 1.000000e+00 : f32
    %223 = vector.broadcast %cst_123 : f32 to vector<2x32xf32>
    %224 = arith.addf %223, %222 : vector<2x32xf32>
    %225 = arith.divf %223, %224 : vector<2x32xf32>
    %226 = arith.mulf %217, %200 : vector<2x32xf32>
    %227 = arith.mulf %211, %219 : vector<2x32xf32>
    %228 = arith.addf %226, %227 : vector<2x32xf32>
    %229 = math.tanh %228 : vector<2x32xf32>
    %230 = arith.mulf %225, %229 : vector<2x32xf32>
    %231 = vector.extract_strided_slice %172 {offsets = [4, 0], sizes = [2, 128], strides = [1, 1]} : vector<16x128xf32> to vector<2x128xf32>
    %cst_124 = arith.constant dense<0.000000e+00> : vector<2x128xf32>
    %232 = tpu.matmul %230, %167, %cst_124 {dimension_numbers = #tpu.dot_dimension_numbers<[1], [0], [0], [1], [0, 0, 1, 1], [], []>} : vector<2x32xf32>, vector<32x128xf32>, vector<2x128xf32> -> vector<2x128xf32>
    %233 = arith.addf %231, %232 : vector<2x128xf32>
    %234 = vector.extract_strided_slice %233 {offsets = [0, 0], sizes = [2, 32], strides = [1, 1]} : vector<2x128xf32> to vector<2x32xf32>
    %235 = arith.negf %234 : vector<2x32xf32>
    %236 = math.exp %235 : vector<2x32xf32>
    %cst_125 = arith.constant 1.000000e+00 : f32
    %237 = vector.broadcast %cst_125 : f32 to vector<2x32xf32>
    %238 = arith.addf %237, %236 : vector<2x32xf32>
    %239 = arith.divf %237, %238 : vector<2x32xf32>
    %240 = vector.extract_strided_slice %233 {offsets = [0, 32], sizes = [2, 32], strides = [1, 1]} : vector<2x128xf32> to vector<2x32xf32>
    %241 = arith.negf %240 : vector<2x32xf32>
    %242 = math.exp %241 : vector<2x32xf32>
    %cst_126 = arith.constant 1.000000e+00 : f32
    %243 = vector.broadcast %cst_126 : f32 to vector<2x32xf32>
    %244 = arith.addf %243, %242 : vector<2x32xf32>
    %245 = arith.divf %243, %244 : vector<2x32xf32>
    %246 = vector.extract_strided_slice %233 {offsets = [0, 64], sizes = [2, 32], strides = [1, 1]} : vector<2x128xf32> to vector<2x32xf32>
    %247 = math.tanh %246 : vector<2x32xf32>
    %248 = vector.extract_strided_slice %233 {offsets = [0, 96], sizes = [2, 32], strides = [1, 1]} : vector<2x128xf32> to vector<2x32xf32>
    %249 = arith.negf %248 : vector<2x32xf32>
    %250 = math.exp %249 : vector<2x32xf32>
    %cst_127 = arith.constant 1.000000e+00 : f32
    %251 = vector.broadcast %cst_127 : f32 to vector<2x32xf32>
    %252 = arith.addf %251, %250 : vector<2x32xf32>
    %253 = arith.divf %251, %252 : vector<2x32xf32>
    %254 = arith.mulf %245, %228 : vector<2x32xf32>
    %255 = arith.mulf %239, %247 : vector<2x32xf32>
    %256 = arith.addf %254, %255 : vector<2x32xf32>
    %257 = math.tanh %256 : vector<2x32xf32>
    %258 = arith.mulf %253, %257 : vector<2x32xf32>
    %259 = vector.extract_strided_slice %172 {offsets = [6, 0], sizes = [2, 128], strides = [1, 1]} : vector<16x128xf32> to vector<2x128xf32>
    %cst_128 = arith.constant dense<0.000000e+00> : vector<2x128xf32>
    %260 = tpu.matmul %258, %167, %cst_128 {dimension_numbers = #tpu.dot_dimension_numbers<[1], [0], [0], [1], [0, 0, 1, 1], [], []>} : vector<2x32xf32>, vector<32x128xf32>, vector<2x128xf32> -> vector<2x128xf32>
    %261 = arith.addf %259, %260 : vector<2x128xf32>
    %262 = vector.extract_strided_slice %261 {offsets = [0, 0], sizes = [2, 32], strides = [1, 1]} : vector<2x128xf32> to vector<2x32xf32>
    %263 = arith.negf %262 : vector<2x32xf32>
    %264 = math.exp %263 : vector<2x32xf32>
    %cst_129 = arith.constant 1.000000e+00 : f32
    %265 = vector.broadcast %cst_129 : f32 to vector<2x32xf32>
    %266 = arith.addf %265, %264 : vector<2x32xf32>
    %267 = arith.divf %265, %266 : vector<2x32xf32>
    %268 = vector.extract_strided_slice %261 {offsets = [0, 32], sizes = [2, 32], strides = [1, 1]} : vector<2x128xf32> to vector<2x32xf32>
    %269 = arith.negf %268 : vector<2x32xf32>
    %270 = math.exp %269 : vector<2x32xf32>
    %cst_130 = arith.constant 1.000000e+00 : f32
    %271 = vector.broadcast %cst_130 : f32 to vector<2x32xf32>
    %272 = arith.addf %271, %270 : vector<2x32xf32>
    %273 = arith.divf %271, %272 : vector<2x32xf32>
    %274 = vector.extract_strided_slice %261 {offsets = [0, 64], sizes = [2, 32], strides = [1, 1]} : vector<2x128xf32> to vector<2x32xf32>
    %275 = math.tanh %274 : vector<2x32xf32>
    %276 = vector.extract_strided_slice %261 {offsets = [0, 96], sizes = [2, 32], strides = [1, 1]} : vector<2x128xf32> to vector<2x32xf32>
    %277 = arith.negf %276 : vector<2x32xf32>
    %278 = math.exp %277 : vector<2x32xf32>
    %cst_131 = arith.constant 1.000000e+00 : f32
    %279 = vector.broadcast %cst_131 : f32 to vector<2x32xf32>
    %280 = arith.addf %279, %278 : vector<2x32xf32>
    %281 = arith.divf %279, %280 : vector<2x32xf32>
    %282 = arith.mulf %273, %256 : vector<2x32xf32>
    %283 = arith.mulf %267, %275 : vector<2x32xf32>
    %284 = arith.addf %282, %283 : vector<2x32xf32>
    %285 = math.tanh %284 : vector<2x32xf32>
    %286 = arith.mulf %281, %285 : vector<2x32xf32>
    %287 = vector.extract_strided_slice %172 {offsets = [8, 0], sizes = [2, 128], strides = [1, 1]} : vector<16x128xf32> to vector<2x128xf32>
    %cst_132 = arith.constant dense<0.000000e+00> : vector<2x128xf32>
    %288 = tpu.matmul %286, %167, %cst_132 {dimension_numbers = #tpu.dot_dimension_numbers<[1], [0], [0], [1], [0, 0, 1, 1], [], []>} : vector<2x32xf32>, vector<32x128xf32>, vector<2x128xf32> -> vector<2x128xf32>
    %289 = arith.addf %287, %288 : vector<2x128xf32>
    %290 = vector.extract_strided_slice %289 {offsets = [0, 0], sizes = [2, 32], strides = [1, 1]} : vector<2x128xf32> to vector<2x32xf32>
    %291 = arith.negf %290 : vector<2x32xf32>
    %292 = math.exp %291 : vector<2x32xf32>
    %cst_133 = arith.constant 1.000000e+00 : f32
    %293 = vector.broadcast %cst_133 : f32 to vector<2x32xf32>
    %294 = arith.addf %293, %292 : vector<2x32xf32>
    %295 = arith.divf %293, %294 : vector<2x32xf32>
    %296 = vector.extract_strided_slice %289 {offsets = [0, 32], sizes = [2, 32], strides = [1, 1]} : vector<2x128xf32> to vector<2x32xf32>
    %297 = arith.negf %296 : vector<2x32xf32>
    %298 = math.exp %297 : vector<2x32xf32>
    %cst_134 = arith.constant 1.000000e+00 : f32
    %299 = vector.broadcast %cst_134 : f32 to vector<2x32xf32>
    %300 = arith.addf %299, %298 : vector<2x32xf32>
    %301 = arith.divf %299, %300 : vector<2x32xf32>
    %302 = vector.extract_strided_slice %289 {offsets = [0, 64], sizes = [2, 32], strides = [1, 1]} : vector<2x128xf32> to vector<2x32xf32>
    %303 = math.tanh %302 : vector<2x32xf32>
    %304 = vector.extract_strided_slice %289 {offsets = [0, 96], sizes = [2, 32], strides = [1, 1]} : vector<2x128xf32> to vector<2x32xf32>
    %305 = arith.negf %304 : vector<2x32xf32>
    %306 = math.exp %305 : vector<2x32xf32>
    %cst_135 = arith.constant 1.000000e+00 : f32
    %307 = vector.broadcast %cst_135 : f32 to vector<2x32xf32>
    %308 = arith.addf %307, %306 : vector<2x32xf32>
    %309 = arith.divf %307, %308 : vector<2x32xf32>
    %310 = arith.mulf %301, %284 : vector<2x32xf32>
    %311 = arith.mulf %295, %303 : vector<2x32xf32>
    %312 = arith.addf %310, %311 : vector<2x32xf32>
    %313 = math.tanh %312 : vector<2x32xf32>
    %314 = arith.mulf %309, %313 : vector<2x32xf32>
    %315 = vector.extract_strided_slice %172 {offsets = [10, 0], sizes = [2, 128], strides = [1, 1]} : vector<16x128xf32> to vector<2x128xf32>
    %cst_136 = arith.constant dense<0.000000e+00> : vector<2x128xf32>
    %316 = tpu.matmul %314, %167, %cst_136 {dimension_numbers = #tpu.dot_dimension_numbers<[1], [0], [0], [1], [0, 0, 1, 1], [], []>} : vector<2x32xf32>, vector<32x128xf32>, vector<2x128xf32> -> vector<2x128xf32>
    %317 = arith.addf %315, %316 : vector<2x128xf32>
    %318 = vector.extract_strided_slice %317 {offsets = [0, 0], sizes = [2, 32], strides = [1, 1]} : vector<2x128xf32> to vector<2x32xf32>
    %319 = arith.negf %318 : vector<2x32xf32>
    %320 = math.exp %319 : vector<2x32xf32>
    %cst_137 = arith.constant 1.000000e+00 : f32
    %321 = vector.broadcast %cst_137 : f32 to vector<2x32xf32>
    %322 = arith.addf %321, %320 : vector<2x32xf32>
    %323 = arith.divf %321, %322 : vector<2x32xf32>
    %324 = vector.extract_strided_slice %317 {offsets = [0, 32], sizes = [2, 32], strides = [1, 1]} : vector<2x128xf32> to vector<2x32xf32>
    %325 = arith.negf %324 : vector<2x32xf32>
    %326 = math.exp %325 : vector<2x32xf32>
    %cst_138 = arith.constant 1.000000e+00 : f32
    %327 = vector.broadcast %cst_138 : f32 to vector<2x32xf32>
    %328 = arith.addf %327, %326 : vector<2x32xf32>
    %329 = arith.divf %327, %328 : vector<2x32xf32>
    %330 = vector.extract_strided_slice %317 {offsets = [0, 64], sizes = [2, 32], strides = [1, 1]} : vector<2x128xf32> to vector<2x32xf32>
    %331 = math.tanh %330 : vector<2x32xf32>
    %332 = vector.extract_strided_slice %317 {offsets = [0, 96], sizes = [2, 32], strides = [1, 1]} : vector<2x128xf32> to vector<2x32xf32>
    %333 = arith.negf %332 : vector<2x32xf32>
    %334 = math.exp %333 : vector<2x32xf32>
    %cst_139 = arith.constant 1.000000e+00 : f32
    %335 = vector.broadcast %cst_139 : f32 to vector<2x32xf32>
    %336 = arith.addf %335, %334 : vector<2x32xf32>
    %337 = arith.divf %335, %336 : vector<2x32xf32>
    %338 = arith.mulf %329, %312 : vector<2x32xf32>
    %339 = arith.mulf %323, %331 : vector<2x32xf32>
    %340 = arith.addf %338, %339 : vector<2x32xf32>
    %341 = math.tanh %340 : vector<2x32xf32>
    %342 = arith.mulf %337, %341 : vector<2x32xf32>
    %343 = vector.extract_strided_slice %172 {offsets = [12, 0], sizes = [2, 128], strides = [1, 1]} : vector<16x128xf32> to vector<2x128xf32>
    %cst_140 = arith.constant dense<0.000000e+00> : vector<2x128xf32>
    %344 = tpu.matmul %342, %167, %cst_140 {dimension_numbers = #tpu.dot_dimension_numbers<[1], [0], [0], [1], [0, 0, 1, 1], [], []>} : vector<2x32xf32>, vector<32x128xf32>, vector<2x128xf32> -> vector<2x128xf32>
    %345 = arith.addf %343, %344 : vector<2x128xf32>
    %346 = vector.extract_strided_slice %345 {offsets = [0, 0], sizes = [2, 32], strides = [1, 1]} : vector<2x128xf32> to vector<2x32xf32>
    %347 = arith.negf %346 : vector<2x32xf32>
    %348 = math.exp %347 : vector<2x32xf32>
    %cst_141 = arith.constant 1.000000e+00 : f32
    %349 = vector.broadcast %cst_141 : f32 to vector<2x32xf32>
    %350 = arith.addf %349, %348 : vector<2x32xf32>
    %351 = arith.divf %349, %350 : vector<2x32xf32>
    %352 = vector.extract_strided_slice %345 {offsets = [0, 32], sizes = [2, 32], strides = [1, 1]} : vector<2x128xf32> to vector<2x32xf32>
    %353 = arith.negf %352 : vector<2x32xf32>
    %354 = math.exp %353 : vector<2x32xf32>
    %cst_142 = arith.constant 1.000000e+00 : f32
    %355 = vector.broadcast %cst_142 : f32 to vector<2x32xf32>
    %356 = arith.addf %355, %354 : vector<2x32xf32>
    %357 = arith.divf %355, %356 : vector<2x32xf32>
    %358 = vector.extract_strided_slice %345 {offsets = [0, 64], sizes = [2, 32], strides = [1, 1]} : vector<2x128xf32> to vector<2x32xf32>
    %359 = math.tanh %358 : vector<2x32xf32>
    %360 = vector.extract_strided_slice %345 {offsets = [0, 96], sizes = [2, 32], strides = [1, 1]} : vector<2x128xf32> to vector<2x32xf32>
    %361 = arith.negf %360 : vector<2x32xf32>
    %362 = math.exp %361 : vector<2x32xf32>
    %cst_143 = arith.constant 1.000000e+00 : f32
    %363 = vector.broadcast %cst_143 : f32 to vector<2x32xf32>
    %364 = arith.addf %363, %362 : vector<2x32xf32>
    %365 = arith.divf %363, %364 : vector<2x32xf32>
    %366 = arith.mulf %357, %340 : vector<2x32xf32>
    %367 = arith.mulf %351, %359 : vector<2x32xf32>
    %368 = arith.addf %366, %367 : vector<2x32xf32>
    %369 = math.tanh %368 : vector<2x32xf32>
    %370 = arith.mulf %365, %369 : vector<2x32xf32>
    %371 = vector.extract_strided_slice %172 {offsets = [14, 0], sizes = [2, 128], strides = [1, 1]} : vector<16x128xf32> to vector<2x128xf32>
    %cst_144 = arith.constant dense<0.000000e+00> : vector<2x128xf32>
    %372 = tpu.matmul %370, %167, %cst_144 {dimension_numbers = #tpu.dot_dimension_numbers<[1], [0], [0], [1], [0, 0, 1, 1], [], []>} : vector<2x32xf32>, vector<32x128xf32>, vector<2x128xf32> -> vector<2x128xf32>
    %373 = arith.addf %371, %372 : vector<2x128xf32>
    %374 = vector.extract_strided_slice %373 {offsets = [0, 0], sizes = [2, 32], strides = [1, 1]} : vector<2x128xf32> to vector<2x32xf32>
    %375 = arith.negf %374 : vector<2x32xf32>
    %376 = math.exp %375 : vector<2x32xf32>
    %cst_145 = arith.constant 1.000000e+00 : f32
    %377 = vector.broadcast %cst_145 : f32 to vector<2x32xf32>
    %378 = arith.addf %377, %376 : vector<2x32xf32>
    %379 = arith.divf %377, %378 : vector<2x32xf32>
    %380 = vector.extract_strided_slice %373 {offsets = [0, 32], sizes = [2, 32], strides = [1, 1]} : vector<2x128xf32> to vector<2x32xf32>
    %381 = arith.negf %380 : vector<2x32xf32>
    %382 = math.exp %381 : vector<2x32xf32>
    %cst_146 = arith.constant 1.000000e+00 : f32
    %383 = vector.broadcast %cst_146 : f32 to vector<2x32xf32>
    %384 = arith.addf %383, %382 : vector<2x32xf32>
    %385 = arith.divf %383, %384 : vector<2x32xf32>
    %386 = vector.extract_strided_slice %373 {offsets = [0, 64], sizes = [2, 32], strides = [1, 1]} : vector<2x128xf32> to vector<2x32xf32>
    %387 = math.tanh %386 : vector<2x32xf32>
    %388 = vector.extract_strided_slice %373 {offsets = [0, 96], sizes = [2, 32], strides = [1, 1]} : vector<2x128xf32> to vector<2x32xf32>
    %389 = arith.negf %388 : vector<2x32xf32>
    %390 = math.exp %389 : vector<2x32xf32>
    %cst_147 = arith.constant 1.000000e+00 : f32
    %391 = vector.broadcast %cst_147 : f32 to vector<2x32xf32>
    %392 = arith.addf %391, %390 : vector<2x32xf32>
    %393 = arith.divf %391, %392 : vector<2x32xf32>
    %394 = arith.mulf %385, %368 : vector<2x32xf32>
    %395 = arith.mulf %379, %387 : vector<2x32xf32>
    %396 = arith.addf %394, %395 : vector<2x32xf32>
    %397 = math.tanh %396 : vector<2x32xf32>
    %398 = arith.mulf %393, %397 : vector<2x32xf32>
    %c16 = arith.constant 16 : index
    %c0_148 = arith.constant 0 : index
    %399 = vector.load %arg4[%c16, %c0_148] : memref<88x128xf32, #tpu.memory_space<vmem>>, vector<32x64xf32>
    %cst_149 = arith.constant dense<0.000000e+00> : vector<2x64xf32>
    %400 = tpu.matmul %398, %399, %cst_149 {dimension_numbers = #tpu.dot_dimension_numbers<[1], [0], [0], [1], [0, 0, 1, 1], [], []>} : vector<2x32xf32>, vector<32x64xf32>, vector<2x64xf32> -> vector<2x64xf32>
    %c11 = arith.constant 11 : index
    %c0_150 = arith.constant 0 : index
    %401 = vector.load %arg3[%c11, %c0_150] : memref<16x256xf32, #tpu.memory_space<vmem>>, vector<1x64xf32>
    %402 = vector.broadcast %401 : vector<1x64xf32> to vector<2x64xf32>
    %403 = arith.addf %400, %402 : vector<2x64xf32>
    %c0_i32_151 = arith.constant 0 : i32
    %404 = tpu.memref_slice %arg12[%c0_i32_151] : memref<1x!tpu.dma_semaphore, #tpu.memory_space<semaphore_mem>> -> memref<1x!tpu.dma_semaphore, #tpu.memory_space<semaphore_mem>>
    %405 = tpu.memref_squeeze %404 : memref<1x!tpu.dma_semaphore, #tpu.memory_space<semaphore_mem>> -> memref<!tpu.dma_semaphore, #tpu.memory_space<semaphore_mem>>
    tpu.wait_dma2 semaphore(%405 : memref<!tpu.dma_semaphore, #tpu.memory_space<semaphore_mem>>) src(%arg7 : memref<512x256xf32, #tpu.memory_space<any>>) dst(%arg9 : memref<512x256xf32, #tpu.memory_space<vmem>>)
    %c0_152 = arith.constant 0 : index
    %c0_153 = arith.constant 0 : index
    %406 = vector.load %arg9[%c0_152, %c0_153] : memref<512x256xf32, #tpu.memory_space<vmem>>, vector<256x256xf32>
    %c256 = arith.constant 256 : index
    %c0_154 = arith.constant 0 : index
    %407 = vector.load %arg9[%c256, %c0_154] : memref<512x256xf32, #tpu.memory_space<vmem>>, vector<256x128xf32>
    %c256_155 = arith.constant 256 : index
    %c128_156 = arith.constant 128 : index
    %408 = vector.load %arg9[%c256_155, %c128_156] : memref<512x256xf32, #tpu.memory_space<vmem>>, vector<256x64xf32>
    %c256_157 = arith.constant 256 : index
    %c192 = arith.constant 192 : index
    %409 = vector.load %arg9[%c256_157, %c192] : memref<512x256xf32, #tpu.memory_space<vmem>>, vector<64x3xf32>
    %410 = vector.extract_strided_slice %408 {offsets = [0, 0], sizes = [128, 64], strides = [1, 1]} : vector<256x64xf32> to vector<128x64xf32>
    %cst_158 = arith.constant dense<0.000000e+00> : vector<2x64xf32>
    %411 = tpu.matmul %94, %410, %cst_158 {dimension_numbers = #tpu.dot_dimension_numbers<[1], [0], [0], [1], [0, 0, 1, 1], [], []>} : vector<2x128xf32>, vector<128x64xf32>, vector<2x64xf32> -> vector<2x64xf32>
    %412 = vector.extract_strided_slice %408 {offsets = [128, 0], sizes = [64, 64], strides = [1, 1]} : vector<256x64xf32> to vector<64x64xf32>
    %cst_159 = arith.constant dense<0.000000e+00> : vector<2x64xf32>
    %413 = tpu.matmul %165, %412, %cst_159 {dimension_numbers = #tpu.dot_dimension_numbers<[1], [0], [0], [1], [0, 0, 1, 1], [], []>} : vector<2x64xf32>, vector<64x64xf32>, vector<2x64xf32> -> vector<2x64xf32>
    %414 = arith.addf %411, %413 : vector<2x64xf32>
    %415 = vector.extract_strided_slice %408 {offsets = [192, 0], sizes = [64, 64], strides = [1, 1]} : vector<256x64xf32> to vector<64x64xf32>
    %cst_160 = arith.constant dense<0.000000e+00> : vector<2x64xf32>
    %416 = tpu.matmul %403, %415, %cst_160 {dimension_numbers = #tpu.dot_dimension_numbers<[1], [0], [0], [1], [0, 0, 1, 1], [], []>} : vector<2x64xf32>, vector<64x64xf32>, vector<2x64xf32> -> vector<2x64xf32>
    %417 = arith.addf %414, %416 : vector<2x64xf32>
    %c12 = arith.constant 12 : index
    %c0_161 = arith.constant 0 : index
    %418 = vector.load %arg3[%c12, %c0_161] : memref<16x256xf32, #tpu.memory_space<vmem>>, vector<1x64xf32>
    %419 = vector.broadcast %418 : vector<1x64xf32> to vector<2x64xf32>
    %420 = arith.addf %417, %419 : vector<2x64xf32>
    %cst_162 = arith.constant 0.000000e+00 : f32
    %421 = vector.broadcast %cst_162 : f32 to vector<2x64xf32>
    %422 = arith.maximumf %420, %421 : vector<2x64xf32>
    %cst_163 = arith.constant dense<0.000000e+00> : vector<2x3xf32>
    %423 = tpu.matmul %422, %409, %cst_163 {dimension_numbers = #tpu.dot_dimension_numbers<[1], [0], [0], [1], [0, 0, 1, 1], [], []>} : vector<2x64xf32>, vector<64x3xf32>, vector<2x3xf32> -> vector<2x3xf32>
    %c13 = arith.constant 13 : index
    %c0_164 = arith.constant 0 : index
    %424 = vector.load %arg3[%c13, %c0_164] : memref<16x256xf32, #tpu.memory_space<vmem>>, vector<1x3xf32>
    %425 = vector.broadcast %424 : vector<1x3xf32> to vector<2x3xf32>
    %426 = arith.addf %423, %425 : vector<2x3xf32>
    %cst_165 = arith.constant dense<0xFF800000> : vector<2xf32>
    %427 = vector.multi_reduction <maximumf>, %426, %cst_165 [1] : vector<2x3xf32> to vector<2xf32>
    %428 = vector.shape_cast %427 : vector<2xf32> to vector<2x1xf32>
    %429 = vector.broadcast %428 : vector<2x1xf32> to vector<2x3xf32>
    %430 = arith.subf %426, %429 : vector<2x3xf32>
    %431 = math.exp %430 : vector<2x3xf32>
    %cst_166 = arith.constant dense<0.000000e+00> : vector<2xf32>
    %432 = vector.multi_reduction <add>, %431, %cst_166 [1] : vector<2x3xf32> to vector<2xf32>
    %433 = vector.shape_cast %432 : vector<2xf32> to vector<2x1xf32>
    %434 = vector.broadcast %433 : vector<2x1xf32> to vector<2x3xf32>
    %435 = arith.divf %431, %434 : vector<2x3xf32>
    %436 = vector.extract_strided_slice %435 {offsets = [0, 0], sizes = [2, 1], strides = [1, 1]} : vector<2x3xf32> to vector<2x1xf32>
    %437 = vector.broadcast %436 : vector<2x1xf32> to vector<2x128xf32>
    %438 = arith.mulf %94, %437 : vector<2x128xf32>
    %439 = vector.extract_strided_slice %435 {offsets = [0, 1], sizes = [2, 1], strides = [1, 1]} : vector<2x3xf32> to vector<2x1xf32>
    %440 = vector.broadcast %439 : vector<2x1xf32> to vector<2x64xf32>
    %441 = arith.mulf %165, %440 : vector<2x64xf32>
    %442 = vector.extract_strided_slice %435 {offsets = [0, 2], sizes = [2, 1], strides = [1, 1]} : vector<2x3xf32> to vector<2x1xf32>
    %443 = vector.broadcast %442 : vector<2x1xf32> to vector<2x64xf32>
    %444 = arith.mulf %403, %443 : vector<2x64xf32>
    %445 = vector.extract_strided_slice %406 {offsets = [0, 0], sizes = [128, 256], strides = [1, 1]} : vector<256x256xf32> to vector<128x256xf32>
    %cst_167 = arith.constant dense<0.000000e+00> : vector<2x256xf32>
    %446 = tpu.matmul %438, %445, %cst_167 {dimension_numbers = #tpu.dot_dimension_numbers<[1], [0], [0], [1], [0, 0, 1, 1], [], []>} : vector<2x128xf32>, vector<128x256xf32>, vector<2x256xf32> -> vector<2x256xf32>
    %447 = vector.extract_strided_slice %406 {offsets = [128, 0], sizes = [64, 256], strides = [1, 1]} : vector<256x256xf32> to vector<64x256xf32>
    %cst_168 = arith.constant dense<0.000000e+00> : vector<2x256xf32>
    %448 = tpu.matmul %441, %447, %cst_168 {dimension_numbers = #tpu.dot_dimension_numbers<[1], [0], [0], [1], [0, 0, 1, 1], [], []>} : vector<2x64xf32>, vector<64x256xf32>, vector<2x256xf32> -> vector<2x256xf32>
    %449 = arith.addf %446, %448 : vector<2x256xf32>
    %450 = vector.extract_strided_slice %406 {offsets = [192, 0], sizes = [64, 256], strides = [1, 1]} : vector<256x256xf32> to vector<64x256xf32>
    %cst_169 = arith.constant dense<0.000000e+00> : vector<2x256xf32>
    %451 = tpu.matmul %444, %450, %cst_169 {dimension_numbers = #tpu.dot_dimension_numbers<[1], [0], [0], [1], [0, 0, 1, 1], [], []>} : vector<2x64xf32>, vector<64x256xf32>, vector<2x256xf32> -> vector<2x256xf32>
    %452 = arith.addf %449, %451 : vector<2x256xf32>
    %c14 = arith.constant 14 : index
    %c0_170 = arith.constant 0 : index
    %453 = vector.load %arg3[%c14, %c0_170] : memref<16x256xf32, #tpu.memory_space<vmem>>, vector<1x256xf32>
    %454 = vector.broadcast %453 : vector<1x256xf32> to vector<2x256xf32>
    %455 = arith.addf %452, %454 : vector<2x256xf32>
    %cst_171 = arith.constant 0.000000e+00 : f32
    %456 = vector.broadcast %cst_171 : f32 to vector<2x256xf32>
    %457 = arith.maximumf %455, %456 : vector<2x256xf32>
    %cst_172 = arith.constant dense<0.000000e+00> : vector<2x128xf32>
    %458 = tpu.matmul %457, %407, %cst_172 {dimension_numbers = #tpu.dot_dimension_numbers<[1], [0], [0], [1], [0, 0, 1, 1], [], []>} : vector<2x256xf32>, vector<256x128xf32>, vector<2x128xf32> -> vector<2x128xf32>
    %c15 = arith.constant 15 : index
    %c0_173 = arith.constant 0 : index
    %459 = vector.load %arg3[%c15, %c0_173] : memref<16x256xf32, #tpu.memory_space<vmem>>, vector<1x128xf32>
    %460 = vector.broadcast %459 : vector<1x128xf32> to vector<2x128xf32>
    %461 = arith.addf %458, %460 : vector<2x128xf32>
    %c0_174 = arith.constant 0 : index
    %c0_175 = arith.constant 0 : index
    %462 = vector.load %arg8[%c0_174, %c0_175] : memref<2x128xf32, #tpu.memory_space<vmem>>, vector<2x128xf32>
    tpu.vector_store %arg8[%c0_174, %c0_175], %461 {strides = array<i32>} : memref<2x128xf32, #tpu.memory_space<vmem>>, vector<2x128xf32>,
    return
  }
}

</mosaic_0001>

<llo_original>
// kernel: multimodal_forward.1
$region0: #{multimodal_forward.1}
  #allocation0 [shape = 'u32[]', space=smem, size = 0x4, offset = 0x4, fixed_abs, tag = 'smem constant byte address 0x4 - core index']
  #allocation1 [shape = 'u32[144,128]{1,0:T(1,128)}', space=vmem, size = 0x12000, scoped, tag = 'internal scratch']
  #allocation2 [shape = 'f32[512,256]{1,0:T(8,128)}', space=vmem, size = 0x80000, scoped, tag = 'scratch operand']
  #allocation3 [shape = 'f32[2,128,160]{2,1,0:T(8,128)}', space=vmem, size = 0x40000, scoped, tag = 'scratch operand']
  #allocation4 [shape = 'f32[2,64,96]{2,1,0:T(8,128)}', space=vmem, size = 0x10000, scoped, tag = 'scratch operand']
  #allocation5 [shape = 's32[1]{0}', space=sflag, size = 0x4, scoped, tag = 'scratch operand']
  #allocation6 [shape = 's32[]', space=sflag, size = 0x4, offset = 0, fixed_abs, tag = 'sflag constant byte address 0x0 - dummy sync flag']
  #allocation7 [shape = 's32[]', space=sflag, size = 0x4, offset = 0, fixed_abs, tag = 'sflag constant byte address 0x0 - dummy sync flag']
  #allocation8 [shape = 'u32[]', space=smem, size = 0x4, offset = 0x44, fixed_abs, tag = 'smem constant byte address 0x44 - assertion arg 0']
  #allocation9 [shape = 'u32[]', space=smem, size = 0x4, offset = 0x48, fixed_abs, tag = 'smem constant byte address 0x48 - assertion arg 1']
  %s0 = inlined_call_operand.vmem [shape: f32[2,132,1], index: 0, kind: input, shape index: {}]
  %s1 = inlined_call_operand.vmem [shape: f32[2,66,1], index: 1, kind: input, shape index: {}]
  %s2 = inlined_call_operand.vmem [shape: f32[16,8], index: 2, kind: input, shape index: {}]
  %s3 = inlined_call_operand.vmem [shape: f32[16,256], index: 3, kind: input, shape index: {}]
  %s4 = inlined_call_operand.vmem [shape: f32[88,128], index: 4, kind: input, shape index: {}]
  %s5 = inlined_call_operand.vmem [shape: f32[256,64], index: 5, kind: input, shape index: {}]
  %s6 = inlined_call_operand.vmem [shape: f32[128,128], index: 6, kind: input, shape index: {}]
  %s7 = inlined_call_operand.hbm [shape: f32[512,256], index: 7, kind: input, shape index: {}]
  %s8 = inlined_call_operand.vmem [shape: f32[2,128], index: 8, kind: output, shape index: {}]
  %s9 = sld [smem:[#allocation0]]
  $region42: #{multimodal_forward.1} parent=0
    _
  %s11 = ssub.s32 1, %s9
  %s12 = scalar_select 0, %s11, %s9
  // Predicated region
  $region2: #{multimodal_forward.1} parent=0 // pred_check
    _
  $region3: #{multimodal_forward.1} parent=0 // pred_check_branch
    %14 = sbr.rel (0) target = $region5
  $region4: #{multimodal_forward.1} parent=0 // pred_region
    _
  $region5: #{multimodal_forward.1} parent=0 // pred_fallthru
    _
  // Predicated region
  $region6: #{multimodal_forward.1} parent=0 // pred_check
    _
  $region7: #{multimodal_forward.1} parent=0 // pred_check_branch
    %16 = sbr.rel (0) target = $region9
  $region8: #{multimodal_forward.1} parent=0 // pred_region
    _
  $region9: #{multimodal_forward.1} parent=0 // pred_fallthru
    _
  // Predicated region
  $region10: #{multimodal_forward.1} parent=0 // pred_check
    _
  $region11: #{multimodal_forward.1} parent=0 // pred_check_branch
    %18 = sbr.rel (0) target = $region13
  $region12: #{multimodal_forward.1} parent=0 // pred_region
    _
  $region13: #{multimodal_forward.1} parent=0 // pred_fallthru
    _
  // Predicated region
  $region14: #{multimodal_forward.1} parent=0 // pred_check
    _
  $region15: #{multimodal_forward.1} parent=0 // pred_check_branch
    %20 = sbr.rel (0) target = $region17
  $region16: #{multimodal_forward.1} parent=0 // pred_region
    _
  $region17: #{multimodal_forward.1} parent=0 // pred_fallthru
    _
  // Predicated region
  $region18: #{multimodal_forward.1} parent=0 // pred_check
    _
  $region19: #{multimodal_forward.1} parent=0 // pred_check_branch
    %22 = sbr.rel (0) target = $region21
  $region20: #{multimodal_forward.1} parent=0 // pred_region
    _
  $region21: #{multimodal_forward.1} parent=0 // pred_fallthru
    _
  // Predicated region
  $region22: #{multimodal_forward.1} parent=0 // pred_check
    _
  $region23: #{multimodal_forward.1} parent=0 // pred_check_branch
    %24 = sbr.rel (0) target = $region25
  $region24: #{multimodal_forward.1} parent=0 // pred_region
    _
  $region25: #{multimodal_forward.1} parent=0 // pred_fallthru
    _
  // Predicated region
  $region26: #{multimodal_forward.1} parent=0 // pred_check
    _
  $region27: #{multimodal_forward.1} parent=0 // pred_check_branch
    %26 = sbr.rel (0) target = $region29
  $region28: #{multimodal_forward.1} parent=0 // pred_region
    _
  $region29: #{multimodal_forward.1} parent=0 // pred_fallthru
    _
  // Predicated region
  $region30: #{multimodal_forward.1} parent=0 // pred_check
    _
  $region31: #{multimodal_forward.1} parent=0 // pred_check_branch
    %28 = sbr.rel target = $region33
  $region32: #{multimodal_forward.1} parent=0 // pred_region
    %29 = sst [smem:[#allocation8]] [#allocation7]
    %30 = sst [smem:[#allocation9]] [#allocation6]
  $region33: #{multimodal_forward.1} parent=0 // pred_fallthru
    _
  %32 = shalt.err (0)
  %s34 = sshll.u32 [#allocation2], 4
  %s35 = int_to_ptr.vmem [resolvable:$true] %s34
  %37 = dma.hbm_to_vmem [thread:$0]  %s7, 16384, %s35, [#allocation5]
  %v38 = vld [vmem:[%s4] sm:$0x1f]
  %v39 = vld [vmem:[%s3] ss:$0 sm:$0xff]
  %v40 = vld [vmem:[%s3 + $0x1] ss:$0 sm:$0xff]
  %v41 = vld [vmem:[%s3 + $0x2] ss:$0 sm:$0xff]
  %v42 = vld [vmem:[%s5] sm:$0xff]
  %v43 = vld [vmem:[%s5 + $0x8] sm:$0xff]
  %v44 = vld [vmem:[%s5 + $0x10] sm:$0xff]
  %v45 = vld [vmem:[%s5 + $0x18] sm:$0xff]
  %v46 = vld [vmem:[%s5 + $0x20] sm:$0xff]
  %v47 = vld [vmem:[%s5 + $0x28] sm:$0xff]
  %v48 = vld [vmem:[%s5 + $0x30] sm:$0xff]
  %v49 = vld [vmem:[%s5 + $0x38] sm:$0xff]
  %v50 = vld [vmem:[%s5 + $0x40] sm:$0xff]
  %v51 = vld [vmem:[%s5 + $0x48] sm:$0xff]
  %v52 = vld [vmem:[%s5 + $0x50] sm:$0xff]
  %v53 = vld [vmem:[%s5 + $0x58] sm:$0xff]
  %v54 = vld [vmem:[%s5 + $0x60] sm:$0xff]
  %v55 = vld [vmem:[%s5 + $0x68] sm:$0xff]
  %v56 = vld [vmem:[%s5 + $0x70] sm:$0xff]
  %v57 = vld [vmem:[%s5 + $0x78] sm:$0xff]
  %v58 = vld [vmem:[%s5 + $0x80] sm:$0xff]
  %v59 = vld [vmem:[%s5 + $0x88] sm:$0xff]
  %v60 = vld [vmem:[%s5 + $0x90] sm:$0xff]
  %v61 = vld [vmem:[%s5 + $0x98] sm:$0xff]
  %v62 = vld [vmem:[%s3 + $0x3] ss:$0 sm:$0xff]
  %v63 = vld [vmem:[%s6] sm:$0xff]
  %v64 = vld [vmem:[%s6 + $0x8] sm:$0xff]
  %v65 = vld [vmem:[%s6 + $0x10] sm:$0xff]
  %v66 = vld [vmem:[%s6 + $0x18] sm:$0xff]
  %v67 = vld [vmem:[%s6 + $0x20] sm:$0xff]
  %v68 = vld [vmem:[%s6 + $0x28] sm:$0xff]
  %v69 = vld [vmem:[%s6 + $0x30] sm:$0xff]
  %v70 = vld [vmem:[%s6 + $0x38] sm:$0xff]
  %v71 = vld [vmem:[%s3 + $0x4] ss:$0 sm:$0xff]
  %v72 = vld [vmem:[%s0] sm:$0xff]
  %v73 = vld [vmem:[%s0 + $0x8] sm:$0xff]
  %v74 = vld [vmem:[%s0 + $0x10] sm:$0xff]
  %v75 = vld [vmem:[%s0 + $0x18] sm:$0xff]
  %v76 = vld [vmem:[%s0 + $0x20] sm:$0xff]
  %v77 = vld [vmem:[%s0 + $0x28] sm:$0xff]
  %v78 = vld [vmem:[%s0 + $0x30] sm:$0xff]
  %v79 = vld [vmem:[%s0 + $0x38] sm:$0xff]
  %v80 = vld [vmem:[%s0 + $0x40] sm:$0xff]
  %v81 = vld [vmem:[%s0 + $0x48] sm:$0xff]
  %v82 = vld [vmem:[%s0 + $0x50] sm:$0xff]
  %v83 = vld [vmem:[%s0 + $0x58] sm:$0xff]
  %v84 = vld [vmem:[%s0 + $0x60] sm:$0xff]
  %v85 = vld [vmem:[%s0 + $0x68] sm:$0xff]
  %v86 = vld [vmem:[%s0 + $0x70] sm:$0xff]
  %v87 = vld [vmem:[%s0 + $0x78] sm:$0xff]
  %v88 = vld [vmem:[%s0 + $0x88] sm:$0xff]
  %v89 = vld [vmem:[%s0 + $0x90] sm:$0xff]
  %v90 = vld [vmem:[%s0 + $0x98] sm:$0xff]
  %v91 = vld [vmem:[%s0 + $0xa0] sm:$0xff]
  %v92 = vld [vmem:[%s0 + $0xa8] sm:$0xff]
  %v93 = vld [vmem:[%s0 + $0xb0] sm:$0xff]
  %v94 = vld [vmem:[%s0 + $0xb8] sm:$0xff]
  %v95 = vld [vmem:[%s0 + $0xc0] sm:$0xff]
  %v96 = vld [vmem:[%s0 + $0xc8] sm:$0xff]
  %v97 = vld [vmem:[%s0 + $0xd0] sm:$0xff]
  %v98 = vld [vmem:[%s0 + $0xd8] sm:$0xff]
  %v99 = vld [vmem:[%s0 + $0xe0] sm:$0xff]
  %v100 = vld [vmem:[%s0 + $0xe8] sm:$0xff]
  %v101 = vld [vmem:[%s0 + $0xf0] sm:$0xff]
  %v102 = vld [vmem:[%s0 + $0xf8] sm:$0xff]
  %v103 = vld [vmem:[%s0 + $0x100] sm:$0xff]
  %105 = vset.pattern.permute.xlu0 0
  %106 = vperm.xlu0 %105, %v72
  %v107 = vpop.permute.xlu0 %106
  %110 = vset.pattern.permute.xlu0 0
  %111 = vperm.xlu0 %110, %v73
  %v112 = vpop.permute.xlu0 %111
  %115 = vset.pattern.permute.xlu0 0
  %116 = vperm.xlu0 %115, %v74
  %v117 = vpop.permute.xlu0 %116
  %120 = vset.pattern.permute.xlu0 0
  %121 = vperm.xlu0 %120, %v75
  %v122 = vpop.permute.xlu0 %121
  %125 = vset.pattern.permute.xlu0 0
  %126 = vperm.xlu0 %125, %v76
  %v127 = vpop.permute.xlu0 %126
  %130 = vset.pattern.permute.xlu0 0
  %131 = vperm.xlu0 %130, %v77
  %v132 = vpop.permute.xlu0 %131
  %135 = vset.pattern.permute.xlu0 0
  %136 = vperm.xlu0 %135, %v78
  %v137 = vpop.permute.xlu0 %136
  %140 = vset.pattern.permute.xlu0 0
  %141 = vperm.xlu0 %140, %v79
  %v142 = vpop.permute.xlu0 %141
  %145 = vset.pattern.permute.xlu0 0
  %146 = vperm.xlu0 %145, %v80
  %v147 = vpop.permute.xlu0 %146
  %150 = vset.pattern.permute.xlu0 0
  %151 = vperm.xlu0 %150, %v81
  %v152 = vpop.permute.xlu0 %151
  %155 = vset.pattern.permute.xlu0 0
  %156 = vperm.xlu0 %155, %v82
  %v157 = vpop.permute.xlu0 %156
  %160 = vset.pattern.permute.xlu0 0
  %161 = vperm.xlu0 %160, %v83
  %v162 = vpop.permute.xlu0 %161
  %165 = vset.pattern.permute.xlu0 0
  %166 = vperm.xlu0 %165, %v84
  %v167 = vpop.permute.xlu0 %166
  %170 = vset.pattern.permute.xlu0 0
  %171 = vperm.xlu0 %170, %v85
  %v172 = vpop.permute.xlu0 %171
  %175 = vset.pattern.permute.xlu0 0
  %176 = vperm.xlu0 %175, %v86
  %v177 = vpop.permute.xlu0 %176
  %180 = vset.pattern.permute.xlu0 0
  %181 = vperm.xlu0 %180, %v87
  %v182 = vpop.permute.xlu0 %181
  %185 = vset.pattern.permute.xlu0 0
  %186 = vperm.xlu0 %185, %v88
  %v187 = vpop.permute.xlu0 %186
  %190 = vset.pattern.permute.xlu0 0
  %191 = vperm.xlu0 %190, %v89
  %v192 = vpop.permute.xlu0 %191
  %195 = vset.pattern.permute.xlu0 0
  %196 = vperm.xlu0 %195, %v90
  %v197 = vpop.permute.xlu0 %196
  %200 = vset.pattern.permute.xlu0 0
  %201 = vperm.xlu0 %200, %v91
  %v202 = vpop.permute.xlu0 %201
  %205 = vset.pattern.permute.xlu0 0
  %206 = vperm.xlu0 %205, %v92
  %v207 = vpop.permute.xlu0 %206
  %210 = vset.pattern.permute.xlu0 0
  %211 = vperm.xlu0 %210, %v93
  %v212 = vpop.permute.xlu0 %211
  %215 = vset.pattern.permute.xlu0 0
  %216 = vperm.xlu0 %215, %v94
  %v217 = vpop.permute.xlu0 %216
  %220 = vset.pattern.permute.xlu0 0
  %221 = vperm.xlu0 %220, %v95
  %v222 = vpop.permute.xlu0 %221
  %225 = vset.pattern.permute.xlu0 0
  %226 = vperm.xlu0 %225, %v96
  %v227 = vpop.permute.xlu0 %226
  %230 = vset.pattern.permute.xlu0 0
  %231 = vperm.xlu0 %230, %v97
  %v232 = vpop.permute.xlu0 %231
  %235 = vset.pattern.permute.xlu0 0
  %236 = vperm.xlu0 %235, %v98
  %v237 = vpop.permute.xlu0 %236
  %240 = vset.pattern.permute.xlu0 0
  %241 = vperm.xlu0 %240, %v99
  %v242 = vpop.permute.xlu0 %241
  %245 = vset.pattern.permute.xlu0 0
  %246 = vperm.xlu0 %245, %v100
  %v247 = vpop.permute.xlu0 %246
  %250 = vset.pattern.permute.xlu0 0
  %251 = vperm.xlu0 %250, %v101
  %v252 = vpop.permute.xlu0 %251
  %255 = vset.pattern.permute.xlu0 0
  %256 = vperm.xlu0 %255, %v102
  %v257 = vpop.permute.xlu0 %256
  %260 = vset.pattern.permute.xlu0 0
  %261 = vperm.xlu0 %260, %v103
  %v262 = vpop.permute.xlu0 %261
  %v264 = vlaneseq
  %v265 = vshrl.u32 %v264, 7
  %v266 = vsub.s32 0, %v265
  %v267 = vrot.slane %v38, %v266
  %v268 = vmul.f32 %v107, %v267
  %v269 = vmul.f32 %v112, %v267
  %v270 = vmul.f32 %v117, %v267
  %v271 = vmul.f32 %v122, %v267
  %v272 = vmul.f32 %v127, %v267
  %v273 = vmul.f32 %v132, %v267
  %v274 = vmul.f32 %v137, %v267
  %v275 = vmul.f32 %v142, %v267
  %v276 = vmul.f32 %v147, %v267
  %v277 = vmul.f32 %v152, %v267
  %v278 = vmul.f32 %v157, %v267
  %v279 = vmul.f32 %v162, %v267
  %v280 = vmul.f32 %v167, %v267
  %v281 = vmul.f32 %v172, %v267
  %v282 = vmul.f32 %v177, %v267
  %v283 = vmul.f32 %v182, %v267
  %v284 = vmul.f32 %v187, %v267
  %v285 = vmul.f32 %v192, %v267
  %v286 = vmul.f32 %v197, %v267
  %v287 = vmul.f32 %v202, %v267
  %v288 = vmul.f32 %v207, %v267
  %v289 = vmul.f32 %v212, %v267
  %v290 = vmul.f32 %v217, %v267
  %v291 = vmul.f32 %v222, %v267
  %v292 = vmul.f32 %v227, %v267
  %v293 = vmul.f32 %v232, %v267
  %v294 = vmul.f32 %v237, %v267
  %v295 = vmul.f32 %v242, %v267
  %v296 = vmul.f32 %v247, %v267
  %v297 = vmul.f32 %v252, %v267
  %v298 = vmul.f32 %v257, %v267
  %v299 = vmul.f32 %v262, %v267
  %v300 = vld [vmem:[%s0 + $0x1] sm:$0xff]
  %v301 = vld [vmem:[%s0 + $0x9] sm:$0xff]
  %v302 = vld [vmem:[%s0 + $0x11] sm:$0xff]
  %v303 = vld [vmem:[%s0 + $0x19] sm:$0xff]
  %v304 = vld [vmem:[%s0 + $0x21] sm:$0xff]
  %v305 = vld [vmem:[%s0 + $0x29] sm:$0xff]
  %v306 = vld [vmem:[%s0 + $0x31] sm:$0xff]
  %v307 = vld [vmem:[%s0 + $0x39] sm:$0xff]
  %v308 = vld [vmem:[%s0 + $0x41] sm:$0xff]
  %v309 = vld [vmem:[%s0 + $0x49] sm:$0xff]
  %v310 = vld [vmem:[%s0 + $0x51] sm:$0xff]
  %v311 = vld [vmem:[%s0 + $0x59] sm:$0xff]
  %v312 = vld [vmem:[%s0 + $0x61] sm:$0xff]
  %v313 = vld [vmem:[%s0 + $0x69] sm:$0xff]
  %v314 = vld [vmem:[%s0 + $0x71] sm:$0xff]
  %v315 = vld [vmem:[%s0 + $0x79] sm:$0xff]
  %v316 = vld [vmem:[%s0 + $0x89] sm:$0xff]
  %v317 = vld [vmem:[%s0 + $0x91] sm:$0xff]
  %v318 = vld [vmem:[%s0 + $0x99] sm:$0xff]
  %v319 = vld [vmem:[%s0 + $0xa1] sm:$0xff]
  %v320 = vld [vmem:[%s0 + $0xa9] sm:$0xff]
  %v321 = vld [vmem:[%s0 + $0xb1] sm:$0xff]
  %v322 = vld [vmem:[%s0 + $0xb9] sm:$0xff]
  %v323 = vld [vmem:[%s0 + $0xc1] sm:$0xff]
  %v324 = vld [vmem:[%s0 + $0xc9] sm:$0xff]
  %v325 = vld [vmem:[%s0 + $0xd1] sm:$0xff]
  %v326 = vld [vmem:[%s0 + $0xd9] sm:$0xff]
  %v327 = vld [vmem:[%s0 + $0xe1] sm:$0xff]
  %v328 = vld [vmem:[%s0 + $0xe9] sm:$0xff]
  %v329 = vld [vmem:[%s0 + $0xf1] sm:$0xff]
  %v330 = vld [vmem:[%s0 + $0xf9] sm:$0xff]
  %v331 = vld [vmem:[%s0 + $0x101] sm:$0xff]
  %333 = vset.pattern.permute.xlu0 0
  %334 = vperm.xlu0 %333, %v300
  %v335 = vpop.permute.xlu0 %334
  %338 = vset.pattern.permute.xlu0 0
  %339 = vperm.xlu0 %338, %v301
  %v340 = vpop.permute.xlu0 %339
  %343 = vset.pattern.permute.xlu0 0
  %344 = vperm.xlu0 %343, %v302
  %v345 = vpop.permute.xlu0 %344
  %348 = vset.pattern.permute.xlu0 0
  %349 = vperm.xlu0 %348, %v303
  %v350 = vpop.permute.xlu0 %349
  %353 = vset.pattern.permute.xlu0 0
  %354 = vperm.xlu0 %353, %v304
  %v355 = vpop.permute.xlu0 %354
  %358 = vset.pattern.permute.xlu0 0
  %359 = vperm.xlu0 %358, %v305
  %v360 = vpop.permute.xlu0 %359
  %363 = vset.pattern.permute.xlu0 0
  %364 = vperm.xlu0 %363, %v306
  %v365 = vpop.permute.xlu0 %364
  %368 = vset.pattern.permute.xlu0 0
  %369 = vperm.xlu0 %368, %v307
  %v370 = vpop.permute.xlu0 %369
  %373 = vset.pattern.permute.xlu0 0
  %374 = vperm.xlu0 %373, %v308
  %v375 = vpop.permute.xlu0 %374
  %378 = vset.pattern.permute.xlu0 0
  %379 = vperm.xlu0 %378, %v309
  %v380 = vpop.permute.xlu0 %379
  %383 = vset.pattern.permute.xlu0 0
  %384 = vperm.xlu0 %383, %v310
  %v385 = vpop.permute.xlu0 %384
  %388 = vset.pattern.permute.xlu0 0
  %389 = vperm.xlu0 %388, %v311
  %v390 = vpop.permute.xlu0 %389
  %393 = vset.pattern.permute.xlu0 0
  %394 = vperm.xlu0 %393, %v312
  %v395 = vpop.permute.xlu0 %394
  %398 = vset.pattern.permute.xlu0 0
  %399 = vperm.xlu0 %398, %v313
  %v400 = vpop.permute.xlu0 %399
  %403 = vset.pattern.permute.xlu0 0
  %404 = vperm.xlu0 %403, %v314
  %v405 = vpop.permute.xlu0 %404
  %408 = vset.pattern.permute.xlu0 0
  %409 = vperm.xlu0 %408, %v315
  %v410 = vpop.permute.xlu0 %409
  %413 = vset.pattern.permute.xlu0 0
  %414 = vperm.xlu0 %413, %v316
  %v415 = vpop.permute.xlu0 %414
  %418 = vset.pattern.permute.xlu0 0
  %419 = vperm.xlu0 %418, %v317
  %v420 = vpop.permute.xlu0 %419
  %423 = vset.pattern.permute.xlu0 0
  %424 = vperm.xlu0 %423, %v318
  %v425 = vpop.permute.xlu0 %424
  %428 = vset.pattern.permute.xlu0 0
  %429 = vperm.xlu0 %428, %v319
  %v430 = vpop.permute.xlu0 %429
  %433 = vset.pattern.permute.xlu0 0
  %434 = vperm.xlu0 %433, %v320
  %v435 = vpop.permute.xlu0 %434
  %438 = vset.pattern.permute.xlu0 0
  %439 = vperm.xlu0 %438, %v321
  %v440 = vpop.permute.xlu0 %439
  %443 = vset.pattern.permute.xlu0 0
  %444 = vperm.xlu0 %443, %v322
  %v445 = vpop.permute.xlu0 %444
  %448 = vset.pattern.permute.xlu0 0
  %449 = vperm.xlu0 %448, %v323
  %v450 = vpop.permute.xlu0 %449
  %453 = vset.pattern.permute.xlu0 0
  %454 = vperm.xlu0 %453, %v324
  %v455 = vpop.permute.xlu0 %454
  %458 = vset.pattern.permute.xlu0 0
  %459 = vperm.xlu0 %458, %v325
  %v460 = vpop.permute.xlu0 %459
  %463 = vset.pattern.permute.xlu0 0
  %464 = vperm.xlu0 %463, %v326
  %v465 = vpop.permute.xlu0 %464
  %468 = vset.pattern.permute.xlu0 0
  %469 = vperm.xlu0 %468, %v327
  %v470 = vpop.permute.xlu0 %469
  %473 = vset.pattern.permute.xlu0 0
  %474 = vperm.xlu0 %473, %v328
  %v475 = vpop.permute.xlu0 %474
  %478 = vset.pattern.permute.xlu0 0
  %479 = vperm.xlu0 %478, %v329
  %v480 = vpop.permute.xlu0 %479
  %483 = vset.pattern.permute.xlu0 0
  %484 = vperm.xlu0 %483, %v330
  %v485 = vpop.permute.xlu0 %484
  %488 = vset.pattern.permute.xlu0 0
  %489 = vperm.xlu0 %488, %v331
  %v490 = vpop.permute.xlu0 %489
  %v492 = vlaneseq
  %v493 = vshrl.u32 %v492, 7
  %v494 = vsub.s32 1, %v493
  %v495 = vrot.slane %v38, %v494
  %v496 = vmul.f32 %v335, %v495
  %v497 = vmul.f32 %v340, %v495
  %v498 = vmul.f32 %v345, %v495
  %v499 = vmul.f32 %v350, %v495
  %v500 = vmul.f32 %v355, %v495
  %v501 = vmul.f32 %v360, %v495
  %v502 = vmul.f32 %v365, %v495
  %v503 = vmul.f32 %v370, %v495
  %v504 = vmul.f32 %v375, %v495
  %v505 = vmul.f32 %v380, %v495
  %v506 = vmul.f32 %v385, %v495
  %v507 = vmul.f32 %v390, %v495
  %v508 = vmul.f32 %v395, %v495
  %v509 = vmul.f32 %v400, %v495
  %v510 = vmul.f32 %v405, %v495
  %v511 = vmul.f32 %v410, %v495
  %v512 = vmul.f32 %v415, %v495
  %v513 = vmul.f32 %v420, %v495
  %v514 = vmul.f32 %v425, %v495
  %v515 = vmul.f32 %v430, %v495
  %v516 = vmul.f32 %v435, %v495
  %v517 = vmul.f32 %v440, %v495
  %v518 = vmul.f32 %v445, %v495
  %v519 = vmul.f32 %v450, %v495
  %v520 = vmul.f32 %v455, %v495
  %v521 = vmul.f32 %v460, %v495
  %v522 = vmul.f32 %v465, %v495
  %v523 = vmul.f32 %v470, %v495
  %v524 = vmul.f32 %v475, %v495
  %v525 = vmul.f32 %v480, %v495
  %v526 = vmul.f32 %v485, %v495
  %v527 = vmul.f32 %v490, %v495
  %v528 = vadd.f32 %v268, %v496
  %v529 = vadd.f32 %v269, %v497
  %v530 = vadd.f32 %v270, %v498
  %v531 = vadd.f32 %v271, %v499
  %v532 = vadd.f32 %v272, %v500
  %v533 = vadd.f32 %v273, %v501
  %v534 = vadd.f32 %v274, %v502
  %v535 = vadd.f32 %v275, %v503
  %v536 = vadd.f32 %v276, %v504
  %v537 = vadd.f32 %v277, %v505
  %v538 = vadd.f32 %v278, %v506
  %v539 = vadd.f32 %v279, %v507
  %v540 = vadd.f32 %v280, %v508
  %v541 = vadd.f32 %v281, %v509
  %v542 = vadd.f32 %v282, %v510
  %v543 = vadd.f32 %v283, %v511
  %v544 = vadd.f32 %v284, %v512
  %v545 = vadd.f32 %v285, %v513
  %v546 = vadd.f32 %v286, %v514
  %v547 = vadd.f32 %v287, %v515
  %v548 = vadd.f32 %v288, %v516
  %v549 = vadd.f32 %v289, %v517
  %v550 = vadd.f32 %v290, %v518
  %v551 = vadd.f32 %v291, %v519
  %v552 = vadd.f32 %v292, %v520
  %v553 = vadd.f32 %v293, %v521
  %v554 = vadd.f32 %v294, %v522
  %v555 = vadd.f32 %v295, %v523
  %v556 = vadd.f32 %v296, %v524
  %v557 = vadd.f32 %v297, %v525
  %v558 = vadd.f32 %v298, %v526
  %v559 = vadd.f32 %v299, %v527
  %v560 = vld [vmem:[%s0 + $0x2] sm:$0xff]
  %v561 = vld [vmem:[%s0 + $0xa] sm:$0xff]
  %v562 = vld [vmem:[%s0 + $0x12] sm:$0xff]
  %v563 = vld [vmem:[%s0 + $0x1a] sm:$0xff]
  %v564 = vld [vmem:[%s0 + $0x22] sm:$0xff]
  %v565 = vld [vmem:[%s0 + $0x2a] sm:$0xff]
  %v566 = vld [vmem:[%s0 + $0x32] sm:$0xff]
  %v567 = vld [vmem:[%s0 + $0x3a] sm:$0xff]
  %v568 = vld [vmem:[%s0 + $0x42] sm:$0xff]
  %v569 = vld [vmem:[%s0 + $0x4a] sm:$0xff]
  %v570 = vld [vmem:[%s0 + $0x52] sm:$0xff]
  %v571 = vld [vmem:[%s0 + $0x5a] sm:$0xff]
  %v572 = vld [vmem:[%s0 + $0x62] sm:$0xff]
  %v573 = vld [vmem:[%s0 + $0x6a] sm:$0xff]
  %v574 = vld [vmem:[%s0 + $0x72] sm:$0xff]
  %v575 = vld [vmem:[%s0 + $0x7a] sm:$0xff]
  %v576 = vld [vmem:[%s0 + $0x8a] sm:$0xff]
  %v577 = vld [vmem:[%s0 + $0x92] sm:$0xff]
  %v578 = vld [vmem:[%s0 + $0x9a] sm:$0xff]
  %v579 = vld [vmem:[%s0 + $0xa2] sm:$0xff]
  %v580 = vld [vmem:[%s0 + $0xaa] sm:$0xff]
  %v581 = vld [vmem:[%s0 + $0xb2] sm:$0xff]
  %v582 = vld [vmem:[%s0 + $0xba] sm:$0xff]
  %v583 = vld [vmem:[%s0 + $0xc2] sm:$0xff]
  %v584 = vld [vmem:[%s0 + $0xca] sm:$0xff]
  %v585 = vld [vmem:[%s0 + $0xd2] sm:$0xff]
  %v586 = vld [vmem:[%s0 + $0xda] sm:$0xff]
  %v587 = vld [vmem:[%s0 + $0xe2] sm:$0xff]
  %v588 = vld [vmem:[%s0 + $0xea] sm:$0xff]
  %v589 = vld [vmem:[%s0 + $0xf2] sm:$0xff]
  %v590 = vld [vmem:[%s0 + $0xfa] sm:$0xff]
  %v591 = vld [vmem:[%s0 + $0x102] sm:$0xff]
  %593 = vset.pattern.permute.xlu0 0
  %594 = vperm.xlu0 %593, %v560
  %v595 = vpop.permute.xlu0 %594
  %598 = vset.pattern.permute.xlu0 0
  %599 = vperm.xlu0 %598, %v561
  %v600 = vpop.permute.xlu0 %599
  %603 = vset.pattern.permute.xlu0 0
  %604 = vperm.xlu0 %603, %v562
  %v605 = vpop.permute.xlu0 %604
  %608 = vset.pattern.permute.xlu0 0
  %609 = vperm.xlu0 %608, %v563
  %v610 = vpop.permute.xlu0 %609
  %613 = vset.pattern.permute.xlu0 0
  %614 = vperm.xlu0 %613, %v564
  %v615 = vpop.permute.xlu0 %614
  %618 = vset.pattern.permute.xlu0 0
  %619 = vperm.xlu0 %618, %v565
  %v620 = vpop.permute.xlu0 %619
  %623 = vset.pattern.permute.xlu0 0
  %624 = vperm.xlu0 %623, %v566
  %v625 = vpop.permute.xlu0 %624
  %628 = vset.pattern.permute.xlu0 0
  %629 = vperm.xlu0 %628, %v567
  %v630 = vpop.permute.xlu0 %629
  %633 = vset.pattern.permute.xlu0 0
  %634 = vperm.xlu0 %633, %v568
  %v635 = vpop.permute.xlu0 %634
  %638 = vset.pattern.permute.xlu0 0
  %639 = vperm.xlu0 %638, %v569
  %v640 = vpop.permute.xlu0 %639
  %643 = vset.pattern.permute.xlu0 0
  %644 = vperm.xlu0 %643, %v570
  %v645 = vpop.permute.xlu0 %644
  %648 = vset.pattern.permute.xlu0 0
  %649 = vperm.xlu0 %648, %v571
  %v650 = vpop.permute.xlu0 %649
  %653 = vset.pattern.permute.xlu0 0
  %654 = vperm.xlu0 %653, %v572
  %v655 = vpop.permute.xlu0 %654
  %658 = vset.pattern.permute.xlu0 0
  %659 = vperm.xlu0 %658, %v573
  %v660 = vpop.permute.xlu0 %659
  %663 = vset.pattern.permute.xlu0 0
  %664 = vperm.xlu0 %663, %v574
  %v665 = vpop.permute.xlu0 %664
  %668 = vset.pattern.permute.xlu0 0
  %669 = vperm.xlu0 %668, %v575
  %v670 = vpop.permute.xlu0 %669
  %673 = vset.pattern.permute.xlu0 0
  %674 = vperm.xlu0 %673, %v576
  %v675 = vpop.permute.xlu0 %674
  %678 = vset.pattern.permute.xlu0 0
  %679 = vperm.xlu0 %678, %v577
  %v680 = vpop.permute.xlu0 %679
  %683 = vset.pattern.permute.xlu0 0
  %684 = vperm.xlu0 %683, %v578
  %v685 = vpop.permute.xlu0 %684
  %688 = vset.pattern.permute.xlu0 0
  %689 = vperm.xlu0 %688, %v579
  %v690 = vpop.permute.xlu0 %689
  %693 = vset.pattern.permute.xlu0 0
  %694 = vperm.xlu0 %693, %v580
  %v695 = vpop.permute.xlu0 %694
  %698 = vset.pattern.permute.xlu0 0
  %699 = vperm.xlu0 %698, %v581
  %v700 = vpop.permute.xlu0 %699
  %703 = vset.pattern.permute.xlu0 0
  %704 = vperm.xlu0 %703, %v582
  %v705 = vpop.permute.xlu0 %704
  %708 = vset.pattern.permute.xlu0 0
  %709 = vperm.xlu0 %708, %v583
  %v710 = vpop.permute.xlu0 %709
  %713 = vset.pattern.permute.xlu0 0
  %714 = vperm.xlu0 %713, %v584
  %v715 = vpop.permute.xlu0 %714
  %718 = vset.pattern.permute.xlu0 0
  %719 = vperm.xlu0 %718, %v585
  %v720 = vpop.permute.xlu0 %719
  %723 = vset.pattern.permute.xlu0 0
  %724 = vperm.xlu0 %723, %v586
  %v725 = vpop.permute.xlu0 %724
  %728 = vset.pattern.permute.xlu0 0
  %729 = vperm.xlu0 %728, %v587
  %v730 = vpop.permute.xlu0 %729
  %733 = vset.pattern.permute.xlu0 0
  %734 = vperm.xlu0 %733, %v588
  %v735 = vpop.permute.xlu0 %734
  %738 = vset.pattern.permute.xlu0 0
  %739 = vperm.xlu0 %738, %v589
  %v740 = vpop.permute.xlu0 %739
  %743 = vset.pattern.permute.xlu0 0
  %744 = vperm.xlu0 %743, %v590
  %v745 = vpop.permute.xlu0 %744
  %748 = vset.pattern.permute.xlu0 0
  %749 = vperm.xlu0 %748, %v591
  %v750 = vpop.permute.xlu0 %749
  %v752 = vlaneseq
  %v753 = vshrl.u32 %v752, 7
  %v754 = vsub.s32 2, %v753
  %v755 = vrot.slane %v38, %v754
  %v756 = vmul.f32 %v595, %v755
  %v757 = vmul.f32 %v600, %v755
  %v758 = vmul.f32 %v605, %v755
  %v759 = vmul.f32 %v610, %v755
  %v760 = vmul.f32 %v615, %v755
  %v761 = vmul.f32 %v620, %v755
  %v762 = vmul.f32 %v625, %v755
  %v763 = vmul.f32 %v630, %v755
  %v764 = vmul.f32 %v635, %v755
  %v765 = vmul.f32 %v640, %v755
  %v766 = vmul.f32 %v645, %v755
  %v767 = vmul.f32 %v650, %v755
  %v768 = vmul.f32 %v655, %v755
  %v769 = vmul.f32 %v660, %v755
  %v770 = vmul.f32 %v665, %v755
  %v771 = vmul.f32 %v670, %v755
  %v772 = vmul.f32 %v675, %v755
  %v773 = vmul.f32 %v680, %v755
  %v774 = vmul.f32 %v685, %v755
  %v775 = vmul.f32 %v690, %v755
  %v776 = vmul.f32 %v695, %v755
  %v777 = vmul.f32 %v700, %v755
  %v778 = vmul.f32 %v705, %v755
  %v779 = vmul.f32 %v710, %v755
  %v780 = vmul.f32 %v715, %v755
  %v781 = vmul.f32 %v720, %v755
  %v782 = vmul.f32 %v725, %v755
  %v783 = vmul.f32 %v730, %v755
  %v784 = vmul.f32 %v735, %v755
  %v785 = vmul.f32 %v740, %v755
  %v786 = vmul.f32 %v745, %v755
  %v787 = vmul.f32 %v750, %v755
  %v788 = vadd.f32 %v528, %v756
  %v789 = vadd.f32 %v529, %v757
  %v790 = vadd.f32 %v530, %v758
  %v791 = vadd.f32 %v531, %v759
  %v792 = vadd.f32 %v532, %v760
  %v793 = vadd.f32 %v533, %v761
  %v794 = vadd.f32 %v534, %v762
  %v795 = vadd.f32 %v535, %v763
  %v796 = vadd.f32 %v536, %v764
  %v797 = vadd.f32 %v537, %v765
  %v798 = vadd.f32 %v538, %v766
  %v799 = vadd.f32 %v539, %v767
  %v800 = vadd.f32 %v540, %v768
  %v801 = vadd.f32 %v541, %v769
  %v802 = vadd.f32 %v542, %v770
  %v803 = vadd.f32 %v543, %v771
  %v804 = vadd.f32 %v544, %v772
  %v805 = vadd.f32 %v545, %v773
  %v806 = vadd.f32 %v546, %v774
  %v807 = vadd.f32 %v547, %v775
  %v808 = vadd.f32 %v548, %v776
  %v809 = vadd.f32 %v549, %v777
  %v810 = vadd.f32 %v550, %v778
  %v811 = vadd.f32 %v551, %v779
  %v812 = vadd.f32 %v552, %v780
  %v813 = vadd.f32 %v553, %v781
  %v814 = vadd.f32 %v554, %v782
  %v815 = vadd.f32 %v555, %v783
  %v816 = vadd.f32 %v556, %v784
  %v817 = vadd.f32 %v557, %v785
  %v818 = vadd.f32 %v558, %v786
  %v819 = vadd.f32 %v559, %v787
  %v820 = vld [vmem:[%s0 + $0x3] sm:$0xff]
  %v821 = vld [vmem:[%s0 + $0xb] sm:$0xff]
  %v822 = vld [vmem:[%s0 + $0x13] sm:$0xff]
  %v823 = vld [vmem:[%s0 + $0x1b] sm:$0xff]
  %v824 = vld [vmem:[%s0 + $0x23] sm:$0xff]
  %v825 = vld [vmem:[%s0 + $0x2b] sm:$0xff]
  %v826 = vld [vmem:[%s0 + $0x33] sm:$0xff]
  %v827 = vld [vmem:[%s0 + $0x3b] sm:$0xff]
  %v828 = vld [vmem:[%s0 + $0x43] sm:$0xff]
  %v829 = vld [vmem:[%s0 + $0x4b] sm:$0xff]
  %v830 = vld [vmem:[%s0 + $0x53] sm:$0xff]
  %v831 = vld [vmem:[%s0 + $0x5b] sm:$0xff]
  %v832 = vld [vmem:[%s0 + $0x63] sm:$0xff]
  %v833 = vld [vmem:[%s0 + $0x6b] sm:$0xff]
  %v834 = vld [vmem:[%s0 + $0x73] sm:$0xff]
  %v835 = vld [vmem:[%s0 + $0x7b] sm:$0xff]
  %v836 = vld [vmem:[%s0 + $0x8b] sm:$0xff]
  %v837 = vld [vmem:[%s0 + $0x93] sm:$0xff]
  %v838 = vld [vmem:[%s0 + $0x9b] sm:$0xff]
  %v839 = vld [vmem:[%s0 + $0xa3] sm:$0xff]
  %v840 = vld [vmem:[%s0 + $0xab] sm:$0xff]
  %v841 = vld [vmem:[%s0 + $0xb3] sm:$0xff]
  %v842 = vld [vmem:[%s0 + $0xbb] sm:$0xff]
  %v843 = vld [vmem:[%s0 + $0xc3] sm:$0xff]
  %v844 = vld [vmem:[%s0 + $0xcb] sm:$0xff]
  %v845 = vld [vmem:[%s0 + $0xd3] sm:$0xff]
  %v846 = vld [vmem:[%s0 + $0xdb] sm:$0xff]
  %v847 = vld [vmem:[%s0 + $0xe3] sm:$0xff]
  %v848 = vld [vmem:[%s0 + $0xeb] sm:$0xff]
  %v849 = vld [vmem:[%s0 + $0xf3] sm:$0xff]
  %v850 = vld [vmem:[%s0 + $0xfb] sm:$0xff]
  %v851 = vld [vmem:[%s0 + $0x103] sm:$0xff]
  %853 = vset.pattern.permute.xlu0 0
  %854 = vperm.xlu0 %853, %v820
  %v855 = vpop.permute.xlu0 %854
  %858 = vset.pattern.permute.xlu0 0
  %859 = vperm.xlu0 %858, %v821
  %v860 = vpop.permute.xlu0 %859
  %863 = vset.pattern.permute.xlu0 0
  %864 = vperm.xlu0 %863, %v822
  %v865 = vpop.permute.xlu0 %864
  %868 = vset.pattern.permute.xlu0 0
  %869 = vperm.xlu0 %868, %v823
  %v870 = vpop.permute.xlu0 %869
  %873 = vset.pattern.permute.xlu0 0
  %874 = vperm.xlu0 %873, %v824
  %v875 = vpop.permute.xlu0 %874
  %878 = vset.pattern.permute.xlu0 0
  %879 = vperm.xlu0 %878, %v825
  %v880 = vpop.permute.xlu0 %879
  %883 = vset.pattern.permute.xlu0 0
  %884 = vperm.xlu0 %883, %v826
  %v885 = vpop.permute.xlu0 %884
  %888 = vset.pattern.permute.xlu0 0
  %889 = vperm.xlu0 %888, %v827
  %v890 = vpop.permute.xlu0 %889
  %893 = vset.pattern.permute.xlu0 0
  %894 = vperm.xlu0 %893, %v828
  %v895 = vpop.permute.xlu0 %894
  %898 = vset.pattern.permute.xlu0 0
  %899 = vperm.xlu0 %898, %v829
  %v900 = vpop.permute.xlu0 %899
  %903 = vset.pattern.permute.xlu0 0
  %904 = vperm.xlu0 %903, %v830
  %v905 = vpop.permute.xlu0 %904
  %908 = vset.pattern.permute.xlu0 0
  %909 = vperm.xlu0 %908, %v831
  %v910 = vpop.permute.xlu0 %909
  %913 = vset.pattern.permute.xlu0 0
  %914 = vperm.xlu0 %913, %v832
  %v915 = vpop.permute.xlu0 %914
  %918 = vset.pattern.permute.xlu0 0
  %919 = vperm.xlu0 %918, %v833
  %v920 = vpop.permute.xlu0 %919
  %923 = vset.pattern.permute.xlu0 0
  %924 = vperm.xlu0 %923, %v834
  %v925 = vpop.permute.xlu0 %924
  %928 = vset.pattern.permute.xlu0 0
  %929 = vperm.xlu0 %928, %v835
  %v930 = vpop.permute.xlu0 %929
  %933 = vset.pattern.permute.xlu0 0
  %934 = vperm.xlu0 %933, %v836
  %v935 = vpop.permute.xlu0 %934
  %938 = vset.pattern.permute.xlu0 0
  %939 = vperm.xlu0 %938, %v837
  %v940 = vpop.permute.xlu0 %939
  %943 = vset.pattern.permute.xlu0 0
  %944 = vperm.xlu0 %943, %v838
  %v945 = vpop.permute.xlu0 %944
  %948 = vset.pattern.permute.xlu0 0
  %949 = vperm.xlu0 %948, %v839
  %v950 = vpop.permute.xlu0 %949
  %953 = vset.pattern.permute.xlu0 0
  %954 = vperm.xlu0 %953, %v840
  %v955 = vpop.permute.xlu0 %954
  %958 = vset.pattern.permute.xlu0 0
  %959 = vperm.xlu0 %958, %v841
  %v960 = vpop.permute.xlu0 %959
  %963 = vset.pattern.permute.xlu0 0
  %964 = vperm.xlu0 %963, %v842
  %v965 = vpop.permute.xlu0 %964
  %968 = vset.pattern.permute.xlu0 0
  %969 = vperm.xlu0 %968, %v843
  %v970 = vpop.permute.xlu0 %969
  %973 = vset.pattern.permute.xlu0 0
  %974 = vperm.xlu0 %973, %v844
  %v975 = vpop.permute.xlu0 %974
  %978 = vset.pattern.permute.xlu0 0
  %979 = vperm.xlu0 %978, %v845
  %v980 = vpop.permute.xlu0 %979
  %983 = vset.pattern.permute.xlu0 0
  %984 = vperm.xlu0 %983, %v846
  %v985 = vpop.permute.xlu0 %984
  %988 = vset.pattern.permute.xlu0 0
  %989 = vperm.xlu0 %988, %v847
  %v990 = vpop.permute.xlu0 %989
  %993 = vset.pattern.permute.xlu0 0
  %994 = vperm.xlu0 %993, %v848
  %v995 = vpop.permute.xlu0 %994
  %998 = vset.pattern.permute.xlu0 0
  %999 = vperm.xlu0 %998, %v849
  %v1000 = vpop.permute.xlu0 %999
  %1003 = vset.pattern.permute.xlu0 0
  %1004 = vperm.xlu0 %1003, %v850
  %v1005 = vpop.permute.xlu0 %1004
  %1008 = vset.pattern.permute.xlu0 0
  %1009 = vperm.xlu0 %1008, %v851
  %v1010 = vpop.permute.xlu0 %1009
  %v1012 = vlaneseq
  %v1013 = vshrl.u32 %v1012, 7
  %v1014 = vsub.s32 3, %v1013
  %v1015 = vrot.slane %v38, %v1014
  %v1016 = vmul.f32 %v855, %v1015
  %v1017 = vmul.f32 %v860, %v1015
  %v1018 = vmul.f32 %v865, %v1015
  %v1019 = vmul.f32 %v870, %v1015
  %v1020 = vmul.f32 %v875, %v1015
  %v1021 = vmul.f32 %v880, %v1015
  %v1022 = vmul.f32 %v885, %v1015
  %v1023 = vmul.f32 %v890, %v1015
  %v1024 = vmul.f32 %v895, %v1015
  %v1025 = vmul.f32 %v900, %v1015
  %v1026 = vmul.f32 %v905, %v1015
  %v1027 = vmul.f32 %v910, %v1015
  %v1028 = vmul.f32 %v915, %v1015
  %v1029 = vmul.f32 %v920, %v1015
  %v1030 = vmul.f32 %v925, %v1015
  %v1031 = vmul.f32 %v930, %v1015
  %v1032 = vmul.f32 %v935, %v1015
  %v1033 = vmul.f32 %v940, %v1015
  %v1034 = vmul.f32 %v945, %v1015
  %v1035 = vmul.f32 %v950, %v1015
  %v1036 = vmul.f32 %v955, %v1015
  %v1037 = vmul.f32 %v960, %v1015
  %v1038 = vmul.f32 %v965, %v1015
  %v1039 = vmul.f32 %v970, %v1015
  %v1040 = vmul.f32 %v975, %v1015
  %v1041 = vmul.f32 %v980, %v1015
  %v1042 = vmul.f32 %v985, %v1015
  %v1043 = vmul.f32 %v990, %v1015
  %v1044 = vmul.f32 %v995, %v1015
  %v1045 = vmul.f32 %v1000, %v1015
  %v1046 = vmul.f32 %v1005, %v1015
  %v1047 = vmul.f32 %v1010, %v1015
  %v1048 = vadd.f32 %v788, %v1016
  %v1049 = vadd.f32 %v789, %v1017
  %v1050 = vadd.f32 %v790, %v1018
  %v1051 = vadd.f32 %v791, %v1019
  %v1052 = vadd.f32 %v792, %v1020
  %v1053 = vadd.f32 %v793, %v1021
  %v1054 = vadd.f32 %v794, %v1022
  %v1055 = vadd.f32 %v795, %v1023
  %v1056 = vadd.f32 %v796, %v1024
  %v1057 = vadd.f32 %v797, %v1025
  %v1058 = vadd.f32 %v798, %v1026
  %v1059 = vadd.f32 %v799, %v1027
  %v1060 = vadd.f32 %v800, %v1028
  %v1061 = vadd.f32 %v801, %v1029
  %v1062 = vadd.f32 %v802, %v1030
  %v1063 = vadd.f32 %v803, %v1031
  %v1064 = vadd.f32 %v804, %v1032
  %v1065 = vadd.f32 %v805, %v1033
  %v1066 = vadd.f32 %v806, %v1034
  %v1067 = vadd.f32 %v807, %v1035
  %v1068 = vadd.f32 %v808, %v1036
  %v1069 = vadd.f32 %v809, %v1037
  %v1070 = vadd.f32 %v810, %v1038
  %v1071 = vadd.f32 %v811, %v1039
  %v1072 = vadd.f32 %v812, %v1040
  %v1073 = vadd.f32 %v813, %v1041
  %v1074 = vadd.f32 %v814, %v1042
  %v1075 = vadd.f32 %v815, %v1043
  %v1076 = vadd.f32 %v816, %v1044
  %v1077 = vadd.f32 %v817, %v1045
  %v1078 = vadd.f32 %v818, %v1046
  %v1079 = vadd.f32 %v819, %v1047
  %v1080 = vld [vmem:[%s0 + $0x4] sm:$0xff]
  %v1081 = vld [vmem:[%s0 + $0xc] sm:$0xff]
  %v1082 = vld [vmem:[%s0 + $0x14] sm:$0xff]
  %v1083 = vld [vmem:[%s0 + $0x1c] sm:$0xff]
  %v1084 = vld [vmem:[%s0 + $0x24] sm:$0xff]
  %v1085 = vld [vmem:[%s0 + $0x2c] sm:$0xff]
  %v1086 = vld [vmem:[%s0 + $0x34] sm:$0xff]
  %v1087 = vld [vmem:[%s0 + $0x3c] sm:$0xff]
  %v1088 = vld [vmem:[%s0 + $0x44] sm:$0xff]
  %v1089 = vld [vmem:[%s0 + $0x4c] sm:$0xff]
  %v1090 = vld [vmem:[%s0 + $0x54] sm:$0xff]
  %v1091 = vld [vmem:[%s0 + $0x5c] sm:$0xff]
  %v1092 = vld [vmem:[%s0 + $0x64] sm:$0xff]
  %v1093 = vld [vmem:[%s0 + $0x6c] sm:$0xff]
  %v1094 = vld [vmem:[%s0 + $0x74] sm:$0xff]
  %v1095 = vld [vmem:[%s0 + $0x7c] sm:$0xff]
  %v1096 = vld [vmem:[%s0 + $0x8c] sm:$0xff]
  %v1097 = vld [vmem:[%s0 + $0x94] sm:$0xff]
  %v1098 = vld [vmem:[%s0 + $0x9c] sm:$0xff]
  %v1099 = vld [vmem:[%s0 + $0xa4] sm:$0xff]
  %v1100 = vld [vmem:[%s0 + $0xac] sm:$0xff]
  %v1101 = vld [vmem:[%s0 + $0xb4] sm:$0xff]
  %v1102 = vld [vmem:[%s0 + $0xbc] sm:$0xff]
  %v1103 = vld [vmem:[%s0 + $0xc4] sm:$0xff]
  %v1104 = vld [vmem:[%s0 + $0xcc] sm:$0xff]
  %v1105 = vld [vmem:[%s0 + $0xd4] sm:$0xff]
  %v1106 = vld [vmem:[%s0 + $0xdc] sm:$0xff]
  %v1107 = vld [vmem:[%s0 + $0xe4] sm:$0xff]
  %v1108 = vld [vmem:[%s0 + $0xec] sm:$0xff]
  %v1109 = vld [vmem:[%s0 + $0xf4] sm:$0xff]
  %v1110 = vld [vmem:[%s0 + $0xfc] sm:$0xff]
  %v1111 = vld [vmem:[%s0 + $0x104] sm:$0xff]
  %1113 = vset.pattern.permute.xlu0 0
  %1114 = vperm.xlu0 %1113, %v1080
  %v1115 = vpop.permute.xlu0 %1114
  %1118 = vset.pattern.permute.xlu0 0
  %1119 = vperm.xlu0 %1118, %v1081
  %v1120 = vpop.permute.xlu0 %1119
  %1123 = vset.pattern.permute.xlu0 0
  %1124 = vperm.xlu0 %1123, %v1082
  %v1125 = vpop.permute.xlu0 %1124
  %1128 = vset.pattern.permute.xlu0 0
  %1129 = vperm.xlu0 %1128, %v1083
  %v1130 = vpop.permute.xlu0 %1129
  %1133 = vset.pattern.permute.xlu0 0
  %1134 = vperm.xlu0 %1133, %v1084
  %v1135 = vpop.permute.xlu0 %1134
  %1138 = vset.pattern.permute.xlu0 0
  %1139 = vperm.xlu0 %1138, %v1085
  %v1140 = vpop.permute.xlu0 %1139
  %1143 = vset.pattern.permute.xlu0 0
  %1144 = vperm.xlu0 %1143, %v1086
  %v1145 = vpop.permute.xlu0 %1144
  %1148 = vset.pattern.permute.xlu0 0
  %1149 = vperm.xlu0 %1148, %v1087
  %v1150 = vpop.permute.xlu0 %1149
  %1153 = vset.pattern.permute.xlu0 0
  %1154 = vperm.xlu0 %1153, %v1088
  %v1155 = vpop.permute.xlu0 %1154
  %1158 = vset.pattern.permute.xlu0 0
  %1159 = vperm.xlu0 %1158, %v1089
  %v1160 = vpop.permute.xlu0 %1159
  %1163 = vset.pattern.permute.xlu0 0
  %1164 = vperm.xlu0 %1163, %v1090
  %v1165 = vpop.permute.xlu0 %1164
  %1168 = vset.pattern.permute.xlu0 0
  %1169 = vperm.xlu0 %1168, %v1091
  %v1170 = vpop.permute.xlu0 %1169
  %1173 = vset.pattern.permute.xlu0 0
  %1174 = vperm.xlu0 %1173, %v1092
  %v1175 = vpop.permute.xlu0 %1174
  %1178 = vset.pattern.permute.xlu0 0
  %1179 = vperm.xlu0 %1178, %v1093
  %v1180 = vpop.permute.xlu0 %1179
  %1183 = vset.pattern.permute.xlu0 0
  %1184 = vperm.xlu0 %1183, %v1094
  %v1185 = vpop.permute.xlu0 %1184
  %1188 = vset.pattern.permute.xlu0 0
  %1189 = vperm.xlu0 %1188, %v1095
  %v1190 = vpop.permute.xlu0 %1189
  %1193 = vset.pattern.permute.xlu0 0
  %1194 = vperm.xlu0 %1193, %v1096
  %v1195 = vpop.permute.xlu0 %1194
  %1198 = vset.pattern.permute.xlu0 0
  %1199 = vperm.xlu0 %1198, %v1097
  %v1200 = vpop.permute.xlu0 %1199
  %1203 = vset.pattern.permute.xlu0 0
  %1204 = vperm.xlu0 %1203, %v1098
  %v1205 = vpop.permute.xlu0 %1204
  %1208 = vset.pattern.permute.xlu0 0
  %1209 = vperm.xlu0 %1208, %v1099
  %v1210 = vpop.permute.xlu0 %1209
  %1213 = vset.pattern.permute.xlu0 0
  %1214 = vperm.xlu0 %1213, %v1100
  %v1215 = vpop.permute.xlu0 %1214
  %1218 = vset.pattern.permute.xlu0 0
  %1219 = vperm.xlu0 %1218, %v1101
  %v1220 = vpop.permute.xlu0 %1219
  %1223 = vset.pattern.permute.xlu0 0
  %1224 = vperm.xlu0 %1223, %v1102
  %v1225 = vpop.permute.xlu0 %1224
  %1228 = vset.pattern.permute.xlu0 0
  %1229 = vperm.xlu0 %1228, %v1103
  %v1230 = vpop.permute.xlu0 %1229
  %1233 = vset.pattern.permute.xlu0 0
  %1234 = vperm.xlu0 %1233, %v1104
  %v1235 = vpop.permute.xlu0 %1234
  %1238 = vset.pattern.permute.xlu0 0
  %1239 = vperm.xlu0 %1238, %v1105
  %v1240 = vpop.permute.xlu0 %1239
  %1243 = vset.pattern.permute.xlu0 0
  %1244 = vperm.xlu0 %1243, %v1106
  %v1245 = vpop.permute.xlu0 %1244
  %1248 = vset.pattern.permute.xlu0 0
  %1249 = vperm.xlu0 %1248, %v1107
  %v1250 = vpop.permute.xlu0 %1249
  %1253 = vset.pattern.permute.xlu0 0
  %1254 = vperm.xlu0 %1253, %v1108
  %v1255 = vpop.permute.xlu0 %1254
  %1258 = vset.pattern.permute.xlu0 0
  %1259 = vperm.xlu0 %1258, %v1109
  %v1260 = vpop.permute.xlu0 %1259
  %1263 = vset.pattern.permute.xlu0 0
  %1264 = vperm.xlu0 %1263, %v1110
  %v1265 = vpop.permute.xlu0 %1264
  %1268 = vset.pattern.permute.xlu0 0
  %1269 = vperm.xlu0 %1268, %v1111
  %v1270 = vpop.permute.xlu0 %1269
  %v1272 = vlaneseq
  %v1273 = vshrl.u32 %v1272, 7
  %v1274 = vsub.s32 4, %v1273
  %v1275 = vrot.slane %v38, %v1274
  %v1276 = vmul.f32 %v1115, %v1275
  %v1277 = vmul.f32 %v1120, %v1275
  %v1278 = vmul.f32 %v1125, %v1275
  %v1279 = vmul.f32 %v1130, %v1275
  %v1280 = vmul.f32 %v1135, %v1275
  %v1281 = vmul.f32 %v1140, %v1275
  %v1282 = vmul.f32 %v1145, %v1275
  %v1283 = vmul.f32 %v1150, %v1275
  %v1284 = vmul.f32 %v1155, %v1275
  %v1285 = vmul.f32 %v1160, %v1275
  %v1286 = vmul.f32 %v1165, %v1275
  %v1287 = vmul.f32 %v1170, %v1275
  %v1288 = vmul.f32 %v1175, %v1275
  %v1289 = vmul.f32 %v1180, %v1275
  %v1290 = vmul.f32 %v1185, %v1275
  %v1291 = vmul.f32 %v1190, %v1275
  %v1292 = vmul.f32 %v1195, %v1275
  %v1293 = vmul.f32 %v1200, %v1275
  %v1294 = vmul.f32 %v1205, %v1275
  %v1295 = vmul.f32 %v1210, %v1275
  %v1296 = vmul.f32 %v1215, %v1275
  %v1297 = vmul.f32 %v1220, %v1275
  %v1298 = vmul.f32 %v1225, %v1275
  %v1299 = vmul.f32 %v1230, %v1275
  %v1300 = vmul.f32 %v1235, %v1275
  %v1301 = vmul.f32 %v1240, %v1275
  %v1302 = vmul.f32 %v1245, %v1275
  %v1303 = vmul.f32 %v1250, %v1275
  %v1304 = vmul.f32 %v1255, %v1275
  %v1305 = vmul.f32 %v1260, %v1275
  %v1306 = vmul.f32 %v1265, %v1275
  %v1307 = vmul.f32 %v1270, %v1275
  %v1308 = vadd.f32 %v1048, %v1276
  %v1309 = vadd.f32 %v1049, %v1277
  %v1310 = vadd.f32 %v1050, %v1278
  %v1311 = vadd.f32 %v1051, %v1279
  %v1312 = vadd.f32 %v1052, %v1280
  %v1313 = vadd.f32 %v1053, %v1281
  %v1314 = vadd.f32 %v1054, %v1282
  %v1315 = vadd.f32 %v1055, %v1283
  %v1316 = vadd.f32 %v1056, %v1284
  %v1317 = vadd.f32 %v1057, %v1285
  %v1318 = vadd.f32 %v1058, %v1286
  %v1319 = vadd.f32 %v1059, %v1287
  %v1320 = vadd.f32 %v1060, %v1288
  %v1321 = vadd.f32 %v1061, %v1289
  %v1322 = vadd.f32 %v1062, %v1290
  %v1323 = vadd.f32 %v1063, %v1291
  %v1324 = vadd.f32 %v1064, %v1292
  %v1325 = vadd.f32 %v1065, %v1293
  %v1326 = vadd.f32 %v1066, %v1294
  %v1327 = vadd.f32 %v1067, %v1295
  %v1328 = vadd.f32 %v1068, %v1296
  %v1329 = vadd.f32 %v1069, %v1297
  %v1330 = vadd.f32 %v1070, %v1298
  %v1331 = vadd.f32 %v1071, %v1299
  %v1332 = vadd.f32 %v1072, %v1300
  %v1333 = vadd.f32 %v1073, %v1301
  %v1334 = vadd.f32 %v1074, %v1302
  %v1335 = vadd.f32 %v1075, %v1303
  %v1336 = vadd.f32 %v1076, %v1304
  %v1337 = vadd.f32 %v1077, %v1305
  %v1338 = vadd.f32 %v1078, %v1306
  %v1339 = vadd.f32 %v1079, %v1307
  %v1340 = vadd.f32 %v1308, %v39
  %v1341 = vadd.f32 %v1309, %v39
  %v1342 = vadd.f32 %v1310, %v39
  %v1343 = vadd.f32 %v1311, %v39
  %v1344 = vadd.f32 %v1312, %v39
  %v1345 = vadd.f32 %v1313, %v39
  %v1346 = vadd.f32 %v1314, %v39
  %v1347 = vadd.f32 %v1315, %v39
  %v1348 = vadd.f32 %v1316, %v39
  %v1349 = vadd.f32 %v1317, %v39
  %v1350 = vadd.f32 %v1318, %v39
  %v1351 = vadd.f32 %v1319, %v39
  %v1352 = vadd.f32 %v1320, %v39
  %v1353 = vadd.f32 %v1321, %v39
  %v1354 = vadd.f32 %v1322, %v39
  %v1355 = vadd.f32 %v1323, %v39
  %v1356 = vadd.f32 %v1324, %v39
  %v1357 = vadd.f32 %v1325, %v39
  %v1358 = vadd.f32 %v1326, %v39
  %v1359 = vadd.f32 %v1327, %v39
  %v1360 = vadd.f32 %v1328, %v39
  %v1361 = vadd.f32 %v1329, %v39
  %v1362 = vadd.f32 %v1330, %v39
  %v1363 = vadd.f32 %v1331, %v39
  %v1364 = vadd.f32 %v1332, %v39
  %v1365 = vadd.f32 %v1333, %v39
  %v1366 = vadd.f32 %v1334, %v39
  %v1367 = vadd.f32 %v1335, %v39
  %v1368 = vadd.f32 %v1336, %v39
  %v1369 = vadd.f32 %v1337, %v39
  %v1370 = vadd.f32 %v1338, %v39
  %v1371 = vadd.f32 %v1339, %v39
  %v1372 = vmax.f32 %v1340, 0.0
  %v1373 = vmax.f32 %v1341, 0.0
  %v1374 = vmax.f32 %v1342, 0.0
  %v1375 = vmax.f32 %v1343, 0.0
  %v1376 = vmax.f32 %v1344, 0.0
  %v1377 = vmax.f32 %v1345, 0.0
  %v1378 = vmax.f32 %v1346, 0.0
  %v1379 = vmax.f32 %v1347, 0.0
  %v1380 = vmax.f32 %v1348, 0.0
  %v1381 = vmax.f32 %v1349, 0.0
  %v1382 = vmax.f32 %v1350, 0.0
  %v1383 = vmax.f32 %v1351, 0.0
  %v1384 = vmax.f32 %v1352, 0.0
  %v1385 = vmax.f32 %v1353, 0.0
  %v1386 = vmax.f32 %v1354, 0.0
  %v1387 = vmax.f32 %v1355, 0.0
  %v1388 = vmax.f32 %v1356, 0.0
  %v1389 = vmax.f32 %v1357, 0.0
  %v1390 = vmax.f32 %v1358, 0.0
  %v1391 = vmax.f32 %v1359, 0.0
  %v1392 = vmax.f32 %v1360, 0.0
  %v1393 = vmax.f32 %v1361, 0.0
  %v1394 = vmax.f32 %v1362, 0.0
  %v1395 = vmax.f32 %v1363, 0.0
  %v1396 = vmax.f32 %v1364, 0.0
  %v1397 = vmax.f32 %v1365, 0.0
  %v1398 = vmax.f32 %v1366, 0.0
  %v1399 = vmax.f32 %v1367, 0.0
  %v1400 = vmax.f32 %v1368, 0.0
  %v1401 = vmax.f32 %v1369, 0.0
  %v1402 = vmax.f32 %v1370, 0.0
  %v1403 = vmax.f32 %v1371, 0.0
  %v1404 = vmul.f32 %v1372, %v40
  %v1405 = vmul.f32 %v1373, %v40
  %v1406 = vmul.f32 %v1374, %v40
  %v1407 = vmul.f32 %v1375, %v40
  %v1408 = vmul.f32 %v1376, %v40
  %v1409 = vmul.f32 %v1377, %v40
  %v1410 = vmul.f32 %v1378, %v40
  %v1411 = vmul.f32 %v1379, %v40
  %v1412 = vmul.f32 %v1380, %v40
  %v1413 = vmul.f32 %v1381, %v40
  %v1414 = vmul.f32 %v1382, %v40
  %v1415 = vmul.f32 %v1383, %v40
  %v1416 = vmul.f32 %v1384, %v40
  %v1417 = vmul.f32 %v1385, %v40
  %v1418 = vmul.f32 %v1386, %v40
  %v1419 = vmul.f32 %v1387, %v40
  %v1420 = vmul.f32 %v1388, %v40
  %v1421 = vmul.f32 %v1389, %v40
  %v1422 = vmul.f32 %v1390, %v40
  %v1423 = vmul.f32 %v1391, %v40
  %v1424 = vmul.f32 %v1392, %v40
  %v1425 = vmul.f32 %v1393, %v40
  %v1426 = vmul.f32 %v1394, %v40
  %v1427 = vmul.f32 %v1395, %v40
  %v1428 = vmul.f32 %v1396, %v40
  %v1429 = vmul.f32 %v1397, %v40
  %v1430 = vmul.f32 %v1398, %v40
  %v1431 = vmul.f32 %v1399, %v40
  %v1432 = vmul.f32 %v1400, %v40
  %v1433 = vmul.f32 %v1401, %v40
  %v1434 = vmul.f32 %v1402, %v40
  %v1435 = vmul.f32 %v1403, %v40
  %v1436 = vadd.f32 %v1404, %v41
  %v1437 = vadd.f32 %v1405, %v41
  %v1438 = vadd.f32 %v1406, %v41
  %v1439 = vadd.f32 %v1407, %v41
  %v1440 = vadd.f32 %v1408, %v41
  %v1441 = vadd.f32 %v1409, %v41
  %v1442 = vadd.f32 %v1410, %v41
  %v1443 = vadd.f32 %v1411, %v41
  %v1444 = vadd.f32 %v1412, %v41
  %v1445 = vadd.f32 %v1413, %v41
  %v1446 = vadd.f32 %v1414, %v41
  %v1447 = vadd.f32 %v1415, %v41
  %v1448 = vadd.f32 %v1416, %v41
  %v1449 = vadd.f32 %v1417, %v41
  %v1450 = vadd.f32 %v1418, %v41
  %v1451 = vadd.f32 %v1419, %v41
  %v1452 = vadd.f32 %v1420, %v41
  %v1453 = vadd.f32 %v1421, %v41
  %v1454 = vadd.f32 %v1422, %v41
  %v1455 = vadd.f32 %v1423, %v41
  %v1456 = vadd.f32 %v1424, %v41
  %v1457 = vadd.f32 %v1425, %v41
  %v1458 = vadd.f32 %v1426, %v41
  %v1459 = vadd.f32 %v1427, %v41
  %v1460 = vadd.f32 %v1428, %v41
  %v1461 = vadd.f32 %v1429, %v41
  %v1462 = vadd.f32 %v1430, %v41
  %v1463 = vadd.f32 %v1431, %v41
  %v1464 = vadd.f32 %v1432, %v41
  %v1465 = vadd.f32 %v1433, %v41
  %v1466 = vadd.f32 %v1434, %v41
  %v1467 = vadd.f32 %v1435, %v41
  %vm1500 = vcmask 1041408
  %v1501 = vrot.slane %v1436, 6
  %v1502 = vrot.slane %v1437, 6
  %v1503 = vsel %vm1500, %v1501, %v1502
  %v1504 = vrot.slane %v1438, 6
  %v1505 = vsel %vm1500, %v1502, %v1504
  %v1506 = vrot.slane %v1439, 6
  %v1507 = vsel %vm1500, %v1504, %v1506
  %v1508 = vrot.slane %v1440, 6
  %v1509 = vsel %vm1500, %v1506, %v1508
  %v1510 = vrot.slane %v1441, 6
  %v1511 = vsel %vm1500, %v1508, %v1510
  %v1512 = vrot.slane %v1442, 6
  %v1513 = vsel %vm1500, %v1510, %v1512
  %v1514 = vrot.slane %v1443, 6
  %v1515 = vsel %vm1500, %v1512, %v1514
  %v1516 = vrot.slane %v1444, 6
  %v1517 = vsel %vm1500, %v1514, %v1516
  %v1518 = vrot.slane %v1445, 6
  %v1519 = vsel %vm1500, %v1516, %v1518
  %v1520 = vrot.slane %v1446, 6
  %v1521 = vsel %vm1500, %v1518, %v1520
  %v1522 = vrot.slane %v1447, 6
  %v1523 = vsel %vm1500, %v1520, %v1522
  %v1524 = vrot.slane %v1448, 6
  %v1525 = vsel %vm1500, %v1522, %v1524
  %v1526 = vrot.slane %v1449, 6
  %v1527 = vsel %vm1500, %v1524, %v1526
  %v1528 = vrot.slane %v1450, 6
  %v1529 = vsel %vm1500, %v1526, %v1528
  %v1530 = vrot.slane %v1451, 6
  %v1531 = vsel %vm1500, %v1528, %v1530
  %v1532 = vrot.slane %v1452, 6
  %v1533 = vrot.slane %v1453, 6
  %v1534 = vsel %vm1500, %v1532, %v1533
  %v1535 = vrot.slane %v1454, 6
  %v1536 = vsel %vm1500, %v1533, %v1535
  %v1537 = vrot.slane %v1455, 6
  %v1538 = vsel %vm1500, %v1535, %v1537
  %v1539 = vrot.slane %v1456, 6
  %v1540 = vsel %vm1500, %v1537, %v1539
  %v1541 = vrot.slane %v1457, 6
  %v1542 = vsel %vm1500, %v1539, %v1541
  %v1543 = vrot.slane %v1458, 6
  %v1544 = vsel %vm1500, %v1541, %v1543
  %v1545 = vrot.slane %v1459, 6
  %v1546 = vsel %vm1500, %v1543, %v1545
  %v1547 = vrot.slane %v1460, 6
  %v1548 = vsel %vm1500, %v1545, %v1547
  %v1549 = vrot.slane %v1461, 6
  %v1550 = vsel %vm1500, %v1547, %v1549
  %v1551 = vrot.slane %v1462, 6
  %v1552 = vsel %vm1500, %v1549, %v1551
  %v1553 = vrot.slane %v1463, 6
  %v1554 = vsel %vm1500, %v1551, %v1553
  %v1555 = vrot.slane %v1464, 6
  %v1556 = vsel %vm1500, %v1553, %v1555
  %v1557 = vrot.slane %v1465, 6
  %v1558 = vsel %vm1500, %v1555, %v1557
  %v1559 = vrot.slane %v1466, 6
  %v1560 = vsel %vm1500, %v1557, %v1559
  %v1561 = vrot.slane %v1467, 6
  %v1562 = vsel %vm1500, %v1559, %v1561
  %vm1595 = vcmask 261122
  %1596 = vst.msk [vmem:[#allocation3] sm:$0xfc] %vm1595, %v1501
  %vm1597 = vcmask 261120
  %1598 = vst.msk [vmem:[#allocation3 + $0x10] sm:$0xff] %vm1597, %v1503
  %1599 = vst.msk [vmem:[#allocation3 + $0x20] sm:$0xff] %vm1597, %v1505
  %1600 = vst.msk [vmem:[#allocation3 + $0x30] sm:$0xff] %vm1597, %v1507
  %1601 = vst.msk [vmem:[#allocation3 + $0x40] sm:$0xff] %vm1597, %v1509
  %1602 = vst.msk [vmem:[#allocation3 + $0x50] sm:$0xff] %vm1597, %v1511
  %1603 = vst.msk [vmem:[#allocation3 + $0x60] sm:$0xff] %vm1597, %v1513
  %1604 = vst.msk [vmem:[#allocation3 + $0x70] sm:$0xff] %vm1597, %v1515
  %1605 = vst.msk [vmem:[#allocation3 + $0x80] sm:$0xff] %vm1597, %v1517
  %1606 = vst.msk [vmem:[#allocation3 + $0x90] sm:$0xff] %vm1597, %v1519
  %1607 = vst.msk [vmem:[#allocation3 + $0xa0] sm:$0xff] %vm1597, %v1521
  %1608 = vst.msk [vmem:[#allocation3 + $0xb0] sm:$0xff] %vm1597, %v1523
  %1609 = vst.msk [vmem:[#allocation3 + $0xc0] sm:$0xff] %vm1597, %v1525
  %1610 = vst.msk [vmem:[#allocation3 + $0xd0] sm:$0xff] %vm1597, %v1527
  %1611 = vst.msk [vmem:[#allocation3 + $0xe0] sm:$0xff] %vm1597, %v1529
  %1612 = vst.msk [vmem:[#allocation3 + $0xf0] sm:$0xff] %vm1597, %v1531
  %1613 = vst.msk [vmem:[#allocation3 + $0x100] sm:$0xfc] %vm1595, %v1532
  %1614 = vst.msk [vmem:[#allocation3 + $0x110] sm:$0xff] %vm1597, %v1534
  %1615 = vst.msk [vmem:[#allocation3 + $0x120] sm:$0xff] %vm1597, %v1536
  %1616 = vst.msk [vmem:[#allocation3 + $0x130] sm:$0xff] %vm1597, %v1538
  %1617 = vst.msk [vmem:[#allocation3 + $0x140] sm:$0xff] %vm1597, %v1540
  %1618 = vst.msk [vmem:[#allocation3 + $0x150] sm:$0xff] %vm1597, %v1542
  %1619 = vst.msk [vmem:[#allocation3 + $0x160] sm:$0xff] %vm1597, %v1544
  %1620 = vst.msk [vmem:[#allocation3 + $0x170] sm:$0xff] %vm1597, %v1546
  %1621 = vst.msk [vmem:[#allocation3 + $0x180] sm:$0xff] %vm1597, %v1548
  %1622 = vst.msk [vmem:[#allocation3 + $0x190] sm:$0xff] %vm1597, %v1550
  %1623 = vst.msk [vmem:[#allocation3 + $0x1a0] sm:$0xff] %vm1597, %v1552
  %1624 = vst.msk [vmem:[#allocation3 + $0x1b0] sm:$0xff] %vm1597, %v1554
  %1625 = vst.msk [vmem:[#allocation3 + $0x1c0] sm:$0xff] %vm1597, %v1556
  %1626 = vst.msk [vmem:[#allocation3 + $0x1d0] sm:$0xff] %vm1597, %v1558
  %1627 = vst.msk [vmem:[#allocation3 + $0x1e0] sm:$0xff] %vm1597, %v1560
  %1628 = vst.msk [vmem:[#allocation3 + $0x1f0] sm:$0xff] %vm1597, %v1562
  %vm1629 = vcmask 254976
  %1630 = vst.msk [vmem:[#allocation3] sm:$0x3] %vm1629, 0.0
  %1631 = vst.msk [vmem:[#allocation3 + $0x100] sm:$0x3] %vm1629, 0.0
  %vm1632 = vcmask 1040384
  %v1633 = vrot.slane %v1436, 7
  %v1634 = vrot.slane %v1437, 7
  %v1635 = vsel %vm1632, %v1633, %v1634
  %v1636 = vrot.slane %v1438, 7
  %v1637 = vsel %vm1632, %v1634, %v1636
  %v1638 = vrot.slane %v1439, 7
  %v1639 = vsel %vm1632, %v1636, %v1638
  %v1640 = vrot.slane %v1440, 7
  %v1641 = vsel %vm1632, %v1638, %v1640
  %v1642 = vrot.slane %v1441, 7
  %v1643 = vsel %vm1632, %v1640, %v1642
  %v1644 = vrot.slane %v1442, 7
  %v1645 = vsel %vm1632, %v1642, %v1644
  %v1646 = vrot.slane %v1443, 7
  %v1647 = vsel %vm1632, %v1644, %v1646
  %v1648 = vrot.slane %v1444, 7
  %v1649 = vsel %vm1632, %v1646, %v1648
  %v1650 = vrot.slane %v1445, 7
  %v1651 = vsel %vm1632, %v1648, %v1650
  %v1652 = vrot.slane %v1446, 7
  %v1653 = vsel %vm1632, %v1650, %v1652
  %v1654 = vrot.slane %v1447, 7
  %v1655 = vsel %vm1632, %v1652, %v1654
  %v1656 = vrot.slane %v1448, 7
  %v1657 = vsel %vm1632, %v1654, %v1656
  %v1658 = vrot.slane %v1449, 7
  %v1659 = vsel %vm1632, %v1656, %v1658
  %v1660 = vrot.slane %v1450, 7
  %v1661 = vsel %vm1632, %v1658, %v1660
  %v1662 = vrot.slane %v1451, 7
  %v1663 = vsel %vm1632, %v1660, %v1662
  %v1664 = vrot.slane %v1452, 7
  %v1665 = vrot.slane %v1453, 7
  %v1666 = vsel %vm1632, %v1664, %v1665
  %v1667 = vrot.slane %v1454, 7
  %v1668 = vsel %vm1632, %v1665, %v1667
  %v1669 = vrot.slane %v1455, 7
  %v1670 = vsel %vm1632, %v1667, %v1669
  %v1671 = vrot.slane %v1456, 7
  %v1672 = vsel %vm1632, %v1669, %v1671
  %v1673 = vrot.slane %v1457, 7
  %v1674 = vsel %vm1632, %v1671, %v1673
  %v1675 = vrot.slane %v1458, 7
  %v1676 = vsel %vm1632, %v1673, %v1675
  %v1677 = vrot.slane %v1459, 7
  %v1678 = vsel %vm1632, %v1675, %v1677
  %v1679 = vrot.slane %v1460, 7
  %v1680 = vsel %vm1632, %v1677, %v1679
  %v1681 = vrot.slane %v1461, 7
  %v1682 = vsel %vm1632, %v1679, %v1681
  %v1683 = vrot.slane %v1462, 7
  %v1684 = vsel %vm1632, %v1681, %v1683
  %v1685 = vrot.slane %v1463, 7
  %v1686 = vsel %vm1632, %v1683, %v1685
  %v1687 = vrot.slane %v1464, 7
  %v1688 = vsel %vm1632, %v1685, %v1687
  %v1689 = vrot.slane %v1465, 7
  %v1690 = vsel %vm1632, %v1687, %v1689
  %v1691 = vrot.slane %v1466, 7
  %v1692 = vsel %vm1632, %v1689, %v1691
  %v1693 = vrot.slane %v1467, 7
  %v1694 = vsel %vm1632, %v1691, %v1693
  %1695 = vrot.lane.b32.xlu0 %v1633, 32
  %v1696 = vpop.permute.xlu0 %1695
  %1697 = vrot.lane.b32.xlu0 %v1635, 32
  %v1698 = vpop.permute.xlu0 %1697
  %1699 = vrot.lane.b32.xlu0 %v1637, 32
  %v1700 = vpop.permute.xlu0 %1699
  %1701 = vrot.lane.b32.xlu0 %v1639, 32
  %v1702 = vpop.permute.xlu0 %1701
  %1703 = vrot.lane.b32.xlu0 %v1641, 32
  %v1704 = vpop.permute.xlu0 %1703
  %1705 = vrot.lane.b32.xlu0 %v1643, 32
  %v1706 = vpop.permute.xlu0 %1705
  %1707 = vrot.lane.b32.xlu0 %v1645, 32
  %v1708 = vpop.permute.xlu0 %1707
  %1709 = vrot.lane.b32.xlu0 %v1647, 32
  %v1710 = vpop.permute.xlu0 %1709
  %1711 = vrot.lane.b32.xlu0 %v1649, 32
  %v1712 = vpop.permute.xlu0 %1711
  %1713 = vrot.lane.b32.xlu0 %v1651, 32
  %v1714 = vpop.permute.xlu0 %1713
  %1715 = vrot.lane.b32.xlu0 %v1653, 32
  %v1716 = vpop.permute.xlu0 %1715
  %1717 = vrot.lane.b32.xlu0 %v1655, 32
  %v1718 = vpop.permute.xlu0 %1717
  %1719 = vrot.lane.b32.xlu0 %v1657, 32
  %v1720 = vpop.permute.xlu0 %1719
  %1721 = vrot.lane.b32.xlu0 %v1659, 32
  %v1722 = vpop.permute.xlu0 %1721
  %1723 = vrot.lane.b32.xlu0 %v1661, 32
  %v1724 = vpop.permute.xlu0 %1723
  %1725 = vrot.lane.b32.xlu0 %v1663, 32
  %v1726 = vpop.permute.xlu0 %1725
  %1727 = vrot.lane.b32.xlu0 %v1664, 32
  %v1728 = vpop.permute.xlu0 %1727
  %1729 = vrot.lane.b32.xlu0 %v1666, 32
  %v1730 = vpop.permute.xlu0 %1729
  %1731 = vrot.lane.b32.xlu0 %v1668, 32
  %v1732 = vpop.permute.xlu0 %1731
  %1733 = vrot.lane.b32.xlu0 %v1670, 32
  %v1734 = vpop.permute.xlu0 %1733
  %1735 = vrot.lane.b32.xlu0 %v1672, 32
  %v1736 = vpop.permute.xlu0 %1735
  %1737 = vrot.lane.b32.xlu0 %v1674, 32
  %v1738 = vpop.permute.xlu0 %1737
  %1739 = vrot.lane.b32.xlu0 %v1676, 32
  %v1740 = vpop.permute.xlu0 %1739
  %1741 = vrot.lane.b32.xlu0 %v1678, 32
  %v1742 = vpop.permute.xlu0 %1741
  %1743 = vrot.lane.b32.xlu0 %v1680, 32
  %v1744 = vpop.permute.xlu0 %1743
  %1745 = vrot.lane.b32.xlu0 %v1682, 32
  %v1746 = vpop.permute.xlu0 %1745
  %1747 = vrot.lane.b32.xlu0 %v1684, 32
  %v1748 = vpop.permute.xlu0 %1747
  %1749 = vrot.lane.b32.xlu0 %v1686, 32
  %v1750 = vpop.permute.xlu0 %1749
  %1751 = vrot.lane.b32.xlu0 %v1688, 32
  %v1752 = vpop.permute.xlu0 %1751
  %1753 = vrot.lane.b32.xlu0 %v1690, 32
  %v1754 = vpop.permute.xlu0 %1753
  %1755 = vrot.lane.b32.xlu0 %v1692, 32
  %v1756 = vpop.permute.xlu0 %1755
  %1757 = vrot.lane.b32.xlu0 %v1694, 32
  %v1758 = vpop.permute.xlu0 %1757
  %vm1791 = vcmask 523521
  %1792 = vst.msk [vmem:[#allocation3] sm:$0xfe] %vm1791, %v1696
  %vm1793 = vcmask 523520
  %1794 = vst.msk [vmem:[#allocation3 + $0x10] sm:$0xff] %vm1793, %v1698
  %1795 = vst.msk [vmem:[#allocation3 + $0x20] sm:$0xff] %vm1793, %v1700
  %1796 = vst.msk [vmem:[#allocation3 + $0x30] sm:$0xff] %vm1793, %v1702
  %1797 = vst.msk [vmem:[#allocation3 + $0x40] sm:$0xff] %vm1793, %v1704
  %1798 = vst.msk [vmem:[#allocation3 + $0x50] sm:$0xff] %vm1793, %v1706
  %1799 = vst.msk [vmem:[#allocation3 + $0x60] sm:$0xff] %vm1793, %v1708
  %1800 = vst.msk [vmem:[#allocation3 + $0x70] sm:$0xff] %vm1793, %v1710
  %1801 = vst.msk [vmem:[#allocation3 + $0x80] sm:$0xff] %vm1793, %v1712
  %1802 = vst.msk [vmem:[#allocation3 + $0x90] sm:$0xff] %vm1793, %v1714
  %1803 = vst.msk [vmem:[#allocation3 + $0xa0] sm:$0xff] %vm1793, %v1716
  %1804 = vst.msk [vmem:[#allocation3 + $0xb0] sm:$0xff] %vm1793, %v1718
  %1805 = vst.msk [vmem:[#allocation3 + $0xc0] sm:$0xff] %vm1793, %v1720
  %1806 = vst.msk [vmem:[#allocation3 + $0xd0] sm:$0xff] %vm1793, %v1722
  %1807 = vst.msk [vmem:[#allocation3 + $0xe0] sm:$0xff] %vm1793, %v1724
  %1808 = vst.msk [vmem:[#allocation3 + $0xf0] sm:$0xff] %vm1793, %v1726
  %1809 = vst.msk [vmem:[#allocation3 + $0x100] sm:$0xfe] %vm1791, %v1728
  %1810 = vst.msk [vmem:[#allocation3 + $0x110] sm:$0xff] %vm1793, %v1730
  %1811 = vst.msk [vmem:[#allocation3 + $0x120] sm:$0xff] %vm1793, %v1732
  %1812 = vst.msk [vmem:[#allocation3 + $0x130] sm:$0xff] %vm1793, %v1734
  %1813 = vst.msk [vmem:[#allocation3 + $0x140] sm:$0xff] %vm1793, %v1736
  %1814 = vst.msk [vmem:[#allocation3 + $0x150] sm:$0xff] %vm1793, %v1738
  %1815 = vst.msk [vmem:[#allocation3 + $0x160] sm:$0xff] %vm1793, %v1740
  %1816 = vst.msk [vmem:[#allocation3 + $0x170] sm:$0xff] %vm1793, %v1742
  %1817 = vst.msk [vmem:[#allocation3 + $0x180] sm:$0xff] %vm1793, %v1744
  %1818 = vst.msk [vmem:[#allocation3 + $0x190] sm:$0xff] %vm1793, %v1746
  %1819 = vst.msk [vmem:[#allocation3 + $0x1a0] sm:$0xff] %vm1793, %v1748
  %1820 = vst.msk [vmem:[#allocation3 + $0x1b0] sm:$0xff] %vm1793, %v1750
  %1821 = vst.msk [vmem:[#allocation3 + $0x1c0] sm:$0xff] %vm1793, %v1752
  %1822 = vst.msk [vmem:[#allocation3 + $0x1d0] sm:$0xff] %vm1793, %v1754
  %1823 = vst.msk [vmem:[#allocation3 + $0x1e0] sm:$0xff] %vm1793, %v1756
  %1824 = vst.msk [vmem:[#allocation3 + $0x1f0] sm:$0xff] %vm1793, %v1758
  %vm1825 = vcmask 516352
  %1826 = vst.msk [vmem:[#allocation3] sm:$0x1] %vm1825, 0.0
  %1827 = vst.msk [vmem:[#allocation3 + $0x100] sm:$0x1] %vm1825, 0.0
  %1828 = vrot.lane.b32.xlu0 %v1436, 64
  %v1829 = vpop.permute.xlu0 %1828
  %1830 = vrot.lane.b32.xlu0 %v1437, 64
  %v1831 = vpop.permute.xlu0 %1830
  %1832 = vrot.lane.b32.xlu0 %v1438, 64
  %v1833 = vpop.permute.xlu0 %1832
  %1834 = vrot.lane.b32.xlu0 %v1439, 64
  %v1835 = vpop.permute.xlu0 %1834
  %1836 = vrot.lane.b32.xlu0 %v1440, 64
  %v1837 = vpop.permute.xlu0 %1836
  %1838 = vrot.lane.b32.xlu0 %v1441, 64
  %v1839 = vpop.permute.xlu0 %1838
  %1840 = vrot.lane.b32.xlu0 %v1442, 64
  %v1841 = vpop.permute.xlu0 %1840
  %1842 = vrot.lane.b32.xlu0 %v1443, 64
  %v1843 = vpop.permute.xlu0 %1842
  %1844 = vrot.lane.b32.xlu0 %v1444, 64
  %v1845 = vpop.permute.xlu0 %1844
  %1846 = vrot.lane.b32.xlu0 %v1445, 64
  %v1847 = vpop.permute.xlu0 %1846
  %1848 = vrot.lane.b32.xlu0 %v1446, 64
  %v1849 = vpop.permute.xlu0 %1848
  %1850 = vrot.lane.b32.xlu0 %v1447, 64
  %v1851 = vpop.permute.xlu0 %1850
  %1852 = vrot.lane.b32.xlu0 %v1448, 64
  %v1853 = vpop.permute.xlu0 %1852
  %1854 = vrot.lane.b32.xlu0 %v1449, 64
  %v1855 = vpop.permute.xlu0 %1854
  %1856 = vrot.lane.b32.xlu0 %v1450, 64
  %v1857 = vpop.permute.xlu0 %1856
  %1858 = vrot.lane.b32.xlu0 %v1451, 64
  %v1859 = vpop.permute.xlu0 %1858
  %1860 = vrot.lane.b32.xlu0 %v1452, 64
  %v1861 = vpop.permute.xlu0 %1860
  %1862 = vrot.lane.b32.xlu0 %v1453, 64
  %v1863 = vpop.permute.xlu0 %1862
  %1864 = vrot.lane.b32.xlu0 %v1454, 64
  %v1865 = vpop.permute.xlu0 %1864
  %1866 = vrot.lane.b32.xlu0 %v1455, 64
  %v1867 = vpop.permute.xlu0 %1866
  %1868 = vrot.lane.b32.xlu0 %v1456, 64
  %v1869 = vpop.permute.xlu0 %1868
  %1870 = vrot.lane.b32.xlu0 %v1457, 64
  %v1871 = vpop.permute.xlu0 %1870
  %1872 = vrot.lane.b32.xlu0 %v1458, 64
  %v1873 = vpop.permute.xlu0 %1872
  %1874 = vrot.lane.b32.xlu0 %v1459, 64
  %v1875 = vpop.permute.xlu0 %1874
  %1876 = vrot.lane.b32.xlu0 %v1460, 64
  %v1877 = vpop.permute.xlu0 %1876
  %1878 = vrot.lane.b32.xlu0 %v1461, 64
  %v1879 = vpop.permute.xlu0 %1878
  %1880 = vrot.lane.b32.xlu0 %v1462, 64
  %v1881 = vpop.permute.xlu0 %1880
  %1882 = vrot.lane.b32.xlu0 %v1463, 64
  %v1883 = vpop.permute.xlu0 %1882
  %1884 = vrot.lane.b32.xlu0 %v1464, 64
  %v1885 = vpop.permute.xlu0 %1884
  %1886 = vrot.lane.b32.xlu0 %v1465, 64
  %v1887 = vpop.permute.xlu0 %1886
  %1888 = vrot.lane.b32.xlu0 %v1466, 64
  %v1889 = vpop.permute.xlu0 %1888
  %1890 = vrot.lane.b32.xlu0 %v1467, 64
  %v1891 = vpop.permute.xlu0 %1890
  %vm1924 = vcmask 785920
  %1925 = vst.msk [vmem:[#allocation3] sm:$0xff] %vm1924, %v1829
  %1926 = vst.msk [vmem:[#allocation3 + $0x10] sm:$0xff] %vm1924, %v1831
  %1927 = vst.msk [vmem:[#allocation3 + $0x20] sm:$0xff] %vm1924, %v1833
  %1928 = vst.msk [vmem:[#allocation3 + $0x30] sm:$0xff] %vm1924, %v1835
  %1929 = vst.msk [vmem:[#allocation3 + $0x40] sm:$0xff] %vm1924, %v1837
  %1930 = vst.msk [vmem:[#allocation3 + $0x50] sm:$0xff] %vm1924, %v1839
  %1931 = vst.msk [vmem:[#allocation3 + $0x60] sm:$0xff] %vm1924, %v1841
  %1932 = vst.msk [vmem:[#allocation3 + $0x70] sm:$0xff] %vm1924, %v1843
  %1933 = vst.msk [vmem:[#allocation3 + $0x80] sm:$0xff] %vm1924, %v1845
  %1934 = vst.msk [vmem:[#allocation3 + $0x90] sm:$0xff] %vm1924, %v1847
  %1935 = vst.msk [vmem:[#allocation3 + $0xa0] sm:$0xff] %vm1924, %v1849
  %1936 = vst.msk [vmem:[#allocation3 + $0xb0] sm:$0xff] %vm1924, %v1851
  %1937 = vst.msk [vmem:[#allocation3 + $0xc0] sm:$0xff] %vm1924, %v1853
  %1938 = vst.msk [vmem:[#allocation3 + $0xd0] sm:$0xff] %vm1924, %v1855
  %1939 = vst.msk [vmem:[#allocation3 + $0xe0] sm:$0xff] %vm1924, %v1857
  %1940 = vst.msk [vmem:[#allocation3 + $0xf0] sm:$0xff] %vm1924, %v1859
  %1941 = vst.msk [vmem:[#allocation3 + $0x100] sm:$0xff] %vm1924, %v1861
  %1942 = vst.msk [vmem:[#allocation3 + $0x110] sm:$0xff] %vm1924, %v1863
  %1943 = vst.msk [vmem:[#allocation3 + $0x120] sm:$0xff] %vm1924, %v1865
  %1944 = vst.msk [vmem:[#allocation3 + $0x130] sm:$0xff] %vm1924, %v1867
  %1945 = vst.msk [vmem:[#allocation3 + $0x140] sm:$0xff] %vm1924, %v1869
  %1946 = vst.msk [vmem:[#allocation3 + $0x150] sm:$0xff] %vm1924, %v1871
  %1947 = vst.msk [vmem:[#allocation3 + $0x160] sm:$0xff] %vm1924, %v1873
  %1948 = vst.msk [vmem:[#allocation3 + $0x170] sm:$0xff] %vm1924, %v1875
  %1949 = vst.msk [vmem:[#allocation3 + $0x180] sm:$0xff] %vm1924, %v1877
  %1950 = vst.msk [vmem:[#allocation3 + $0x190] sm:$0xff] %vm1924, %v1879
  %1951 = vst.msk [vmem:[#allocation3 + $0x1a0] sm:$0xff] %vm1924, %v1881
  %1952 = vst.msk [vmem:[#allocation3 + $0x1b0] sm:$0xff] %vm1924, %v1883
  %1953 = vst.msk [vmem:[#allocation3 + $0x1c0] sm:$0xff] %vm1924, %v1885
  %1954 = vst.msk [vmem:[#allocation3 + $0x1d0] sm:$0xff] %vm1924, %v1887
  %1955 = vst.msk [vmem:[#allocation3 + $0x1e0] sm:$0xff] %vm1924, %v1889
  %1956 = vst.msk [vmem:[#allocation3 + $0x1f0] sm:$0xff] %vm1924, %v1891
  %vm1957 = vcmask 1046528
  %v1958 = vrot.slane %v1436, 1
  %v1959 = vrot.slane %v1437, 1
  %v1960 = vsel %vm1957, %v1958, %v1959
  %v1961 = vrot.slane %v1438, 1
  %v1962 = vsel %vm1957, %v1959, %v1961
  %v1963 = vrot.slane %v1439, 1
  %v1964 = vsel %vm1957, %v1961, %v1963
  %v1965 = vrot.slane %v1440, 1
  %v1966 = vsel %vm1957, %v1963, %v1965
  %v1967 = vrot.slane %v1441, 1
  %v1968 = vsel %vm1957, %v1965, %v1967
  %v1969 = vrot.slane %v1442, 1
  %v1970 = vsel %vm1957, %v1967, %v1969
  %v1971 = vrot.slane %v1443, 1
  %v1972 = vsel %vm1957, %v1969, %v1971
  %v1973 = vrot.slane %v1444, 1
  %v1974 = vsel %vm1957, %v1971, %v1973
  %v1975 = vrot.slane %v1445, 1
  %v1976 = vsel %vm1957, %v1973, %v1975
  %v1977 = vrot.slane %v1446, 1
  %v1978 = vsel %vm1957, %v1975, %v1977
  %v1979 = vrot.slane %v1447, 1
  %v1980 = vsel %vm1957, %v1977, %v1979
  %v1981 = vrot.slane %v1448, 1
  %v1982 = vsel %vm1957, %v1979, %v1981
  %v1983 = vrot.slane %v1449, 1
  %v1984 = vsel %vm1957, %v1981, %v1983
  %v1985 = vrot.slane %v1450, 1
  %v1986 = vsel %vm1957, %v1983, %v1985
  %v1987 = vrot.slane %v1451, 1
  %v1988 = vsel %vm1957, %v1985, %v1987
  %v1989 = vrot.slane %v1452, 1
  %v1990 = vrot.slane %v1453, 1
  %v1991 = vsel %vm1957, %v1989, %v1990
  %v1992 = vrot.slane %v1454, 1
  %v1993 = vsel %vm1957, %v1990, %v1992
  %v1994 = vrot.slane %v1455, 1
  %v1995 = vsel %vm1957, %v1992, %v1994
  %v1996 = vrot.slane %v1456, 1
  %v1997 = vsel %vm1957, %v1994, %v1996
  %v1998 = vrot.slane %v1457, 1
  %v1999 = vsel %vm1957, %v1996, %v1998
  %v2000 = vrot.slane %v1458, 1
  %v2001 = vsel %vm1957, %v1998, %v2000
  %v2002 = vrot.slane %v1459, 1
  %v2003 = vsel %vm1957, %v2000, %v2002
  %v2004 = vrot.slane %v1460, 1
  %v2005 = vsel %vm1957, %v2002, %v2004
  %v2006 = vrot.slane %v1461, 1
  %v2007 = vsel %vm1957, %v2004, %v2006
  %v2008 = vrot.slane %v1462, 1
  %v2009 = vsel %vm1957, %v2006, %v2008
  %v2010 = vrot.slane %v1463, 1
  %v2011 = vsel %vm1957, %v2008, %v2010
  %v2012 = vrot.slane %v1464, 1
  %v2013 = vsel %vm1957, %v2010, %v2012
  %v2014 = vrot.slane %v1465, 1
  %v2015 = vsel %vm1957, %v2012, %v2014
  %v2016 = vrot.slane %v1466, 1
  %v2017 = vsel %vm1957, %v2014, %v2016
  %v2018 = vrot.slane %v1467, 1
  %v2019 = vsel %vm1957, %v2016, %v2018
  %2020 = vrot.lane.b32.xlu0 %v1960, 96
  %v2021 = vpop.permute.xlu0 %2020
  %2022 = vrot.lane.b32.xlu0 %v1962, 96
  %v2023 = vpop.permute.xlu0 %2022
  %2024 = vrot.lane.b32.xlu0 %v1964, 96
  %v2025 = vpop.permute.xlu0 %2024
  %2026 = vrot.lane.b32.xlu0 %v1966, 96
  %v2027 = vpop.permute.xlu0 %2026
  %2028 = vrot.lane.b32.xlu0 %v1968, 96
  %v2029 = vpop.permute.xlu0 %2028
  %2030 = vrot.lane.b32.xlu0 %v1970, 96
  %v2031 = vpop.permute.xlu0 %2030
  %2032 = vrot.lane.b32.xlu0 %v1972, 96
  %v2033 = vpop.permute.xlu0 %2032
  %2034 = vrot.lane.b32.xlu0 %v1974, 96
  %v2035 = vpop.permute.xlu0 %2034
  %2036 = vrot.lane.b32.xlu0 %v1976, 96
  %v2037 = vpop.permute.xlu0 %2036
  %2038 = vrot.lane.b32.xlu0 %v1978, 96
  %v2039 = vpop.permute.xlu0 %2038
  %2040 = vrot.lane.b32.xlu0 %v1980, 96
  %v2041 = vpop.permute.xlu0 %2040
  %2042 = vrot.lane.b32.xlu0 %v1982, 96
  %v2043 = vpop.permute.xlu0 %2042
  %2044 = vrot.lane.b32.xlu0 %v1984, 96
  %v2045 = vpop.permute.xlu0 %2044
  %2046 = vrot.lane.b32.xlu0 %v1986, 96
  %v2047 = vpop.permute.xlu0 %2046
  %2048 = vrot.lane.b32.xlu0 %v1988, 96
  %v2049 = vpop.permute.xlu0 %2048
  %2050 = vrot.lane.b32.xlu0 %v1987, 96
  %v2051 = vpop.permute.xlu0 %2050
  %2052 = vrot.lane.b32.xlu0 %v1991, 96
  %v2053 = vpop.permute.xlu0 %2052
  %2054 = vrot.lane.b32.xlu0 %v1993, 96
  %v2055 = vpop.permute.xlu0 %2054
  %2056 = vrot.lane.b32.xlu0 %v1995, 96
  %v2057 = vpop.permute.xlu0 %2056
  %2058 = vrot.lane.b32.xlu0 %v1997, 96
  %v2059 = vpop.permute.xlu0 %2058
  %2060 = vrot.lane.b32.xlu0 %v1999, 96
  %v2061 = vpop.permute.xlu0 %2060
  %2062 = vrot.lane.b32.xlu0 %v2001, 96
  %v2063 = vpop.permute.xlu0 %2062
  %2064 = vrot.lane.b32.xlu0 %v2003, 96
  %v2065 = vpop.permute.xlu0 %2064
  %2066 = vrot.lane.b32.xlu0 %v2005, 96
  %v2067 = vpop.permute.xlu0 %2066
  %2068 = vrot.lane.b32.xlu0 %v2007, 96
  %v2069 = vpop.permute.xlu0 %2068
  %2070 = vrot.lane.b32.xlu0 %v2009, 96
  %v2071 = vpop.permute.xlu0 %2070
  %2072 = vrot.lane.b32.xlu0 %v2011, 96
  %v2073 = vpop.permute.xlu0 %2072
  %2074 = vrot.lane.b32.xlu0 %v2013, 96
  %v2075 = vpop.permute.xlu0 %2074
  %2076 = vrot.lane.b32.xlu0 %v2015, 96
  %v2077 = vpop.permute.xlu0 %2076
  %2078 = vrot.lane.b32.xlu0 %v2017, 96
  %v2079 = vpop.permute.xlu0 %2078
  %2080 = vrot.lane.b32.xlu0 %v2019, 96
  %v2081 = vpop.permute.xlu0 %2080
  %2082 = vrot.lane.b32.xlu0 %v2018, 96
  %v2083 = vpop.permute.xlu0 %2082
  %vm2116 = vcmask 1048320
  %2117 = vst.msk [vmem:[#allocation3] sm:$0xff] %vm2116, %v2021
  %2118 = vst.msk [vmem:[#allocation3 + $0x10] sm:$0xff] %vm2116, %v2023
  %2119 = vst.msk [vmem:[#allocation3 + $0x20] sm:$0xff] %vm2116, %v2025
  %2120 = vst.msk [vmem:[#allocation3 + $0x30] sm:$0xff] %vm2116, %v2027
  %2121 = vst.msk [vmem:[#allocation3 + $0x40] sm:$0xff] %vm2116, %v2029
  %2122 = vst.msk [vmem:[#allocation3 + $0x50] sm:$0xff] %vm2116, %v2031
  %2123 = vst.msk [vmem:[#allocation3 + $0x60] sm:$0xff] %vm2116, %v2033
  %2124 = vst.msk [vmem:[#allocation3 + $0x70] sm:$0xff] %vm2116, %v2035
  %2125 = vst.msk [vmem:[#allocation3 + $0x80] sm:$0xff] %vm2116, %v2037
  %2126 = vst.msk [vmem:[#allocation3 + $0x90] sm:$0xff] %vm2116, %v2039
  %2127 = vst.msk [vmem:[#allocation3 + $0xa0] sm:$0xff] %vm2116, %v2041
  %2128 = vst.msk [vmem:[#allocation3 + $0xb0] sm:$0xff] %vm2116, %v2043
  %2129 = vst.msk [vmem:[#allocation3 + $0xc0] sm:$0xff] %vm2116, %v2045
  %2130 = vst.msk [vmem:[#allocation3 + $0xd0] sm:$0xff] %vm2116, %v2047
  %2131 = vst.msk [vmem:[#allocation3 + $0xe0] sm:$0xff] %vm2116, %v2049
  %vm2132 = vcmask 1047296
  %2133 = vst.msk [vmem:[#allocation3 + $0xf0] sm:$0x7f] %vm2132, %v2051
  %2134 = vst.msk [vmem:[#allocation3 + $0x100] sm:$0xff] %vm2116, %v2053
  %2135 = vst.msk [vmem:[#allocation3 + $0x110] sm:$0xff] %vm2116, %v2055
  %2136 = vst.msk [vmem:[#allocation3 + $0x120] sm:$0xff] %vm2116, %v2057
  %2137 = vst.msk [vmem:[#allocation3 + $0x130] sm:$0xff] %vm2116, %v2059
  %2138 = vst.msk [vmem:[#allocation3 + $0x140] sm:$0xff] %vm2116, %v2061
  %2139 = vst.msk [vmem:[#allocation3 + $0x150] sm:$0xff] %vm2116, %v2063
  %2140 = vst.msk [vmem:[#allocation3 + $0x160] sm:$0xff] %vm2116, %v2065
  %2141 = vst.msk [vmem:[#allocation3 + $0x170] sm:$0xff] %vm2116, %v2067
  %2142 = vst.msk [vmem:[#allocation3 + $0x180] sm:$0xff] %vm2116, %v2069
  %2143 = vst.msk [vmem:[#allocation3 + $0x190] sm:$0xff] %vm2116, %v2071
  %2144 = vst.msk [vmem:[#allocation3 + $0x1a0] sm:$0xff] %vm2116, %v2073
  %2145 = vst.msk [vmem:[#allocation3 + $0x1b0] sm:$0xff] %vm2116, %v2075
  %2146 = vst.msk [vmem:[#allocation3 + $0x1c0] sm:$0xff] %vm2116, %v2077
  %2147 = vst.msk [vmem:[#allocation3 + $0x1d0] sm:$0xff] %vm2116, %v2079
  %2148 = vst.msk [vmem:[#allocation3 + $0x1e0] sm:$0xff] %vm2116, %v2081
  %2149 = vst.msk [vmem:[#allocation3 + $0x1f0] sm:$0x7f] %vm2132, %v2083
  %vm2150 = vcmask 1041152
  %2151 = vst.msk [vmem:[#allocation3 + $0xf7] sm:$0x1] %vm2150, 0.0
  %2152 = vst.msk [vmem:[#allocation3 + $0x1f7] sm:$0x1] %vm2150, 0.0
  %vm2153 = vcmask 1045504
  %v2154 = vrot.slane %v1436, 2
  %v2155 = vrot.slane %v1437, 2
  %v2156 = vsel %vm2153, %v2154, %v2155
  %v2157 = vrot.slane %v1438, 2
  %v2158 = vsel %vm2153, %v2155, %v2157
  %v2159 = vrot.slane %v1439, 2
  %v2160 = vsel %vm2153, %v2157, %v2159
  %v2161 = vrot.slane %v1440, 2
  %v2162 = vsel %vm2153, %v2159, %v2161
  %v2163 = vrot.slane %v1441, 2
  %v2164 = vsel %vm2153, %v2161, %v2163
  %v2165 = vrot.slane %v1442, 2
  %v2166 = vsel %vm2153, %v2163, %v2165
  %v2167 = vrot.slane %v1443, 2
  %v2168 = vsel %vm2153, %v2165, %v2167
  %v2169 = vrot.slane %v1444, 2
  %v2170 = vsel %vm2153, %v2167, %v2169
  %v2171 = vrot.slane %v1445, 2
  %v2172 = vsel %vm2153, %v2169, %v2171
  %v2173 = vrot.slane %v1446, 2
  %v2174 = vsel %vm2153, %v2171, %v2173
  %v2175 = vrot.slane %v1447, 2
  %v2176 = vsel %vm2153, %v2173, %v2175
  %v2177 = vrot.slane %v1448, 2
  %v2178 = vsel %vm2153, %v2175, %v2177
  %v2179 = vrot.slane %v1449, 2
  %v2180 = vsel %vm2153, %v2177, %v2179
  %v2181 = vrot.slane %v1450, 2
  %v2182 = vsel %vm2153, %v2179, %v2181
  %v2183 = vrot.slane %v1451, 2
  %v2184 = vsel %vm2153, %v2181, %v2183
  %v2185 = vrot.slane %v1452, 2
  %v2186 = vrot.slane %v1453, 2
  %v2187 = vsel %vm2153, %v2185, %v2186
  %v2188 = vrot.slane %v1454, 2
  %v2189 = vsel %vm2153, %v2186, %v2188
  %v2190 = vrot.slane %v1455, 2
  %v2191 = vsel %vm2153, %v2188, %v2190
  %v2192 = vrot.slane %v1456, 2
  %v2193 = vsel %vm2153, %v2190, %v2192
  %v2194 = vrot.slane %v1457, 2
  %v2195 = vsel %vm2153, %v2192, %v2194
  %v2196 = vrot.slane %v1458, 2
  %v2197 = vsel %vm2153, %v2194, %v2196
  %v2198 = vrot.slane %v1459, 2
  %v2199 = vsel %vm2153, %v2196, %v2198
  %v2200 = vrot.slane %v1460, 2
  %v2201 = vsel %vm2153, %v2198, %v2200
  %v2202 = vrot.slane %v1461, 2
  %v2203 = vsel %vm2153, %v2200, %v2202
  %v2204 = vrot.slane %v1462, 2
  %v2205 = vsel %vm2153, %v2202, %v2204
  %v2206 = vrot.slane %v1463, 2
  %v2207 = vsel %vm2153, %v2204, %v2206
  %v2208 = vrot.slane %v1464, 2
  %v2209 = vsel %vm2153, %v2206, %v2208
  %v2210 = vrot.slane %v1465, 2
  %v2211 = vsel %vm2153, %v2208, %v2210
  %v2212 = vrot.slane %v1466, 2
  %v2213 = vsel %vm2153, %v2210, %v2212
  %v2214 = vrot.slane %v1467, 2
  %v2215 = vsel %vm2153, %v2212, %v2214
  %2248 = vst.msk [vmem:[#allocation3 + $0x8] sm:$0xff] %vm1597, %v2156
  %2249 = vst.msk [vmem:[#allocation3 + $0x18] sm:$0xff] %vm1597, %v2158
  %2250 = vst.msk [vmem:[#allocation3 + $0x28] sm:$0xff] %vm1597, %v2160
  %2251 = vst.msk [vmem:[#allocation3 + $0x38] sm:$0xff] %vm1597, %v2162
  %2252 = vst.msk [vmem:[#allocation3 + $0x48] sm:$0xff] %vm1597, %v2164
  %2253 = vst.msk [vmem:[#allocation3 + $0x58] sm:$0xff] %vm1597, %v2166
  %2254 = vst.msk [vmem:[#allocation3 + $0x68] sm:$0xff] %vm1597, %v2168
  %2255 = vst.msk [vmem:[#allocation3 + $0x78] sm:$0xff] %vm1597, %v2170
  %2256 = vst.msk [vmem:[#allocation3 + $0x88] sm:$0xff] %vm1597, %v2172
  %2257 = vst.msk [vmem:[#allocation3 + $0x98] sm:$0xff] %vm1597, %v2174
  %2258 = vst.msk [vmem:[#allocation3 + $0xa8] sm:$0xff] %vm1597, %v2176
  %2259 = vst.msk [vmem:[#allocation3 + $0xb8] sm:$0xff] %vm1597, %v2178
  %2260 = vst.msk [vmem:[#allocation3 + $0xc8] sm:$0xff] %vm1597, %v2180
  %2261 = vst.msk [vmem:[#allocation3 + $0xd8] sm:$0xff] %vm1597, %v2182
  %2262 = vst.msk [vmem:[#allocation3 + $0xe8] sm:$0xff] %vm1597, %v2184
  %vm2263 = vcmask 259072
  %2264 = vst.msk [vmem:[#allocation3 + $0xf8] sm:$0x3f] %vm2263, %v2183
  %2265 = vst.msk [vmem:[#allocation3 + $0x108] sm:$0xff] %vm1597, %v2187
  %2266 = vst.msk [vmem:[#allocation3 + $0x118] sm:$0xff] %vm1597, %v2189
  %2267 = vst.msk [vmem:[#allocation3 + $0x128] sm:$0xff] %vm1597, %v2191
  %2268 = vst.msk [vmem:[#allocation3 + $0x138] sm:$0xff] %vm1597, %v2193
  %2269 = vst.msk [vmem:[#allocation3 + $0x148] sm:$0xff] %vm1597, %v2195
  %2270 = vst.msk [vmem:[#allocation3 + $0x158] sm:$0xff] %vm1597, %v2197
  %2271 = vst.msk [vmem:[#allocation3 + $0x168] sm:$0xff] %vm1597, %v2199
  %2272 = vst.msk [vmem:[#allocation3 + $0x178] sm:$0xff] %vm1597, %v2201
  %2273 = vst.msk [vmem:[#allocation3 + $0x188] sm:$0xff] %vm1597, %v2203
  %2274 = vst.msk [vmem:[#allocation3 + $0x198] sm:$0xff] %vm1597, %v2205
  %2275 = vst.msk [vmem:[#allocation3 + $0x1a8] sm:$0xff] %vm1597, %v2207
  %2276 = vst.msk [vmem:[#allocation3 + $0x1b8] sm:$0xff] %vm1597, %v2209
  %2277 = vst.msk [vmem:[#allocation3 + $0x1c8] sm:$0xff] %vm1597, %v2211
  %2278 = vst.msk [vmem:[#allocation3 + $0x1d8] sm:$0xff] %vm1597, %v2213
  %2279 = vst.msk [vmem:[#allocation3 + $0x1e8] sm:$0xff] %vm1597, %v2215
  %2280 = vst.msk [vmem:[#allocation3 + $0x1f8] sm:$0x3f] %vm2263, %v2214
  %vm2281 = vcmask 261126
  %2282 = vst.msk [vmem:[#allocation3 + $0xf8] sm:$0xc0] %vm2281, 0.0
  %2283 = vst.msk [vmem:[#allocation3 + $0x1f8] sm:$0xc0] %vm2281, 0.0
  %v2284 = vld [vmem:[#allocation3] sm:$0xff]
  %v2285 = vld [vmem:[#allocation3 + $0x8] sm:$0xff]
  %v2286 = vld [vmem:[#allocation3 + $0x10] sm:$0xff]
  %v2287 = vld [vmem:[#allocation3 + $0x18] sm:$0xff]
  %v2288 = vld [vmem:[#allocation3 + $0x20] sm:$0xff]
  %v2289 = vld [vmem:[#allocation3 + $0x28] sm:$0xff]
  %v2290 = vld [vmem:[#allocation3 + $0x30] sm:$0xff]
  %v2291 = vld [vmem:[#allocation3 + $0x38] sm:$0xff]
  %v2292 = vld [vmem:[#allocation3 + $0x40] sm:$0xff]
  %v2293 = vld [vmem:[#allocation3 + $0x48] sm:$0xff]
  %v2294 = vld [vmem:[#allocation3 + $0x50] sm:$0xff]
  %v2295 = vld [vmem:[#allocation3 + $0x58] sm:$0xff]
  %v2296 = vld [vmem:[#allocation3 + $0x60] sm:$0xff]
  %v2297 = vld [vmem:[#allocation3 + $0x68] sm:$0xff]
  %v2298 = vld [vmem:[#allocation3 + $0x70] sm:$0xff]
  %v2299 = vld [vmem:[#allocation3 + $0x78] sm:$0xff]
  %v2300 = vld [vmem:[#allocation3 + $0x80] sm:$0xff]
  %v2301 = vld [vmem:[#allocation3 + $0x88] sm:$0xff]
  %v2302 = vld [vmem:[#allocation3 + $0x90] sm:$0xff]
  %v2303 = vld [vmem:[#allocation3 + $0x98] sm:$0xff]
  %v2304 = vld [vmem:[#allocation3 + $0xa0] sm:$0xff]
  %v2305 = vld [vmem:[#allocation3 + $0xa8] sm:$0xff]
  %v2306 = vld [vmem:[#allocation3 + $0xb0] sm:$0xff]
  %v2307 = vld [vmem:[#allocation3 + $0xb8] sm:$0xff]
  %v2308 = vld [vmem:[#allocation3 + $0xc0] sm:$0xff]
  %v2309 = vld [vmem:[#allocation3 + $0xc8] sm:$0xff]
  %v2310 = vld [vmem:[#allocation3 + $0xd0] sm:$0xff]
  %v2311 = vld [vmem:[#allocation3 + $0xd8] sm:$0xff]
  %v2312 = vld [vmem:[#allocation3 + $0xe0] sm:$0xff]
  %v2313 = vld [vmem:[#allocation3 + $0xe8] sm:$0xff]
  %v2314 = vld [vmem:[#allocation3 + $0xf0] sm:$0xff]
  %v2315 = vld [vmem:[#allocation3 + $0xf8] sm:$0xff]
  %v2316 = vld [vmem:[#allocation3 + $0x100] sm:$0xff]
  %v2317 = vld [vmem:[#allocation3 + $0x108] sm:$0xff]
  %v2318 = vld [vmem:[#allocation3 + $0x110] sm:$0xff]
  %v2319 = vld [vmem:[#allocation3 + $0x118] sm:$0xff]
  %v2320 = vld [vmem:[#allocation3 + $0x120] sm:$0xff]
  %v2321 = vld [vmem:[#allocation3 + $0x128] sm:$0xff]
  %v2322 = vld [vmem:[#allocation3 + $0x130] sm:$0xff]
  %v2323 = vld [vmem:[#allocation3 + $0x138] sm:$0xff]
  %v2324 = vld [vmem:[#allocation3 + $0x140] sm:$0xff]
  %v2325 = vld [vmem:[#allocation3 + $0x148] sm:$0xff]
  %v2326 = vld [vmem:[#allocation3 + $0x150] sm:$0xff]
  %v2327 = vld [vmem:[#allocation3 + $0x158] sm:$0xff]
  %v2328 = vld [vmem:[#allocation3 + $0x160] sm:$0xff]
  %v2329 = vld [vmem:[#allocation3 + $0x168] sm:$0xff]
  %v2330 = vld [vmem:[#allocation3 + $0x170] sm:$0xff]
  %v2331 = vld [vmem:[#allocation3 + $0x178] sm:$0xff]
  %v2332 = vld [vmem:[#allocation3 + $0x180] sm:$0xff]
  %v2333 = vld [vmem:[#allocation3 + $0x188] sm:$0xff]
  %v2334 = vld [vmem:[#allocation3 + $0x190] sm:$0xff]
  %v2335 = vld [vmem:[#allocation3 + $0x198] sm:$0xff]
  %v2336 = vld [vmem:[#allocation3 + $0x1a0] sm:$0xff]
  %v2337 = vld [vmem:[#allocation3 + $0x1a8] sm:$0xff]
  %v2338 = vld [vmem:[#allocation3 + $0x1b0] sm:$0xff]
  %v2339 = vld [vmem:[#allocation3 + $0x1b8] sm:$0xff]
  %v2340 = vld [vmem:[#allocation3 + $0x1c0] sm:$0xff]
  %v2341 = vld [vmem:[#allocation3 + $0x1c8] sm:$0xff]
  %v2342 = vld [vmem:[#allocation3 + $0x1d0] sm:$0xff]
  %v2343 = vld [vmem:[#allocation3 + $0x1d8] sm:$0xff]
  %v2344 = vld [vmem:[#allocation3 + $0x1e0] sm:$0xff]
  %v2345 = vld [vmem:[#allocation3 + $0x1e8] sm:$0xff]
  %v2346 = vld [vmem:[#allocation3 + $0x1f0] sm:$0xff]
  %v2347 = vld [vmem:[#allocation3 + $0x1f8] sm:$0xff]
  %v2349 = vsel %vm1597, %v2285, 0
  %v2352 = vsel %vm1597, %v2287, 0
  %v2355 = vsel %vm1597, %v2289, 0
  %v2358 = vsel %vm1597, %v2291, 0
  %v2361 = vsel %vm1597, %v2293, 0
  %v2364 = vsel %vm1597, %v2295, 0
  %v2367 = vsel %vm1597, %v2297, 0
  %v2370 = vsel %vm1597, %v2299, 0
  %v2373 = vsel %vm1597, %v2301, 0
  %v2376 = vsel %vm1597, %v2303, 0
  %v2379 = vsel %vm1597, %v2305, 0
  %v2382 = vsel %vm1597, %v2307, 0
  %v2385 = vsel %vm1597, %v2309, 0
  %v2388 = vsel %vm1597, %v2311, 0
  %v2391 = vsel %vm1597, %v2313, 0
  %v2394 = vsel %vm1597, %v2315, 0
  %v2397 = vsel %vm1597, %v2317, 0
  %v2400 = vsel %vm1597, %v2319, 0
  %v2403 = vsel %vm1597, %v2321, 0
  %v2406 = vsel %vm1597, %v2323, 0
  %v2409 = vsel %vm1597, %v2325, 0
  %v2412 = vsel %vm1597, %v2327, 0
  %v2415 = vsel %vm1597, %v2329, 0
  %v2418 = vsel %vm1597, %v2331, 0
  %v2421 = vsel %vm1597, %v2333, 0
  %v2424 = vsel %vm1597, %v2335, 0
  %v2427 = vsel %vm1597, %v2337, 0
  %v2430 = vsel %vm1597, %v2339, 0
  %v2433 = vsel %vm1597, %v2341, 0
  %v2436 = vsel %vm1597, %v2343, 0
  %v2439 = vsel %vm1597, %v2345, 0
  %v2442 = vsel %vm1597, %v2347, 0
  %2444 = vmatprep.subr.mxu0 0.0
  %2445 = vmatpush1.msra.mxu0 %v57
  %2446 = vmatprep.subr.mxu0 0.0
  %2447 = vmatpush1.msra.mxu0 %v56
  %2448 = vmatprep.subr.mxu0 0.0
  %2449 = vmatpush1.msra.mxu0 %v55
  %2450 = vmatprep.subr.mxu0 0.0
  %2451 = vmatpush1.msra.mxu0 %v54
  %2452 = vmatprep.subr.mxu0 0.0
  %2453 = vmatpush1.msra.mxu0 %v53
  %2454 = vmatprep.subr.mxu0 0.0
  %2455 = vmatpush1.msra.mxu0 %v52
  %2456 = vmatprep.subr.mxu0 0.0
  %2457 = vmatpush1.msra.mxu0 %v51
  %2458 = vmatprep.subr.mxu0 0.0
  %2459 = vmatpush1.msra.mxu0 %v50
  %2460 = vmatprep.subr.mxu0 0.0
  %2461 = vmatpush1.msra.mxu0 %v49
  %2462 = vmatprep.subr.mxu0 0.0
  %2463 = vmatpush1.msra.mxu0 %v48
  %2464 = vmatprep.subr.mxu0 0.0
  %2465 = vmatpush1.msra.mxu0 %v47
  %2466 = vmatprep.subr.mxu0 0.0
  %2467 = vmatpush1.msra.mxu0 %v46
  %2468 = vmatprep.subr.mxu0 0.0
  %2469 = vmatpush1.msra.mxu0 %v45
  %2470 = vmatprep.subr.mxu0 0.0
  %2471 = vmatpush1.msra.mxu0 %v44
  %2472 = vmatprep.subr.mxu0 0.0
  %2473 = vmatpush1.msra.mxu0 %v43
  %2474 = vmatprep.subr.mxu0 0.0
  %2475 = vmatpush1.msra.mxu0 %v42
  %2476 = vmatprep.subr.mxu0 0.0
  %2477 = vmatpush2.msra.mxu0 0.0
  %2478 = vmatprep.subr.mxu0 0.0
  %2479 = vmatpush2.msra.mxu0 0.0
  %2480 = vmatprep.subr.mxu0 0.0
  %2481 = vmatpush2.msra.mxu0 0.0
  %2482 = vmatprep.subr.mxu0 0.0
  %2483 = vmatpush2.msra.mxu0 0.0
  %2484 = vmatprep.subr.mxu0 0.0
  %2485 = vmatpush2.msra.mxu0 0.0
  %2486 = vmatprep.subr.mxu0 0.0
  %2487 = vmatpush2.msra.mxu0 0.0
  %2488 = vmatprep.subr.mxu0 0.0
  %2489 = vmatpush2.msra.mxu0 0.0
  %2490 = vmatprep.subr.mxu0 0.0
  %2491 = vmatpush2.msra.mxu0 0.0
  %2492 = vmatprep.subr.mxu0 0.0
  %2493 = vmatpush2.msra.mxu0 0.0
  %2494 = vmatprep.subr.mxu0 0.0
  %2495 = vmatpush2.msra.mxu0 0.0
  %2496 = vmatprep.subr.mxu0 0.0
  %2497 = vmatpush2.msra.mxu0 0.0
  %2498 = vmatprep.subr.mxu0 0.0
  %2499 = vmatpush2.msra.mxu0 0.0
  %2500 = vmatprep.subr.mxu0 0.0
  %2501 = vmatpush2.msra.mxu0 %v61
  %2502 = vmatprep.subr.mxu0 0.0
  %2503 = vmatpush2.msra.mxu0 %v60
  %2504 = vmatprep.subr.mxu0 0.0
  %2505 = vmatpush2.msra.mxu0 %v59
  %2506 = vmatprep.subr.mxu0 0.0
  %2507 = vmatpush2.msra.mxu0 %v58
  %2508 = vmatprep.mubr.f32.mxu0 %v2349
  %2509 = vmatmul.mubr.f32.gmra.mxu0 %v2284
  %v2510 = vpop.f32.mrf.mxu0
  %v2511 = vadd.f32 %v62, %v2510
  %v2512 = vpop.f32.mrf.mxu0
  %2513 = vmatprep.mubr.f32.mxu0 %v2352
  %2514 = vmatmul.mubr.f32.gmra.mxu0 %v2286
  %v2515 = vpop.f32.mrf.mxu0
  %v2516 = vadd.f32 %v62, %v2515
  %v2517 = vpop.f32.mrf.mxu0
  %2518 = vmatprep.mubr.f32.mxu0 %v2355
  %2519 = vmatmul.mubr.f32.gmra.mxu0 %v2288
  %v2520 = vpop.f32.mrf.mxu0
  %v2521 = vadd.f32 %v62, %v2520
  %v2522 = vpop.f32.mrf.mxu0
  %2523 = vmatprep.mubr.f32.mxu0 %v2358
  %2524 = vmatmul.mubr.f32.gmra.mxu0 %v2290
  %v2525 = vpop.f32.mrf.mxu0
  %v2526 = vadd.f32 %v62, %v2525
  %v2527 = vpop.f32.mrf.mxu0
  %2528 = vmatprep.mubr.f32.mxu0 %v2361
  %2529 = vmatmul.mubr.f32.gmra.mxu0 %v2292
  %v2530 = vpop.f32.mrf.mxu0
  %v2531 = vadd.f32 %v62, %v2530
  %v2532 = vpop.f32.mrf.mxu0
  %2533 = vmatprep.mubr.f32.mxu0 %v2364
  %2534 = vmatmul.mubr.f32.gmra.mxu0 %v2294
  %v2535 = vpop.f32.mrf.mxu0
  %v2536 = vadd.f32 %v62, %v2535
  %v2537 = vpop.f32.mrf.mxu0
  %2538 = vmatprep.mubr.f32.mxu0 %v2367
  %2539 = vmatmul.mubr.f32.gmra.mxu0 %v2296
  %v2540 = vpop.f32.mrf.mxu0
  %v2541 = vadd.f32 %v62, %v2540
  %v2542 = vpop.f32.mrf.mxu0
  %2543 = vmatprep.mubr.f32.mxu0 %v2370
  %2544 = vmatmul.mubr.f32.gmra.mxu0 %v2298
  %v2545 = vpop.f32.mrf.mxu0
  %v2546 = vadd.f32 %v62, %v2545
  %v2547 = vpop.f32.mrf.mxu0
  %2548 = vmatprep.mubr.f32.mxu0 %v2373
  %2549 = vmatmul.mubr.f32.gmra.mxu0 %v2300
  %v2550 = vpop.f32.mrf.mxu0
  %v2551 = vadd.f32 %v62, %v2550
  %v2552 = vpop.f32.mrf.mxu0
  %2553 = vmatprep.mubr.f32.mxu0 %v2376
  %2554 = vmatmul.mubr.f32.gmra.mxu0 %v2302
  %v2555 = vpop.f32.mrf.mxu0
  %v2556 = vadd.f32 %v62, %v2555
  %v2557 = vpop.f32.mrf.mxu0
  %2558 = vmatprep.mubr.f32.mxu0 %v2379
  %2559 = vmatmul.mubr.f32.gmra.mxu0 %v2304
  %v2560 = vpop.f32.mrf.mxu0
  %v2561 = vadd.f32 %v62, %v2560
  %v2562 = vpop.f32.mrf.mxu0
  %2563 = vmatprep.mubr.f32.mxu0 %v2382
  %2564 = vmatmul.mubr.f32.gmra.mxu0 %v2306
  %v2565 = vpop.f32.mrf.mxu0
  %v2566 = vadd.f32 %v62, %v2565
  %v2567 = vpop.f32.mrf.mxu0
  %2568 = vmatprep.mubr.f32.mxu0 %v2385
  %2569 = vmatmul.mubr.f32.gmra.mxu0 %v2308
  %v2570 = vpop.f32.mrf.mxu0
  %v2571 = vadd.f32 %v62, %v2570
  %v2572 = vpop.f32.mrf.mxu0
  %2573 = vmatprep.mubr.f32.mxu0 %v2388
  %2574 = vmatmul.mubr.f32.gmra.mxu0 %v2310
  %v2575 = vpop.f32.mrf.mxu0
  %v2576 = vadd.f32 %v62, %v2575
  %v2577 = vpop.f32.mrf.mxu0
  %2578 = vmatprep.mubr.f32.mxu0 %v2391
  %2579 = vmatmul.mubr.f32.gmra.mxu0 %v2312
  %v2580 = vpop.f32.mrf.mxu0
  %v2581 = vadd.f32 %v62, %v2580
  %v2582 = vpop.f32.mrf.mxu0
  %2583 = vmatprep.mubr.f32.mxu0 %v2394
  %2584 = vmatmul.mubr.f32.gmra.mxu0 %v2314
  %v2585 = vpop.f32.mrf.mxu0
  %v2586 = vadd.f32 %v62, %v2585
  %v2587 = vpop.f32.mrf.mxu0
  %2588 = vmatprep.mubr.f32.mxu0 %v2397
  %2589 = vmatmul.mubr.f32.gmra.mxu0 %v2316
  %v2590 = vpop.f32.mrf.mxu0
  %v2591 = vadd.f32 %v62, %v2590
  %v2592 = vpop.f32.mrf.mxu0
  %2593 = vmatprep.mubr.f32.mxu0 %v2400
  %2594 = vmatmul.mubr.f32.gmra.mxu0 %v2318
  %v2595 = vpop.f32.mrf.mxu0
  %v2596 = vadd.f32 %v62, %v2595
  %v2597 = vpop.f32.mrf.mxu0
  %2598 = vmatprep.mubr.f32.mxu0 %v2403
  %2599 = vmatmul.mubr.f32.gmra.mxu0 %v2320
  %v2600 = vpop.f32.mrf.mxu0
  %v2601 = vadd.f32 %v62, %v2600
  %v2602 = vpop.f32.mrf.mxu0
  %2603 = vmatprep.mubr.f32.mxu0 %v2406
  %2604 = vmatmul.mubr.f32.gmra.mxu0 %v2322
  %v2605 = vpop.f32.mrf.mxu0
  %v2606 = vadd.f32 %v62, %v2605
  %v2607 = vpop.f32.mrf.mxu0
  %2608 = vmatprep.mubr.f32.mxu0 %v2409
  %2609 = vmatmul.mubr.f32.gmra.mxu0 %v2324
  %v2610 = vpop.f32.mrf.mxu0
  %v2611 = vadd.f32 %v62, %v2610
  %v2612 = vpop.f32.mrf.mxu0
  %2613 = vmatprep.mubr.f32.mxu0 %v2412
  %2614 = vmatmul.mubr.f32.gmra.mxu0 %v2326
  %v2615 = vpop.f32.mrf.mxu0
  %v2616 = vadd.f32 %v62, %v2615
  %v2617 = vpop.f32.mrf.mxu0
  %2618 = vmatprep.mubr.f32.mxu0 %v2415
  %2619 = vmatmul.mubr.f32.gmra.mxu0 %v2328
  %v2620 = vpop.f32.mrf.mxu0
  %v2621 = vadd.f32 %v62, %v2620
  %v2622 = vpop.f32.mrf.mxu0
  %2623 = vmatprep.mubr.f32.mxu0 %v2418
  %2624 = vmatmul.mubr.f32.gmra.mxu0 %v2330
  %v2625 = vpop.f32.mrf.mxu0
  %v2626 = vadd.f32 %v62, %v2625
  %v2627 = vpop.f32.mrf.mxu0
  %2628 = vmatprep.mubr.f32.mxu0 %v2421
  %2629 = vmatmul.mubr.f32.gmra.mxu0 %v2332
  %v2630 = vpop.f32.mrf.mxu0
  %v2631 = vadd.f32 %v62, %v2630
  %v2632 = vpop.f32.mrf.mxu0
  %2633 = vmatprep.mubr.f32.mxu0 %v2424
  %2634 = vmatmul.mubr.f32.gmra.mxu0 %v2334
  %v2635 = vpop.f32.mrf.mxu0
  %v2636 = vadd.f32 %v62, %v2635
  %v2637 = vpop.f32.mrf.mxu0
  %2638 = vmatprep.mubr.f32.mxu0 %v2427
  %2639 = vmatmul.mubr.f32.gmra.mxu0 %v2336
  %v2640 = vpop.f32.mrf.mxu0
  %v2641 = vadd.f32 %v62, %v2640
  %v2642 = vpop.f32.mrf.mxu0
  %2643 = vmatprep.mubr.f32.mxu0 %v2430
  %2644 = vmatmul.mubr.f32.gmra.mxu0 %v2338
  %v2645 = vpop.f32.mrf.mxu0
  %v2646 = vadd.f32 %v62, %v2645
  %v2647 = vpop.f32.mrf.mxu0
  %2648 = vmatprep.mubr.f32.mxu0 %v2433
  %2649 = vmatmul.mubr.f32.gmra.mxu0 %v2340
  %v2650 = vpop.f32.mrf.mxu0
  %v2651 = vadd.f32 %v62, %v2650
  %v2652 = vpop.f32.mrf.mxu0
  %2653 = vmatprep.mubr.f32.mxu0 %v2436
  %2654 = vmatmul.mubr.f32.gmra.mxu0 %v2342
  %v2655 = vpop.f32.mrf.mxu0
  %v2656 = vadd.f32 %v62, %v2655
  %v2657 = vpop.f32.mrf.mxu0
  %2658 = vmatprep.mubr.f32.mxu0 %v2439
  %2659 = vmatmul.mubr.f32.gmra.mxu0 %v2344
  %v2660 = vpop.f32.mrf.mxu0
  %v2661 = vadd.f32 %v62, %v2660
  %v2662 = vpop.f32.mrf.mxu0
  %2663 = vmatprep.mubr.f32.mxu0 %v2442
  %2664 = vmatmul.mubr.f32.gmra.mxu0 %v2346
  %v2665 = vpop.f32.mrf.mxu0
  %v2666 = vadd.f32 %v62, %v2665
  %v2667 = vpop.f32.mrf.mxu0
  %2668 = vdwg.mxu0
  %v2669 = vmax.f32 %v2511, 0.0
  %v2670 = vmax.f32 %v2516, 0.0
  %v2671 = vmax.f32 %v2521, 0.0
  %v2672 = vmax.f32 %v2526, 0.0
  %v2673 = vmax.f32 %v2531, 0.0
  %v2674 = vmax.f32 %v2536, 0.0
  %v2675 = vmax.f32 %v2541, 0.0
  %v2676 = vmax.f32 %v2546, 0.0
  %v2677 = vmax.f32 %v2551, 0.0
  %v2678 = vmax.f32 %v2556, 0.0
  %v2679 = vmax.f32 %v2561, 0.0
  %v2680 = vmax.f32 %v2566, 0.0
  %v2681 = vmax.f32 %v2571, 0.0
  %v2682 = vmax.f32 %v2576, 0.0
  %v2683 = vmax.f32 %v2581, 0.0
  %v2684 = vmax.f32 %v2586, 0.0
  %v2685 = vmax.f32 %v2591, 0.0
  %v2686 = vmax.f32 %v2596, 0.0
  %v2687 = vmax.f32 %v2601, 0.0
  %v2688 = vmax.f32 %v2606, 0.0
  %v2689 = vmax.f32 %v2611, 0.0
  %v2690 = vmax.f32 %v2616, 0.0
  %v2691 = vmax.f32 %v2621, 0.0
  %v2692 = vmax.f32 %v2626, 0.0
  %v2693 = vmax.f32 %v2631, 0.0
  %v2694 = vmax.f32 %v2636, 0.0
  %v2695 = vmax.f32 %v2641, 0.0
  %v2696 = vmax.f32 %v2646, 0.0
  %v2697 = vmax.f32 %v2651, 0.0
  %v2698 = vmax.f32 %v2656, 0.0
  %v2699 = vmax.f32 %v2661, 0.0
  %v2700 = vmax.f32 %v2666, 0.0
  %v2701 = vlaneseq
  %v2702 = vshrl.u32 %v2701, 7
  %v2703 = vadd.s32 %v2702, 8
  %v2704 = vadd.s32 %v2702, 16
  %v2705 = vadd.s32 %v2702, 24
  %v2706 = vadd.s32 %v2702, 32
  %v2707 = vadd.s32 %v2702, 40
  %v2708 = vadd.s32 %v2702, 48
  %v2709 = vadd.s32 %v2702, 56
  %v2710 = vadd.s32 %v2702, 64
  %v2711 = vadd.s32 %v2702, 72
  %v2712 = vadd.s32 %v2702, 80
  %v2713 = vadd.s32 %v2702, 88
  %v2714 = vadd.s32 %v2702, 96
  %v2715 = vadd.s32 %v2702, 104
  %v2716 = vadd.s32 %v2702, 112
  %v2717 = vadd.s32 %v2702, 120
  %v2718 = vadd.s32 %v2702, 128
  %v2719 = vadd.s32 %v2702, 136
  %v2720 = vadd.s32 %v2702, 144
  %v2721 = vadd.s32 %v2702, 152
  %v2722 = vadd.s32 %v2702, 160
  %v2723 = vadd.s32 %v2702, 168
  %v2724 = vadd.s32 %v2702, 176
  %v2725 = vadd.s32 %v2702, 184
  %v2726 = vadd.s32 %v2702, 192
  %v2727 = vadd.s32 %v2702, 200
  %v2728 = vadd.s32 %v2702, 208
  %v2729 = vadd.s32 %v2702, 216
  %v2730 = vadd.s32 %v2702, 224
  %v2731 = vadd.s32 %v2702, 232
  %v2732 = vadd.s32 %v2702, 240
  %v2733 = vadd.s32 %v2702, 248
  %v2734 = vand.u32 %v2702, 1
  %v2735 = vand.u32 %v2703, 1
  %v2736 = vand.u32 %v2704, 1
  %v2737 = vand.u32 %v2705, 1
  %v2738 = vand.u32 %v2706, 1
  %v2739 = vand.u32 %v2707, 1
  %v2740 = vand.u32 %v2708, 1
  %v2741 = vand.u32 %v2709, 1
  %v2742 = vand.u32 %v2710, 1
  %v2743 = vand.u32 %v2711, 1
  %v2744 = vand.u32 %v2712, 1
  %v2745 = vand.u32 %v2713, 1
  %v2746 = vand.u32 %v2714, 1
  %v2747 = vand.u32 %v2715, 1
  %v2748 = vand.u32 %v2716, 1
  %v2749 = vand.u32 %v2717, 1
  %v2750 = vand.u32 %v2718, 1
  %v2751 = vand.u32 %v2719, 1
  %v2752 = vand.u32 %v2720, 1
  %v2753 = vand.u32 %v2721, 1
  %v2754 = vand.u32 %v2722, 1
  %v2755 = vand.u32 %v2723, 1
  %v2756 = vand.u32 %v2724, 1
  %v2757 = vand.u32 %v2725, 1
  %v2758 = vand.u32 %v2726, 1
  %v2759 = vand.u32 %v2727, 1
  %v2760 = vand.u32 %v2728, 1
  %v2761 = vand.u32 %v2729, 1
  %v2762 = vand.u32 %v2730, 1
  %v2763 = vand.u32 %v2731, 1
  %v2764 = vand.u32 %v2732, 1
  %v2765 = vand.u32 %v2733, 1
  %vm2766 = vcmp.eq.s32.totalorder %v2734, 0
  %vm2767 = vcmp.eq.s32.totalorder %v2735, 0
  %vm2768 = vcmp.eq.s32.totalorder %v2736, 0
  %vm2769 = vcmp.eq.s32.totalorder %v2737, 0
  %vm2770 = vcmp.eq.s32.totalorder %v2738, 0
  %vm2771 = vcmp.eq.s32.totalorder %v2739, 0
  %vm2772 = vcmp.eq.s32.totalorder %v2740, 0
  %vm2773 = vcmp.eq.s32.totalorder %v2741, 0
  %vm2774 = vcmp.eq.s32.totalorder %v2742, 0
  %vm2775 = vcmp.eq.s32.totalorder %v2743, 0
  %vm2776 = vcmp.eq.s32.totalorder %v2744, 0
  %vm2777 = vcmp.eq.s32.totalorder %v2745, 0
  %vm2778 = vcmp.eq.s32.totalorder %v2746, 0
  %vm2779 = vcmp.eq.s32.totalorder %v2747, 0
  %vm2780 = vcmp.eq.s32.totalorder %v2748, 0
  %vm2781 = vcmp.eq.s32.totalorder %v2749, 0
  %vm2782 = vcmp.eq.s32.totalorder %v2750, 0
  %vm2783 = vcmp.eq.s32.totalorder %v2751, 0
  %vm2784 = vcmp.eq.s32.totalorder %v2752, 0
  %vm2785 = vcmp.eq.s32.totalorder %v2753, 0
  %vm2786 = vcmp.eq.s32.totalorder %v2754, 0
  %vm2787 = vcmp.eq.s32.totalorder %v2755, 0
  %vm2788 = vcmp.eq.s32.totalorder %v2756, 0
  %vm2789 = vcmp.eq.s32.totalorder %v2757, 0
  %vm2790 = vcmp.eq.s32.totalorder %v2758, 0
  %vm2791 = vcmp.eq.s32.totalorder %v2759, 0
  %vm2792 = vcmp.eq.s32.totalorder %v2760, 0
  %vm2793 = vcmp.eq.s32.totalorder %v2761, 0
  %vm2794 = vcmp.eq.s32.totalorder %v2762, 0
  %vm2795 = vcmp.eq.s32.totalorder %v2763, 0
  %vm2796 = vcmp.eq.s32.totalorder %v2764, 0
  %vm2797 = vcmp.eq.s32.totalorder %v2765, 0
  %v2798 = vsel %vm2766, 1, 0
  %v2799 = vsel %vm2767, 1, 0
  %v2800 = vsel %vm2768, 1, 0
  %v2801 = vsel %vm2769, 1, 0
  %v2802 = vsel %vm2770, 1, 0
  %v2803 = vsel %vm2771, 1, 0
  %v2804 = vsel %vm2772, 1, 0
  %v2805 = vsel %vm2773, 1, 0
  %v2806 = vsel %vm2774, 1, 0
  %v2807 = vsel %vm2775, 1, 0
  %v2808 = vsel %vm2776, 1, 0
  %v2809 = vsel %vm2777, 1, 0
  %v2810 = vsel %vm2778, 1, 0
  %v2811 = vsel %vm2779, 1, 0
  %v2812 = vsel %vm2780, 1, 0
  %v2813 = vsel %vm2781, 1, 0
  %v2814 = vsel %vm2782, 1, 0
  %v2815 = vsel %vm2783, 1, 0
  %v2816 = vsel %vm2784, 1, 0
  %v2817 = vsel %vm2785, 1, 0
  %v2818 = vsel %vm2786, 1, 0
  %v2819 = vsel %vm2787, 1, 0
  %v2820 = vsel %vm2788, 1, 0
  %v2821 = vsel %vm2789, 1, 0
  %v2822 = vsel %vm2790, 1, 0
  %v2823 = vsel %vm2791, 1, 0
  %v2824 = vsel %vm2792, 1, 0
  %v2825 = vsel %vm2793, 1, 0
  %v2826 = vsel %vm2794, 1, 0
  %v2827 = vsel %vm2795, 1, 0
  %v2828 = vsel %vm2796, 1, 0
  %v2829 = vsel %vm2797, 1, 0
  %vm2830 = vcmp.eq.s32.totalorder %v2798, 1
  %vm2831 = vcmp.eq.s32.totalorder %v2799, 1
  %vm2832 = vcmp.eq.s32.totalorder %v2800, 1
  %vm2833 = vcmp.eq.s32.totalorder %v2801, 1
  %vm2834 = vcmp.eq.s32.totalorder %v2802, 1
  %vm2835 = vcmp.eq.s32.totalorder %v2803, 1
  %vm2836 = vcmp.eq.s32.totalorder %v2804, 1
  %vm2837 = vcmp.eq.s32.totalorder %v2805, 1
  %vm2838 = vcmp.eq.s32.totalorder %v2806, 1
  %vm2839 = vcmp.eq.s32.totalorder %v2807, 1
  %vm2840 = vcmp.eq.s32.totalorder %v2808, 1
  %vm2841 = vcmp.eq.s32.totalorder %v2809, 1
  %vm2842 = vcmp.eq.s32.totalorder %v2810, 1
  %vm2843 = vcmp.eq.s32.totalorder %v2811, 1
  %vm2844 = vcmp.eq.s32.totalorder %v2812, 1
  %vm2845 = vcmp.eq.s32.totalorder %v2813, 1
  %vm2846 = vcmp.eq.s32.totalorder %v2814, 1
  %vm2847 = vcmp.eq.s32.totalorder %v2815, 1
  %vm2848 = vcmp.eq.s32.totalorder %v2816, 1
  %vm2849 = vcmp.eq.s32.totalorder %v2817, 1
  %vm2850 = vcmp.eq.s32.totalorder %v2818, 1
  %vm2851 = vcmp.eq.s32.totalorder %v2819, 1
  %vm2852 = vcmp.eq.s32.totalorder %v2820, 1
  %vm2853 = vcmp.eq.s32.totalorder %v2821, 1
  %vm2854 = vcmp.eq.s32.totalorder %v2822, 1
  %vm2855 = vcmp.eq.s32.totalorder %v2823, 1
  %vm2856 = vcmp.eq.s32.totalorder %v2824, 1
  %vm2857 = vcmp.eq.s32.totalorder %v2825, 1
  %vm2858 = vcmp.eq.s32.totalorder %v2826, 1
  %vm2859 = vcmp.eq.s32.totalorder %v2827, 1
  %vm2860 = vcmp.eq.s32.totalorder %v2828, 1
  %vm2861 = vcmp.eq.s32.totalorder %v2829, 1
  %v2862 = vsel %vm2830, %v2669, 0.0
  %v2863 = vsel %vm2831, %v2670, 0.0
  %v2864 = vsel %vm2832, %v2671, 0.0
  %v2865 = vsel %vm2833, %v2672, 0.0
  %v2866 = vsel %vm2834, %v2673, 0.0
  %v2867 = vsel %vm2835, %v2674, 0.0
  %v2868 = vsel %vm2836, %v2675, 0.0
  %v2869 = vsel %vm2837, %v2676, 0.0
  %v2870 = vsel %vm2838, %v2677, 0.0
  %v2871 = vsel %vm2839, %v2678, 0.0
  %v2872 = vsel %vm2840, %v2679, 0.0
  %v2873 = vsel %vm2841, %v2680, 0.0
  %v2874 = vsel %vm2842, %v2681, 0.0
  %v2875 = vsel %vm2843, %v2682, 0.0
  %v2876 = vsel %vm2844, %v2683, 0.0
  %v2877 = vsel %vm2845, %v2684, 0.0
  %v2878 = vsel %vm2846, %v2685, 0.0
  %v2879 = vsel %vm2847, %v2686, 0.0
  %v2880 = vsel %vm2848, %v2687, 0.0
  %v2881 = vsel %vm2849, %v2688, 0.0
  %v2882 = vsel %vm2850, %v2689, 0.0
  %v2883 = vsel %vm2851, %v2690, 0.0
  %v2884 = vsel %vm2852, %v2691, 0.0
  %v2885 = vsel %vm2853, %v2692, 0.0
  %v2886 = vsel %vm2854, %v2693, 0.0
  %v2887 = vsel %vm2855, %v2694, 0.0
  %v2888 = vsel %vm2856, %v2695, 0.0
  %v2889 = vsel %vm2857, %v2696, 0.0
  %v2890 = vsel %vm2858, %v2697, 0.0
  %v2891 = vsel %vm2859, %v2698, 0.0
  %v2892 = vsel %vm2860, %v2699, 0.0
  %v2893 = vsel %vm2861, %v2700, 0.0
  %vm2894 = vcmask 523264
  %v2895 = vsel %vm2894, %v2862, 0.0
  %v2896 = vsel %vm2894, %v2863, 0.0
  %v2897 = vadd.f32 %v2895, %v2896
  %v2898 = vsel %vm2894, %v2864, 0.0
  %v2899 = vadd.f32 %v2897, %v2898
  %v2900 = vsel %vm2894, %v2865, 0.0
  %v2901 = vadd.f32 %v2899, %v2900
  %v2902 = vsel %vm2894, %v2866, 0.0
  %v2903 = vadd.f32 %v2901, %v2902
  %v2904 = vsel %vm2894, %v2867, 0.0
  %v2905 = vadd.f32 %v2903, %v2904
  %v2906 = vsel %vm2894, %v2868, 0.0
  %v2907 = vadd.f32 %v2905, %v2906
  %v2908 = vsel %vm2894, %v2869, 0.0
  %v2909 = vadd.f32 %v2907, %v2908
  %v2910 = vsel %vm2894, %v2870, 0.0
  %v2911 = vadd.f32 %v2909, %v2910
  %v2912 = vsel %vm2894, %v2871, 0.0
  %v2913 = vadd.f32 %v2911, %v2912
  %v2914 = vsel %vm2894, %v2872, 0.0
  %v2915 = vadd.f32 %v2913, %v2914
  %v2916 = vsel %vm2894, %v2873, 0.0
  %v2917 = vadd.f32 %v2915, %v2916
  %v2918 = vsel %vm2894, %v2874, 0.0
  %v2919 = vadd.f32 %v2917, %v2918
  %v2920 = vsel %vm2894, %v2875, 0.0
  %v2921 = vadd.f32 %v2919, %v2920
  %v2922 = vsel %vm2894, %v2876, 0.0
  %v2923 = vadd.f32 %v2921, %v2922
  %v2924 = vsel %vm2894, %v2877, 0.0
  %v2925 = vadd.f32 %v2923, %v2924
  %v2926 = vrot.slane %v2925, 4
  %v2927 = vadd.f32 %v2925, %v2926
  %v2928 = vrot.slane %v2927, 2
  %v2929 = vadd.f32 %v2927, %v2928
  %v2930 = vrot.slane %v2929, 1
  %v2931 = vadd.f32 %v2929, %v2930
  %v2932 = vsel %vm2894, %v2878, 0.0
  %v2933 = vsel %vm2894, %v2879, 0.0
  %v2934 = vadd.f32 %v2932, %v2933
  %v2935 = vsel %vm2894, %v2880, 0.0
  %v2936 = vadd.f32 %v2934, %v2935
  %v2937 = vsel %vm2894, %v2881, 0.0
  %v2938 = vadd.f32 %v2936, %v2937
  %v2939 = vsel %vm2894, %v2882, 0.0
  %v2940 = vadd.f32 %v2938, %v2939
  %v2941 = vsel %vm2894, %v2883, 0.0
  %v2942 = vadd.f32 %v2940, %v2941
  %v2943 = vsel %vm2894, %v2884, 0.0
  %v2944 = vadd.f32 %v2942, %v2943
  %v2945 = vsel %vm2894, %v2885, 0.0
  %v2946 = vadd.f32 %v2944, %v2945
  %v2947 = vsel %vm2894, %v2886, 0.0
  %v2948 = vadd.f32 %v2946, %v2947
  %v2949 = vsel %vm2894, %v2887, 0.0
  %v2950 = vadd.f32 %v2948, %v2949
  %v2951 = vsel %vm2894, %v2888, 0.0
  %v2952 = vadd.f32 %v2950, %v2951
  %v2953 = vsel %vm2894, %v2889, 0.0
  %v2954 = vadd.f32 %v2952, %v2953
  %v2955 = vsel %vm2894, %v2890, 0.0
  %v2956 = vadd.f32 %v2954, %v2955
  %v2957 = vsel %vm2894, %v2891, 0.0
  %v2958 = vadd.f32 %v2956, %v2957
  %v2959 = vsel %vm2894, %v2892, 0.0
  %v2960 = vadd.f32 %v2958, %v2959
  %v2961 = vsel %vm2894, %v2893, 0.0
  %v2962 = vadd.f32 %v2960, %v2961
  %v2963 = vrot.slane %v2962, 4
  %v2964 = vadd.f32 %v2962, %v2963
  %v2965 = vrot.slane %v2964, 2
  %v2966 = vadd.f32 %v2964, %v2965
  %v2967 = vrot.slane %v2966, 1
  %v2968 = vadd.f32 %v2966, %v2967
  %v2969 = vmul.f32 %v2931, 0.015625
  %v2970 = vmul.f32 %v2968, 0.015625
  %vm2973 = vcmask 1041409
  %v2974 = vsel %vm2973, %v2970, %v2969
  %v2975 = vsel %vm2894, %v2974, 0
  %2977 = vmatprep.subr.mxu0 0.0
  %2978 = vmatpush1.msra.mxu0 0.0
  %2979 = vmatprep.subr.mxu0 0.0
  %2980 = vmatpush1.msra.mxu0 0.0
  %2981 = vmatprep.subr.mxu0 0.0
  %2982 = vmatpush1.msra.mxu0 0.0
  %2983 = vmatprep.subr.mxu0 0.0
  %2984 = vmatpush1.msra.mxu0 0.0
  %2985 = vmatprep.subr.mxu0 0.0
  %2986 = vmatpush1.msra.mxu0 0.0
  %2987 = vmatprep.subr.mxu0 0.0
  %2988 = vmatpush1.msra.mxu0 0.0
  %2989 = vmatprep.subr.mxu0 0.0
  %2990 = vmatpush1.msra.mxu0 0.0
  %2991 = vmatprep.subr.mxu0 0.0
  %2992 = vmatpush1.msra.mxu0 0.0
  %2993 = vmatprep.subr.mxu0 0.0
  %2994 = vmatpush1.msra.mxu0 %v70
  %2995 = vmatprep.subr.mxu0 0.0
  %2996 = vmatpush1.msra.mxu0 %v69
  %2997 = vmatprep.subr.mxu0 0.0
  %2998 = vmatpush1.msra.mxu0 %v68
  %2999 = vmatprep.subr.mxu0 0.0
  %3000 = vmatpush1.msra.mxu0 %v67
  %3001 = vmatprep.subr.mxu0 0.0
  %3002 = vmatpush1.msra.mxu0 %v66
  %3003 = vmatprep.subr.mxu0 0.0
  %3004 = vmatpush1.msra.mxu0 %v65
  %3005 = vmatprep.subr.mxu0 0.0
  %3006 = vmatpush1.msra.mxu0 %v64
  %3007 = vmatprep.subr.mxu0 0.0
  %3008 = vmatpush1.msra.mxu0 %v63
  %3009 = vmatprep.subr.mxu0 0.0
  %3010 = vmatpush2.msra.mxu0 0.0
  %3011 = vmatprep.subr.mxu0 0.0
  %3012 = vmatpush2.msra.mxu0 0.0
  %3013 = vmatprep.subr.mxu0 0.0
  %3014 = vmatpush2.msra.mxu0 0.0
  %3015 = vmatprep.subr.mxu0 0.0
  %3016 = vmatpush2.msra.mxu0 0.0
  %3017 = vmatprep.subr.mxu0 0.0
  %3018 = vmatpush2.msra.mxu0 0.0
  %3019 = vmatprep.subr.mxu0 0.0
  %3020 = vmatpush2.msra.mxu0 0.0
  %3021 = vmatprep.subr.mxu0 0.0
  %3022 = vmatpush2.msra.mxu0 0.0
  %3023 = vmatprep.subr.mxu0 0.0
  %3024 = vmatpush2.msra.mxu0 0.0
  %3025 = vmatprep.subr.mxu0 0.0
  %3026 = vmatpush2.msra.mxu0 0.0
  %3027 = vmatprep.subr.mxu0 0.0
  %3028 = vmatpush2.msra.mxu0 0.0
  %3029 = vmatprep.subr.mxu0 0.0
  %3030 = vmatpush2.msra.mxu0 0.0
  %3031 = vmatprep.subr.mxu0 0.0
  %3032 = vmatpush2.msra.mxu0 0.0
  %3033 = vmatprep.subr.mxu0 0.0
  %3034 = vmatpush2.msra.mxu0 0.0
  %3035 = vmatprep.subr.mxu0 0.0
  %3036 = vmatpush2.msra.mxu0 0.0
  %3037 = vmatprep.subr.mxu0 0.0
  %3038 = vmatpush2.msra.mxu0 0.0
  %3039 = vmatprep.subr.mxu0 0.0
  %3040 = vmatpush2.msra.mxu0 0.0
  %3041 = vmatprep.mubr.f32.mxu0 0.0
  %3042 = vmatmul.mubr.f32.gmra.mxu0 %v2975
  %v3043 = vpop.f32.mrf.mxu0
  %v3044 = vadd.f32 %v71, %v3043
  %v3045 = vpop.f32.mrf.mxu0
  %3046 = vdwg.mxu0
  %v3047 = vld [vmem:[%s4 + $0x8] sm:$0x7]
  %v3048 = vld [vmem:[%s3 + $0x5] ss:$0 sm:$0xff]
  %v3049 = vld [vmem:[%s3 + $0x6] ss:$0 sm:$0xff]
  %v3050 = vld [vmem:[%s3 + $0x7] ss:$0 sm:$0xff]
  %v3051 = vld [vmem:[%s5 + $0xa0] sm:$0xff]
  %v3052 = vld [vmem:[%s5 + $0xa8] sm:$0xff]
  %v3053 = vld [vmem:[%s5 + $0xb0] sm:$0xff]
  %v3054 = vld [vmem:[%s5 + $0xb8] sm:$0xff]
  %v3055 = vld [vmem:[%s5 + $0xc0] sm:$0xff]
  %v3056 = vld [vmem:[%s5 + $0xc8] sm:$0xff]
  %v3057 = vld [vmem:[%s5 + $0xd0] sm:$0xff]
  %v3058 = vld [vmem:[%s5 + $0xd8] sm:$0xff]
  %v3059 = vld [vmem:[%s5 + $0xe0] sm:$0xff]
  %v3060 = vld [vmem:[%s5 + $0xe8] sm:$0xff]
  %v3061 = vld [vmem:[%s5 + $0xf0] sm:$0xff]
  %v3062 = vld [vmem:[%s5 + $0xf8] sm:$0xff]
  %v3063 = vld [vmem:[%s3 + $0x10] ss:$0 sm:$0xff]
  %v3064 = vld [vmem:[%s6 + $0x40] sm:$0xff]
  %v3065 = vld [vmem:[%s6 + $0x48] sm:$0xff]
  %v3066 = vld [vmem:[%s6 + $0x50] sm:$0xff]
  %v3067 = vld [vmem:[%s6 + $0x58] sm:$0xff]
  %v3068 = vld [vmem:[%s6 + $0x60] sm:$0xff]
  %v3069 = vld [vmem:[%s6 + $0x68] sm:$0xff]
  %v3070 = vld [vmem:[%s6 + $0x70] sm:$0xff]
  %v3071 = vld [vmem:[%s6 + $0x78] sm:$0xff]
  %v3072 = vld [vmem:[%s3 + $0x11] ss:$0 sm:$0xff]
  %v3073 = vld [vmem:[%s1] sm:$0xff]
  %v3074 = vld [vmem:[%s1 + $0x8] sm:$0xff]
  %v3075 = vld [vmem:[%s1 + $0x10] sm:$0xff]
  %v3076 = vld [vmem:[%s1 + $0x18] sm:$0xff]
  %v3077 = vld [vmem:[%s1 + $0x20] sm:$0xff]
  %v3078 = vld [vmem:[%s1 + $0x28] sm:$0xff]
  %v3079 = vld [vmem:[%s1 + $0x30] sm:$0xff]
  %v3080 = vld [vmem:[%s1 + $0x38] sm:$0xff]
  %v3081 = vld [vmem:[%s1 + $0x48] sm:$0xff]
  %v3082 = vld [vmem:[%s1 + $0x50] sm:$0xff]
  %v3083 = vld [vmem:[%s1 + $0x58] sm:$0xff]
  %v3084 = vld [vmem:[%s1 + $0x60] sm:$0xff]
  %v3085 = vld [vmem:[%s1 + $0x68] sm:$0xff]
  %v3086 = vld [vmem:[%s1 + $0x70] sm:$0xff]
  %v3087 = vld [vmem:[%s1 + $0x78] sm:$0xff]
  %v3088 = vld [vmem:[%s1 + $0x80] sm:$0xff]
  %3090 = vset.pattern.permute.xlu0 0
  %3091 = vperm.xlu0 %3090, %v3073
  %v3092 = vpop.permute.xlu0 %3091
  %3095 = vset.pattern.permute.xlu0 0
  %3096 = vperm.xlu0 %3095, %v3074
  %v3097 = vpop.permute.xlu0 %3096
  %3100 = vset.pattern.permute.xlu0 0
  %3101 = vperm.xlu0 %3100, %v3075
  %v3102 = vpop.permute.xlu0 %3101
  %3105 = vset.pattern.permute.xlu0 0
  %3106 = vperm.xlu0 %3105, %v3076
  %v3107 = vpop.permute.xlu0 %3106
  %3110 = vset.pattern.permute.xlu0 0
  %3111 = vperm.xlu0 %3110, %v3077
  %v3112 = vpop.permute.xlu0 %3111
  %3115 = vset.pattern.permute.xlu0 0
  %3116 = vperm.xlu0 %3115, %v3078
  %v3117 = vpop.permute.xlu0 %3116
  %3120 = vset.pattern.permute.xlu0 0
  %3121 = vperm.xlu0 %3120, %v3079
  %v3122 = vpop.permute.xlu0 %3121
  %3125 = vset.pattern.permute.xlu0 0
  %3126 = vperm.xlu0 %3125, %v3080
  %v3127 = vpop.permute.xlu0 %3126
  %3130 = vset.pattern.permute.xlu0 0
  %3131 = vperm.xlu0 %3130, %v3081
  %v3132 = vpop.permute.xlu0 %3131
  %3135 = vset.pattern.permute.xlu0 0
  %3136 = vperm.xlu0 %3135, %v3082
  %v3137 = vpop.permute.xlu0 %3136
  %3140 = vset.pattern.permute.xlu0 0
  %3141 = vperm.xlu0 %3140, %v3083
  %v3142 = vpop.permute.xlu0 %3141
  %3145 = vset.pattern.permute.xlu0 0
  %3146 = vperm.xlu0 %3145, %v3084
  %v3147 = vpop.permute.xlu0 %3146
  %3150 = vset.pattern.permute.xlu0 0
  %3151 = vperm.xlu0 %3150, %v3085
  %v3152 = vpop.permute.xlu0 %3151
  %3155 = vset.pattern.permute.xlu0 0
  %3156 = vperm.xlu0 %3155, %v3086
  %v3157 = vpop.permute.xlu0 %3156
  %3160 = vset.pattern.permute.xlu0 0
  %3161 = vperm.xlu0 %3160, %v3087
  %v3162 = vpop.permute.xlu0 %3161
  %3165 = vset.pattern.permute.xlu0 0
  %3166 = vperm.xlu0 %3165, %v3088
  %v3167 = vpop.permute.xlu0 %3166
  %v3169 = vlaneseq
  %v3170 = vshrl.u32 %v3169, 7
  %v3171 = vsub.s32 0, %v3170
  %v3172 = vrot.slane %v3047, %v3171
  %v3173 = vmul.f32 %v3092, %v3172
  %v3174 = vmul.f32 %v3097, %v3172
  %v3175 = vmul.f32 %v3102, %v3172
  %v3176 = vmul.f32 %v3107, %v3172
  %v3177 = vmul.f32 %v3112, %v3172
  %v3178 = vmul.f32 %v3117, %v3172
  %v3179 = vmul.f32 %v3122, %v3172
  %v3180 = vmul.f32 %v3127, %v3172
  %v3181 = vmul.f32 %v3132, %v3172
  %v3182 = vmul.f32 %v3137, %v3172
  %v3183 = vmul.f32 %v3142, %v3172
  %v3184 = vmul.f32 %v3147, %v3172
  %v3185 = vmul.f32 %v3152, %v3172
  %v3186 = vmul.f32 %v3157, %v3172
  %v3187 = vmul.f32 %v3162, %v3172
  %v3188 = vmul.f32 %v3167, %v3172
  %v3189 = vld [vmem:[%s1 + $0x1] sm:$0xff]
  %v3190 = vld [vmem:[%s1 + $0x9] sm:$0xff]
  %v3191 = vld [vmem:[%s1 + $0x11] sm:$0xff]
  %v3192 = vld [vmem:[%s1 + $0x19] sm:$0xff]
  %v3193 = vld [vmem:[%s1 + $0x21] sm:$0xff]
  %v3194 = vld [vmem:[%s1 + $0x29] sm:$0xff]
  %v3195 = vld [vmem:[%s1 + $0x31] sm:$0xff]
  %v3196 = vld [vmem:[%s1 + $0x39] sm:$0xff]
  %v3197 = vld [vmem:[%s1 + $0x49] sm:$0xff]
  %v3198 = vld [vmem:[%s1 + $0x51] sm:$0xff]
  %v3199 = vld [vmem:[%s1 + $0x59] sm:$0xff]
  %v3200 = vld [vmem:[%s1 + $0x61] sm:$0xff]
  %v3201 = vld [vmem:[%s1 + $0x69] sm:$0xff]
  %v3202 = vld [vmem:[%s1 + $0x71] sm:$0xff]
  %v3203 = vld [vmem:[%s1 + $0x79] sm:$0xff]
  %v3204 = vld [vmem:[%s1 + $0x81] sm:$0xff]
  %3206 = vset.pattern.permute.xlu0 0
  %3207 = vperm.xlu0 %3206, %v3189
  %v3208 = vpop.permute.xlu0 %3207
  %3211 = vset.pattern.permute.xlu0 0
  %3212 = vperm.xlu0 %3211, %v3190
  %v3213 = vpop.permute.xlu0 %3212
  %3216 = vset.pattern.permute.xlu0 0
  %3217 = vperm.xlu0 %3216, %v3191
  %v3218 = vpop.permute.xlu0 %3217
  %3221 = vset.pattern.permute.xlu0 0
  %3222 = vperm.xlu0 %3221, %v3192
  %v3223 = vpop.permute.xlu0 %3222
  %3226 = vset.pattern.permute.xlu0 0
  %3227 = vperm.xlu0 %3226, %v3193
  %v3228 = vpop.permute.xlu0 %3227
  %3231 = vset.pattern.permute.xlu0 0
  %3232 = vperm.xlu0 %3231, %v3194
  %v3233 = vpop.permute.xlu0 %3232
  %3236 = vset.pattern.permute.xlu0 0
  %3237 = vperm.xlu0 %3236, %v3195
  %v3238 = vpop.permute.xlu0 %3237
  %3241 = vset.pattern.permute.xlu0 0
  %3242 = vperm.xlu0 %3241, %v3196
  %v3243 = vpop.permute.xlu0 %3242
  %3246 = vset.pattern.permute.xlu0 0
  %3247 = vperm.xlu0 %3246, %v3197
  %v3248 = vpop.permute.xlu0 %3247
  %3251 = vset.pattern.permute.xlu0 0
  %3252 = vperm.xlu0 %3251, %v3198
  %v3253 = vpop.permute.xlu0 %3252
  %3256 = vset.pattern.permute.xlu0 0
  %3257 = vperm.xlu0 %3256, %v3199
  %v3258 = vpop.permute.xlu0 %3257
  %3261 = vset.pattern.permute.xlu0 0
  %3262 = vperm.xlu0 %3261, %v3200
  %v3263 = vpop.permute.xlu0 %3262
  %3266 = vset.pattern.permute.xlu0 0
  %3267 = vperm.xlu0 %3266, %v3201
  %v3268 = vpop.permute.xlu0 %3267
  %3271 = vset.pattern.permute.xlu0 0
  %3272 = vperm.xlu0 %3271, %v3202
  %v3273 = vpop.permute.xlu0 %3272
  %3276 = vset.pattern.permute.xlu0 0
  %3277 = vperm.xlu0 %3276, %v3203
  %v3278 = vpop.permute.xlu0 %3277
  %3281 = vset.pattern.permute.xlu0 0
  %3282 = vperm.xlu0 %3281, %v3204
  %v3283 = vpop.permute.xlu0 %3282
  %v3285 = vlaneseq
  %v3286 = vshrl.u32 %v3285, 7
  %v3287 = vsub.s32 1, %v3286
  %v3288 = vrot.slane %v3047, %v3287
  %v3289 = vmul.f32 %v3208, %v3288
  %v3290 = vmul.f32 %v3213, %v3288
  %v3291 = vmul.f32 %v3218, %v3288
  %v3292 = vmul.f32 %v3223, %v3288
  %v3293 = vmul.f32 %v3228, %v3288
  %v3294 = vmul.f32 %v3233, %v3288
  %v3295 = vmul.f32 %v3238, %v3288
  %v3296 = vmul.f32 %v3243, %v3288
  %v3297 = vmul.f32 %v3248, %v3288
  %v3298 = vmul.f32 %v3253, %v3288
  %v3299 = vmul.f32 %v3258, %v3288
  %v3300 = vmul.f32 %v3263, %v3288
  %v3301 = vmul.f32 %v3268, %v3288
  %v3302 = vmul.f32 %v3273, %v3288
  %v3303 = vmul.f32 %v3278, %v3288
  %v3304 = vmul.f32 %v3283, %v3288
  %v3305 = vadd.f32 %v3173, %v3289
  %v3306 = vadd.f32 %v3174, %v3290
  %v3307 = vadd.f32 %v3175, %v3291
  %v3308 = vadd.f32 %v3176, %v3292
  %v3309 = vadd.f32 %v3177, %v3293
  %v3310 = vadd.f32 %v3178, %v3294
  %v3311 = vadd.f32 %v3179, %v3295
  %v3312 = vadd.f32 %v3180, %v3296
  %v3313 = vadd.f32 %v3181, %v3297
  %v3314 = vadd.f32 %v3182, %v3298
  %v3315 = vadd.f32 %v3183, %v3299
  %v3316 = vadd.f32 %v3184, %v3300
  %v3317 = vadd.f32 %v3185, %v3301
  %v3318 = vadd.f32 %v3186, %v3302
  %v3319 = vadd.f32 %v3187, %v3303
  %v3320 = vadd.f32 %v3188, %v3304
  %v3321 = vld [vmem:[%s1 + $0x2] sm:$0xff]
  %v3322 = vld [vmem:[%s1 + $0xa] sm:$0xff]
  %v3323 = vld [vmem:[%s1 + $0x12] sm:$0xff]
  %v3324 = vld [vmem:[%s1 + $0x1a] sm:$0xff]
  %v3325 = vld [vmem:[%s1 + $0x22] sm:$0xff]
  %v3326 = vld [vmem:[%s1 + $0x2a] sm:$0xff]
  %v3327 = vld [vmem:[%s1 + $0x32] sm:$0xff]
  %v3328 = vld [vmem:[%s1 + $0x3a] sm:$0xff]
  %v3329 = vld [vmem:[%s1 + $0x4a] sm:$0xff]
  %v3330 = vld [vmem:[%s1 + $0x52] sm:$0xff]
  %v3331 = vld [vmem:[%s1 + $0x5a] sm:$0xff]
  %v3332 = vld [vmem:[%s1 + $0x62] sm:$0xff]
  %v3333 = vld [vmem:[%s1 + $0x6a] sm:$0xff]
  %v3334 = vld [vmem:[%s1 + $0x72] sm:$0xff]
  %v3335 = vld [vmem:[%s1 + $0x7a] sm:$0xff]
  %v3336 = vld [vmem:[%s1 + $0x82] sm:$0xff]
  %3338 = vset.pattern.permute.xlu0 0
  %3339 = vperm.xlu0 %3338, %v3321
  %v3340 = vpop.permute.xlu0 %3339
  %3343 = vset.pattern.permute.xlu0 0
  %3344 = vperm.xlu0 %3343, %v3322
  %v3345 = vpop.permute.xlu0 %3344
  %3348 = vset.pattern.permute.xlu0 0
  %3349 = vperm.xlu0 %3348, %v3323
  %v3350 = vpop.permute.xlu0 %3349
  %3353 = vset.pattern.permute.xlu0 0
  %3354 = vperm.xlu0 %3353, %v3324
  %v3355 = vpop.permute.xlu0 %3354
  %3358 = vset.pattern.permute.xlu0 0
  %3359 = vperm.xlu0 %3358, %v3325
  %v3360 = vpop.permute.xlu0 %3359
  %3363 = vset.pattern.permute.xlu0 0
  %3364 = vperm.xlu0 %3363, %v3326
  %v3365 = vpop.permute.xlu0 %3364
  %3368 = vset.pattern.permute.xlu0 0
  %3369 = vperm.xlu0 %3368, %v3327
  %v3370 = vpop.permute.xlu0 %3369
  %3373 = vset.pattern.permute.xlu0 0
  %3374 = vperm.xlu0 %3373, %v3328
  %v3375 = vpop.permute.xlu0 %3374
  %3378 = vset.pattern.permute.xlu0 0
  %3379 = vperm.xlu0 %3378, %v3329
  %v3380 = vpop.permute.xlu0 %3379
  %3383 = vset.pattern.permute.xlu0 0
  %3384 = vperm.xlu0 %3383, %v3330
  %v3385 = vpop.permute.xlu0 %3384
  %3388 = vset.pattern.permute.xlu0 0
  %3389 = vperm.xlu0 %3388, %v3331
  %v3390 = vpop.permute.xlu0 %3389
  %3393 = vset.pattern.permute.xlu0 0
  %3394 = vperm.xlu0 %3393, %v3332
  %v3395 = vpop.permute.xlu0 %3394
  %3398 = vset.pattern.permute.xlu0 0
  %3399 = vperm.xlu0 %3398, %v3333
  %v3400 = vpop.permute.xlu0 %3399
  %3403 = vset.pattern.permute.xlu0 0
  %3404 = vperm.xlu0 %3403, %v3334
  %v3405 = vpop.permute.xlu0 %3404
  %3408 = vset.pattern.permute.xlu0 0
  %3409 = vperm.xlu0 %3408, %v3335
  %v3410 = vpop.permute.xlu0 %3409
  %3413 = vset.pattern.permute.xlu0 0
  %3414 = vperm.xlu0 %3413, %v3336
  %v3415 = vpop.permute.xlu0 %3414
  %v3417 = vlaneseq
  %v3418 = vshrl.u32 %v3417, 7
  %v3419 = vsub.s32 2, %v3418
  %v3420 = vrot.slane %v3047, %v3419
  %v3421 = vmul.f32 %v3340, %v3420
  %v3422 = vmul.f32 %v3345, %v3420
  %v3423 = vmul.f32 %v3350, %v3420
  %v3424 = vmul.f32 %v3355, %v3420
  %v3425 = vmul.f32 %v3360, %v3420
  %v3426 = vmul.f32 %v3365, %v3420
  %v3427 = vmul.f32 %v3370, %v3420
  %v3428 = vmul.f32 %v3375, %v3420
  %v3429 = vmul.f32 %v3380, %v3420
  %v3430 = vmul.f32 %v3385, %v3420
  %v3431 = vmul.f32 %v3390, %v3420
  %v3432 = vmul.f32 %v3395, %v3420
  %v3433 = vmul.f32 %v3400, %v3420
  %v3434 = vmul.f32 %v3405, %v3420
  %v3435 = vmul.f32 %v3410, %v3420
  %v3436 = vmul.f32 %v3415, %v3420
  %v3437 = vadd.f32 %v3305, %v3421
  %v3438 = vadd.f32 %v3306, %v3422
  %v3439 = vadd.f32 %v3307, %v3423
  %v3440 = vadd.f32 %v3308, %v3424
  %v3441 = vadd.f32 %v3309, %v3425
  %v3442 = vadd.f32 %v3310, %v3426
  %v3443 = vadd.f32 %v3311, %v3427
  %v3444 = vadd.f32 %v3312, %v3428
  %v3445 = vadd.f32 %v3313, %v3429
  %v3446 = vadd.f32 %v3314, %v3430
  %v3447 = vadd.f32 %v3315, %v3431
  %v3448 = vadd.f32 %v3316, %v3432
  %v3449 = vadd.f32 %v3317, %v3433
  %v3450 = vadd.f32 %v3318, %v3434
  %v3451 = vadd.f32 %v3319, %v3435
  %v3452 = vadd.f32 %v3320, %v3436
  %v3453 = vadd.f32 %v3437, %v3048
  %v3454 = vadd.f32 %v3438, %v3048
  %v3455 = vadd.f32 %v3439, %v3048
  %v3456 = vadd.f32 %v3440, %v3048
  %v3457 = vadd.f32 %v3441, %v3048
  %v3458 = vadd.f32 %v3442, %v3048
  %v3459 = vadd.f32 %v3443, %v3048
  %v3460 = vadd.f32 %v3444, %v3048
  %v3461 = vadd.f32 %v3445, %v3048
  %v3462 = vadd.f32 %v3446, %v3048
  %v3463 = vadd.f32 %v3447, %v3048
  %v3464 = vadd.f32 %v3448, %v3048
  %v3465 = vadd.f32 %v3449, %v3048
  %v3466 = vadd.f32 %v3450, %v3048
  %v3467 = vadd.f32 %v3451, %v3048
  %v3468 = vadd.f32 %v3452, %v3048
  %v3469 = vmax.f32 %v3453, 0.0
  %v3470 = vmax.f32 %v3454, 0.0
  %v3471 = vmax.f32 %v3455, 0.0
  %v3472 = vmax.f32 %v3456, 0.0
  %v3473 = vmax.f32 %v3457, 0.0
  %v3474 = vmax.f32 %v3458, 0.0
  %v3475 = vmax.f32 %v3459, 0.0
  %v3476 = vmax.f32 %v3460, 0.0
  %v3477 = vmax.f32 %v3461, 0.0
  %v3478 = vmax.f32 %v3462, 0.0
  %v3479 = vmax.f32 %v3463, 0.0
  %v3480 = vmax.f32 %v3464, 0.0
  %v3481 = vmax.f32 %v3465, 0.0
  %v3482 = vmax.f32 %v3466, 0.0
  %v3483 = vmax.f32 %v3467, 0.0
  %v3484 = vmax.f32 %v3468, 0.0
  %v3485 = vmul.f32 %v3469, %v3049
  %v3486 = vmul.f32 %v3470, %v3049
  %v3487 = vmul.f32 %v3471, %v3049
  %v3488 = vmul.f32 %v3472, %v3049
  %v3489 = vmul.f32 %v3473, %v3049
  %v3490 = vmul.f32 %v3474, %v3049
  %v3491 = vmul.f32 %v3475, %v3049
  %v3492 = vmul.f32 %v3476, %v3049
  %v3493 = vmul.f32 %v3477, %v3049
  %v3494 = vmul.f32 %v3478, %v3049
  %v3495 = vmul.f32 %v3479, %v3049
  %v3496 = vmul.f32 %v3480, %v3049
  %v3497 = vmul.f32 %v3481, %v3049
  %v3498 = vmul.f32 %v3482, %v3049
  %v3499 = vmul.f32 %v3483, %v3049
  %v3500 = vmul.f32 %v3484, %v3049
  %v3501 = vadd.f32 %v3485, %v3050
  %v3502 = vadd.f32 %v3486, %v3050
  %v3503 = vadd.f32 %v3487, %v3050
  %v3504 = vadd.f32 %v3488, %v3050
  %v3505 = vadd.f32 %v3489, %v3050
  %v3506 = vadd.f32 %v3490, %v3050
  %v3507 = vadd.f32 %v3491, %v3050
  %v3508 = vadd.f32 %v3492, %v3050
  %v3509 = vadd.f32 %v3493, %v3050
  %v3510 = vadd.f32 %v3494, %v3050
  %v3511 = vadd.f32 %v3495, %v3050
  %v3512 = vadd.f32 %v3496, %v3050
  %v3513 = vadd.f32 %v3497, %v3050
  %v3514 = vadd.f32 %v3498, %v3050
  %v3515 = vadd.f32 %v3499, %v3050
  %v3516 = vadd.f32 %v3500, %v3050
  %3517 = vst.msk [vmem:[#allocation4 + $0x1] sm:$0xff] %vm1597, %v3501
  %3518 = vst.msk [vmem:[#allocation4 + $0x9] sm:$0xff] %vm1597, %v3502
  %3519 = vst.msk [vmem:[#allocation4 + $0x11] sm:$0xff] %vm1597, %v3503
  %3520 = vst.msk [vmem:[#allocation4 + $0x19] sm:$0xff] %vm1597, %v3504
  %3521 = vst.msk [vmem:[#allocation4 + $0x21] sm:$0xff] %vm1597, %v3505
  %3522 = vst.msk [vmem:[#allocation4 + $0x29] sm:$0xff] %vm1597, %v3506
  %3523 = vst.msk [vmem:[#allocation4 + $0x31] sm:$0xff] %vm1597, %v3507
  %vm3524 = vcmask 260096
  %3525 = vst.msk [vmem:[#allocation4 + $0x39] sm:$0x7f] %vm3524, %v3508
  %3526 = vst.msk [vmem:[#allocation4 + $0x41] sm:$0xff] %vm1597, %v3509
  %3527 = vst.msk [vmem:[#allocation4 + $0x49] sm:$0xff] %vm1597, %v3510
  %3528 = vst.msk [vmem:[#allocation4 + $0x51] sm:$0xff] %vm1597, %v3511
  %3529 = vst.msk [vmem:[#allocation4 + $0x59] sm:$0xff] %vm1597, %v3512
  %3530 = vst.msk [vmem:[#allocation4 + $0x61] sm:$0xff] %vm1597, %v3513
  %3531 = vst.msk [vmem:[#allocation4 + $0x69] sm:$0xff] %vm1597, %v3514
  %3532 = vst.msk [vmem:[#allocation4 + $0x71] sm:$0xff] %vm1597, %v3515
  %3533 = vst.msk [vmem:[#allocation4 + $0x79] sm:$0x7f] %vm3524, %v3516
  %vm3534 = vcmask 253952
  %3535 = vst.msk [vmem:[#allocation4] sm:$0x1] %vm3534, 0.0
  %3536 = vst.msk [vmem:[#allocation4 + $0x40] sm:$0x1] %vm3534, 0.0
  %3553 = vrot.lane.b32.xlu0 %v3501, 32
  %v3554 = vpop.permute.xlu0 %3553
  %3555 = vrot.lane.b32.xlu0 %v3502, 32
  %v3556 = vpop.permute.xlu0 %3555
  %3557 = vrot.lane.b32.xlu0 %v3503, 32
  %v3558 = vpop.permute.xlu0 %3557
  %3559 = vrot.lane.b32.xlu0 %v3504, 32
  %v3560 = vpop.permute.xlu0 %3559
  %3561 = vrot.lane.b32.xlu0 %v3505, 32
  %v3562 = vpop.permute.xlu0 %3561
  %3563 = vrot.lane.b32.xlu0 %v3506, 32
  %v3564 = vpop.permute.xlu0 %3563
  %3565 = vrot.lane.b32.xlu0 %v3507, 32
  %v3566 = vpop.permute.xlu0 %3565
  %3567 = vrot.lane.b32.xlu0 %v3508, 32
  %v3568 = vpop.permute.xlu0 %3567
  %3569 = vrot.lane.b32.xlu0 %v3509, 32
  %v3570 = vpop.permute.xlu0 %3569
  %3571 = vrot.lane.b32.xlu0 %v3510, 32
  %v3572 = vpop.permute.xlu0 %3571
  %3573 = vrot.lane.b32.xlu0 %v3511, 32
  %v3574 = vpop.permute.xlu0 %3573
  %3575 = vrot.lane.b32.xlu0 %v3512, 32
  %v3576 = vpop.permute.xlu0 %3575
  %3577 = vrot.lane.b32.xlu0 %v3513, 32
  %v3578 = vpop.permute.xlu0 %3577
  %3579 = vrot.lane.b32.xlu0 %v3514, 32
  %v3580 = vpop.permute.xlu0 %3579
  %3581 = vrot.lane.b32.xlu0 %v3515, 32
  %v3582 = vpop.permute.xlu0 %3581
  %3583 = vrot.lane.b32.xlu0 %v3516, 32
  %v3584 = vpop.permute.xlu0 %3583
  %3601 = vst.msk [vmem:[#allocation4] sm:$0xff] %vm1793, %v3554
  %3602 = vst.msk [vmem:[#allocation4 + $0x8] sm:$0xff] %vm1793, %v3556
  %3603 = vst.msk [vmem:[#allocation4 + $0x10] sm:$0xff] %vm1793, %v3558
  %3604 = vst.msk [vmem:[#allocation4 + $0x18] sm:$0xff] %vm1793, %v3560
  %3605 = vst.msk [vmem:[#allocation4 + $0x20] sm:$0xff] %vm1793, %v3562
  %3606 = vst.msk [vmem:[#allocation4 + $0x28] sm:$0xff] %vm1793, %v3564
  %3607 = vst.msk [vmem:[#allocation4 + $0x30] sm:$0xff] %vm1793, %v3566
  %3608 = vst.msk [vmem:[#allocation4 + $0x38] sm:$0xff] %vm1793, %v3568
  %3609 = vst.msk [vmem:[#allocation4 + $0x40] sm:$0xff] %vm1793, %v3570
  %3610 = vst.msk [vmem:[#allocation4 + $0x48] sm:$0xff] %vm1793, %v3572
  %3611 = vst.msk [vmem:[#allocation4 + $0x50] sm:$0xff] %vm1793, %v3574
  %3612 = vst.msk [vmem:[#allocation4 + $0x58] sm:$0xff] %vm1793, %v3576
  %3613 = vst.msk [vmem:[#allocation4 + $0x60] sm:$0xff] %vm1793, %v3578
  %3614 = vst.msk [vmem:[#allocation4 + $0x68] sm:$0xff] %vm1793, %v3580
  %3615 = vst.msk [vmem:[#allocation4 + $0x70] sm:$0xff] %vm1793, %v3582
  %3616 = vst.msk [vmem:[#allocation4 + $0x78] sm:$0xff] %vm1793, %v3584
  %3617 = vrot.lane.b32.xlu0 %v3501, 64
  %v3618 = vpop.permute.xlu0 %3617
  %3619 = vrot.lane.b32.xlu0 %v3502, 64
  %v3620 = vpop.permute.xlu0 %3619
  %3621 = vrot.lane.b32.xlu0 %v3503, 64
  %v3622 = vpop.permute.xlu0 %3621
  %3623 = vrot.lane.b32.xlu0 %v3504, 64
  %v3624 = vpop.permute.xlu0 %3623
  %3625 = vrot.lane.b32.xlu0 %v3505, 64
  %v3626 = vpop.permute.xlu0 %3625
  %3627 = vrot.lane.b32.xlu0 %v3506, 64
  %v3628 = vpop.permute.xlu0 %3627
  %3629 = vrot.lane.b32.xlu0 %v3507, 64
  %v3630 = vpop.permute.xlu0 %3629
  %3631 = vrot.lane.b32.xlu0 %v3508, 64
  %v3632 = vpop.permute.xlu0 %3631
  %3633 = vrot.lane.b32.xlu0 %v3509, 64
  %v3634 = vpop.permute.xlu0 %3633
  %3635 = vrot.lane.b32.xlu0 %v3510, 64
  %v3636 = vpop.permute.xlu0 %3635
  %3637 = vrot.lane.b32.xlu0 %v3511, 64
  %v3638 = vpop.permute.xlu0 %3637
  %3639 = vrot.lane.b32.xlu0 %v3512, 64
  %v3640 = vpop.permute.xlu0 %3639
  %3641 = vrot.lane.b32.xlu0 %v3513, 64
  %v3642 = vpop.permute.xlu0 %3641
  %3643 = vrot.lane.b32.xlu0 %v3514, 64
  %v3644 = vpop.permute.xlu0 %3643
  %3645 = vrot.lane.b32.xlu0 %v3515, 64
  %v3646 = vpop.permute.xlu0 %3645
  %3647 = vrot.lane.b32.xlu0 %v3516, 64
  %v3648 = vpop.permute.xlu0 %3647
  %vm3665 = vcmask 785921
  %3666 = vst.msk [vmem:[#allocation4 - $0x1] sm:$0xfe] %vm3665, %v3618
  %3667 = vst.msk [vmem:[#allocation4 + $0x7] sm:$0xff] %vm1924, %v3620
  %3668 = vst.msk [vmem:[#allocation4 + $0xf] sm:$0xff] %vm1924, %v3622
  %3669 = vst.msk [vmem:[#allocation4 + $0x17] sm:$0xff] %vm1924, %v3624
  %3670 = vst.msk [vmem:[#allocation4 + $0x1f] sm:$0xff] %vm1924, %v3626
  %3671 = vst.msk [vmem:[#allocation4 + $0x27] sm:$0xff] %vm1924, %v3628
  %3672 = vst.msk [vmem:[#allocation4 + $0x2f] sm:$0xff] %vm1924, %v3630
  %3673 = vst.msk [vmem:[#allocation4 + $0x37] sm:$0xff] %vm1924, %v3632
  %3674 = vst.msk [vmem:[#allocation4 + $0x3f] sm:$0xfe] %vm3665, %v3634
  %3675 = vst.msk [vmem:[#allocation4 + $0x47] sm:$0xff] %vm1924, %v3636
  %3676 = vst.msk [vmem:[#allocation4 + $0x4f] sm:$0xff] %vm1924, %v3638
  %3677 = vst.msk [vmem:[#allocation4 + $0x57] sm:$0xff] %vm1924, %v3640
  %3678 = vst.msk [vmem:[#allocation4 + $0x5f] sm:$0xff] %vm1924, %v3642
  %3679 = vst.msk [vmem:[#allocation4 + $0x67] sm:$0xff] %vm1924, %v3644
  %3680 = vst.msk [vmem:[#allocation4 + $0x6f] sm:$0xff] %vm1924, %v3646
  %3681 = vst.msk [vmem:[#allocation4 + $0x77] sm:$0xff] %vm1924, %v3648
  %vm3682 = vcmask 778752
  %3683 = vst.msk [vmem:[#allocation4 + $0x3f] sm:$0x1] %vm3682, 0.0
  %3684 = vst.msk [vmem:[#allocation4 + $0x7f] sm:$0x1] %vm3682, 0.0
  %v3685 = vld [vmem:[#allocation4] sm:$0xff]
  %v3686 = vld [vmem:[#allocation4 + $0x8] sm:$0xff]
  %v3687 = vld [vmem:[#allocation4 + $0x10] sm:$0xff]
  %v3688 = vld [vmem:[#allocation4 + $0x18] sm:$0xff]
  %v3689 = vld [vmem:[#allocation4 + $0x20] sm:$0xff]
  %v3690 = vld [vmem:[#allocation4 + $0x28] sm:$0xff]
  %v3691 = vld [vmem:[#allocation4 + $0x30] sm:$0xff]
  %v3692 = vld [vmem:[#allocation4 + $0x38] sm:$0xff]
  %v3693 = vld [vmem:[#allocation4 + $0x40] sm:$0xff]
  %v3694 = vld [vmem:[#allocation4 + $0x48] sm:$0xff]
  %v3695 = vld [vmem:[#allocation4 + $0x50] sm:$0xff]
  %v3696 = vld [vmem:[#allocation4 + $0x58] sm:$0xff]
  %v3697 = vld [vmem:[#allocation4 + $0x60] sm:$0xff]
  %v3698 = vld [vmem:[#allocation4 + $0x68] sm:$0xff]
  %v3699 = vld [vmem:[#allocation4 + $0x70] sm:$0xff]
  %v3700 = vld [vmem:[#allocation4 + $0x78] sm:$0xff]
  %vm3701 = vcmask 785408
  %v3703 = vsel %vm3701, %v3685, 0
  %v3706 = vsel %vm3701, %v3686, 0
  %v3709 = vsel %vm3701, %v3687, 0
  %v3712 = vsel %vm3701, %v3688, 0
  %v3715 = vsel %vm3701, %v3689, 0
  %v3718 = vsel %vm3701, %v3690, 0
  %v3721 = vsel %vm3701, %v3691, 0
  %v3724 = vsel %vm3701, %v3692, 0
  %v3727 = vsel %vm3701, %v3693, 0
  %v3730 = vsel %vm3701, %v3694, 0
  %v3733 = vsel %vm3701, %v3695, 0
  %v3736 = vsel %vm3701, %v3696, 0
  %v3739 = vsel %vm3701, %v3697, 0
  %v3742 = vsel %vm3701, %v3698, 0
  %v3745 = vsel %vm3701, %v3699, 0
  %v3748 = vsel %vm3701, %v3700, 0
  %3750 = vmatprep.subr.mxu0 0.0
  %3751 = vmatpush1.msra.mxu0 0.0
  %3752 = vmatprep.subr.mxu0 0.0
  %3753 = vmatpush1.msra.mxu0 0.0
  %3754 = vmatprep.subr.mxu0 0.0
  %3755 = vmatpush1.msra.mxu0 0.0
  %3756 = vmatprep.subr.mxu0 0.0
  %3757 = vmatpush1.msra.mxu0 0.0
  %3758 = vmatprep.subr.mxu0 0.0
  %3759 = vmatpush1.msra.mxu0 %v3062
  %3760 = vmatprep.subr.mxu0 0.0
  %3761 = vmatpush1.msra.mxu0 %v3061
  %3762 = vmatprep.subr.mxu0 0.0
  %3763 = vmatpush1.msra.mxu0 %v3060
  %3764 = vmatprep.subr.mxu0 0.0
  %3765 = vmatpush1.msra.mxu0 %v3059
  %3766 = vmatprep.subr.mxu0 0.0
  %3767 = vmatpush1.msra.mxu0 %v3058
  %3768 = vmatprep.subr.mxu0 0.0
  %3769 = vmatpush1.msra.mxu0 %v3057
  %3770 = vmatprep.subr.mxu0 0.0
  %3771 = vmatpush1.msra.mxu0 %v3056
  %3772 = vmatprep.subr.mxu0 0.0
  %3773 = vmatpush1.msra.mxu0 %v3055
  %3774 = vmatprep.subr.mxu0 0.0
  %3775 = vmatpush1.msra.mxu0 %v3054
  %3776 = vmatprep.subr.mxu0 0.0
  %3777 = vmatpush1.msra.mxu0 %v3053
  %3778 = vmatprep.subr.mxu0 0.0
  %3779 = vmatpush1.msra.mxu0 %v3052
  %3780 = vmatprep.subr.mxu0 0.0
  %3781 = vmatpush1.msra.mxu0 %v3051
  %3782 = vmatprep.subr.mxu0 0.0
  %3783 = vmatpush2.msra.mxu0 0.0
  %3784 = vmatprep.subr.mxu0 0.0
  %3785 = vmatpush2.msra.mxu0 0.0
  %3786 = vmatprep.subr.mxu0 0.0
  %3787 = vmatpush2.msra.mxu0 0.0
  %3788 = vmatprep.subr.mxu0 0.0
  %3789 = vmatpush2.msra.mxu0 0.0
  %3790 = vmatprep.subr.mxu0 0.0
  %3791 = vmatpush2.msra.mxu0 0.0
  %3792 = vmatprep.subr.mxu0 0.0
  %3793 = vmatpush2.msra.mxu0 0.0
  %3794 = vmatprep.subr.mxu0 0.0
  %3795 = vmatpush2.msra.mxu0 0.0
  %3796 = vmatprep.subr.mxu0 0.0
  %3797 = vmatpush2.msra.mxu0 0.0
  %3798 = vmatprep.subr.mxu0 0.0
  %3799 = vmatpush2.msra.mxu0 0.0
  %3800 = vmatprep.subr.mxu0 0.0
  %3801 = vmatpush2.msra.mxu0 0.0
  %3802 = vmatprep.subr.mxu0 0.0
  %3803 = vmatpush2.msra.mxu0 0.0
  %3804 = vmatprep.subr.mxu0 0.0
  %3805 = vmatpush2.msra.mxu0 0.0
  %3806 = vmatprep.subr.mxu0 0.0
  %3807 = vmatpush2.msra.mxu0 0.0
  %3808 = vmatprep.subr.mxu0 0.0
  %3809 = vmatpush2.msra.mxu0 0.0
  %3810 = vmatprep.subr.mxu0 0.0
  %3811 = vmatpush2.msra.mxu0 0.0
  %3812 = vmatprep.subr.mxu0 0.0
  %3813 = vmatpush2.msra.mxu0 0.0
  %3814 = vmatprep.mubr.f32.mxu0 0.0
  %3815 = vmatmul.mubr.f32.gmra.mxu0 %v3703
  %v3816 = vpop.f32.mrf.mxu0
  %v3817 = vadd.f32 %v3063, %v3816
  %v3818 = vpop.f32.mrf.mxu0
  %3819 = vmatprep.mubr.f32.mxu0 0.0
  %3820 = vmatmul.mubr.f32.gmra.mxu0 %v3706
  %v3821 = vpop.f32.mrf.mxu0
  %v3822 = vadd.f32 %v3063, %v3821
  %v3823 = vpop.f32.mrf.mxu0
  %3824 = vmatprep.mubr.f32.mxu0 0.0
  %3825 = vmatmul.mubr.f32.gmra.mxu0 %v3709
  %v3826 = vpop.f32.mrf.mxu0
  %v3827 = vadd.f32 %v3063, %v3826
  %v3828 = vpop.f32.mrf.mxu0
  %3829 = vmatprep.mubr.f32.mxu0 0.0
  %3830 = vmatmul.mubr.f32.gmra.mxu0 %v3712
  %v3831 = vpop.f32.mrf.mxu0
  %v3832 = vadd.f32 %v3063, %v3831
  %v3833 = vpop.f32.mrf.mxu0
  %3834 = vmatprep.mubr.f32.mxu0 0.0
  %3835 = vmatmul.mubr.f32.gmra.mxu0 %v3715
  %v3836 = vpop.f32.mrf.mxu0
  %v3837 = vadd.f32 %v3063, %v3836
  %v3838 = vpop.f32.mrf.mxu0
  %3839 = vmatprep.mubr.f32.mxu0 0.0
  %3840 = vmatmul.mubr.f32.gmra.mxu0 %v3718
  %v3841 = vpop.f32.mrf.mxu0
  %v3842 = vadd.f32 %v3063, %v3841
  %v3843 = vpop.f32.mrf.mxu0
  %3844 = vmatprep.mubr.f32.mxu0 0.0
  %3845 = vmatmul.mubr.f32.gmra.mxu0 %v3721
  %v3846 = vpop.f32.mrf.mxu0
  %v3847 = vadd.f32 %v3063, %v3846
  %v3848 = vpop.f32.mrf.mxu0
  %3849 = vmatprep.mubr.f32.mxu0 0.0
  %3850 = vmatmul.mubr.f32.gmra.mxu0 %v3724
  %v3851 = vpop.f32.mrf.mxu0
  %v3852 = vadd.f32 %v3063, %v3851
  %v3853 = vpop.f32.mrf.mxu0
  %3854 = vmatprep.mubr.f32.mxu0 0.0
  %3855 = vmatmul.mubr.f32.gmra.mxu0 %v3727
  %v3856 = vpop.f32.mrf.mxu0
  %v3857 = vadd.f32 %v3063, %v3856
  %v3858 = vpop.f32.mrf.mxu0
  %3859 = vmatprep.mubr.f32.mxu0 0.0
  %3860 = vmatmul.mubr.f32.gmra.mxu0 %v3730
  %v3861 = vpop.f32.mrf.mxu0
  %v3862 = vadd.f32 %v3063, %v3861
  %v3863 = vpop.f32.mrf.mxu0
  %3864 = vmatprep.mubr.f32.mxu0 0.0
  %3865 = vmatmul.mubr.f32.gmra.mxu0 %v3733
  %v3866 = vpop.f32.mrf.mxu0
  %v3867 = vadd.f32 %v3063, %v3866
  %v3868 = vpop.f32.mrf.mxu0
  %3869 = vmatprep.mubr.f32.mxu0 0.0
  %3870 = vmatmul.mubr.f32.gmra.mxu0 %v3736
  %v3871 = vpop.f32.mrf.mxu0
  %v3872 = vadd.f32 %v3063, %v3871
  %v3873 = vpop.f32.mrf.mxu0
  %3874 = vmatprep.mubr.f32.mxu0 0.0
  %3875 = vmatmul.mubr.f32.gmra.mxu0 %v3739
  %v3876 = vpop.f32.mrf.mxu0
  %v3877 = vadd.f32 %v3063, %v3876
  %v3878 = vpop.f32.mrf.mxu0
  %3879 = vmatprep.mubr.f32.mxu0 0.0
  %3880 = vmatmul.mubr.f32.gmra.mxu0 %v3742
  %v3881 = vpop.f32.mrf.mxu0
  %v3882 = vadd.f32 %v3063, %v3881
  %v3883 = vpop.f32.mrf.mxu0
  %3884 = vmatprep.mubr.f32.mxu0 0.0
  %3885 = vmatmul.mubr.f32.gmra.mxu0 %v3745
  %v3886 = vpop.f32.mrf.mxu0
  %v3887 = vadd.f32 %v3063, %v3886
  %v3888 = vpop.f32.mrf.mxu0
  %3889 = vmatprep.mubr.f32.mxu0 0.0
  %3890 = vmatmul.mubr.f32.gmra.mxu0 %v3748
  %v3891 = vpop.f32.mrf.mxu0
  %v3892 = vadd.f32 %v3063, %v3891
  %v3893 = vpop.f32.mrf.mxu0
  %3894 = vdwg.mxu0
  %v3895 = vmax.f32 %v3817, 0.0
  %v3896 = vmax.f32 %v3822, 0.0
  %v3897 = vmax.f32 %v3827, 0.0
  %v3898 = vmax.f32 %v3832, 0.0
  %v3899 = vmax.f32 %v3837, 0.0
  %v3900 = vmax.f32 %v3842, 0.0
  %v3901 = vmax.f32 %v3847, 0.0
  %v3902 = vmax.f32 %v3852, 0.0
  %v3903 = vmax.f32 %v3857, 0.0
  %v3904 = vmax.f32 %v3862, 0.0
  %v3905 = vmax.f32 %v3867, 0.0
  %v3906 = vmax.f32 %v3872, 0.0
  %v3907 = vmax.f32 %v3877, 0.0
  %v3908 = vmax.f32 %v3882, 0.0
  %v3909 = vmax.f32 %v3887, 0.0
  %v3910 = vmax.f32 %v3892, 0.0
  %v3911 = vsel %vm2830, %v3895, 0.0
  %v3912 = vsel %vm2831, %v3896, 0.0
  %v3913 = vsel %vm2832, %v3897, 0.0
  %v3914 = vsel %vm2833, %v3898, 0.0
  %v3915 = vsel %vm2834, %v3899, 0.0
  %v3916 = vsel %vm2835, %v3900, 0.0
  %v3917 = vsel %vm2836, %v3901, 0.0
  %v3918 = vsel %vm2837, %v3902, 0.0
  %v3919 = vsel %vm2838, %v3903, 0.0
  %v3920 = vsel %vm2839, %v3904, 0.0
  %v3921 = vsel %vm2840, %v3905, 0.0
  %v3922 = vsel %vm2841, %v3906, 0.0
  %v3923 = vsel %vm2842, %v3907, 0.0
  %v3924 = vsel %vm2843, %v3908, 0.0
  %v3925 = vsel %vm2844, %v3909, 0.0
  %v3926 = vsel %vm2845, %v3910, 0.0
  %v3927 = vsel %vm2894, %v3911, 0.0
  %v3928 = vsel %vm2894, %v3912, 0.0
  %v3929 = vadd.f32 %v3927, %v3928
  %v3930 = vsel %vm2894, %v3913, 0.0
  %v3931 = vadd.f32 %v3929, %v3930
  %v3932 = vsel %vm2894, %v3914, 0.0
  %v3933 = vadd.f32 %v3931, %v3932
  %v3934 = vsel %vm2894, %v3915, 0.0
  %v3935 = vadd.f32 %v3933, %v3934
  %v3936 = vsel %vm2894, %v3916, 0.0
  %v3937 = vadd.f32 %v3935, %v3936
  %v3938 = vsel %vm2894, %v3917, 0.0
  %v3939 = vadd.f32 %v3937, %v3938
  %v3940 = vsel %vm2894, %v3918, 0.0
  %v3941 = vadd.f32 %v3939, %v3940
  %v3942 = vrot.slane %v3941, 4
  %v3943 = vadd.f32 %v3941, %v3942
  %v3944 = vrot.slane %v3943, 2
  %v3945 = vadd.f32 %v3943, %v3944
  %v3946 = vrot.slane %v3945, 1
  %v3947 = vadd.f32 %v3945, %v3946
  %v3948 = vsel %vm2894, %v3919, 0.0
  %v3949 = vsel %vm2894, %v3920, 0.0
  %v3950 = vadd.f32 %v3948, %v3949
  %v3951 = vsel %vm2894, %v3921, 0.0
  %v3952 = vadd.f32 %v3950, %v3951
  %v3953 = vsel %vm2894, %v3922, 0.0
  %v3954 = vadd.f32 %v3952, %v3953
  %v3955 = vsel %vm2894, %v3923, 0.0
  %v3956 = vadd.f32 %v3954, %v3955
  %v3957 = vsel %vm2894, %v3924, 0.0
  %v3958 = vadd.f32 %v3956, %v3957
  %v3959 = vsel %vm2894, %v3925, 0.0
  %v3960 = vadd.f32 %v3958, %v3959
  %v3961 = vsel %vm2894, %v3926, 0.0
  %v3962 = vadd.f32 %v3960, %v3961
  %v3963 = vrot.slane %v3962, 4
  %v3964 = vadd.f32 %v3962, %v3963
  %v3965 = vrot.slane %v3964, 2
  %v3966 = vadd.f32 %v3964, %v3965
  %v3967 = vrot.slane %v3966, 1
  %v3968 = vadd.f32 %v3966, %v3967
  %v3969 = vmul.f32 %v3947, 0.03125
  %v3970 = vmul.f32 %v3968, 0.03125
  %v3973 = vsel %vm2973, %v3970, %v3969
  %v3974 = vsel %vm2894, %v3973, 0
  %3976 = vmatprep.subr.mxu0 0.0
  %3977 = vmatpush1.msra.mxu0 0.0
  %3978 = vmatprep.subr.mxu0 0.0
  %3979 = vmatpush1.msra.mxu0 0.0
  %3980 = vmatprep.subr.mxu0 0.0
  %3981 = vmatpush1.msra.mxu0 0.0
  %3982 = vmatprep.subr.mxu0 0.0
  %3983 = vmatpush1.msra.mxu0 0.0
  %3984 = vmatprep.subr.mxu0 0.0
  %3985 = vmatpush1.msra.mxu0 0.0
  %3986 = vmatprep.subr.mxu0 0.0
  %3987 = vmatpush1.msra.mxu0 0.0
  %3988 = vmatprep.subr.mxu0 0.0
  %3989 = vmatpush1.msra.mxu0 0.0
  %3990 = vmatprep.subr.mxu0 0.0
  %3991 = vmatpush1.msra.mxu0 0.0
  %3992 = vmatprep.subr.mxu0 0.0
  %3993 = vmatpush1.msra.mxu0 %v3071
  %3994 = vmatprep.subr.mxu0 0.0
  %3995 = vmatpush1.msra.mxu0 %v3070
  %3996 = vmatprep.subr.mxu0 0.0
  %3997 = vmatpush1.msra.mxu0 %v3069
  %3998 = vmatprep.subr.mxu0 0.0
  %3999 = vmatpush1.msra.mxu0 %v3068
  %4000 = vmatprep.subr.mxu0 0.0
  %4001 = vmatpush1.msra.mxu0 %v3067
  %4002 = vmatprep.subr.mxu0 0.0
  %4003 = vmatpush1.msra.mxu0 %v3066
  %4004 = vmatprep.subr.mxu0 0.0
  %4005 = vmatpush1.msra.mxu0 %v3065
  %4006 = vmatprep.subr.mxu0 0.0
  %4007 = vmatpush1.msra.mxu0 %v3064
  %4008 = vmatprep.subr.mxu0 0.0
  %4009 = vmatpush2.msra.mxu0 0.0
  %4010 = vmatprep.subr.mxu0 0.0
  %4011 = vmatpush2.msra.mxu0 0.0
  %4012 = vmatprep.subr.mxu0 0.0
  %4013 = vmatpush2.msra.mxu0 0.0
  %4014 = vmatprep.subr.mxu0 0.0
  %4015 = vmatpush2.msra.mxu0 0.0
  %4016 = vmatprep.subr.mxu0 0.0
  %4017 = vmatpush2.msra.mxu0 0.0
  %4018 = vmatprep.subr.mxu0 0.0
  %4019 = vmatpush2.msra.mxu0 0.0
  %4020 = vmatprep.subr.mxu0 0.0
  %4021 = vmatpush2.msra.mxu0 0.0
  %4022 = vmatprep.subr.mxu0 0.0
  %4023 = vmatpush2.msra.mxu0 0.0
  %4024 = vmatprep.subr.mxu0 0.0
  %4025 = vmatpush2.msra.mxu0 0.0
  %4026 = vmatprep.subr.mxu0 0.0
  %4027 = vmatpush2.msra.mxu0 0.0
  %4028 = vmatprep.subr.mxu0 0.0
  %4029 = vmatpush2.msra.mxu0 0.0
  %4030 = vmatprep.subr.mxu0 0.0
  %4031 = vmatpush2.msra.mxu0 0.0
  %4032 = vmatprep.subr.mxu0 0.0
  %4033 = vmatpush2.msra.mxu0 0.0
  %4034 = vmatprep.subr.mxu0 0.0
  %4035 = vmatpush2.msra.mxu0 0.0
  %4036 = vmatprep.subr.mxu0 0.0
  %4037 = vmatpush2.msra.mxu0 0.0
  %4038 = vmatprep.subr.mxu0 0.0
  %4039 = vmatpush2.msra.mxu0 0.0
  %4040 = vmatprep.mubr.f32.mxu0 0.0
  %4041 = vmatmul.mubr.f32.gmra.mxu0 %v3974
  %v4042 = vpop.f32.mrf.mxu0
  %v4043 = vadd.f32 %v3072, %v4042
  %v4044 = vpop.f32.mrf.mxu0
  %4045 = vdwg.mxu0
  %v4046 = vld [vmem:[%s4 + $0x30] sm:$0xff]
  %v4047 = vld [vmem:[%s4 + $0x38] sm:$0xff]
  %v4048 = vld [vmem:[%s4 + $0x40] sm:$0xff]
  %v4049 = vld [vmem:[%s4 + $0x48] sm:$0xff]
  %v4050 = vld [vmem:[%s4 + $0x50] sm:$0xff]
  %v4051 = vld [vmem:[%s2] sm:$0xff]
  %v4052 = vld [vmem:[%s2 + $0x8] sm:$0xff]
  %v4053 = vld [vmem:[%s3 + $0x12] ss:$0 sm:$0xff]
  %vm4054 = vcmask 64512
  %v4056 = vsel %vm4054, %v4051, 0
  %v4059 = vsel %vm4054, %v4052, 0
  %4061 = vmatprep.subr.mxu0 0.0
  %4062 = vmatpush1.msra.mxu0 0.0
  %4063 = vmatprep.subr.mxu0 0.0
  %4064 = vmatpush1.msra.mxu0 0.0
  %4065 = vmatprep.subr.mxu0 0.0
  %4066 = vmatpush1.msra.mxu0 0.0
  %4067 = vmatprep.subr.mxu0 0.0
  %4068 = vmatpush1.msra.mxu0 0.0
  %4069 = vmatprep.subr.mxu0 0.0
  %4070 = vmatpush1.msra.mxu0 0.0
  %4071 = vmatprep.subr.mxu0 0.0
  %4072 = vmatpush1.msra.mxu0 0.0
  %4073 = vmatprep.subr.mxu0 0.0
  %4074 = vmatpush1.msra.mxu0 0.0
  %4075 = vmatprep.subr.mxu0 0.0
  %4076 = vmatpush1.msra.mxu0 0.0
  %4077 = vmatprep.subr.mxu0 0.0
  %4078 = vmatpush1.msra.mxu0 0.0
  %4079 = vmatprep.subr.mxu0 0.0
  %4080 = vmatpush1.msra.mxu0 0.0
  %4081 = vmatprep.subr.mxu0 0.0
  %4082 = vmatpush1.msra.mxu0 0.0
  %4083 = vmatprep.subr.mxu0 0.0
  %4084 = vmatpush1.msra.mxu0 0.0
  %4085 = vmatprep.subr.mxu0 0.0
  %4086 = vmatpush1.msra.mxu0 0.0
  %4087 = vmatprep.subr.mxu0 0.0
  %4088 = vmatpush1.msra.mxu0 0.0
  %4089 = vmatprep.subr.mxu0 0.0
  %4090 = vmatpush1.msra.mxu0 0.0
  %4091 = vmatprep.subr.mxu0 0.0
  %4092 = vmatpush1.msra.mxu0 %v4046
  %4093 = vmatprep.subr.mxu0 0.0
  %4094 = vmatpush2.msra.mxu0 0.0
  %4095 = vmatprep.subr.mxu0 0.0
  %4096 = vmatpush2.msra.mxu0 0.0
  %4097 = vmatprep.subr.mxu0 0.0
  %4098 = vmatpush2.msra.mxu0 0.0
  %4099 = vmatprep.subr.mxu0 0.0
  %4100 = vmatpush2.msra.mxu0 0.0
  %4101 = vmatprep.subr.mxu0 0.0
  %4102 = vmatpush2.msra.mxu0 0.0
  %4103 = vmatprep.subr.mxu0 0.0
  %4104 = vmatpush2.msra.mxu0 0.0
  %4105 = vmatprep.subr.mxu0 0.0
  %4106 = vmatpush2.msra.mxu0 0.0
  %4107 = vmatprep.subr.mxu0 0.0
  %4108 = vmatpush2.msra.mxu0 0.0
  %4109 = vmatprep.subr.mxu0 0.0
  %4110 = vmatpush2.msra.mxu0 0.0
  %4111 = vmatprep.subr.mxu0 0.0
  %4112 = vmatpush2.msra.mxu0 0.0
  %4113 = vmatprep.subr.mxu0 0.0
  %4114 = vmatpush2.msra.mxu0 0.0
  %4115 = vmatprep.subr.mxu0 0.0
  %4116 = vmatpush2.msra.mxu0 0.0
  %4117 = vmatprep.subr.mxu0 0.0
  %4118 = vmatpush2.msra.mxu0 0.0
  %4119 = vmatprep.subr.mxu0 0.0
  %4120 = vmatpush2.msra.mxu0 0.0
  %4121 = vmatprep.subr.mxu0 0.0
  %4122 = vmatpush2.msra.mxu0 0.0
  %4123 = vmatprep.subr.mxu0 0.0
  %4124 = vmatpush2.msra.mxu0 0.0
  %4125 = vmatprep.mubr.f32.mxu0 0.0
  %4126 = vmatmul.mubr.f32.gmra.mxu0 %v4056
  %v4127 = vpop.f32.mrf.mxu0
  %v4128 = vadd.f32 %v4053, %v4127
  %v4129 = vpop.f32.mrf.mxu0
  %4130 = vmatprep.mubr.f32.mxu0 0.0
  %4131 = vmatmul.mubr.f32.gmra.mxu0 %v4059
  %v4132 = vpop.f32.mrf.mxu0
  %v4133 = vadd.f32 %v4053, %v4132
  %v4134 = vpop.f32.mrf.mxu0
  %4135 = vdwg.mxu0
  %v4137 = vsel %vm1597, 0.0, 0
  %4139 = vmatprep.subr.mxu0 0.0
  %4140 = vmatpush1.msra.mxu0 0.0
  %4141 = vmatprep.subr.mxu0 0.0
  %4142 = vmatpush1.msra.mxu0 0.0
  %4143 = vmatprep.subr.mxu0 0.0
  %4144 = vmatpush1.msra.mxu0 0.0
  %4145 = vmatprep.subr.mxu0 0.0
  %4146 = vmatpush1.msra.mxu0 0.0
  %4147 = vmatprep.subr.mxu0 0.0
  %4148 = vmatpush1.msra.mxu0 0.0
  %4149 = vmatprep.subr.mxu0 0.0
  %4150 = vmatpush1.msra.mxu0 0.0
  %4151 = vmatprep.subr.mxu0 0.0
  %4152 = vmatpush1.msra.mxu0 0.0
  %4153 = vmatprep.subr.mxu0 0.0
  %4154 = vmatpush1.msra.mxu0 0.0
  %4155 = vmatprep.subr.mxu0 0.0
  %4156 = vmatpush1.msra.mxu0 0.0
  %4157 = vmatprep.subr.mxu0 0.0
  %4158 = vmatpush1.msra.mxu0 0.0
  %4159 = vmatprep.subr.mxu0 0.0
  %4160 = vmatpush1.msra.mxu0 0.0
  %4161 = vmatprep.subr.mxu0 0.0
  %4162 = vmatpush1.msra.mxu0 0.0
  %4163 = vmatprep.subr.mxu0 0.0
  %4164 = vmatpush1.msra.mxu0 %v4050
  %4165 = vmatprep.subr.mxu0 0.0
  %4166 = vmatpush1.msra.mxu0 %v4049
  %4167 = vmatprep.subr.mxu0 0.0
  %4168 = vmatpush1.msra.mxu0 %v4048
  %4169 = vmatprep.subr.mxu0 0.0
  %4170 = vmatpush1.msra.mxu0 %v4047
  %4171 = vmatprep.subr.mxu0 0.0
  %4172 = vmatpush2.msra.mxu0 0.0
  %4173 = vmatprep.subr.mxu0 0.0
  %4174 = vmatpush2.msra.mxu0 0.0
  %4175 = vmatprep.subr.mxu0 0.0
  %4176 = vmatpush2.msra.mxu0 0.0
  %4177 = vmatprep.subr.mxu0 0.0
  %4178 = vmatpush2.msra.mxu0 0.0
  %4179 = vmatprep.subr.mxu0 0.0
  %4180 = vmatpush2.msra.mxu0 0.0
  %4181 = vmatprep.subr.mxu0 0.0
  %4182 = vmatpush2.msra.mxu0 0.0
  %4183 = vmatprep.subr.mxu0 0.0
  %4184 = vmatpush2.msra.mxu0 0.0
  %4185 = vmatprep.subr.mxu0 0.0
  %4186 = vmatpush2.msra.mxu0 0.0
  %4187 = vmatprep.subr.mxu0 0.0
  %4188 = vmatpush2.msra.mxu0 0.0
  %4189 = vmatprep.subr.mxu0 0.0
  %4190 = vmatpush2.msra.mxu0 0.0
  %4191 = vmatprep.subr.mxu0 0.0
  %4192 = vmatpush2.msra.mxu0 0.0
  %4193 = vmatprep.subr.mxu0 0.0
  %4194 = vmatpush2.msra.mxu0 0.0
  %4195 = vmatprep.subr.mxu0 0.0
  %4196 = vmatpush2.msra.mxu0 0.0
  %4197 = vmatprep.subr.mxu0 0.0
  %4198 = vmatpush2.msra.mxu0 0.0
  %4199 = vmatprep.subr.mxu0 0.0
  %4200 = vmatpush2.msra.mxu0 0.0
  %4201 = vmatprep.subr.mxu0 0.0
  %4202 = vmatpush2.msra.mxu0 0.0
  %4203 = vmatprep.mubr.f32.mxu0 0.0
  %4204 = vmatmul.mubr.f32.gmra.mxu0 %v4137
  %v4205 = vpop.f32.mrf.mxu0
  %v4206 = vadd.f32 0.0, %v4205
  %v4207 = vpop.f32.mrf.mxu0
  %4208 = vdwg.mxu0
  %v4209 = vadd.f32 %v4128, %v4206
  %v4210 = vxor.u32 %v4209, 2147483648
  %v4211 = vmul.f32 %v4210, 1.442695
  %v4212 = vpow.pop %v4211
  %v4213 = vadd.f32 %v4212, 1.0
  %v4214 = vrcp.pop %v4213
  %v4215 = vmul.f32 1.0, %v4214
  %v4216 = vtanh.pop %v4209
  %v4217 = vmul.f32 %v4215, 0.0
  %4219 = vrot.lane.b32.xlu0 %v4216, 64
  %v4220 = vpop.permute.xlu0 %4219
  %v4222 = vmul.f32 %v4215, %v4220
  %4224 = vrot.lane.b32.xlu0 %v4222, 32
  %v4225 = vpop.permute.xlu0 %4224
  %v4227 = vadd.f32 %v4217, %v4225
  %v4228 = vtanh.pop %v4227
  %4230 = vrot.lane.b32.xlu0 %v4228, 64
  %v4231 = vpop.permute.xlu0 %4230
  %v4233 = vmul.f32 %v4215, %v4231
  %4235 = vrot.lane.b32.xlu0 %v4233, 32
  %v4236 = vpop.permute.xlu0 %4235
  %v4237 = vsel %vm1597, %v4236, 0
  %4239 = vmatprep.subr.mxu0 0.0
  %4240 = vmatpush1.msra.mxu0 0.0
  %4241 = vmatprep.subr.mxu0 0.0
  %4242 = vmatpush1.msra.mxu0 0.0
  %4243 = vmatprep.subr.mxu0 0.0
  %4244 = vmatpush1.msra.mxu0 0.0
  %4245 = vmatprep.subr.mxu0 0.0
  %4246 = vmatpush1.msra.mxu0 0.0
  %4247 = vmatprep.subr.mxu0 0.0
  %4248 = vmatpush1.msra.mxu0 0.0
  %4249 = vmatprep.subr.mxu0 0.0
  %4250 = vmatpush1.msra.mxu0 0.0
  %4251 = vmatprep.subr.mxu0 0.0
  %4252 = vmatpush1.msra.mxu0 0.0
  %4253 = vmatprep.subr.mxu0 0.0
  %4254 = vmatpush1.msra.mxu0 0.0
  %4255 = vmatprep.subr.mxu0 0.0
  %4256 = vmatpush1.msra.mxu0 0.0
  %4257 = vmatprep.subr.mxu0 0.0
  %4258 = vmatpush1.msra.mxu0 0.0
  %4259 = vmatprep.subr.mxu0 0.0
  %4260 = vmatpush1.msra.mxu0 0.0
  %4261 = vmatprep.subr.mxu0 0.0
  %4262 = vmatpush1.msra.mxu0 0.0
  %4263 = vmatprep.subr.mxu0 0.0
  %4264 = vmatpush1.msra.mxu0 %v4050
  %4265 = vmatprep.subr.mxu0 0.0
  %4266 = vmatpush1.msra.mxu0 %v4049
  %4267 = vmatprep.subr.mxu0 0.0
  %4268 = vmatpush1.msra.mxu0 %v4048
  %4269 = vmatprep.subr.mxu0 0.0
  %4270 = vmatpush1.msra.mxu0 %v4047
  %4271 = vmatprep.subr.mxu0 0.0
  %4272 = vmatpush2.msra.mxu0 0.0
  %4273 = vmatprep.subr.mxu0 0.0
  %4274 = vmatpush2.msra.mxu0 0.0
  %4275 = vmatprep.subr.mxu0 0.0
  %4276 = vmatpush2.msra.mxu0 0.0
  %4277 = vmatprep.subr.mxu0 0.0
  %4278 = vmatpush2.msra.mxu0 0.0
  %4279 = vmatprep.subr.mxu0 0.0
  %4280 = vmatpush2.msra.mxu0 0.0
  %4281 = vmatprep.subr.mxu0 0.0
  %4282 = vmatpush2.msra.mxu0 0.0
  %4283 = vmatprep.subr.mxu0 0.0
  %4284 = vmatpush2.msra.mxu0 0.0
  %4285 = vmatprep.subr.mxu0 0.0
  %4286 = vmatpush2.msra.mxu0 0.0
  %4287 = vmatprep.subr.mxu0 0.0
  %4288 = vmatpush2.msra.mxu0 0.0
  %4289 = vmatprep.subr.mxu0 0.0
  %4290 = vmatpush2.msra.mxu0 0.0
  %4291 = vmatprep.subr.mxu0 0.0
  %4292 = vmatpush2.msra.mxu0 0.0
  %4293 = vmatprep.subr.mxu0 0.0
  %4294 = vmatpush2.msra.mxu0 0.0
  %4295 = vmatprep.subr.mxu0 0.0
  %4296 = vmatpush2.msra.mxu0 0.0
  %4297 = vmatprep.subr.mxu0 0.0
  %4298 = vmatpush2.msra.mxu0 0.0
  %4299 = vmatprep.subr.mxu0 0.0
  %4300 = vmatpush2.msra.mxu0 0.0
  %4301 = vmatprep.subr.mxu0 0.0
  %4302 = vmatpush2.msra.mxu0 0.0
  %4303 = vmatprep.mubr.f32.mxu0 0.0
  %4304 = vmatmul.mubr.f32.gmra.mxu0 %v4237
  %v4305 = vpop.f32.mrf.mxu0
  %v4306 = vadd.f32 0.0, %v4305
  %v4307 = vpop.f32.mrf.mxu0
  %4308 = vdwg.mxu0
  %v4310 = vrot.slane %v4306, 6
  %v4312 = vadd.f32 %v4128, %v4310
  %v4313 = vxor.u32 %v4312, 2147483648
  %v4314 = vmul.f32 %v4313, 1.442695
  %v4315 = vpow.pop %v4314
  %v4316 = vadd.f32 %v4315, 1.0
  %v4317 = vrcp.pop %v4316
  %v4318 = vmul.f32 1.0, %v4317
  %v4319 = vtanh.pop %v4312
  %v4321 = vrot.slane %v4227, 6
  %v4323 = vmul.f32 %v4318, %v4321
  %4325 = vrot.lane.b32.xlu0 %v4319, 64
  %v4326 = vpop.permute.xlu0 %4325
  %v4328 = vmul.f32 %v4318, %v4326
  %4330 = vrot.lane.b32.xlu0 %v4328, 32
  %v4331 = vpop.permute.xlu0 %4330
  %v4333 = vadd.f32 %v4323, %v4331
  %v4334 = vtanh.pop %v4333
  %4336 = vrot.lane.b32.xlu0 %v4334, 64
  %v4337 = vpop.permute.xlu0 %4336
  %v4339 = vmul.f32 %v4318, %v4337
  %v4341 = vrot.slane %v4339, 2
  %4342 = vrot.lane.b32.xlu0 %v4341, 32
  %v4343 = vpop.permute.xlu0 %4342
  %v4344 = vsel %vm1597, %v4343, 0
  %4346 = vmatprep.subr.mxu0 0.0
  %4347 = vmatpush1.msra.mxu0 0.0
  %4348 = vmatprep.subr.mxu0 0.0
  %4349 = vmatpush1.msra.mxu0 0.0
  %4350 = vmatprep.subr.mxu0 0.0
  %4351 = vmatpush1.msra.mxu0 0.0
  %4352 = vmatprep.subr.mxu0 0.0
  %4353 = vmatpush1.msra.mxu0 0.0
  %4354 = vmatprep.subr.mxu0 0.0
  %4355 = vmatpush1.msra.mxu0 0.0
  %4356 = vmatprep.subr.mxu0 0.0
  %4357 = vmatpush1.msra.mxu0 0.0
  %4358 = vmatprep.subr.mxu0 0.0
  %4359 = vmatpush1.msra.mxu0 0.0
  %4360 = vmatprep.subr.mxu0 0.0
  %4361 = vmatpush1.msra.mxu0 0.0
  %4362 = vmatprep.subr.mxu0 0.0
  %4363 = vmatpush1.msra.mxu0 0.0
  %4364 = vmatprep.subr.mxu0 0.0
  %4365 = vmatpush1.msra.mxu0 0.0
  %4366 = vmatprep.subr.mxu0 0.0
  %4367 = vmatpush1.msra.mxu0 0.0
  %4368 = vmatprep.subr.mxu0 0.0
  %4369 = vmatpush1.msra.mxu0 0.0
  %4370 = vmatprep.subr.mxu0 0.0
  %4371 = vmatpush1.msra.mxu0 %v4050
  %4372 = vmatprep.subr.mxu0 0.0
  %4373 = vmatpush1.msra.mxu0 %v4049
  %4374 = vmatprep.subr.mxu0 0.0
  %4375 = vmatpush1.msra.mxu0 %v4048
  %4376 = vmatprep.subr.mxu0 0.0
  %4377 = vmatpush1.msra.mxu0 %v4047
  %4378 = vmatprep.subr.mxu0 0.0
  %4379 = vmatpush2.msra.mxu0 0.0
  %4380 = vmatprep.subr.mxu0 0.0
  %4381 = vmatpush2.msra.mxu0 0.0
  %4382 = vmatprep.subr.mxu0 0.0
  %4383 = vmatpush2.msra.mxu0 0.0
  %4384 = vmatprep.subr.mxu0 0.0
  %4385 = vmatpush2.msra.mxu0 0.0
  %4386 = vmatprep.subr.mxu0 0.0
  %4387 = vmatpush2.msra.mxu0 0.0
  %4388 = vmatprep.subr.mxu0 0.0
  %4389 = vmatpush2.msra.mxu0 0.0
  %4390 = vmatprep.subr.mxu0 0.0
  %4391 = vmatpush2.msra.mxu0 0.0
  %4392 = vmatprep.subr.mxu0 0.0
  %4393 = vmatpush2.msra.mxu0 0.0
  %4394 = vmatprep.subr.mxu0 0.0
  %4395 = vmatpush2.msra.mxu0 0.0
  %4396 = vmatprep.subr.mxu0 0.0
  %4397 = vmatpush2.msra.mxu0 0.0
  %4398 = vmatprep.subr.mxu0 0.0
  %4399 = vmatpush2.msra.mxu0 0.0
  %4400 = vmatprep.subr.mxu0 0.0
  %4401 = vmatpush2.msra.mxu0 0.0
  %4402 = vmatprep.subr.mxu0 0.0
  %4403 = vmatpush2.msra.mxu0 0.0
  %4404 = vmatprep.subr.mxu0 0.0
  %4405 = vmatpush2.msra.mxu0 0.0
  %4406 = vmatprep.subr.mxu0 0.0
  %4407 = vmatpush2.msra.mxu0 0.0
  %4408 = vmatprep.subr.mxu0 0.0
  %4409 = vmatpush2.msra.mxu0 0.0
  %4410 = vmatprep.mubr.f32.mxu0 0.0
  %4411 = vmatmul.mubr.f32.gmra.mxu0 %v4344
  %v4412 = vpop.f32.mrf.mxu0
  %v4413 = vadd.f32 0.0, %v4412
  %v4414 = vpop.f32.mrf.mxu0
  %4415 = vdwg.mxu0
  %v4417 = vrot.slane %v4413, 4
  %v4419 = vadd.f32 %v4128, %v4417
  %v4420 = vxor.u32 %v4419, 2147483648
  %v4421 = vmul.f32 %v4420, 1.442695
  %v4422 = vpow.pop %v4421
  %v4423 = vadd.f32 %v4422, 1.0
  %v4424 = vrcp.pop %v4423
  %v4425 = vmul.f32 1.0, %v4424
  %v4426 = vtanh.pop %v4419
  %v4428 = vrot.slane %v4333, 6
  %v4430 = vmul.f32 %v4425, %v4428
  %4432 = vrot.lane.b32.xlu0 %v4426, 64
  %v4433 = vpop.permute.xlu0 %4432
  %v4435 = vmul.f32 %v4425, %v4433
  %4437 = vrot.lane.b32.xlu0 %v4435, 32
  %v4438 = vpop.permute.xlu0 %4437
  %v4440 = vadd.f32 %v4430, %v4438
  %v4441 = vtanh.pop %v4440
  %4443 = vrot.lane.b32.xlu0 %v4441, 64
  %v4444 = vpop.permute.xlu0 %4443
  %v4446 = vmul.f32 %v4425, %v4444
  %v4448 = vrot.slane %v4446, 4
  %4449 = vrot.lane.b32.xlu0 %v4448, 32
  %v4450 = vpop.permute.xlu0 %4449
  %v4451 = vsel %vm1597, %v4450, 0
  %4453 = vmatprep.subr.mxu0 0.0
  %4454 = vmatpush1.msra.mxu0 0.0
  %4455 = vmatprep.subr.mxu0 0.0
  %4456 = vmatpush1.msra.mxu0 0.0
  %4457 = vmatprep.subr.mxu0 0.0
  %4458 = vmatpush1.msra.mxu0 0.0
  %4459 = vmatprep.subr.mxu0 0.0
  %4460 = vmatpush1.msra.mxu0 0.0
  %4461 = vmatprep.subr.mxu0 0.0
  %4462 = vmatpush1.msra.mxu0 0.0
  %4463 = vmatprep.subr.mxu0 0.0
  %4464 = vmatpush1.msra.mxu0 0.0
  %4465 = vmatprep.subr.mxu0 0.0
  %4466 = vmatpush1.msra.mxu0 0.0
  %4467 = vmatprep.subr.mxu0 0.0
  %4468 = vmatpush1.msra.mxu0 0.0
  %4469 = vmatprep.subr.mxu0 0.0
  %4470 = vmatpush1.msra.mxu0 0.0
  %4471 = vmatprep.subr.mxu0 0.0
  %4472 = vmatpush1.msra.mxu0 0.0
  %4473 = vmatprep.subr.mxu0 0.0
  %4474 = vmatpush1.msra.mxu0 0.0
  %4475 = vmatprep.subr.mxu0 0.0
  %4476 = vmatpush1.msra.mxu0 0.0
  %4477 = vmatprep.subr.mxu0 0.0
  %4478 = vmatpush1.msra.mxu0 %v4050
  %4479 = vmatprep.subr.mxu0 0.0
  %4480 = vmatpush1.msra.mxu0 %v4049
  %4481 = vmatprep.subr.mxu0 0.0
  %4482 = vmatpush1.msra.mxu0 %v4048
  %4483 = vmatprep.subr.mxu0 0.0
  %4484 = vmatpush1.msra.mxu0 %v4047
  %4485 = vmatprep.subr.mxu0 0.0
  %4486 = vmatpush2.msra.mxu0 0.0
  %4487 = vmatprep.subr.mxu0 0.0
  %4488 = vmatpush2.msra.mxu0 0.0
  %4489 = vmatprep.subr.mxu0 0.0
  %4490 = vmatpush2.msra.mxu0 0.0
  %4491 = vmatprep.subr.mxu0 0.0
  %4492 = vmatpush2.msra.mxu0 0.0
  %4493 = vmatprep.subr.mxu0 0.0
  %4494 = vmatpush2.msra.mxu0 0.0
  %4495 = vmatprep.subr.mxu0 0.0
  %4496 = vmatpush2.msra.mxu0 0.0
  %4497 = vmatprep.subr.mxu0 0.0
  %4498 = vmatpush2.msra.mxu0 0.0
  %4499 = vmatprep.subr.mxu0 0.0
  %4500 = vmatpush2.msra.mxu0 0.0
  %4501 = vmatprep.subr.mxu0 0.0
  %4502 = vmatpush2.msra.mxu0 0.0
  %4503 = vmatprep.subr.mxu0 0.0
  %4504 = vmatpush2.msra.mxu0 0.0
  %4505 = vmatprep.subr.mxu0 0.0
  %4506 = vmatpush2.msra.mxu0 0.0
  %4507 = vmatprep.subr.mxu0 0.0
  %4508 = vmatpush2.msra.mxu0 0.0
  %4509 = vmatprep.subr.mxu0 0.0
  %4510 = vmatpush2.msra.mxu0 0.0
  %4511 = vmatprep.subr.mxu0 0.0
  %4512 = vmatpush2.msra.mxu0 0.0
  %4513 = vmatprep.subr.mxu0 0.0
  %4514 = vmatpush2.msra.mxu0 0.0
  %4515 = vmatprep.subr.mxu0 0.0
  %4516 = vmatpush2.msra.mxu0 0.0
  %4517 = vmatprep.mubr.f32.mxu0 0.0
  %4518 = vmatmul.mubr.f32.gmra.mxu0 %v4451
  %v4519 = vpop.f32.mrf.mxu0
  %v4520 = vadd.f32 0.0, %v4519
  %v4521 = vpop.f32.mrf.mxu0
  %4522 = vdwg.mxu0
  %v4524 = vrot.slane %v4520, 2
  %v4526 = vadd.f32 %v4128, %v4524
  %v4527 = vxor.u32 %v4526, 2147483648
  %v4528 = vmul.f32 %v4527, 1.442695
  %v4529 = vpow.pop %v4528
  %v4530 = vadd.f32 %v4529, 1.0
  %v4531 = vrcp.pop %v4530
  %v4532 = vmul.f32 1.0, %v4531
  %v4533 = vtanh.pop %v4526
  %v4535 = vrot.slane %v4440, 6
  %v4537 = vmul.f32 %v4532, %v4535
  %4539 = vrot.lane.b32.xlu0 %v4533, 64
  %v4540 = vpop.permute.xlu0 %4539
  %v4542 = vmul.f32 %v4532, %v4540
  %4544 = vrot.lane.b32.xlu0 %v4542, 32
  %v4545 = vpop.permute.xlu0 %4544
  %v4547 = vadd.f32 %v4537, %v4545
  %v4548 = vtanh.pop %v4547
  %4550 = vrot.lane.b32.xlu0 %v4548, 64
  %v4551 = vpop.permute.xlu0 %4550
  %v4553 = vmul.f32 %v4532, %v4551
  %v4555 = vrot.slane %v4553, 6
  %4556 = vrot.lane.b32.xlu0 %v4555, 32
  %v4557 = vpop.permute.xlu0 %4556
  %v4558 = vsel %vm1597, %v4557, 0
  %4560 = vmatprep.subr.mxu0 0.0
  %4561 = vmatpush1.msra.mxu0 0.0
  %4562 = vmatprep.subr.mxu0 0.0
  %4563 = vmatpush1.msra.mxu0 0.0
  %4564 = vmatprep.subr.mxu0 0.0
  %4565 = vmatpush1.msra.mxu0 0.0
  %4566 = vmatprep.subr.mxu0 0.0
  %4567 = vmatpush1.msra.mxu0 0.0
  %4568 = vmatprep.subr.mxu0 0.0
  %4569 = vmatpush1.msra.mxu0 0.0
  %4570 = vmatprep.subr.mxu0 0.0
  %4571 = vmatpush1.msra.mxu0 0.0
  %4572 = vmatprep.subr.mxu0 0.0
  %4573 = vmatpush1.msra.mxu0 0.0
  %4574 = vmatprep.subr.mxu0 0.0
  %4575 = vmatpush1.msra.mxu0 0.0
  %4576 = vmatprep.subr.mxu0 0.0
  %4577 = vmatpush1.msra.mxu0 0.0
  %4578 = vmatprep.subr.mxu0 0.0
  %4579 = vmatpush1.msra.mxu0 0.0
  %4580 = vmatprep.subr.mxu0 0.0
  %4581 = vmatpush1.msra.mxu0 0.0
  %4582 = vmatprep.subr.mxu0 0.0
  %4583 = vmatpush1.msra.mxu0 0.0
  %4584 = vmatprep.subr.mxu0 0.0
  %4585 = vmatpush1.msra.mxu0 %v4050
  %4586 = vmatprep.subr.mxu0 0.0
  %4587 = vmatpush1.msra.mxu0 %v4049
  %4588 = vmatprep.subr.mxu0 0.0
  %4589 = vmatpush1.msra.mxu0 %v4048
  %4590 = vmatprep.subr.mxu0 0.0
  %4591 = vmatpush1.msra.mxu0 %v4047
  %4592 = vmatprep.subr.mxu0 0.0
  %4593 = vmatpush2.msra.mxu0 0.0
  %4594 = vmatprep.subr.mxu0 0.0
  %4595 = vmatpush2.msra.mxu0 0.0
  %4596 = vmatprep.subr.mxu0 0.0
  %4597 = vmatpush2.msra.mxu0 0.0
  %4598 = vmatprep.subr.mxu0 0.0
  %4599 = vmatpush2.msra.mxu0 0.0
  %4600 = vmatprep.subr.mxu0 0.0
  %4601 = vmatpush2.msra.mxu0 0.0
  %4602 = vmatprep.subr.mxu0 0.0
  %4603 = vmatpush2.msra.mxu0 0.0
  %4604 = vmatprep.subr.mxu0 0.0
  %4605 = vmatpush2.msra.mxu0 0.0
  %4606 = vmatprep.subr.mxu0 0.0
  %4607 = vmatpush2.msra.mxu0 0.0
  %4608 = vmatprep.subr.mxu0 0.0
  %4609 = vmatpush2.msra.mxu0 0.0
  %4610 = vmatprep.subr.mxu0 0.0
  %4611 = vmatpush2.msra.mxu0 0.0
  %4612 = vmatprep.subr.mxu0 0.0
  %4613 = vmatpush2.msra.mxu0 0.0
  %4614 = vmatprep.subr.mxu0 0.0
  %4615 = vmatpush2.msra.mxu0 0.0
  %4616 = vmatprep.subr.mxu0 0.0
  %4617 = vmatpush2.msra.mxu0 0.0
  %4618 = vmatprep.subr.mxu0 0.0
  %4619 = vmatpush2.msra.mxu0 0.0
  %4620 = vmatprep.subr.mxu0 0.0
  %4621 = vmatpush2.msra.mxu0 0.0
  %4622 = vmatprep.subr.mxu0 0.0
  %4623 = vmatpush2.msra.mxu0 0.0
  %4624 = vmatprep.mubr.f32.mxu0 0.0
  %4625 = vmatmul.mubr.f32.gmra.mxu0 %v4558
  %v4626 = vpop.f32.mrf.mxu0
  %v4627 = vadd.f32 0.0, %v4626
  %v4628 = vpop.f32.mrf.mxu0
  %4629 = vdwg.mxu0
  %v4630 = vadd.f32 %v4133, %v4627
  %v4631 = vxor.u32 %v4630, 2147483648
  %v4632 = vmul.f32 %v4631, 1.442695
  %v4633 = vpow.pop %v4632
  %v4634 = vadd.f32 %v4633, 1.0
  %v4635 = vrcp.pop %v4634
  %v4636 = vmul.f32 1.0, %v4635
  %v4637 = vtanh.pop %v4630
  %v4639 = vrot.slane %v4547, 6
  %v4641 = vmul.f32 %v4636, %v4639
  %4643 = vrot.lane.b32.xlu0 %v4637, 64
  %v4644 = vpop.permute.xlu0 %4643
  %v4646 = vmul.f32 %v4636, %v4644
  %4648 = vrot.lane.b32.xlu0 %v4646, 32
  %v4649 = vpop.permute.xlu0 %4648
  %v4651 = vadd.f32 %v4641, %v4649
  %v4652 = vtanh.pop %v4651
  %4654 = vrot.lane.b32.xlu0 %v4652, 64
  %v4655 = vpop.permute.xlu0 %4654
  %v4657 = vmul.f32 %v4636, %v4655
  %4659 = vrot.lane.b32.xlu0 %v4657, 32
  %v4660 = vpop.permute.xlu0 %4659
  %v4661 = vsel %vm1597, %v4660, 0
  %4663 = vmatprep.subr.mxu0 0.0
  %4664 = vmatpush1.msra.mxu0 0.0
  %4665 = vmatprep.subr.mxu0 0.0
  %4666 = vmatpush1.msra.mxu0 0.0
  %4667 = vmatprep.subr.mxu0 0.0
  %4668 = vmatpush1.msra.mxu0 0.0
  %4669 = vmatprep.subr.mxu0 0.0
  %4670 = vmatpush1.msra.mxu0 0.0
  %4671 = vmatprep.subr.mxu0 0.0
  %4672 = vmatpush1.msra.mxu0 0.0
  %4673 = vmatprep.subr.mxu0 0.0
  %4674 = vmatpush1.msra.mxu0 0.0
  %4675 = vmatprep.subr.mxu0 0.0
  %4676 = vmatpush1.msra.mxu0 0.0
  %4677 = vmatprep.subr.mxu0 0.0
  %4678 = vmatpush1.msra.mxu0 0.0
  %4679 = vmatprep.subr.mxu0 0.0
  %4680 = vmatpush1.msra.mxu0 0.0
  %4681 = vmatprep.subr.mxu0 0.0
  %4682 = vmatpush1.msra.mxu0 0.0
  %4683 = vmatprep.subr.mxu0 0.0
  %4684 = vmatpush1.msra.mxu0 0.0
  %4685 = vmatprep.subr.mxu0 0.0
  %4686 = vmatpush1.msra.mxu0 0.0
  %4687 = vmatprep.subr.mxu0 0.0
  %4688 = vmatpush1.msra.mxu0 %v4050
  %4689 = vmatprep.subr.mxu0 0.0
  %4690 = vmatpush1.msra.mxu0 %v4049
  %4691 = vmatprep.subr.mxu0 0.0
  %4692 = vmatpush1.msra.mxu0 %v4048
  %4693 = vmatprep.subr.mxu0 0.0
  %4694 = vmatpush1.msra.mxu0 %v4047
  %4695 = vmatprep.subr.mxu0 0.0
  %4696 = vmatpush2.msra.mxu0 0.0
  %4697 = vmatprep.subr.mxu0 0.0
  %4698 = vmatpush2.msra.mxu0 0.0
  %4699 = vmatprep.subr.mxu0 0.0
  %4700 = vmatpush2.msra.mxu0 0.0
  %4701 = vmatprep.subr.mxu0 0.0
  %4702 = vmatpush2.msra.mxu0 0.0
  %4703 = vmatprep.subr.mxu0 0.0
  %4704 = vmatpush2.msra.mxu0 0.0
  %4705 = vmatprep.subr.mxu0 0.0
  %4706 = vmatpush2.msra.mxu0 0.0
  %4707 = vmatprep.subr.mxu0 0.0
  %4708 = vmatpush2.msra.mxu0 0.0
  %4709 = vmatprep.subr.mxu0 0.0
  %4710 = vmatpush2.msra.mxu0 0.0
  %4711 = vmatprep.subr.mxu0 0.0
  %4712 = vmatpush2.msra.mxu0 0.0
  %4713 = vmatprep.subr.mxu0 0.0
  %4714 = vmatpush2.msra.mxu0 0.0
  %4715 = vmatprep.subr.mxu0 0.0
  %4716 = vmatpush2.msra.mxu0 0.0
  %4717 = vmatprep.subr.mxu0 0.0
  %4718 = vmatpush2.msra.mxu0 0.0
  %4719 = vmatprep.subr.mxu0 0.0
  %4720 = vmatpush2.msra.mxu0 0.0
  %4721 = vmatprep.subr.mxu0 0.0
  %4722 = vmatpush2.msra.mxu0 0.0
  %4723 = vmatprep.subr.mxu0 0.0
  %4724 = vmatpush2.msra.mxu0 0.0
  %4725 = vmatprep.subr.mxu0 0.0
  %4726 = vmatpush2.msra.mxu0 0.0
  %4727 = vmatprep.mubr.f32.mxu0 0.0
  %4728 = vmatmul.mubr.f32.gmra.mxu0 %v4661
  %v4729 = vpop.f32.mrf.mxu0
  %v4730 = vadd.f32 0.0, %v4729
  %v4731 = vpop.f32.mrf.mxu0
  %4732 = vdwg.mxu0
  %v4734 = vrot.slane %v4730, 6
  %v4736 = vadd.f32 %v4133, %v4734
  %v4737 = vxor.u32 %v4736, 2147483648
  %v4738 = vmul.f32 %v4737, 1.442695
  %v4739 = vpow.pop %v4738
  %v4740 = vadd.f32 %v4739, 1.0
  %v4741 = vrcp.pop %v4740
  %v4742 = vmul.f32 1.0, %v4741
  %v4743 = vtanh.pop %v4736
  %v4745 = vrot.slane %v4651, 6
  %v4747 = vmul.f32 %v4742, %v4745
  %4749 = vrot.lane.b32.xlu0 %v4743, 64
  %v4750 = vpop.permute.xlu0 %4749
  %v4752 = vmul.f32 %v4742, %v4750
  %4754 = vrot.lane.b32.xlu0 %v4752, 32
  %v4755 = vpop.permute.xlu0 %4754
  %v4757 = vadd.f32 %v4747, %v4755
  %v4758 = vtanh.pop %v4757
  %4760 = vrot.lane.b32.xlu0 %v4758, 64
  %v4761 = vpop.permute.xlu0 %4760
  %v4763 = vmul.f32 %v4742, %v4761
  %v4765 = vrot.slane %v4763, 2
  %4766 = vrot.lane.b32.xlu0 %v4765, 32
  %v4767 = vpop.permute.xlu0 %4766
  %v4768 = vsel %vm1597, %v4767, 0
  %4770 = vmatprep.subr.mxu0 0.0
  %4771 = vmatpush1.msra.mxu0 0.0
  %4772 = vmatprep.subr.mxu0 0.0
  %4773 = vmatpush1.msra.mxu0 0.0
  %4774 = vmatprep.subr.mxu0 0.0
  %4775 = vmatpush1.msra.mxu0 0.0
  %4776 = vmatprep.subr.mxu0 0.0
  %4777 = vmatpush1.msra.mxu0 0.0
  %4778 = vmatprep.subr.mxu0 0.0
  %4779 = vmatpush1.msra.mxu0 0.0
  %4780 = vmatprep.subr.mxu0 0.0
  %4781 = vmatpush1.msra.mxu0 0.0
  %4782 = vmatprep.subr.mxu0 0.0
  %4783 = vmatpush1.msra.mxu0 0.0
  %4784 = vmatprep.subr.mxu0 0.0
  %4785 = vmatpush1.msra.mxu0 0.0
  %4786 = vmatprep.subr.mxu0 0.0
  %4787 = vmatpush1.msra.mxu0 0.0
  %4788 = vmatprep.subr.mxu0 0.0
  %4789 = vmatpush1.msra.mxu0 0.0
  %4790 = vmatprep.subr.mxu0 0.0
  %4791 = vmatpush1.msra.mxu0 0.0
  %4792 = vmatprep.subr.mxu0 0.0
  %4793 = vmatpush1.msra.mxu0 0.0
  %4794 = vmatprep.subr.mxu0 0.0
  %4795 = vmatpush1.msra.mxu0 %v4050
  %4796 = vmatprep.subr.mxu0 0.0
  %4797 = vmatpush1.msra.mxu0 %v4049
  %4798 = vmatprep.subr.mxu0 0.0
  %4799 = vmatpush1.msra.mxu0 %v4048
  %4800 = vmatprep.subr.mxu0 0.0
  %4801 = vmatpush1.msra.mxu0 %v4047
  %4802 = vmatprep.subr.mxu0 0.0
  %4803 = vmatpush2.msra.mxu0 0.0
  %4804 = vmatprep.subr.mxu0 0.0
  %4805 = vmatpush2.msra.mxu0 0.0
  %4806 = vmatprep.subr.mxu0 0.0
  %4807 = vmatpush2.msra.mxu0 0.0
  %4808 = vmatprep.subr.mxu0 0.0
  %4809 = vmatpush2.msra.mxu0 0.0
  %4810 = vmatprep.subr.mxu0 0.0
  %4811 = vmatpush2.msra.mxu0 0.0
  %4812 = vmatprep.subr.mxu0 0.0
  %4813 = vmatpush2.msra.mxu0 0.0
  %4814 = vmatprep.subr.mxu0 0.0
  %4815 = vmatpush2.msra.mxu0 0.0
  %4816 = vmatprep.subr.mxu0 0.0
  %4817 = vmatpush2.msra.mxu0 0.0
  %4818 = vmatprep.subr.mxu0 0.0
  %4819 = vmatpush2.msra.mxu0 0.0
  %4820 = vmatprep.subr.mxu0 0.0
  %4821 = vmatpush2.msra.mxu0 0.0
  %4822 = vmatprep.subr.mxu0 0.0
  %4823 = vmatpush2.msra.mxu0 0.0
  %4824 = vmatprep.subr.mxu0 0.0
  %4825 = vmatpush2.msra.mxu0 0.0
  %4826 = vmatprep.subr.mxu0 0.0
  %4827 = vmatpush2.msra.mxu0 0.0
  %4828 = vmatprep.subr.mxu0 0.0
  %4829 = vmatpush2.msra.mxu0 0.0
  %4830 = vmatprep.subr.mxu0 0.0
  %4831 = vmatpush2.msra.mxu0 0.0
  %4832 = vmatprep.subr.mxu0 0.0
  %4833 = vmatpush2.msra.mxu0 0.0
  %4834 = vmatprep.mubr.f32.mxu0 0.0
  %4835 = vmatmul.mubr.f32.gmra.mxu0 %v4768
  %v4836 = vpop.f32.mrf.mxu0
  %v4837 = vadd.f32 0.0, %v4836
  %v4838 = vpop.f32.mrf.mxu0
  %4839 = vdwg.mxu0
  %v4841 = vrot.slane %v4837, 4
  %v4843 = vadd.f32 %v4133, %v4841
  %v4844 = vxor.u32 %v4843, 2147483648
  %v4845 = vmul.f32 %v4844, 1.442695
  %v4846 = vpow.pop %v4845
  %v4847 = vadd.f32 %v4846, 1.0
  %v4848 = vrcp.pop %v4847
  %v4849 = vmul.f32 1.0, %v4848
  %v4850 = vtanh.pop %v4843
  %v4852 = vrot.slane %v4757, 6
  %v4854 = vmul.f32 %v4849, %v4852
  %4856 = vrot.lane.b32.xlu0 %v4850, 64
  %v4857 = vpop.permute.xlu0 %4856
  %v4859 = vmul.f32 %v4849, %v4857
  %4861 = vrot.lane.b32.xlu0 %v4859, 32
  %v4862 = vpop.permute.xlu0 %4861
  %v4864 = vadd.f32 %v4854, %v4862
  %v4865 = vtanh.pop %v4864
  %4867 = vrot.lane.b32.xlu0 %v4865, 64
  %v4868 = vpop.permute.xlu0 %4867
  %v4870 = vmul.f32 %v4849, %v4868
  %v4872 = vrot.slane %v4870, 4
  %4873 = vrot.lane.b32.xlu0 %v4872, 32
  %v4874 = vpop.permute.xlu0 %4873
  %v4875 = vsel %vm1597, %v4874, 0
  %4877 = vmatprep.subr.mxu0 0.0
  %4878 = vmatpush1.msra.mxu0 0.0
  %4879 = vmatprep.subr.mxu0 0.0
  %4880 = vmatpush1.msra.mxu0 0.0
  %4881 = vmatprep.subr.mxu0 0.0
  %4882 = vmatpush1.msra.mxu0 0.0
  %4883 = vmatprep.subr.mxu0 0.0
  %4884 = vmatpush1.msra.mxu0 0.0
  %4885 = vmatprep.subr.mxu0 0.0
  %4886 = vmatpush1.msra.mxu0 0.0
  %4887 = vmatprep.subr.mxu0 0.0
  %4888 = vmatpush1.msra.mxu0 0.0
  %4889 = vmatprep.subr.mxu0 0.0
  %4890 = vmatpush1.msra.mxu0 0.0
  %4891 = vmatprep.subr.mxu0 0.0
  %4892 = vmatpush1.msra.mxu0 0.0
  %4893 = vmatprep.subr.mxu0 0.0
  %4894 = vmatpush1.msra.mxu0 0.0
  %4895 = vmatprep.subr.mxu0 0.0
  %4896 = vmatpush1.msra.mxu0 0.0
  %4897 = vmatprep.subr.mxu0 0.0
  %4898 = vmatpush1.msra.mxu0 0.0
  %4899 = vmatprep.subr.mxu0 0.0
  %4900 = vmatpush1.msra.mxu0 0.0
  %4901 = vmatprep.subr.mxu0 0.0
  %4902 = vmatpush1.msra.mxu0 %v4050
  %4903 = vmatprep.subr.mxu0 0.0
  %4904 = vmatpush1.msra.mxu0 %v4049
  %4905 = vmatprep.subr.mxu0 0.0
  %4906 = vmatpush1.msra.mxu0 %v4048
  %4907 = vmatprep.subr.mxu0 0.0
  %4908 = vmatpush1.msra.mxu0 %v4047
  %4909 = vmatprep.subr.mxu0 0.0
  %4910 = vmatpush2.msra.mxu0 0.0
  %4911 = vmatprep.subr.mxu0 0.0
  %4912 = vmatpush2.msra.mxu0 0.0
  %4913 = vmatprep.subr.mxu0 0.0
  %4914 = vmatpush2.msra.mxu0 0.0
  %4915 = vmatprep.subr.mxu0 0.0
  %4916 = vmatpush2.msra.mxu0 0.0
  %4917 = vmatprep.subr.mxu0 0.0
  %4918 = vmatpush2.msra.mxu0 0.0
  %4919 = vmatprep.subr.mxu0 0.0
  %4920 = vmatpush2.msra.mxu0 0.0
  %4921 = vmatprep.subr.mxu0 0.0
  %4922 = vmatpush2.msra.mxu0 0.0
  %4923 = vmatprep.subr.mxu0 0.0
  %4924 = vmatpush2.msra.mxu0 0.0
  %4925 = vmatprep.subr.mxu0 0.0
  %4926 = vmatpush2.msra.mxu0 0.0
  %4927 = vmatprep.subr.mxu0 0.0
  %4928 = vmatpush2.msra.mxu0 0.0
  %4929 = vmatprep.subr.mxu0 0.0
  %4930 = vmatpush2.msra.mxu0 0.0
  %4931 = vmatprep.subr.mxu0 0.0
  %4932 = vmatpush2.msra.mxu0 0.0
  %4933 = vmatprep.subr.mxu0 0.0
  %4934 = vmatpush2.msra.mxu0 0.0
  %4935 = vmatprep.subr.mxu0 0.0
  %4936 = vmatpush2.msra.mxu0 0.0
  %4937 = vmatprep.subr.mxu0 0.0
  %4938 = vmatpush2.msra.mxu0 0.0
  %4939 = vmatprep.subr.mxu0 0.0
  %4940 = vmatpush2.msra.mxu0 0.0
  %4941 = vmatprep.mubr.f32.mxu0 0.0
  %4942 = vmatmul.mubr.f32.gmra.mxu0 %v4875
  %v4943 = vpop.f32.mrf.mxu0
  %v4944 = vadd.f32 0.0, %v4943
  %v4945 = vpop.f32.mrf.mxu0
  %4946 = vdwg.mxu0
  %v4948 = vrot.slane %v4944, 2
  %v4950 = vadd.f32 %v4133, %v4948
  %v4951 = vxor.u32 %v4950, 2147483648
  %v4952 = vmul.f32 %v4951, 1.442695
  %v4953 = vpow.pop %v4952
  %v4954 = vadd.f32 %v4953, 1.0
  %v4955 = vrcp.pop %v4954
  %v4956 = vmul.f32 1.0, %v4955
  %v4957 = vtanh.pop %v4950
  %v4959 = vrot.slane %v4864, 6
  %v4961 = vmul.f32 %v4956, %v4959
  %4963 = vrot.lane.b32.xlu0 %v4957, 64
  %v4964 = vpop.permute.xlu0 %4963
  %v4966 = vmul.f32 %v4956, %v4964
  %4968 = vrot.lane.b32.xlu0 %v4966, 32
  %v4969 = vpop.permute.xlu0 %4968
  %v4971 = vadd.f32 %v4961, %v4969
  %v4972 = vtanh.pop %v4971
  %4974 = vrot.lane.b32.xlu0 %v4972, 64
  %v4975 = vpop.permute.xlu0 %4974
  %v4977 = vmul.f32 %v4956, %v4975
  %v4978 = vld [vmem:[%s4 + $0x10] sm:$0xff]
  %v4979 = vld [vmem:[%s4 + $0x18] sm:$0xff]
  %v4980 = vld [vmem:[%s4 + $0x20] sm:$0xff]
  %v4981 = vld [vmem:[%s4 + $0x28] sm:$0xff]
  %v4982 = vld [vmem:[%s3 + $0x13] ss:$0 sm:$0xff]
  %v4984 = vrot.slane %v4977, 6
  %4985 = vrot.lane.b32.xlu0 %v4984, 32
  %v4986 = vpop.permute.xlu0 %4985
  %v4987 = vsel %vm1597, %v4986, 0
  %4989 = vmatprep.subr.mxu0 0.0
  %4990 = vmatpush1.msra.mxu0 0.0
  %4991 = vmatprep.subr.mxu0 0.0
  %4992 = vmatpush1.msra.mxu0 0.0
  %4993 = vmatprep.subr.mxu0 0.0
  %4994 = vmatpush1.msra.mxu0 0.0
  %4995 = vmatprep.subr.mxu0 0.0
  %4996 = vmatpush1.msra.mxu0 0.0
  %4997 = vmatprep.subr.mxu0 0.0
  %4998 = vmatpush1.msra.mxu0 0.0
  %4999 = vmatprep.subr.mxu0 0.0
  %5000 = vmatpush1.msra.mxu0 0.0
  %5001 = vmatprep.subr.mxu0 0.0
  %5002 = vmatpush1.msra.mxu0 0.0
  %5003 = vmatprep.subr.mxu0 0.0
  %5004 = vmatpush1.msra.mxu0 0.0
  %5005 = vmatprep.subr.mxu0 0.0
  %5006 = vmatpush1.msra.mxu0 0.0
  %5007 = vmatprep.subr.mxu0 0.0
  %5008 = vmatpush1.msra.mxu0 0.0
  %5009 = vmatprep.subr.mxu0 0.0
  %5010 = vmatpush1.msra.mxu0 0.0
  %5011 = vmatprep.subr.mxu0 0.0
  %5012 = vmatpush1.msra.mxu0 0.0
  %5013 = vmatprep.subr.mxu0 0.0
  %5014 = vmatpush1.msra.mxu0 %v4981
  %5015 = vmatprep.subr.mxu0 0.0
  %5016 = vmatpush1.msra.mxu0 %v4980
  %5017 = vmatprep.subr.mxu0 0.0
  %5018 = vmatpush1.msra.mxu0 %v4979
  %5019 = vmatprep.subr.mxu0 0.0
  %5020 = vmatpush1.msra.mxu0 %v4978
  %5021 = vmatprep.subr.mxu0 0.0
  %5022 = vmatpush2.msra.mxu0 0.0
  %5023 = vmatprep.subr.mxu0 0.0
  %5024 = vmatpush2.msra.mxu0 0.0
  %5025 = vmatprep.subr.mxu0 0.0
  %5026 = vmatpush2.msra.mxu0 0.0
  %5027 = vmatprep.subr.mxu0 0.0
  %5028 = vmatpush2.msra.mxu0 0.0
  %5029 = vmatprep.subr.mxu0 0.0
  %5030 = vmatpush2.msra.mxu0 0.0
  %5031 = vmatprep.subr.mxu0 0.0
  %5032 = vmatpush2.msra.mxu0 0.0
  %5033 = vmatprep.subr.mxu0 0.0
  %5034 = vmatpush2.msra.mxu0 0.0
  %5035 = vmatprep.subr.mxu0 0.0
  %5036 = vmatpush2.msra.mxu0 0.0
  %5037 = vmatprep.subr.mxu0 0.0
  %5038 = vmatpush2.msra.mxu0 0.0
  %5039 = vmatprep.subr.mxu0 0.0
  %5040 = vmatpush2.msra.mxu0 0.0
  %5041 = vmatprep.subr.mxu0 0.0
  %5042 = vmatpush2.msra.mxu0 0.0
  %5043 = vmatprep.subr.mxu0 0.0
  %5044 = vmatpush2.msra.mxu0 0.0
  %5045 = vmatprep.subr.mxu0 0.0
  %5046 = vmatpush2.msra.mxu0 0.0
  %5047 = vmatprep.subr.mxu0 0.0
  %5048 = vmatpush2.msra.mxu0 0.0
  %5049 = vmatprep.subr.mxu0 0.0
  %5050 = vmatpush2.msra.mxu0 0.0
  %5051 = vmatprep.subr.mxu0 0.0
  %5052 = vmatpush2.msra.mxu0 0.0
  %5053 = vmatprep.mubr.f32.mxu0 0.0
  %5054 = vmatmul.mubr.f32.gmra.mxu0 %v4987
  %v5055 = vpop.f32.mrf.mxu0
  %v5056 = vadd.f32 %v4982, %v5055
  %v5057 = vpop.f32.mrf.mxu0
  %5058 = vdwg.mxu0
  %s5059 = smul.u32 8, 64
  %s5060 = smul.u32 %s5059, 2
  %s5061 = sshll.u32 %s5060, 4
  %5062 = dma.done [#allocation5], %s5061
  %v5063 = vld [vmem:[#allocation2] sm:$0xff]
  %v5064 = vld [vmem:[#allocation2 + $0x8] sm:$0xff]
  %v5065 = vld [vmem:[#allocation2 + $0x10] sm:$0xff]
  %v5066 = vld [vmem:[#allocation2 + $0x18] sm:$0xff]
  %v5067 = vld [vmem:[#allocation2 + $0x20] sm:$0xff]
  %v5068 = vld [vmem:[#allocation2 + $0x28] sm:$0xff]
  %v5069 = vld [vmem:[#allocation2 + $0x30] sm:$0xff]
  %v5070 = vld [vmem:[#allocation2 + $0x38] sm:$0xff]
  %v5071 = vld [vmem:[#allocation2 + $0x40] sm:$0xff]
  %v5072 = vld [vmem:[#allocation2 + $0x48] sm:$0xff]
  %v5073 = vld [vmem:[#allocation2 + $0x50] sm:$0xff]
  %v5074 = vld [vmem:[#allocation2 + $0x58] sm:$0xff]
  %v5075 = vld [vmem:[#allocation2 + $0x60] sm:$0xff]
  %v5076 = vld [vmem:[#allocation2 + $0x68] sm:$0xff]
  %v5077 = vld [vmem:[#allocation2 + $0x70] sm:$0xff]
  %v5078 = vld [vmem:[#allocation2 + $0x78] sm:$0xff]
  %v5079 = vld [vmem:[#allocation2 + $0x80] sm:$0xff]
  %v5080 = vld [vmem:[#allocation2 + $0x88] sm:$0xff]
  %v5081 = vld [vmem:[#allocation2 + $0x90] sm:$0xff]
  %v5082 = vld [vmem:[#allocation2 + $0x98] sm:$0xff]
  %v5083 = vld [vmem:[#allocation2 + $0xa0] sm:$0xff]
  %v5084 = vld [vmem:[#allocation2 + $0xa8] sm:$0xff]
  %v5085 = vld [vmem:[#allocation2 + $0xb0] sm:$0xff]
  %v5086 = vld [vmem:[#allocation2 + $0xb8] sm:$0xff]
  %v5087 = vld [vmem:[#allocation2 + $0xc0] sm:$0xff]
  %v5088 = vld [vmem:[#allocation2 + $0xc8] sm:$0xff]
  %v5089 = vld [vmem:[#allocation2 + $0xd0] sm:$0xff]
  %v5090 = vld [vmem:[#allocation2 + $0xd8] sm:$0xff]
  %v5091 = vld [vmem:[#allocation2 + $0xe0] sm:$0xff]
  %v5092 = vld [vmem:[#allocation2 + $0xe8] sm:$0xff]
  %v5093 = vld [vmem:[#allocation2 + $0xf0] sm:$0xff]
  %v5094 = vld [vmem:[#allocation2 + $0xf8] sm:$0xff]
  %v5095 = vld [vmem:[#allocation2 + $0x100] sm:$0xff]
  %v5096 = vld [vmem:[#allocation2 + $0x108] sm:$0xff]
  %v5097 = vld [vmem:[#allocation2 + $0x110] sm:$0xff]
  %v5098 = vld [vmem:[#allocation2 + $0x118] sm:$0xff]
  %v5099 = vld [vmem:[#allocation2 + $0x120] sm:$0xff]
  %v5100 = vld [vmem:[#allocation2 + $0x128] sm:$0xff]
  %v5101 = vld [vmem:[#allocation2 + $0x130] sm:$0xff]
  %v5102 = vld [vmem:[#allocation2 + $0x138] sm:$0xff]
  %v5103 = vld [vmem:[#allocation2 + $0x140] sm:$0xff]
  %v5104 = vld [vmem:[#allocation2 + $0x148] sm:$0xff]
  %v5105 = vld [vmem:[#allocation2 + $0x150] sm:$0xff]
  %v5106 = vld [vmem:[#allocation2 + $0x158] sm:$0xff]
  %v5107 = vld [vmem:[#allocation2 + $0x160] sm:$0xff]
  %v5108 = vld [vmem:[#allocation2 + $0x168] sm:$0xff]
  %v5109 = vld [vmem:[#allocation2 + $0x170] sm:$0xff]
  %v5110 = vld [vmem:[#allocation2 + $0x178] sm:$0xff]
  %v5111 = vld [vmem:[#allocation2 + $0x180] sm:$0xff]
  %v5112 = vld [vmem:[#allocation2 + $0x188] sm:$0xff]
  %v5113 = vld [vmem:[#allocation2 + $0x190] sm:$0xff]
  %v5114 = vld [vmem:[#allocation2 + $0x198] sm:$0xff]
  %v5115 = vld [vmem:[#allocation2 + $0x1a0] sm:$0xff]
  %v5116 = vld [vmem:[#allocation2 + $0x1a8] sm:$0xff]
  %v5117 = vld [vmem:[#allocation2 + $0x1b0] sm:$0xff]
  %v5118 = vld [vmem:[#allocation2 + $0x1b8] sm:$0xff]
  %v5119 = vld [vmem:[#allocation2 + $0x1c0] sm:$0xff]
  %v5120 = vld [vmem:[#allocation2 + $0x1c8] sm:$0xff]
  %v5121 = vld [vmem:[#allocation2 + $0x1d0] sm:$0xff]
  %v5122 = vld [vmem:[#allocation2 + $0x1d8] sm:$0xff]
  %v5123 = vld [vmem:[#allocation2 + $0x1e0] sm:$0xff]
  %v5124 = vld [vmem:[#allocation2 + $0x1e8] sm:$0xff]
  %v5125 = vld [vmem:[#allocation2 + $0x1f0] sm:$0xff]
  %v5126 = vld [vmem:[#allocation2 + $0x1f8] sm:$0xff]
  %v5127 = vld [vmem:[#allocation2 + $0x200] sm:$0xff]
  %v5128 = vld [vmem:[#allocation2 + $0x210] sm:$0xff]
  %v5129 = vld [vmem:[#allocation2 + $0x220] sm:$0xff]
  %v5130 = vld [vmem:[#allocation2 + $0x230] sm:$0xff]
  %v5131 = vld [vmem:[#allocation2 + $0x240] sm:$0xff]
  %v5132 = vld [vmem:[#allocation2 + $0x250] sm:$0xff]
  %v5133 = vld [vmem:[#allocation2 + $0x260] sm:$0xff]
  %v5134 = vld [vmem:[#allocation2 + $0x270] sm:$0xff]
  %v5135 = vld [vmem:[#allocation2 + $0x280] sm:$0xff]
  %v5136 = vld [vmem:[#allocation2 + $0x290] sm:$0xff]
  %v5137 = vld [vmem:[#allocation2 + $0x2a0] sm:$0xff]
  %v5138 = vld [vmem:[#allocation2 + $0x2b0] sm:$0xff]
  %v5139 = vld [vmem:[#allocation2 + $0x2c0] sm:$0xff]
  %v5140 = vld [vmem:[#allocation2 + $0x2d0] sm:$0xff]
  %v5141 = vld [vmem:[#allocation2 + $0x2e0] sm:$0xff]
  %v5142 = vld [vmem:[#allocation2 + $0x2f0] sm:$0xff]
  %v5143 = vld [vmem:[#allocation2 + $0x300] sm:$0xff]
  %v5144 = vld [vmem:[#allocation2 + $0x310] sm:$0xff]
  %v5145 = vld [vmem:[#allocation2 + $0x320] sm:$0xff]
  %v5146 = vld [vmem:[#allocation2 + $0x330] sm:$0xff]
  %v5147 = vld [vmem:[#allocation2 + $0x340] sm:$0xff]
  %v5148 = vld [vmem:[#allocation2 + $0x350] sm:$0xff]
  %v5149 = vld [vmem:[#allocation2 + $0x360] sm:$0xff]
  %v5150 = vld [vmem:[#allocation2 + $0x370] sm:$0xff]
  %v5151 = vld [vmem:[#allocation2 + $0x380] sm:$0xff]
  %v5152 = vld [vmem:[#allocation2 + $0x390] sm:$0xff]
  %v5153 = vld [vmem:[#allocation2 + $0x3a0] sm:$0xff]
  %v5154 = vld [vmem:[#allocation2 + $0x3b0] sm:$0xff]
  %v5155 = vld [vmem:[#allocation2 + $0x3c0] sm:$0xff]
  %v5156 = vld [vmem:[#allocation2 + $0x3d0] sm:$0xff]
  %v5157 = vld [vmem:[#allocation2 + $0x3e0] sm:$0xff]
  %v5158 = vld [vmem:[#allocation2 + $0x3f0] sm:$0xff]
  %v5159 = vld [vmem:[#allocation2 + $0x208] sm:$0xff]
  %v5160 = vld [vmem:[#allocation2 + $0x218] sm:$0xff]
  %v5161 = vld [vmem:[#allocation2 + $0x228] sm:$0xff]
  %v5162 = vld [vmem:[#allocation2 + $0x238] sm:$0xff]
  %v5163 = vld [vmem:[#allocation2 + $0x248] sm:$0xff]
  %v5164 = vld [vmem:[#allocation2 + $0x258] sm:$0xff]
  %v5165 = vld [vmem:[#allocation2 + $0x268] sm:$0xff]
  %v5166 = vld [vmem:[#allocation2 + $0x278] sm:$0xff]
  %v5167 = vld [vmem:[#allocation2 + $0x288] sm:$0xff]
  %v5168 = vld [vmem:[#allocation2 + $0x298] sm:$0xff]
  %v5169 = vld [vmem:[#allocation2 + $0x2a8] sm:$0xff]
  %v5170 = vld [vmem:[#allocation2 + $0x2b8] sm:$0xff]
  %v5171 = vld [vmem:[#allocation2 + $0x2c8] sm:$0xff]
  %v5172 = vld [vmem:[#allocation2 + $0x2d8] sm:$0xff]
  %v5173 = vld [vmem:[#allocation2 + $0x2e8] sm:$0xff]
  %v5174 = vld [vmem:[#allocation2 + $0x2f8] sm:$0xff]
  %v5175 = vld [vmem:[#allocation2 + $0x308] sm:$0xff]
  %v5176 = vld [vmem:[#allocation2 + $0x318] sm:$0xff]
  %v5177 = vld [vmem:[#allocation2 + $0x328] sm:$0xff]
  %v5178 = vld [vmem:[#allocation2 + $0x338] sm:$0xff]
  %v5179 = vld [vmem:[#allocation2 + $0x348] sm:$0xff]
  %v5180 = vld [vmem:[#allocation2 + $0x358] sm:$0xff]
  %v5181 = vld [vmem:[#allocation2 + $0x368] sm:$0xff]
  %v5182 = vld [vmem:[#allocation2 + $0x378] sm:$0xff]
  %v5183 = vld [vmem:[#allocation2 + $0x388] sm:$0xff]
  %v5184 = vld [vmem:[#allocation2 + $0x398] sm:$0xff]
  %v5185 = vld [vmem:[#allocation2 + $0x3a8] sm:$0xff]
  %v5186 = vld [vmem:[#allocation2 + $0x3b8] sm:$0xff]
  %v5187 = vld [vmem:[#allocation2 + $0x3c8] sm:$0xff]
  %v5188 = vld [vmem:[#allocation2 + $0x3d8] sm:$0xff]
  %v5189 = vld [vmem:[#allocation2 + $0x3e8] sm:$0xff]
  %v5190 = vld [vmem:[#allocation2 + $0x3f8] sm:$0xff]
  %v5191 = vld [vmem:[#allocation2 + $0x208] sm:$0xff]
  %v5192 = vld [vmem:[#allocation2 + $0x218] sm:$0xff]
  %v5193 = vld [vmem:[#allocation2 + $0x228] sm:$0xff]
  %v5194 = vld [vmem:[#allocation2 + $0x238] sm:$0xff]
  %v5195 = vld [vmem:[#allocation2 + $0x248] sm:$0xff]
  %v5196 = vld [vmem:[#allocation2 + $0x258] sm:$0xff]
  %v5197 = vld [vmem:[#allocation2 + $0x268] sm:$0xff]
  %v5198 = vld [vmem:[#allocation2 + $0x278] sm:$0xff]
  %v5200 = vsel %vm2894, %v4043, 0
  %5202 = vmatprep.subr.mxu0 0.0
  %5203 = vmatpush1.msra.mxu0 0.0
  %5204 = vmatprep.subr.mxu0 0.0
  %5205 = vmatpush1.msra.mxu0 0.0
  %5206 = vmatprep.subr.mxu0 0.0
  %5207 = vmatpush1.msra.mxu0 0.0
  %5208 = vmatprep.subr.mxu0 0.0
  %5209 = vmatpush1.msra.mxu0 0.0
  %5210 = vmatprep.subr.mxu0 0.0
  %5211 = vmatpush1.msra.mxu0 0.0
  %5212 = vmatprep.subr.mxu0 0.0
  %5213 = vmatpush1.msra.mxu0 0.0
  %5214 = vmatprep.subr.mxu0 0.0
  %5215 = vmatpush1.msra.mxu0 0.0
  %5216 = vmatprep.subr.mxu0 0.0
  %5217 = vmatpush1.msra.mxu0 0.0
  %5218 = vmatprep.subr.mxu0 0.0
  %5219 = vmatpush1.msra.mxu0 %v5182
  %5220 = vmatprep.subr.mxu0 0.0
  %5221 = vmatpush1.msra.mxu0 %v5181
  %5222 = vmatprep.subr.mxu0 0.0
  %5223 = vmatpush1.msra.mxu0 %v5180
  %5224 = vmatprep.subr.mxu0 0.0
  %5225 = vmatpush1.msra.mxu0 %v5179
  %5226 = vmatprep.subr.mxu0 0.0
  %5227 = vmatpush1.msra.mxu0 %v5178
  %5228 = vmatprep.subr.mxu0 0.0
  %5229 = vmatpush1.msra.mxu0 %v5177
  %5230 = vmatprep.subr.mxu0 0.0
  %5231 = vmatpush1.msra.mxu0 %v5176
  %5232 = vmatprep.subr.mxu0 0.0
  %5233 = vmatpush1.msra.mxu0 %v5175
  %5234 = vmatprep.subr.mxu0 0.0
  %5235 = vmatpush2.msra.mxu0 0.0
  %5236 = vmatprep.subr.mxu0 0.0
  %5237 = vmatpush2.msra.mxu0 0.0
  %5238 = vmatprep.subr.mxu0 0.0
  %5239 = vmatpush2.msra.mxu0 0.0
  %5240 = vmatprep.subr.mxu0 0.0
  %5241 = vmatpush2.msra.mxu0 0.0
  %5242 = vmatprep.subr.mxu0 0.0
  %5243 = vmatpush2.msra.mxu0 0.0
  %5244 = vmatprep.subr.mxu0 0.0
  %5245 = vmatpush2.msra.mxu0 0.0
  %5246 = vmatprep.subr.mxu0 0.0
  %5247 = vmatpush2.msra.mxu0 0.0
  %5248 = vmatprep.subr.mxu0 0.0
  %5249 = vmatpush2.msra.mxu0 0.0
  %5250 = vmatprep.subr.mxu0 0.0
  %5251 = vmatpush2.msra.mxu0 0.0
  %5252 = vmatprep.subr.mxu0 0.0
  %5253 = vmatpush2.msra.mxu0 0.0
  %5254 = vmatprep.subr.mxu0 0.0
  %5255 = vmatpush2.msra.mxu0 0.0
  %5256 = vmatprep.subr.mxu0 0.0
  %5257 = vmatpush2.msra.mxu0 0.0
  %5258 = vmatprep.subr.mxu0 0.0
  %5259 = vmatpush2.msra.mxu0 0.0
  %5260 = vmatprep.subr.mxu0 0.0
  %5261 = vmatpush2.msra.mxu0 0.0
  %5262 = vmatprep.subr.mxu0 0.0
  %5263 = vmatpush2.msra.mxu0 0.0
  %5264 = vmatprep.subr.mxu0 0.0
  %5265 = vmatpush2.msra.mxu0 0.0
  %5266 = vmatprep.mubr.f32.mxu0 0.0
  %5267 = vmatmul.mubr.f32.gmra.mxu0 %v5200
  %v5268 = vpop.f32.mrf.mxu0
  %v5269 = vadd.f32 0.0, %v5268
  %v5270 = vpop.f32.mrf.mxu0
  %5271 = vdwg.mxu0
  %5272 = vmatprep.subr.mxu0 0.0
  %5273 = vmatpush1.msra.mxu0 %v5174
  %5274 = vmatprep.subr.mxu0 0.0
  %5275 = vmatpush1.msra.mxu0 %v5173
  %5276 = vmatprep.subr.mxu0 0.0
  %5277 = vmatpush1.msra.mxu0 %v5172
  %5278 = vmatprep.subr.mxu0 0.0
  %5279 = vmatpush1.msra.mxu0 %v5171
  %5280 = vmatprep.subr.mxu0 0.0
  %5281 = vmatpush1.msra.mxu0 %v5170
  %5282 = vmatprep.subr.mxu0 0.0
  %5283 = vmatpush1.msra.mxu0 %v5169
  %5284 = vmatprep.subr.mxu0 0.0
  %5285 = vmatpush1.msra.mxu0 %v5168
  %5286 = vmatprep.subr.mxu0 0.0
  %5287 = vmatpush1.msra.mxu0 %v5167
  %5288 = vmatprep.subr.mxu0 0.0
  %5289 = vmatpush1.msra.mxu0 %v5166
  %5290 = vmatprep.subr.mxu0 0.0
  %5291 = vmatpush1.msra.mxu0 %v5165
  %5292 = vmatprep.subr.mxu0 0.0
  %5293 = vmatpush1.msra.mxu0 %v5164
  %5294 = vmatprep.subr.mxu0 0.0
  %5295 = vmatpush1.msra.mxu0 %v5163
  %5296 = vmatprep.subr.mxu0 0.0
  %5297 = vmatpush1.msra.mxu0 %v5162
  %5298 = vmatprep.subr.mxu0 0.0
  %5299 = vmatpush1.msra.mxu0 %v5161
  %5300 = vmatprep.subr.mxu0 0.0
  %5301 = vmatpush1.msra.mxu0 %v5160
  %5302 = vmatprep.subr.mxu0 0.0
  %5303 = vmatpush1.msra.mxu0 %v5159
  %5304 = vmatprep.subr.mxu0 0.0
  %5305 = vmatpush2.msra.mxu0 0.0
  %5306 = vmatprep.subr.mxu0 0.0
  %5307 = vmatpush2.msra.mxu0 0.0
  %5308 = vmatprep.subr.mxu0 0.0
  %5309 = vmatpush2.msra.mxu0 0.0
  %5310 = vmatprep.subr.mxu0 0.0
  %5311 = vmatpush2.msra.mxu0 0.0
  %5312 = vmatprep.subr.mxu0 0.0
  %5313 = vmatpush2.msra.mxu0 0.0
  %5314 = vmatprep.subr.mxu0 0.0
  %5315 = vmatpush2.msra.mxu0 0.0
  %5316 = vmatprep.subr.mxu0 0.0
  %5317 = vmatpush2.msra.mxu0 0.0
  %5318 = vmatprep.subr.mxu0 0.0
  %5319 = vmatpush2.msra.mxu0 0.0
  %5320 = vmatprep.subr.mxu0 0.0
  %5321 = vmatpush2.msra.mxu0 0.0
  %5322 = vmatprep.subr.mxu0 0.0
  %5323 = vmatpush2.msra.mxu0 0.0
  %5324 = vmatprep.subr.mxu0 0.0
  %5325 = vmatpush2.msra.mxu0 0.0
  %5326 = vmatprep.subr.mxu0 0.0
  %5327 = vmatpush2.msra.mxu0 0.0
  %5328 = vmatprep.subr.mxu0 0.0
  %5329 = vmatpush2.msra.mxu0 0.0
  %5330 = vmatprep.subr.mxu0 0.0
  %5331 = vmatpush2.msra.mxu0 0.0
  %5332 = vmatprep.subr.mxu0 0.0
  %5333 = vmatpush2.msra.mxu0 0.0
  %5334 = vmatprep.subr.mxu0 0.0
  %5335 = vmatpush2.msra.mxu0 0.0
  %5336 = vmatprep.mubr.f32.mxu0 0.0
  %5337 = vmatmul.mubr.f32.gmra.mxu0 %v3044
  %v5338 = vpop.f32.mrf.mxu0
  %v5339 = vadd.f32 %v5269, %v5338
  %v5340 = vpop.f32.mrf.mxu0
  %5341 = vdwg.mxu0
  %v5343 = vsel %vm2894, %v5056, 0
  %5345 = vmatprep.subr.mxu0 0.0
  %5346 = vmatpush1.msra.mxu0 0.0
  %5347 = vmatprep.subr.mxu0 0.0
  %5348 = vmatpush1.msra.mxu0 0.0
  %5349 = vmatprep.subr.mxu0 0.0
  %5350 = vmatpush1.msra.mxu0 0.0
  %5351 = vmatprep.subr.mxu0 0.0
  %5352 = vmatpush1.msra.mxu0 0.0
  %5353 = vmatprep.subr.mxu0 0.0
  %5354 = vmatpush1.msra.mxu0 0.0
  %5355 = vmatprep.subr.mxu0 0.0
  %5356 = vmatpush1.msra.mxu0 0.0
  %5357 = vmatprep.subr.mxu0 0.0
  %5358 = vmatpush1.msra.mxu0 0.0
  %5359 = vmatprep.subr.mxu0 0.0
  %5360 = vmatpush1.msra.mxu0 0.0
  %5361 = vmatprep.subr.mxu0 0.0
  %5362 = vmatpush1.msra.mxu0 %v5190
  %5363 = vmatprep.subr.mxu0 0.0
  %5364 = vmatpush1.msra.mxu0 %v5189
  %5365 = vmatprep.subr.mxu0 0.0
  %5366 = vmatpush1.msra.mxu0 %v5188
  %5367 = vmatprep.subr.mxu0 0.0
  %5368 = vmatpush1.msra.mxu0 %v5187
  %5369 = vmatprep.subr.mxu0 0.0
  %5370 = vmatpush1.msra.mxu0 %v5186
  %5371 = vmatprep.subr.mxu0 0.0
  %5372 = vmatpush1.msra.mxu0 %v5185
  %5373 = vmatprep.subr.mxu0 0.0
  %5374 = vmatpush1.msra.mxu0 %v5184
  %5375 = vmatprep.subr.mxu0 0.0
  %5376 = vmatpush1.msra.mxu0 %v5183
  %5377 = vmatprep.subr.mxu0 0.0
  %5378 = vmatpush2.msra.mxu0 0.0
  %5379 = vmatprep.subr.mxu0 0.0
  %5380 = vmatpush2.msra.mxu0 0.0
  %5381 = vmatprep.subr.mxu0 0.0
  %5382 = vmatpush2.msra.mxu0 0.0
  %5383 = vmatprep.subr.mxu0 0.0
  %5384 = vmatpush2.msra.mxu0 0.0
  %5385 = vmatprep.subr.mxu0 0.0
  %5386 = vmatpush2.msra.mxu0 0.0
  %5387 = vmatprep.subr.mxu0 0.0
  %5388 = vmatpush2.msra.mxu0 0.0
  %5389 = vmatprep.subr.mxu0 0.0
  %5390 = vmatpush2.msra.mxu0 0.0
  %5391 = vmatprep.subr.mxu0 0.0
  %5392 = vmatpush2.msra.mxu0 0.0
  %5393 = vmatprep.subr.mxu0 0.0
  %5394 = vmatpush2.msra.mxu0 0.0
  %5395 = vmatprep.subr.mxu0 0.0
  %5396 = vmatpush2.msra.mxu0 0.0
  %5397 = vmatprep.subr.mxu0 0.0
  %5398 = vmatpush2.msra.mxu0 0.0
  %5399 = vmatprep.subr.mxu0 0.0
  %5400 = vmatpush2.msra.mxu0 0.0
  %5401 = vmatprep.subr.mxu0 0.0
  %5402 = vmatpush2.msra.mxu0 0.0
  %5403 = vmatprep.subr.mxu0 0.0
  %5404 = vmatpush2.msra.mxu0 0.0
  %5405 = vmatprep.subr.mxu0 0.0
  %5406 = vmatpush2.msra.mxu0 0.0
  %5407 = vmatprep.subr.mxu0 0.0
  %5408 = vmatpush2.msra.mxu0 0.0
  %5409 = vmatprep.mubr.f32.mxu0 0.0
  %5410 = vmatmul.mubr.f32.gmra.mxu0 %v5343
  %v5411 = vpop.f32.mrf.mxu0
  %v5412 = vadd.f32 0.0, %v5411
  %v5413 = vpop.f32.mrf.mxu0
  %5414 = vdwg.mxu0
  %v5415 = vadd.f32 %v5339, %v5412
  %v5416 = vld [vmem:[%s3 + $0x14] ss:$0 sm:$0xff]
  %v5417 = vadd.f32 %v5415, %v5416
  %v5418 = vmax.f32 %v5417, 0.0
  %v5419 = vld [vmem:[%s3 + $0x15] ss:$0 sm:$0xff]
  %5428 = vrot.lane.b32.xlu0 %v5191, 64
  %v5429 = vpop.permute.xlu0 %5428
  %5430 = vrot.lane.b32.xlu0 %v5192, 64
  %v5431 = vpop.permute.xlu0 %5430
  %5432 = vrot.lane.b32.xlu0 %v5193, 64
  %v5433 = vpop.permute.xlu0 %5432
  %5434 = vrot.lane.b32.xlu0 %v5194, 64
  %v5435 = vpop.permute.xlu0 %5434
  %5436 = vrot.lane.b32.xlu0 %v5195, 64
  %v5437 = vpop.permute.xlu0 %5436
  %5438 = vrot.lane.b32.xlu0 %v5196, 64
  %v5439 = vpop.permute.xlu0 %5438
  %5440 = vrot.lane.b32.xlu0 %v5197, 64
  %v5441 = vpop.permute.xlu0 %5440
  %5442 = vrot.lane.b32.xlu0 %v5198, 64
  %v5443 = vpop.permute.xlu0 %5442
  %v5453 = vsel %vm2894, %v5418, 0
  %5455 = vmatprep.subr.mxu0 0.0
  %5456 = vmatpush1.msra.mxu0 0.0
  %5457 = vmatprep.subr.mxu0 0.0
  %5458 = vmatpush1.msra.mxu0 0.0
  %5459 = vmatprep.subr.mxu0 0.0
  %5460 = vmatpush1.msra.mxu0 0.0
  %5461 = vmatprep.subr.mxu0 0.0
  %5462 = vmatpush1.msra.mxu0 0.0
  %5463 = vmatprep.subr.mxu0 0.0
  %5464 = vmatpush1.msra.mxu0 0.0
  %5465 = vmatprep.subr.mxu0 0.0
  %5466 = vmatpush1.msra.mxu0 0.0
  %5467 = vmatprep.subr.mxu0 0.0
  %5468 = vmatpush1.msra.mxu0 0.0
  %5469 = vmatprep.subr.mxu0 0.0
  %5470 = vmatpush1.msra.mxu0 0.0
  %5471 = vmatprep.subr.mxu0 0.0
  %5472 = vmatpush1.msra.mxu0 %v5443
  %5473 = vmatprep.subr.mxu0 0.0
  %5474 = vmatpush1.msra.mxu0 %v5441
  %5475 = vmatprep.subr.mxu0 0.0
  %5476 = vmatpush1.msra.mxu0 %v5439
  %5477 = vmatprep.subr.mxu0 0.0
  %5478 = vmatpush1.msra.mxu0 %v5437
  %5479 = vmatprep.subr.mxu0 0.0
  %5480 = vmatpush1.msra.mxu0 %v5435
  %5481 = vmatprep.subr.mxu0 0.0
  %5482 = vmatpush1.msra.mxu0 %v5433
  %5483 = vmatprep.subr.mxu0 0.0
  %5484 = vmatpush1.msra.mxu0 %v5431
  %5485 = vmatprep.subr.mxu0 0.0
  %5486 = vmatpush1.msra.mxu0 %v5429
  %5487 = vmatprep.subr.mxu0 0.0
  %5488 = vmatpush2.msra.mxu0 0.0
  %5489 = vmatprep.subr.mxu0 0.0
  %5490 = vmatpush2.msra.mxu0 0.0
  %5491 = vmatprep.subr.mxu0 0.0
  %5492 = vmatpush2.msra.mxu0 0.0
  %5493 = vmatprep.subr.mxu0 0.0
  %5494 = vmatpush2.msra.mxu0 0.0
  %5495 = vmatprep.subr.mxu0 0.0
  %5496 = vmatpush2.msra.mxu0 0.0
  %5497 = vmatprep.subr.mxu0 0.0
  %5498 = vmatpush2.msra.mxu0 0.0
  %5499 = vmatprep.subr.mxu0 0.0
  %5500 = vmatpush2.msra.mxu0 0.0
  %5501 = vmatprep.subr.mxu0 0.0
  %5502 = vmatpush2.msra.mxu0 0.0
  %5503 = vmatprep.subr.mxu0 0.0
  %5504 = vmatpush2.msra.mxu0 0.0
  %5505 = vmatprep.subr.mxu0 0.0
  %5506 = vmatpush2.msra.mxu0 0.0
  %5507 = vmatprep.subr.mxu0 0.0
  %5508 = vmatpush2.msra.mxu0 0.0
  %5509 = vmatprep.subr.mxu0 0.0
  %5510 = vmatpush2.msra.mxu0 0.0
  %5511 = vmatprep.subr.mxu0 0.0
  %5512 = vmatpush2.msra.mxu0 0.0
  %5513 = vmatprep.subr.mxu0 0.0
  %5514 = vmatpush2.msra.mxu0 0.0
  %5515 = vmatprep.subr.mxu0 0.0
  %5516 = vmatpush2.msra.mxu0 0.0
  %5517 = vmatprep.subr.mxu0 0.0
  %5518 = vmatpush2.msra.mxu0 0.0
  %5519 = vmatprep.mubr.f32.mxu0 0.0
  %5520 = vmatmul.mubr.f32.gmra.mxu0 %v5453
  %v5521 = vpop.f32.mrf.mxu0
  %v5522 = vadd.f32 %v5419, %v5521
  %v5523 = vpop.f32.mrf.mxu0
  %5524 = vdwg.mxu0
  %vm5525 = vcmask 17408
  %v5526 = vsel %vm5525, %v5522, -inf
  %5527 = vmax.xlane.f32.xlu0 %v5526
  %v5528 = vpop.xlane.xlu0 %5527
  %v5529 = vsub.f32 %v5522, %v5528
  %v5530 = vmul.f32 %v5529, 1.442695
  %v5531 = vpow.pop %v5530
  %v5532 = vsel %vm5525, %v5531, 0.0
  %5533 = vadd.xlane.f32.xlu0 %v5532
  %v5534 = vpop.xlane.xlu0 %5533
  %v5535 = vrcp.pop %v5534
  %v5536 = vmul.f32 %v5531, %v5535
  %5538 = vset.pattern.permute.xlu0 0
  %5539 = vperm.xlu0 %5538, %v5536
  %v5540 = vpop.permute.xlu0 %5539
  %v5542 = vmul.f32 %v3044, %v5540
  %5543 = vset.pattern.permute.xlu0 1
  %5544 = vperm.xlu0 %5543, %v5536
  %v5545 = vpop.permute.xlu0 %5544
  %v5547 = vmul.f32 %v4043, %v5545
  %5548 = vset.pattern.permute.xlu0 2
  %5549 = vperm.xlu0 %5548, %v5536
  %v5550 = vpop.permute.xlu0 %5549
  %v5552 = vmul.f32 %v5056, %v5550
  %v5554 = vsel %vm2894, %v5547, 0
  %5556 = vmatprep.subr.mxu0 0.0
  %5557 = vmatpush1.msra.mxu0 0.0
  %5558 = vmatprep.subr.mxu0 0.0
  %5559 = vmatpush1.msra.mxu0 0.0
  %5560 = vmatprep.subr.mxu0 0.0
  %5561 = vmatpush1.msra.mxu0 0.0
  %5562 = vmatprep.subr.mxu0 0.0
  %5563 = vmatpush1.msra.mxu0 0.0
  %5564 = vmatprep.subr.mxu0 0.0
  %5565 = vmatpush1.msra.mxu0 0.0
  %5566 = vmatprep.subr.mxu0 0.0
  %5567 = vmatpush1.msra.mxu0 0.0
  %5568 = vmatprep.subr.mxu0 0.0
  %5569 = vmatpush1.msra.mxu0 0.0
  %5570 = vmatprep.subr.mxu0 0.0
  %5571 = vmatpush1.msra.mxu0 0.0
  %5572 = vmatprep.subr.mxu0 %v5110
  %5573 = vmatpush1.msra.mxu0 %v5109
  %5574 = vmatprep.subr.mxu0 %v5108
  %5575 = vmatpush1.msra.mxu0 %v5107
  %5576 = vmatprep.subr.mxu0 %v5106
  %5577 = vmatpush1.msra.mxu0 %v5105
  %5578 = vmatprep.subr.mxu0 %v5104
  %5579 = vmatpush1.msra.mxu0 %v5103
  %5580 = vmatprep.subr.mxu0 %v5102
  %5581 = vmatpush1.msra.mxu0 %v5101
  %5582 = vmatprep.subr.mxu0 %v5100
  %5583 = vmatpush1.msra.mxu0 %v5099
  %5584 = vmatprep.subr.mxu0 %v5098
  %5585 = vmatpush1.msra.mxu0 %v5097
  %5586 = vmatprep.subr.mxu0 %v5096
  %5587 = vmatpush1.msra.mxu0 %v5095
  %5588 = vmatprep.subr.mxu0 0.0
  %5589 = vmatpush2.msra.mxu0 0.0
  %5590 = vmatprep.subr.mxu0 0.0
  %5591 = vmatpush2.msra.mxu0 0.0
  %5592 = vmatprep.subr.mxu0 0.0
  %5593 = vmatpush2.msra.mxu0 0.0
  %5594 = vmatprep.subr.mxu0 0.0
  %5595 = vmatpush2.msra.mxu0 0.0
  %5596 = vmatprep.subr.mxu0 0.0
  %5597 = vmatpush2.msra.mxu0 0.0
  %5598 = vmatprep.subr.mxu0 0.0
  %5599 = vmatpush2.msra.mxu0 0.0
  %5600 = vmatprep.subr.mxu0 0.0
  %5601 = vmatpush2.msra.mxu0 0.0
  %5602 = vmatprep.subr.mxu0 0.0
  %5603 = vmatpush2.msra.mxu0 0.0
  %5604 = vmatprep.subr.mxu0 0.0
  %5605 = vmatpush2.msra.mxu0 0.0
  %5606 = vmatprep.subr.mxu0 0.0
  %5607 = vmatpush2.msra.mxu0 0.0
  %5608 = vmatprep.subr.mxu0 0.0
  %5609 = vmatpush2.msra.mxu0 0.0
  %5610 = vmatprep.subr.mxu0 0.0
  %5611 = vmatpush2.msra.mxu0 0.0
  %5612 = vmatprep.subr.mxu0 0.0
  %5613 = vmatpush2.msra.mxu0 0.0
  %5614 = vmatprep.subr.mxu0 0.0
  %5615 = vmatpush2.msra.mxu0 0.0
  %5616 = vmatprep.subr.mxu0 0.0
  %5617 = vmatpush2.msra.mxu0 0.0
  %5618 = vmatprep.subr.mxu0 0.0
  %5619 = vmatpush2.msra.mxu0 0.0
  %5620 = vmatprep.mubr.f32.mxu0 0.0
  %5621 = vmatmul.mubr.f32.gmra.mxu0 %v5554
  %v5622 = vpop.f32.mrf.mxu0
  %v5623 = vadd.f32 0.0, %v5622
  %v5624 = vpop.f32.mrf.mxu0
  %v5625 = vadd.f32 0.0, %v5624
  %5626 = vdwg.mxu0
  %5627 = vmatprep.subr.mxu0 %v5094
  %5628 = vmatpush1.msra.mxu0 %v5093
  %5629 = vmatprep.subr.mxu0 %v5092
  %5630 = vmatpush1.msra.mxu0 %v5091
  %5631 = vmatprep.subr.mxu0 %v5090
  %5632 = vmatpush1.msra.mxu0 %v5089
  %5633 = vmatprep.subr.mxu0 %v5088
  %5634 = vmatpush1.msra.mxu0 %v5087
  %5635 = vmatprep.subr.mxu0 %v5086
  %5636 = vmatpush1.msra.mxu0 %v5085
  %5637 = vmatprep.subr.mxu0 %v5084
  %5638 = vmatpush1.msra.mxu0 %v5083
  %5639 = vmatprep.subr.mxu0 %v5082
  %5640 = vmatpush1.msra.mxu0 %v5081
  %5641 = vmatprep.subr.mxu0 %v5080
  %5642 = vmatpush1.msra.mxu0 %v5079
  %5643 = vmatprep.subr.mxu0 %v5078
  %5644 = vmatpush1.msra.mxu0 %v5077
  %5645 = vmatprep.subr.mxu0 %v5076
  %5646 = vmatpush1.msra.mxu0 %v5075
  %5647 = vmatprep.subr.mxu0 %v5074
  %5648 = vmatpush1.msra.mxu0 %v5073
  %5649 = vmatprep.subr.mxu0 %v5072
  %5650 = vmatpush1.msra.mxu0 %v5071
  %5651 = vmatprep.subr.mxu0 %v5070
  %5652 = vmatpush1.msra.mxu0 %v5069
  %5653 = vmatprep.subr.mxu0 %v5068
  %5654 = vmatpush1.msra.mxu0 %v5067
  %5655 = vmatprep.subr.mxu0 %v5066
  %5656 = vmatpush1.msra.mxu0 %v5065
  %5657 = vmatprep.subr.mxu0 %v5064
  %5658 = vmatpush1.msra.mxu0 %v5063
  %5659 = vmatprep.subr.mxu0 0.0
  %5660 = vmatpush2.msra.mxu0 0.0
  %5661 = vmatprep.subr.mxu0 0.0
  %5662 = vmatpush2.msra.mxu0 0.0
  %5663 = vmatprep.subr.mxu0 0.0
  %5664 = vmatpush2.msra.mxu0 0.0
  %5665 = vmatprep.subr.mxu0 0.0
  %5666 = vmatpush2.msra.mxu0 0.0
  %5667 = vmatprep.subr.mxu0 0.0
  %5668 = vmatpush2.msra.mxu0 0.0
  %5669 = vmatprep.subr.mxu0 0.0
  %5670 = vmatpush2.msra.mxu0 0.0
  %5671 = vmatprep.subr.mxu0 0.0
  %5672 = vmatpush2.msra.mxu0 0.0
  %5673 = vmatprep.subr.mxu0 0.0
  %5674 = vmatpush2.msra.mxu0 0.0
  %5675 = vmatprep.subr.mxu0 0.0
  %5676 = vmatpush2.msra.mxu0 0.0
  %5677 = vmatprep.subr.mxu0 0.0
  %5678 = vmatpush2.msra.mxu0 0.0
  %5679 = vmatprep.subr.mxu0 0.0
  %5680 = vmatpush2.msra.mxu0 0.0
  %5681 = vmatprep.subr.mxu0 0.0
  %5682 = vmatpush2.msra.mxu0 0.0
  %5683 = vmatprep.subr.mxu0 0.0
  %5684 = vmatpush2.msra.mxu0 0.0
  %5685 = vmatprep.subr.mxu0 0.0
  %5686 = vmatpush2.msra.mxu0 0.0
  %5687 = vmatprep.subr.mxu0 0.0
  %5688 = vmatpush2.msra.mxu0 0.0
  %5689 = vmatprep.subr.mxu0 0.0
  %5690 = vmatpush2.msra.mxu0 0.0
  %5691 = vmatprep.mubr.f32.mxu0 0.0
  %5692 = vmatmul.mubr.f32.gmra.mxu0 %v5542
  %v5693 = vpop.f32.mrf.mxu0
  %v5694 = vadd.f32 %v5623, %v5693
  %v5695 = vpop.f32.mrf.mxu0
  %v5696 = vadd.f32 %v5625, %v5695
  %5697 = vdwg.mxu0
  %v5699 = vsel %vm2894, %v5552, 0
  %5701 = vmatprep.subr.mxu0 0.0
  %5702 = vmatpush1.msra.mxu0 0.0
  %5703 = vmatprep.subr.mxu0 0.0
  %5704 = vmatpush1.msra.mxu0 0.0
  %5705 = vmatprep.subr.mxu0 0.0
  %5706 = vmatpush1.msra.mxu0 0.0
  %5707 = vmatprep.subr.mxu0 0.0
  %5708 = vmatpush1.msra.mxu0 0.0
  %5709 = vmatprep.subr.mxu0 0.0
  %5710 = vmatpush1.msra.mxu0 0.0
  %5711 = vmatprep.subr.mxu0 0.0
  %5712 = vmatpush1.msra.mxu0 0.0
  %5713 = vmatprep.subr.mxu0 0.0
  %5714 = vmatpush1.msra.mxu0 0.0
  %5715 = vmatprep.subr.mxu0 0.0
  %5716 = vmatpush1.msra.mxu0 0.0
  %5717 = vmatprep.subr.mxu0 %v5126
  %5718 = vmatpush1.msra.mxu0 %v5125
  %5719 = vmatprep.subr.mxu0 %v5124
  %5720 = vmatpush1.msra.mxu0 %v5123
  %5721 = vmatprep.subr.mxu0 %v5122
  %5722 = vmatpush1.msra.mxu0 %v5121
  %5723 = vmatprep.subr.mxu0 %v5120
  %5724 = vmatpush1.msra.mxu0 %v5119
  %5725 = vmatprep.subr.mxu0 %v5118
  %5726 = vmatpush1.msra.mxu0 %v5117
  %5727 = vmatprep.subr.mxu0 %v5116
  %5728 = vmatpush1.msra.mxu0 %v5115
  %5729 = vmatprep.subr.mxu0 %v5114
  %5730 = vmatpush1.msra.mxu0 %v5113
  %5731 = vmatprep.subr.mxu0 %v5112
  %5732 = vmatpush1.msra.mxu0 %v5111
  %5733 = vmatprep.subr.mxu0 0.0
  %5734 = vmatpush2.msra.mxu0 0.0
  %5735 = vmatprep.subr.mxu0 0.0
  %5736 = vmatpush2.msra.mxu0 0.0
  %5737 = vmatprep.subr.mxu0 0.0
  %5738 = vmatpush2.msra.mxu0 0.0
  %5739 = vmatprep.subr.mxu0 0.0
  %5740 = vmatpush2.msra.mxu0 0.0
  %5741 = vmatprep.subr.mxu0 0.0
  %5742 = vmatpush2.msra.mxu0 0.0
  %5743 = vmatprep.subr.mxu0 0.0
  %5744 = vmatpush2.msra.mxu0 0.0
  %5745 = vmatprep.subr.mxu0 0.0
  %5746 = vmatpush2.msra.mxu0 0.0
  %5747 = vmatprep.subr.mxu0 0.0
  %5748 = vmatpush2.msra.mxu0 0.0
  %5749 = vmatprep.subr.mxu0 0.0
  %5750 = vmatpush2.msra.mxu0 0.0
  %5751 = vmatprep.subr.mxu0 0.0
  %5752 = vmatpush2.msra.mxu0 0.0
  %5753 = vmatprep.subr.mxu0 0.0
  %5754 = vmatpush2.msra.mxu0 0.0
  %5755 = vmatprep.subr.mxu0 0.0
  %5756 = vmatpush2.msra.mxu0 0.0
  %5757 = vmatprep.subr.mxu0 0.0
  %5758 = vmatpush2.msra.mxu0 0.0
  %5759 = vmatprep.subr.mxu0 0.0
  %5760 = vmatpush2.msra.mxu0 0.0
  %5761 = vmatprep.subr.mxu0 0.0
  %5762 = vmatpush2.msra.mxu0 0.0
  %5763 = vmatprep.subr.mxu0 0.0
  %5764 = vmatpush2.msra.mxu0 0.0
  %5765 = vmatprep.mubr.f32.mxu0 0.0
  %5766 = vmatmul.mubr.f32.gmra.mxu0 %v5699
  %v5767 = vpop.f32.mrf.mxu0
  %v5768 = vadd.f32 0.0, %v5767
  %v5769 = vpop.f32.mrf.mxu0
  %v5770 = vadd.f32 0.0, %v5769
  %5771 = vdwg.mxu0
  %v5772 = vadd.f32 %v5694, %v5768
  %v5773 = vadd.f32 %v5696, %v5770
  %s5774 = scalar_lea.vmem %s3, 22
  %v5775 = vld [vmem:[%s5774] ss:$8 sm:$0x3]
  %v5777 = vlaneseq
  %v5778 = vshrl.u32 %v5777, 7
  %v5779 = vsub.s32 0, %v5778
  %v5780 = vrot.slane %v5775, %v5779
  %v5781 = vlaneseq
  %v5782 = vshrl.u32 %v5781, 7
  %v5783 = vsub.s32 1, %v5782
  %v5784 = vrot.slane %v5775, %v5783
  %v5787 = vadd.f32 %v5772, %v5780
  %v5788 = vadd.f32 %v5773, %v5784
  %v5789 = vmax.f32 %v5787, 0.0
  %v5790 = vmax.f32 %v5788, 0.0
  %v5791 = vld [vmem:[%s3 + $0x17] ss:$0 sm:$0xff]
  %5792 = vmatprep.subr.mxu0 0.0
  %5793 = vmatpush1.msra.mxu0 %v5142
  %5794 = vmatprep.subr.mxu0 0.0
  %5795 = vmatpush1.msra.mxu0 %v5141
  %5796 = vmatprep.subr.mxu0 0.0
  %5797 = vmatpush1.msra.mxu0 %v5140
  %5798 = vmatprep.subr.mxu0 0.0
  %5799 = vmatpush1.msra.mxu0 %v5139
  %5800 = vmatprep.subr.mxu0 0.0
  %5801 = vmatpush1.msra.mxu0 %v5138
  %5802 = vmatprep.subr.mxu0 0.0
  %5803 = vmatpush1.msra.mxu0 %v5137
  %5804 = vmatprep.subr.mxu0 0.0
  %5805 = vmatpush1.msra.mxu0 %v5136
  %5806 = vmatprep.subr.mxu0 0.0
  %5807 = vmatpush1.msra.mxu0 %v5135
  %5808 = vmatprep.subr.mxu0 0.0
  %5809 = vmatpush1.msra.mxu0 %v5134
  %5810 = vmatprep.subr.mxu0 0.0
  %5811 = vmatpush1.msra.mxu0 %v5133
  %5812 = vmatprep.subr.mxu0 0.0
  %5813 = vmatpush1.msra.mxu0 %v5132
  %5814 = vmatprep.subr.mxu0 0.0
  %5815 = vmatpush1.msra.mxu0 %v5131
  %5816 = vmatprep.subr.mxu0 0.0
  %5817 = vmatpush1.msra.mxu0 %v5130
  %5818 = vmatprep.subr.mxu0 0.0
  %5819 = vmatpush1.msra.mxu0 %v5129
  %5820 = vmatprep.subr.mxu0 0.0
  %5821 = vmatpush1.msra.mxu0 %v5128
  %5822 = vmatprep.subr.mxu0 0.0
  %5823 = vmatpush1.msra.mxu0 %v5127
  %5824 = vmatprep.subr.mxu0 0.0
  %5825 = vmatpush2.msra.mxu0 %v5158
  %5826 = vmatprep.subr.mxu0 0.0
  %5827 = vmatpush2.msra.mxu0 %v5157
  %5828 = vmatprep.subr.mxu0 0.0
  %5829 = vmatpush2.msra.mxu0 %v5156
  %5830 = vmatprep.subr.mxu0 0.0
  %5831 = vmatpush2.msra.mxu0 %v5155
  %5832 = vmatprep.subr.mxu0 0.0
  %5833 = vmatpush2.msra.mxu0 %v5154
  %5834 = vmatprep.subr.mxu0 0.0
  %5835 = vmatpush2.msra.mxu0 %v5153
  %5836 = vmatprep.subr.mxu0 0.0
  %5837 = vmatpush2.msra.mxu0 %v5152
  %5838 = vmatprep.subr.mxu0 0.0
  %5839 = vmatpush2.msra.mxu0 %v5151
  %5840 = vmatprep.subr.mxu0 0.0
  %5841 = vmatpush2.msra.mxu0 %v5150
  %5842 = vmatprep.subr.mxu0 0.0
  %5843 = vmatpush2.msra.mxu0 %v5149
  %5844 = vmatprep.subr.mxu0 0.0
  %5845 = vmatpush2.msra.mxu0 %v5148
  %5846 = vmatprep.subr.mxu0 0.0
  %5847 = vmatpush2.msra.mxu0 %v5147
  %5848 = vmatprep.subr.mxu0 0.0
  %5849 = vmatpush2.msra.mxu0 %v5146
  %5850 = vmatprep.subr.mxu0 0.0
  %5851 = vmatpush2.msra.mxu0 %v5145
  %5852 = vmatprep.subr.mxu0 0.0
  %5853 = vmatpush2.msra.mxu0 %v5144
  %5854 = vmatprep.subr.mxu0 0.0
  %5855 = vmatpush2.msra.mxu0 %v5143
  %5856 = vmatprep.mubr.f32.mxu0 %v5790
  %5857 = vmatmul.mubr.f32.gmra.mxu0 %v5789
  %v5858 = vpop.f32.mrf.mxu0
  %v5859 = vadd.f32 %v5791, %v5858
  %v5860 = vpop.f32.mrf.mxu0
  %5861 = vdwg.mxu0
  %5862 = vst [vmem:[%s8] sm:$0x3] %v5859
  // Predicated region
  $region34: #{multimodal_forward.1} parent=0 // pred_check
    _
  $region35: #{multimodal_forward.1} parent=0 // pred_check_branch
    %5864 = sbr.rel (0) target = $region37
  $region36: #{multimodal_forward.1} parent=0 // pred_region
    _
  $region37: #{multimodal_forward.1} parent=0 // pred_fallthru
    _
  // Predicated region
  $region38: #{multimodal_forward.1} parent=0 // pred_check
    _
  $region39: #{multimodal_forward.1} parent=0 // pred_check_branch
    %5866 = sbr.rel (0) target = $region41
  $region40: #{multimodal_forward.1} parent=0 // pred_region
    _
  $region41: #{multimodal_forward.1} parent=0 // pred_fallthru
    _
  %5867 = vsyncmov [#allocation5]
  %s5868 = vpop.sfrf %5867
  %p5869 = scmp.eq.s32.totalorder %s5868, 0
  %p5870 = pneg %p5869
  %5872 = shalt.err (%p5870)

</llo_original>
